<compile_context>
chip_gen: v6e
topology: v6e:2x2x1
jax: 0.10.0
libtpu: 0.0.40
codegen_flags: <defaults>
</compile_context>

<pallas_src>
import functools
import numpy as np

import jax
import jax.numpy as jnp
from jax import lax
from jax.experimental import pallas as pl
from jax.experimental.pallas import tpu as pltpu


_NEG_SLOPE = 0.01          # torch LeakyReLU default
_BN_EPS = 1e-5             # torch BatchNorm2d default


# ----------------------- device / feature detection -------------------------

def _device_config():
    """Generation-aware VMEM budget / row tile.

    v5e / v6e have 128 MiB physical VMEM -> big limit + big row tiles.
    v7x (64 MiB) or unknown -> conservative 48 MiB / 512 rows.
    """
    vmem_cap = None
    try:
        info = pltpu.get_tpu_info()
        vmem_cap = getattr(info, "vmem_capacity_bytes", None)
    except Exception:
        vmem_cap = None
    if vmem_cap is not None and vmem_cap > 96 * 1024 * 1024:
        return {"vmem_limit": 100 * 1024 * 1024, "row_tile": 1024}
    return {"vmem_limit": 48 * 1024 * 1024, "row_tile": 512}


_BUFFERED_FLAG = None


def _probe_kernel(x_ref, o_ref):
    o_ref[...] = x_ref[...]


def _buffered_ok():
    """True iff BlockSpec(pipeline_mode=pl.Buffered(1)) works on this jax/TPU."""
    global _BUFFERED_FLAG
    if _BUFFERED_FLAG is None:
        try:
            f = pl.pallas_call(
                _probe_kernel,
                grid=(2,),
                in_specs=[pl.BlockSpec((8, 128), lambda i: (0, 0),
                                       pipeline_mode=pl.Buffered(1))],
                out_specs=pl.BlockSpec((8, 128), lambda i: (i, 0)),
                out_shape=jax.ShapeDtypeStruct((16, 128), jnp.float32))
            jax.block_until_ready(f(jnp.zeros((8, 128), jnp.float32)))
            _BUFFERED_FLAG = True
        except Exception:
            _BUFFERED_FLAG = False
    return _BUFFERED_FLAG


def _const_spec(shape, index_map):
    """Spec for grid-invariant operands: single-buffered when supported."""
    if _buffered_ok():
        return pl.BlockSpec(shape, index_map, pipeline_mode=pl.Buffered(1))
    return pl.BlockSpec(shape, index_map)


def _compiler_params(vmem_limit):
    return pltpu.CompilerParams(dimension_semantics=("parallel",),
                                vmem_limit_bytes=vmem_limit)


def _choose_row_tile(M, target):
    """Row tile: divisor of M, multiple of 16 (8 fallback), <= target, and
    giving >= 2 grid steps (v7x megacore) whenever M is comfortably large."""
    if M <= target:
        if M >= 32 and M % 2 == 0 and (M // 2) % 8 == 0:
            return M // 2
        return M
    cap = min(target, M // 2)
    for mod in (16, 8):
        for tm in range(cap, mod - 1, -1):
            if M % tm == 0 and tm % mod == 0:
                return tm
    # TODO(synk): awkward M -> single tile; switch to cdiv grid + masked tail.
    return M


# ----------------------------- Pallas kernels -------------------------------

def _mm_bias_stats_kernel(x_ref, w_ref, b_ref, y_ref, s_ref):
    """y = x @ w + b (bf16 MXU operands, f32 acc); y stored bf16; per-tile
    mean-centred (sum, sum-sq-dev) column stats for the BN fold."""
    acc = jnp.dot(x_ref[...], w_ref[...], preferred_element_type=jnp.float32)
    acc = acc + b_ref[...]
    s0 = jnp.sum(acc, axis=0, keepdims=True)
    mu = s0 * (1.0 / acc.shape[0])
    d = acc - mu
    s1 = jnp.sum(d * d, axis=0, keepdims=True)
    s_ref[...] = jnp.concatenate([s0, s1], axis=0)[None]
    y_ref[...] = acc.astype(y_ref.dtype)


def _scale_shift_lrelu_kernel(y_ref, sc_ref, sh_ref, o_ref):
    """Folded BatchNorm (scale/shift) + LeakyReLU; bf16 in/out, f32 math."""
    y = y_ref[...].astype(jnp.float32) * sc_ref[...] + sh_ref[...]
    o_ref[...] = jnp.where(y >= 0, y, _NEG_SLOPE * y).astype(o_ref.dtype)


def _convt_phase_kernel(x_ref, w_ref, b_ref, y_ref, s_ref, *, H, W):
    """ConvTranspose2d(3, s=2, p=1, op=1) for one batch element via the
    4-phase sub-pixel decomposition.

    x_ref: (1, H+1, W+1, Cin) right/bottom zero-padded input (bf16)
    w_ref: (4, Cin, 4*Cout) per-source-tap phase blocks (bf16)
    y_ref: (1, H, 2, W, 2*Cout) bf16, phase-interleaved: bit-identical to the
           (2H, 2W, Cout) NHWC output map (no XLA transpose needed).
    s_ref: (1, 2, 4*Cout) f32 mean-centred BN partial stats.
    """
    cin = w_ref.shape[1]
    xp = x_ref[0]

    def win(dh, dw):
        return xp[dh:dh + H, dw:dw + W, :].reshape(H * W, cin)

    acc = jnp.dot(win(0, 0), w_ref[0], preferred_element_type=jnp.float32)
    acc = acc + jnp.dot(win(0, 1), w_ref[1], preferred_element_type=jnp.float32)
    acc = acc + jnp.dot(win(1, 0), w_ref[2], preferred_element_type=jnp.float32)
    acc = acc + jnp.dot(win(1, 1), w_ref[3], preferred_element_type=jnp.float32)
    acc = acc + b_ref[...]

    s0 = jnp.sum(acc, axis=0, keepdims=True)
    mu = s0 * (1.0 / acc.shape[0])
    d = acc - mu
    s1 = jnp.sum(d * d, axis=0, keepdims=True)
    s_ref[...] = jnp.concatenate([s0, s1], axis=0)[None]

    a = acc.astype(y_ref.dtype)                      # (H*W, 4*Cout)
    half = a.shape[1] // 2
    y_ref[0, :, 0, :, :] = a[:, :half].reshape(H, W, half)   # dy = 0 phases
    y_ref[0, :, 1, :, :] = a[:, half:].reshape(H, W, half)   # dy = 1 phases


def _final_conv_kernel(x_ref, w_ref, b_ref, o_ref, *, S):
    """3x3 / stride-1 / pad-1 conv + Tanh for one batch element, computed as
    nine shifted in-VMEM matmuls on the (S+2, S+2, Cin) padded block.
    (Replaces the 9x im2col patch matrix.)"""
    cin = w_ref.shape[2]
    cout = w_ref.shape[3]
    xp = x_ref[0]
    acc = jnp.zeros((S * S, cout), jnp.float32)
    for di in range(3):
        for dj in range(3):
            patch = xp[di:di + S, dj:dj + S, :].reshape(S * S, cin)
            acc = acc + jnp.dot(patch, w_ref[di, dj],
                                preferred_element_type=jnp.float32)
    acc = jnp.tanh(acc + b_ref[...])
    o_ref[0] = acc.reshape(S, S, cout).astype(o_ref.dtype)


def _head_kernel(x_ref, wh_ref, bh_ref, noise_ref, wd_ref, bd_ref,
                 h_ref, d_ref, *, latent_dim):
    """Fused bottleneck: [mu|logvar] = x@Wh + bh ; z = mu + exp(.5*lv)*noise ;
    d = z @ Wd + bd (decoder_input)."""
    h = jnp.dot(x_ref[...], wh_ref[...], preferred_element_type=jnp.float32)
    h = h + bh_ref[...]
    h_ref[...] = h
    mu = h[:, :latent_dim]
    logvar = h[:, latent_dim:]
    z = mu + jnp.exp(0.5 * logvar) * noise_ref[...]
    d = jnp.dot(z.astype(jnp.bfloat16), wd_ref[...],
                preferred_element_type=jnp.float32)
    d_ref[...] = (d + bd_ref[...]).astype(d_ref.dtype)


# ----------------------------- kernel wrappers ------------------------------

def matmul_bias_stats(x, w, b, row_tile, vmem_limit):
    M, K = x.shape
    N = w.shape[1]
    tm = _choose_row_tile(M, row_tile)
    T = M // tm
    y, stats = pl.pallas_call(
        _mm_bias_stats_kernel,
        grid=(T,),
        in_specs=[pl.BlockSpec((tm, K), lambda i: (i, 0)),
                  _const_spec((K, N), lambda i: (0, 0)),
                  _const_spec((1, N), lambda i: (0, 0))],
        out_specs=[pl.BlockSpec((tm, N), lambda i: (i, 0)),
                   pl.BlockSpec((1, 2, N), lambda i: (i, 0, 0))],
        out_shape=[jax.ShapeDtypeStruct((M, N), jnp.bfloat16),
                   jax.ShapeDtypeStruct((T, 2, N), jnp.float32)],
        compiler_params=_compiler_params(vmem_limit),
    )(x, w, b)
    return y, stats, tm


def scale_shift_lrelu(y, scale, shift, row_tile, vmem_limit):
    M, N = y.shape
    tm = _choose_row_tile(M, row_tile)
    T = M // tm
    return pl.pallas_call(
        _scale_shift_lrelu_kernel,
        grid=(T,),
        in_specs=[pl.BlockSpec((tm, N), lambda i: (i, 0)),
                  _const_spec((1, N), lambda i: (0, 0)),
                  _const_spec((1, N), lambda i: (0, 0))],
        out_specs=pl.BlockSpec((tm, N), lambda i: (i, 0)),
        out_shape=jax.ShapeDtypeStruct((M, N), jnp.bfloat16),
        compiler_params=_compiler_params(vmem_limit),
    )(y, scale, shift)


def convt_phase(xp, w4, b, H, W, cout, vmem_limit):
    B = xp.shape[0]
    cin = w4.shape[1]
    c4 = 4 * cout
    kern = functools.partial(_convt_phase_kernel, H=H, W=W)
    y, stats = pl.pallas_call(
        kern,
        grid=(B,),
        in_specs=[pl.BlockSpec((1, H + 1, W + 1, cin), lambda i: (i, 0, 0, 0)),
                  _const_spec((4, cin, c4), lambda i: (0, 0, 0)),
                  _const_spec((1, c4), lambda i: (0, 0))],
        out_specs=[pl.BlockSpec((1, H, 2, W, 2 * cout),
                                lambda i: (i, 0, 0, 0, 0)),
                   pl.BlockSpec((1, 2, c4), lambda i: (i, 0, 0))],
        out_shape=[jax.ShapeDtypeStruct((B, H, 2, W, 2 * cout), jnp.bfloat16),
                   jax.ShapeDtypeStruct((B, 2, c4), jnp.float32)],
        compiler_params=_compiler_params(vmem_limit),
    )(xp, w4, b)
    return y, stats


def final_conv_tanh(xp, w, b, S, vmem_limit):
    B, _, _, cin = xp.shape
    cout = w.shape[3]
    kern = functools.partial(_final_conv_kernel, S=S)
    return pl.pallas_call(
        kern,
        grid=(B,),
        in_specs=[pl.BlockSpec((1, S + 2, S + 2, cin), lambda i: (i, 0, 0, 0)),
                  _const_spec((3, 3, cin, cout), lambda i: (0, 0, 0, 0)),
                  _const_spec((1, cout), lambda i: (0, 0))],
        out_specs=pl.BlockSpec((1, S, S, cout), lambda i: (i, 0, 0, 0)),
        out_shape=jax.ShapeDtypeStruct((B, S, S, cout), jnp.float32),
        compiler_params=_compiler_params(vmem_limit),
    )(xp, w, b)


def head_fused(x_flat, head, noise, latent_dim, vmem_limit):
    # TODO(synk): tile over batch rows / single-buffer weights if B or the
    # flattened dim grows well beyond toy sizes (everything is VMEM-resident).
    B = x_flat.shape[0]
    flat = head["w_dec"].shape[1]
    vspec = pl.BlockSpec(memory_space=pltpu.MemorySpace.VMEM)
    kern = functools.partial(_head_kernel, latent_dim=latent_dim)
    h, d = pl.pallas_call(
        kern,
        in_specs=[vspec] * 6,
        out_specs=[vspec, vspec],
        out_shape=[jax.ShapeDtypeStruct((B, 2 * latent_dim), jnp.float32),
                   jax.ShapeDtypeStruct((B, flat), jnp.bfloat16)],
        compiler_params=pltpu.CompilerParams(vmem_limit_bytes=vmem_limit),
    )(x_flat, head["w_head"], head["b_head"], noise,
      head["w_dec"], head["b_dec"])
    return h, d


# ------------------------------ JAX glue ops --------------------------------

def _im2col(x_nhwc, k, stride, pad):
    """(B,H,W,C) -> bf16 patches (B*Ho*Wo, k*k*C), flat order (kh*k+kw)*C + c.
    TODO(synk): fold the encoder tap reduction into the matmul kernel grid."""
    B, H, W, C = x_nhwc.shape
    if pad:
        x_nhwc = jnp.pad(x_nhwc, ((0, 0), (pad, pad), (pad, pad), (0, 0)))
    Ho = (H + 2 * pad - k) // stride + 1
    Wo = (W + 2 * pad - k) // stride + 1
    cols = []
    for di in range(k):
        for dj in range(k):
            cols.append(x_nhwc[:, di:di + stride * (Ho - 1) + 1:stride,
                                  dj:dj + stride * (Wo - 1) + 1:stride, :])
    patches = jnp.concatenate(cols, axis=-1).reshape(B * Ho * Wo, k * k * C)
    return patches, (B, Ho, Wo)


def _bn_fold(stats, gamma, beta, rows_per_group, phases, out_phases):
    """Combine per-group mean-centred partial stats (Chan's formula) into
    per-channel BN scale/shift (training-mode BN, biased var, eps=1e-5)."""
    C = gamma.shape[0]
    G = stats.shape[0]
    n = float(rows_per_group)
    s = stats.reshape(G, 2, phases, C)
    s0 = s[:, 0].reshape(G * phases, C)
    s1 = s[:, 1].reshape(G * phases, C)
    count = n * G * phases
    mean_g = s0 / n
    mean = jnp.sum(s0, axis=0) / count
    m2 = jnp.sum(s1, axis=0) + n * jnp.sum((mean_g - mean) ** 2, axis=0)
    var = jnp.maximum(m2 / count, 0.0)
    inv = lax.rsqrt(var + _BN_EPS)
    scale = gamma * inv
    shift = beta - mean * scale
    if out_phases > 1:
        scale = jnp.tile(scale, out_phases)
        shift = jnp.tile(shift, out_phases)
    return (scale.reshape(1, -1).astype(jnp.float32),
            shift.reshape(1, -1).astype(jnp.float32))


# --------------------------- weight layout transforms ------------------------

def _conv_w_to_mat(w_oihw):
    # torch Conv2d weight (Cout,Cin,kH,kW) -> (kH*kW*Cin, Cout)
    return jnp.transpose(w_oihw, (2, 3, 1, 0)).reshape(-1, w_oihw.shape[0])


def _convT_w_to_phase_blocks(w_iohw):
    """torch ConvTranspose2d weight (Cin,Cout,3,3) -> (4, Cin, 4*Cout).
    Leading axis = source taps [x(h,w), x(h,w+1), x(h+1,w), x(h+1,w+1)];
    column blocks = output phases [(0,0),(0,1),(1,0),(1,1)]."""
    Cin, Cout = w_iohw.shape[0], w_iohw.shape[1]

    def tap(kh, kw):
        return w_iohw[:, :, kh, kw]                   # (Cin, Cout)

    Z = jnp.zeros((Cin, Cout), w_iohw.dtype)
    r0 = jnp.concatenate([tap(1, 1), tap(1, 2), tap(2, 1), tap(2, 2)], axis=1)
    r1 = jnp.concatenate([Z,         tap(1, 0), Z,         tap(2, 0)], axis=1)
    r2 = jnp.concatenate([Z,         Z,         tap(0, 1), tap(0, 2)], axis=1)
    r3 = jnp.concatenate([Z,         Z,         Z,         tap(0, 0)], axis=1)
    return jnp.stack([r0, r1, r2, r3], axis=0)


# ------------------------------ VanillaVAE ----------------------------------

class VanillaVAEPallas:
    def __init__(self, input_shape, input_channels, latent_dim, hidden_dims,
                 key):
        cfg = _device_config()
        self.vmem_limit = cfg["vmem_limit"]
        self.row_tile = cfg["row_tile"]
        _buffered_ok()                    # probe once, eagerly (not under jit)
        self.input_shape = input_shape
        self.input_channels = input_channels
        self.latent_dim = latent_dim
        self.hidden_dims = list(hidden_dims)
        self.multiplier = int(np.round(input_shape / 2 ** len(hidden_dims), 0))
        self.last_channel = hidden_dims[-1]
        self.params = self._init_params(key)

    # --------------------------- parameters ---------------------------------
    def _init_params(self, key):
        keys = iter(jax.random.split(key, 64))

        def nrm(shape, scale=0.1):
            return scale * jax.random.normal(next(keys), shape, jnp.float32)

        p = {}
        # encoder: Conv2d(k=3,s=2,p=1) + BN + LeakyReLU per hidden dim
        enc, cin = [], self.input_channels
        for hdim in self.hidden_dims:
            w = nrm((hdim, cin, 3, 3))
            enc.append(dict(w=_conv_w_to_mat(w).astype(jnp.bfloat16),
                            b=nrm((hdim,)).reshape(1, -1),
                            gamma=jnp.ones((hdim,), jnp.float32),
                            beta=jnp.zeros((hdim,), jnp.float32)))
            cin = hdim
        p["enc"] = enc

        # fused bottleneck (torch NCHW-flatten permutation folded into weights)
        m = self.multiplier
        C = self.hidden_dims[-1]
        flat = C * m * m
        idx = np.arange(flat)
        c_idx = idx % C
        hw = idx // C
        h_idx = hw // m
        w_idx = hw % m
        torch_of = np.asarray(c_idx * m * m + h_idx * m + w_idx)

        w_mu = nrm((self.latent_dim, flat))
        w_lv = nrm((self.latent_dim, flat))
        b_mu = nrm((self.latent_dim,))
        b_lv = nrm((self.latent_dim,))
        w_head = jnp.concatenate([w_mu.T, w_lv.T], axis=1)[torch_of, :]
        b_head = jnp.concatenate([b_mu, b_lv]).reshape(1, -1)

        w_di = nrm((flat, self.latent_dim))           # torch Linear (out, in)
        b_di = nrm((flat,))
        w_dec = w_di.T[:, torch_of]
        b_dec = b_di[torch_of].reshape(1, -1)

        p["head"] = dict(w_head=w_head.astype(jnp.bfloat16), b_head=b_head,
                         w_dec=w_dec.astype(jnp.bfloat16), b_dec=b_dec)

        # decoder: ConvTranspose2d(3,s2,p1,op1) + BN + LeakyReLU
        rev = list(reversed(self.hidden_dims))
        dec = []
        for i in range(len(rev) - 1):
            w = nrm((rev[i], rev[i + 1], 3, 3))
            dec.append(dict(
                w=_convT_w_to_phase_blocks(w).astype(jnp.bfloat16),
                b=jnp.tile(nrm((rev[i + 1],)), 4).reshape(1, -1),
                gamma=jnp.ones((rev[i + 1],), jnp.float32),
                beta=jnp.zeros((rev[i + 1],), jnp.float32)))
        p["dec"] = dec

        hl = rev[-1]
        w = nrm((hl, hl, 3, 3))
        p["final_convT"] = dict(
            w=_convT_w_to_phase_blocks(w).astype(jnp.bfloat16),
            b=jnp.tile(nrm((hl,)), 4).reshape(1, -1),
            gamma=jnp.ones((hl,), jnp.float32),
            beta=jnp.zeros((hl,), jnp.float32))

        w = nrm((self.input_channels, hl, 3, 3))
        p["final_conv"] = dict(
            w=jnp.transpose(w, (2, 3, 1, 0)).astype(jnp.bfloat16),
            b=nrm((self.input_channels,)).reshape(1, -1))
        return p

    # ----------------------------- layer ops --------------------------------
    def _conv_bn_lrelu(self, x, layer):
        cols, (B, Ho, Wo) = _im2col(x, 3, 2, 1)
        y, stats, tm = matmul_bias_stats(cols, layer["w"], layer["b"],
                                         self.row_tile, self.vmem_limit)
        scale, shift = _bn_fold(stats, layer["gamma"], layer["beta"],
                                rows_per_group=tm, phases=1, out_phases=1)
        act = scale_shift_lrelu(y, scale, shift, self.row_tile, self.vmem_limit)
        return act.reshape(B, Ho, Wo, -1)

    def _convt_bn_lrelu(self, x, layer):
        B, H, W, _ = x.shape
        cout = layer["gamma"].shape[0]
        xp = jnp.pad(x, ((0, 0), (0, 1), (0, 1), (0, 0)))
        y, stats = convt_phase(xp, layer["w"], layer["b"], H, W, cout,
                               self.vmem_limit)
        scale, shift = _bn_fold(stats, layer["gamma"], layer["beta"],
                                rows_per_group=H * W, phases=4, out_phases=2)
        act = scale_shift_lrelu(y.reshape(B * H * 2 * W, 2 * cout),
                                scale, shift, self.row_tile, self.vmem_limit)
        # (B*H*2*W, 2*Cout) is bit-identical to (B, 2H, 2W, Cout): pure reshape.
        return act.reshape(B, 2 * H, 2 * W, cout)

    # ------------------------------ forward ----------------------------------
    def forward(self, x_nchw, noise):
        p = self.params
        B = x_nchw.shape[0]
        x = jnp.transpose(x_nchw, (0, 2, 3, 1)).astype(jnp.bfloat16)   # NHWC

        # ---- encode ----
        for layer in p["enc"]:
            x = self._conv_bn_lrelu(x, layer)
        x_flat = x.reshape(B, -1)

        # ---- fused head: fc_mu|fc_logvar, reparameterize, decoder_input ----
        h, d = head_fused(x_flat, p["head"], noise, self.latent_dim,
                          self.vmem_limit)
        mu = h[:, :self.latent_dim]
        logvar = h[:, self.latent_dim:]

        # ---- decode ----
        d = d.reshape(B, self.multiplier, self.multiplier, self.last_channel)
        for layer in p["dec"]:
            d = self._convt_bn_lrelu(d, layer)
        d = self._convt_bn_lrelu(d, p["final_convT"])

        # final 3x3/s1 conv + tanh (no im2col: per-batch shifted-matmul kernel)
        S = d.shape[1]
        dp = jnp.pad(d, ((0, 0), (1, 1), (1, 1), (0, 0)))
        recon = final_conv_tanh(dp, p["final_conv"]["w"], p["final_conv"]["b"],
                                S, self.vmem_limit)

        return jnp.transpose(recon, (0, 3, 1, 2)), mu, logvar   # NHWC -> NCHW


# --------------------------------- main --------------------------------------

if __name__ == "__main__":
    key = jax.random.PRNGKey(0)
    k_param, k_x, k_noise = jax.random.split(key, 3)

    # small, forward-consistent shapes: 16x16 images, 4 hidden dims -> multiplier 1
    B, C, S = 2, 3, 16
    latent_dim = 16
    hidden_dims = [8, 16, 32, 64]

    model = VanillaVAEPallas(S, C, latent_dim, hidden_dims, k_param)

    x = jax.random.normal(k_x, (B, C, S, S), jnp.float32)
    noise = jax.random.normal(k_noise, (B, latent_dim), jnp.float32)

    fwd = jax.jit(model.forward)
    recon, mu, logvar = fwd(x, noise)
    jax.block_until_ready((recon, mu, logvar))

    assert recon.shape == (B, C, S, S), recon.shape
    assert mu.shape == (B, latent_dim), mu.shape
    assert logvar.shape == (B, latent_dim), logvar.shape
    assert bool(jnp.all(jnp.isfinite(recon)))
    assert bool(jnp.all(jnp.isfinite(mu))) and bool(jnp.all(jnp.isfinite(logvar)))

    print("KERNEL_OK")
</pallas_src>

<mosaic_0001>
module attributes {stable_mosaic.version = 11 : i64} {
  func.func @_probe_kernel(%arg0: i32, %arg1: memref<8x128xf32, #tpu.memory_space<vmem>>, %arg2: memref<8x128xf32, #tpu.memory_space<vmem>>) attributes {dimension_semantics = [#tpu.dimension_semantics<arbitrary>], iteration_bounds = array<i64: 2>, scalar_prefetch = 0 : i64, scratch_operands = 0 : i64, tpu.core_type = #tpu.core_type<tc>, window_params = [{pipeline_mode = #tpu.pipeline_mode<synchronous>, transform_indices = @transform_0, window_bounds = array<i64: 8, 128>}, {transform_indices = @transform_1, window_bounds = array<i64: 8, 128>}]} {
    %c0 = arith.constant 0 : index
    %c0_0 = arith.constant 0 : index
    %0 = vector.load %arg1[%c0, %c0_0] : memref<8x128xf32, #tpu.memory_space<vmem>>, vector<8x128xf32>
    %c0_1 = arith.constant 0 : index
    %c0_2 = arith.constant 0 : index
    %1 = vector.load %arg2[%c0_1, %c0_2] : memref<8x128xf32, #tpu.memory_space<vmem>>, vector<8x128xf32>
    tpu.vector_store %arg2[%c0_1, %c0_2], %0 {strides = array<i32>} : memref<8x128xf32, #tpu.memory_space<vmem>>, vector<8x128xf32>,
    return
  }
  func.func @transform_0(%arg0: i32) -> (i32, i32) {
    %c0_i32 = arith.constant 0 : i32
    %c0_i32_0 = arith.constant 0 : i32
    %c0_i32_1 = arith.constant 0 : i32
    return %c0_i32, %c0_i32_0 : i32, i32
  }
  func.func @transform_1(%arg0: i32) -> (i32, i32) {
    %c0_i32 = arith.constant 0 : i32
    %c0_i32_0 = arith.constant 0 : i32
    return %arg0, %c0_i32 : i32, i32
  }
}

module attributes {stable_mosaic.version = 11 : i64} {
  func.func @_mm_bias_stats_kernel(%arg0: i32, %arg1: memref<64x27xbf16, #tpu.memory_space<vmem>>, %arg2: memref<27x8xbf16, #tpu.memory_space<vmem>>, %arg3: memref<1x8xf32, #tpu.memory_space<vmem>>, %arg4: memref<64x8xbf16, #tpu.memory_space<vmem>>, %arg5: memref<1x2x8xf32, #tpu.memory_space<vmem>>) attributes {dimension_semantics = [#tpu.dimension_semantics<parallel>], iteration_bounds = array<i64: 2>, scalar_prefetch = 0 : i64, scratch_operands = 0 : i64, tpu.core_type = #tpu.core_type<tc>, window_params = [{transform_indices = @transform_0, window_bounds = array<i64: 64, 27>}, {pipeline_mode = #tpu.pipeline_mode<synchronous>, transform_indices = @transform_1, window_bounds = array<i64: 27, 8>}, {pipeline_mode = #tpu.pipeline_mode<synchronous>, transform_indices = @transform_2, window_bounds = array<i64: 1, 8>}, {transform_indices = @transform_3, window_bounds = array<i64: 64, 8>}, {transform_indices = @transform_4, window_bounds = array<i64: 1, 2, 8>}]} {
    %c0 = arith.constant 0 : index
    %c0_0 = arith.constant 0 : index
    %0 = vector.load %arg1[%c0, %c0_0] : memref<64x27xbf16, #tpu.memory_space<vmem>>, vector<64x27xbf16>
    %c0_1 = arith.constant 0 : index
    %c0_2 = arith.constant 0 : index
    %1 = vector.load %arg2[%c0_1, %c0_2] : memref<27x8xbf16, #tpu.memory_space<vmem>>, vector<27x8xbf16>
    %cst = arith.constant dense<0.000000e+00> : vector<64x8xf32>
    %2 = tpu.matmul %0, %1, %cst {dimension_numbers = #tpu.dot_dimension_numbers<[1], [0], [0], [1], [0, 0, 1, 1], [], []>} : vector<64x27xbf16>, vector<27x8xbf16>, vector<64x8xf32> -> vector<64x8xf32>
    %c0_3 = arith.constant 0 : index
    %c0_4 = arith.constant 0 : index
    %3 = vector.load %arg3[%c0_3, %c0_4] : memref<1x8xf32, #tpu.memory_space<vmem>>, vector<1x8xf32>
    %4 = vector.broadcast %3 : vector<1x8xf32> to vector<64x8xf32>
    %5 = arith.addf %2, %4 : vector<64x8xf32>
    %cst_5 = arith.constant dense<0.000000e+00> : vector<8xf32>
    %6 = vector.multi_reduction <add>, %5, %cst_5 [0] : vector<64x8xf32> to vector<8xf32>
    %7 = vector.shape_cast %6 : vector<8xf32> to vector<1x8xf32>
    %cst_6 = arith.constant 1.562500e-02 : f32
    %8 = vector.broadcast %cst_6 : f32 to vector<1x8xf32>
    %9 = arith.mulf %7, %8 : vector<1x8xf32>
    %10 = vector.broadcast %9 : vector<1x8xf32> to vector<64x8xf32>
    %11 = arith.subf %5, %10 : vector<64x8xf32>
    %12 = arith.mulf %11, %11 : vector<64x8xf32>
    %cst_7 = arith.constant dense<0.000000e+00> : vector<8xf32>
    %13 = vector.multi_reduction <add>, %12, %cst_7 [0] : vector<64x8xf32> to vector<8xf32>
    %14 = vector.shape_cast %13 : vector<8xf32> to vector<1x8xf32>
    %15 = tpu.concatenate %7, %14 in 0 : vector<1x8xf32>, vector<1x8xf32> -> vector<2x8xf32>
    %16 = vector.shape_cast %15 : vector<2x8xf32> to vector<1x2x8xf32>
    %c0_8 = arith.constant 0 : index
    %c0_9 = arith.constant 0 : index
    %c0_10 = arith.constant 0 : index
    %17 = vector.load %arg5[%c0_8, %c0_9, %c0_10] : memref<1x2x8xf32, #tpu.memory_space<vmem>>, vector<1x2x8xf32>
    tpu.vector_store %arg5[%c0_8, %c0_9, %c0_10], %16 {strides = array<i32>} : memref<1x2x8xf32, #tpu.memory_space<vmem>>, vector<1x2x8xf32>,
    %18 = arith.truncf %5 : vector<64x8xf32> to vector<64x8xbf16>
    %c0_11 = arith.constant 0 : index
    %c0_12 = arith.constant 0 : index
    %19 = vector.load %arg4[%c0_11, %c0_12] : memref<64x8xbf16, #tpu.memory_space<vmem>>, vector<64x8xbf16>
    tpu.vector_store %arg4[%c0_11, %c0_12], %18 {strides = array<i32>} : memref<64x8xbf16, #tpu.memory_space<vmem>>, vector<64x8xbf16>,
    return
  }
  func.func @transform_0(%arg0: i32) -> (i32, i32) {
    %c0_i32 = arith.constant 0 : i32
    %c0_i32_0 = arith.constant 0 : i32
    return %arg0, %c0_i32 : i32, i32
  }
  func.func @transform_1(%arg0: i32) -> (i32, i32) {
    %c0_i32 = arith.constant 0 : i32
    %c0_i32_0 = arith.constant 0 : i32
    %c0_i32_1 = arith.constant 0 : i32
    return %c0_i32, %c0_i32_0 : i32, i32
  }
  func.func @transform_2(%arg0: i32) -> (i32, i32) {
    %c0_i32 = arith.constant 0 : i32
    %c0_i32_0 = arith.constant 0 : i32
    %c0_i32_1 = arith.constant 0 : i32
    return %c0_i32, %c0_i32_0 : i32, i32
  }
  func.func @transform_3(%arg0: i32) -> (i32, i32) {
    %c0_i32 = arith.constant 0 : i32
    %c0_i32_0 = arith.constant 0 : i32
    return %arg0, %c0_i32 : i32, i32
  }
  func.func @transform_4(%arg0: i32) -> (i32, i32, i32) {
    %c0_i32 = arith.constant 0 : i32
    %c0_i32_0 = arith.constant 0 : i32
    %c0_i32_1 = arith.constant 0 : i32
    return %arg0, %c0_i32, %c0_i32_0 : i32, i32, i32
  }
}

module attributes {stable_mosaic.version = 11 : i64} {
  func.func @_scale_shift_lrelu_kernel(%arg0: i32, %arg1: memref<64x8xbf16, #tpu.memory_space<vmem>>, %arg2: memref<1x8xf32, #tpu.memory_space<vmem>>, %arg3: memref<1x8xf32, #tpu.memory_space<vmem>>, %arg4: memref<64x8xbf16, #tpu.memory_space<vmem>>) attributes {dimension_semantics = [#tpu.dimension_semantics<parallel>], iteration_bounds = array<i64: 2>, scalar_prefetch = 0 : i64, scratch_operands = 0 : i64, tpu.core_type = #tpu.core_type<tc>, window_params = [{transform_indices = @transform_0, window_bounds = array<i64: 64, 8>}, {pipeline_mode = #tpu.pipeline_mode<synchronous>, transform_indices = @transform_1, window_bounds = array<i64: 1, 8>}, {pipeline_mode = #tpu.pipeline_mode<synchronous>, transform_indices = @transform_2, window_bounds = array<i64: 1, 8>}, {transform_indices = @transform_3, window_bounds = array<i64: 64, 8>}]} {
    %c0 = arith.constant 0 : index
    %c0_0 = arith.constant 0 : index
    %0 = vector.load %arg1[%c0, %c0_0] : memref<64x8xbf16, #tpu.memory_space<vmem>>, vector<64x8xbf16>
    %1 = arith.extf %0 : vector<64x8xbf16> to vector<64x8xf32>
    %c0_1 = arith.constant 0 : index
    %c0_2 = arith.constant 0 : index
    %2 = vector.load %arg2[%c0_1, %c0_2] : memref<1x8xf32, #tpu.memory_space<vmem>>, vector<1x8xf32>
    %3 = vector.broadcast %2 : vector<1x8xf32> to vector<64x8xf32>
    %4 = arith.mulf %1, %3 : vector<64x8xf32>
    %c0_3 = arith.constant 0 : index
    %c0_4 = arith.constant 0 : index
    %5 = vector.load %arg3[%c0_3, %c0_4] : memref<1x8xf32, #tpu.memory_space<vmem>>, vector<1x8xf32>
    %6 = vector.broadcast %5 : vector<1x8xf32> to vector<64x8xf32>
    %7 = arith.addf %4, %6 : vector<64x8xf32>
    %cst = arith.constant 0.000000e+00 : f32
    %8 = vector.broadcast %cst : f32 to vector<64x8xf32>
    %9 = arith.cmpf oge, %7, %8 : vector<64x8xf32>
    %cst_5 = arith.constant 0.00999999977 : f32
    %10 = vector.broadcast %cst_5 : f32 to vector<64x8xf32>
    %11 = arith.mulf %10, %7 : vector<64x8xf32>
    %12 = arith.select %9, %7, %11 : vector<64x8xi1>, vector<64x8xf32>
    %13 = arith.truncf %12 : vector<64x8xf32> to vector<64x8xbf16>
    %c0_6 = arith.constant 0 : index
    %c0_7 = arith.constant 0 : index
    %14 = vector.load %arg4[%c0_6, %c0_7] : memref<64x8xbf16, #tpu.memory_space<vmem>>, vector<64x8xbf16>
    tpu.vector_store %arg4[%c0_6, %c0_7], %13 {strides = array<i32>} : memref<64x8xbf16, #tpu.memory_space<vmem>>, vector<64x8xbf16>,
    return
  }
  func.func @transform_0(%arg0: i32) -> (i32, i32) {
    %c0_i32 = arith.constant 0 : i32
    %c0_i32_0 = arith.constant 0 : i32
    return %arg0, %c0_i32 : i32, i32
  }
  func.func @transform_1(%arg0: i32) -> (i32, i32) {
    %c0_i32 = arith.constant 0 : i32
    %c0_i32_0 = arith.constant 0 : i32
    %c0_i32_1 = arith.constant 0 : i32
    return %c0_i32, %c0_i32_0 : i32, i32
  }
  func.func @transform_2(%arg0: i32) -> (i32, i32) {
    %c0_i32 = arith.constant 0 : i32
    %c0_i32_0 = arith.constant 0 : i32
    %c0_i32_1 = arith.constant 0 : i32
    return %c0_i32, %c0_i32_0 : i32, i32
  }
  func.func @transform_3(%arg0: i32) -> (i32, i32) {
    %c0_i32 = arith.constant 0 : i32
    %c0_i32_0 = arith.constant 0 : i32
    return %arg0, %c0_i32 : i32, i32
  }
}

module attributes {stable_mosaic.version = 11 : i64} {
  func.func @_mm_bias_stats_kernel(%arg0: i32, %arg1: memref<16x72xbf16, #tpu.memory_space<vmem>>, %arg2: memref<72x16xbf16, #tpu.memory_space<vmem>>, %arg3: memref<1x16xf32, #tpu.memory_space<vmem>>, %arg4: memref<16x16xbf16, #tpu.memory_space<vmem>>, %arg5: memref<1x2x16xf32, #tpu.memory_space<vmem>>) attributes {dimension_semantics = [#tpu.dimension_semantics<parallel>], iteration_bounds = array<i64: 2>, scalar_prefetch = 0 : i64, scratch_operands = 0 : i64, tpu.core_type = #tpu.core_type<tc>, window_params = [{transform_indices = @transform_0, window_bounds = array<i64: 16, 72>}, {pipeline_mode = #tpu.pipeline_mode<synchronous>, transform_indices = @transform_1, window_bounds = array<i64: 72, 16>}, {pipeline_mode = #tpu.pipeline_mode<synchronous>, transform_indices = @transform_2, window_bounds = array<i64: 1, 16>}, {transform_indices = @transform_3, window_bounds = array<i64: 16, 16>}, {transform_indices = @transform_4, window_bounds = array<i64: 1, 2, 16>}]} {
    %c0 = arith.constant 0 : index
    %c0_0 = arith.constant 0 : index
    %0 = vector.load %arg1[%c0, %c0_0] : memref<16x72xbf16, #tpu.memory_space<vmem>>, vector<16x72xbf16>
    %c0_1 = arith.constant 0 : index
    %c0_2 = arith.constant 0 : index
    %1 = vector.load %arg2[%c0_1, %c0_2] : memref<72x16xbf16, #tpu.memory_space<vmem>>, vector<72x16xbf16>
    %cst = arith.constant dense<0.000000e+00> : vector<16x16xf32>
    %2 = tpu.matmul %0, %1, %cst {dimension_numbers = #tpu.dot_dimension_numbers<[1], [0], [0], [1], [0, 0, 1, 1], [], []>} : vector<16x72xbf16>, vector<72x16xbf16>, vector<16x16xf32> -> vector<16x16xf32>
    %c0_3 = arith.constant 0 : index
    %c0_4 = arith.constant 0 : index
    %3 = vector.load %arg3[%c0_3, %c0_4] : memref<1x16xf32, #tpu.memory_space<vmem>>, vector<1x16xf32>
    %4 = vector.broadcast %3 : vector<1x16xf32> to vector<16x16xf32>
    %5 = arith.addf %2, %4 : vector<16x16xf32>
    %cst_5 = arith.constant dense<0.000000e+00> : vector<16xf32>
    %6 = vector.multi_reduction <add>, %5, %cst_5 [0] : vector<16x16xf32> to vector<16xf32>
    %7 = vector.shape_cast %6 : vector<16xf32> to vector<1x16xf32>
    %cst_6 = arith.constant 6.250000e-02 : f32
    %8 = vector.broadcast %cst_6 : f32 to vector<1x16xf32>
    %9 = arith.mulf %7, %8 : vector<1x16xf32>
    %10 = vector.broadcast %9 : vector<1x16xf32> to vector<16x16xf32>
    %11 = arith.subf %5, %10 : vector<16x16xf32>
    %12 = arith.mulf %11, %11 : vector<16x16xf32>
    %cst_7 = arith.constant dense<0.000000e+00> : vector<16xf32>
    %13 = vector.multi_reduction <add>, %12, %cst_7 [0] : vector<16x16xf32> to vector<16xf32>
    %14 = vector.shape_cast %13 : vector<16xf32> to vector<1x16xf32>
    %15 = tpu.concatenate %7, %14 in 0 : vector<1x16xf32>, vector<1x16xf32> -> vector<2x16xf32>
    %16 = vector.shape_cast %15 : vector<2x16xf32> to vector<1x2x16xf32>
    %c0_8 = arith.constant 0 : index
    %c0_9 = arith.constant 0 : index
    %c0_10 = arith.constant 0 : index
    %17 = vector.load %arg5[%c0_8, %c0_9, %c0_10] : memref<1x2x16xf32, #tpu.memory_space<vmem>>, vector<1x2x16xf32>
    tpu.vector_store %arg5[%c0_8, %c0_9, %c0_10], %16 {strides = array<i32>} : memref<1x2x16xf32, #tpu.memory_space<vmem>>, vector<1x2x16xf32>,
    %18 = arith.truncf %5 : vector<16x16xf32> to vector<16x16xbf16>
    %c0_11 = arith.constant 0 : index
    %c0_12 = arith.constant 0 : index
    %19 = vector.load %arg4[%c0_11, %c0_12] : memref<16x16xbf16, #tpu.memory_space<vmem>>, vector<16x16xbf16>
    tpu.vector_store %arg4[%c0_11, %c0_12], %18 {strides = array<i32>} : memref<16x16xbf16, #tpu.memory_space<vmem>>, vector<16x16xbf16>,
    return
  }
  func.func @transform_0(%arg0: i32) -> (i32, i32) {
    %c0_i32 = arith.constant 0 : i32
    %c0_i32_0 = arith.constant 0 : i32
    return %arg0, %c0_i32 : i32, i32
  }
  func.func @transform_1(%arg0: i32) -> (i32, i32) {
    %c0_i32 = arith.constant 0 : i32
    %c0_i32_0 = arith.constant 0 : i32
    %c0_i32_1 = arith.constant 0 : i32
    return %c0_i32, %c0_i32_0 : i32, i32
  }
  func.func @transform_2(%arg0: i32) -> (i32, i32) {
    %c0_i32 = arith.constant 0 : i32
    %c0_i32_0 = arith.constant 0 : i32
    %c0_i32_1 = arith.constant 0 : i32
    return %c0_i32, %c0_i32_0 : i32, i32
  }
  func.func @transform_3(%arg0: i32) -> (i32, i32) {
    %c0_i32 = arith.constant 0 : i32
    %c0_i32_0 = arith.constant 0 : i32
    return %arg0, %c0_i32 : i32, i32
  }
  func.func @transform_4(%arg0: i32) -> (i32, i32, i32) {
    %c0_i32 = arith.constant 0 : i32
    %c0_i32_0 = arith.constant 0 : i32
    %c0_i32_1 = arith.constant 0 : i32
    return %arg0, %c0_i32, %c0_i32_0 : i32, i32, i32
  }
}

module attributes {stable_mosaic.version = 11 : i64} {
  func.func @_scale_shift_lrelu_kernel(%arg0: i32, %arg1: memref<16x16xbf16, #tpu.memory_space<vmem>>, %arg2: memref<1x16xf32, #tpu.memory_space<vmem>>, %arg3: memref<1x16xf32, #tpu.memory_space<vmem>>, %arg4: memref<16x16xbf16, #tpu.memory_space<vmem>>) attributes {dimension_semantics = [#tpu.dimension_semantics<parallel>], iteration_bounds = array<i64: 2>, scalar_prefetch = 0 : i64, scratch_operands = 0 : i64, tpu.core_type = #tpu.core_type<tc>, window_params = [{transform_indices = @transform_0, window_bounds = array<i64: 16, 16>}, {pipeline_mode = #tpu.pipeline_mode<synchronous>, transform_indices = @transform_1, window_bounds = array<i64: 1, 16>}, {pipeline_mode = #tpu.pipeline_mode<synchronous>, transform_indices = @transform_2, window_bounds = array<i64: 1, 16>}, {transform_indices = @transform_3, window_bounds = array<i64: 16, 16>}]} {
    %c0 = arith.constant 0 : index
    %c0_0 = arith.constant 0 : index
    %0 = vector.load %arg1[%c0, %c0_0] : memref<16x16xbf16, #tpu.memory_space<vmem>>, vector<16x16xbf16>
    %1 = arith.extf %0 : vector<16x16xbf16> to vector<16x16xf32>
    %c0_1 = arith.constant 0 : index
    %c0_2 = arith.constant 0 : index
    %2 = vector.load %arg2[%c0_1, %c0_2] : memref<1x16xf32, #tpu.memory_space<vmem>>, vector<1x16xf32>
    %3 = vector.broadcast %2 : vector<1x16xf32> to vector<16x16xf32>
    %4 = arith.mulf %1, %3 : vector<16x16xf32>
    %c0_3 = arith.constant 0 : index
    %c0_4 = arith.constant 0 : index
    %5 = vector.load %arg3[%c0_3, %c0_4] : memref<1x16xf32, #tpu.memory_space<vmem>>, vector<1x16xf32>
    %6 = vector.broadcast %5 : vector<1x16xf32> to vector<16x16xf32>
    %7 = arith.addf %4, %6 : vector<16x16xf32>
    %cst = arith.constant 0.000000e+00 : f32
    %8 = vector.broadcast %cst : f32 to vector<16x16xf32>
    %9 = arith.cmpf oge, %7, %8 : vector<16x16xf32>
    %cst_5 = arith.constant 0.00999999977 : f32
    %10 = vector.broadcast %cst_5 : f32 to vector<16x16xf32>
    %11 = arith.mulf %10, %7 : vector<16x16xf32>
    %12 = arith.select %9, %7, %11 : vector<16x16xi1>, vector<16x16xf32>
    %13 = arith.truncf %12 : vector<16x16xf32> to vector<16x16xbf16>
    %c0_6 = arith.constant 0 : index
    %c0_7 = arith.constant 0 : index
    %14 = vector.load %arg4[%c0_6, %c0_7] : memref<16x16xbf16, #tpu.memory_space<vmem>>, vector<16x16xbf16>
    tpu.vector_store %arg4[%c0_6, %c0_7], %13 {strides = array<i32>} : memref<16x16xbf16, #tpu.memory_space<vmem>>, vector<16x16xbf16>,
    return
  }
  func.func @transform_0(%arg0: i32) -> (i32, i32) {
    %c0_i32 = arith.constant 0 : i32
    %c0_i32_0 = arith.constant 0 : i32
    return %arg0, %c0_i32 : i32, i32
  }
  func.func @transform_1(%arg0: i32) -> (i32, i32) {
    %c0_i32 = arith.constant 0 : i32
    %c0_i32_0 = arith.constant 0 : i32
    %c0_i32_1 = arith.constant 0 : i32
    return %c0_i32, %c0_i32_0 : i32, i32
  }
  func.func @transform_2(%arg0: i32) -> (i32, i32) {
    %c0_i32 = arith.constant 0 : i32
    %c0_i32_0 = arith.constant 0 : i32
    %c0_i32_1 = arith.constant 0 : i32
    return %c0_i32, %c0_i32_0 : i32, i32
  }
  func.func @transform_3(%arg0: i32) -> (i32, i32) {
    %c0_i32 = arith.constant 0 : i32
    %c0_i32_0 = arith.constant 0 : i32
    return %arg0, %c0_i32 : i32, i32
  }
}

module attributes {stable_mosaic.version = 11 : i64} {
  func.func @_mm_bias_stats_kernel(%arg0: i32, %arg1: memref<8x144xbf16, #tpu.memory_space<vmem>>, %arg2: memref<144x32xbf16, #tpu.memory_space<vmem>>, %arg3: memref<1x32xf32, #tpu.memory_space<vmem>>, %arg4: memref<8x32xbf16, #tpu.memory_space<vmem>>, %arg5: memref<1x2x32xf32, #tpu.memory_space<vmem>>) attributes {dimension_semantics = [#tpu.dimension_semantics<parallel>], iteration_bounds = array<i64: 1>, scalar_prefetch = 0 : i64, scratch_operands = 0 : i64, tpu.core_type = #tpu.core_type<tc>, window_params = [{transform_indices = @transform_0, window_bounds = array<i64: 8, 144>}, {pipeline_mode = #tpu.pipeline_mode<synchronous>, transform_indices = @transform_1, window_bounds = array<i64: 144, 32>}, {pipeline_mode = #tpu.pipeline_mode<synchronous>, transform_indices = @transform_2, window_bounds = array<i64: 1, 32>}, {transform_indices = @transform_3, window_bounds = array<i64: 8, 32>}, {transform_indices = @transform_4, window_bounds = array<i64: 1, 2, 32>}]} {
    %c0 = arith.constant 0 : index
    %c0_0 = arith.constant 0 : index
    %0 = vector.load %arg1[%c0, %c0_0] : memref<8x144xbf16, #tpu.memory_space<vmem>>, vector<8x144xbf16>
    %c0_1 = arith.constant 0 : index
    %c0_2 = arith.constant 0 : index
    %1 = vector.load %arg2[%c0_1, %c0_2] : memref<144x32xbf16, #tpu.memory_space<vmem>>, vector<144x32xbf16>
    %cst = arith.constant dense<0.000000e+00> : vector<8x32xf32>
    %2 = tpu.matmul %0, %1, %cst {dimension_numbers = #tpu.dot_dimension_numbers<[1], [0], [0], [1], [0, 0, 1, 1], [], []>} : vector<8x144xbf16>, vector<144x32xbf16>, vector<8x32xf32> -> vector<8x32xf32>
    %c0_3 = arith.constant 0 : index
    %c0_4 = arith.constant 0 : index
    %3 = vector.load %arg3[%c0_3, %c0_4] : memref<1x32xf32, #tpu.memory_space<vmem>>, vector<1x32xf32>
    %4 = vector.broadcast %3 : vector<1x32xf32> to vector<8x32xf32>
    %5 = arith.addf %2, %4 : vector<8x32xf32>
    %cst_5 = arith.constant dense<0.000000e+00> : vector<32xf32>
    %6 = vector.multi_reduction <add>, %5, %cst_5 [0] : vector<8x32xf32> to vector<32xf32>
    %7 = vector.shape_cast %6 : vector<32xf32> to vector<1x32xf32>
    %cst_6 = arith.constant 1.250000e-01 : f32
    %8 = vector.broadcast %cst_6 : f32 to vector<1x32xf32>
    %9 = arith.mulf %7, %8 : vector<1x32xf32>
    %10 = vector.broadcast %9 : vector<1x32xf32> to vector<8x32xf32>
    %11 = arith.subf %5, %10 : vector<8x32xf32>
    %12 = arith.mulf %11, %11 : vector<8x32xf32>
    %cst_7 = arith.constant dense<0.000000e+00> : vector<32xf32>
    %13 = vector.multi_reduction <add>, %12, %cst_7 [0] : vector<8x32xf32> to vector<32xf32>
    %14 = vector.shape_cast %13 : vector<32xf32> to vector<1x32xf32>
    %15 = tpu.concatenate %7, %14 in 0 : vector<1x32xf32>, vector<1x32xf32> -> vector<2x32xf32>
    %16 = vector.shape_cast %15 : vector<2x32xf32> to vector<1x2x32xf32>
    %c0_8 = arith.constant 0 : index
    %c0_9 = arith.constant 0 : index
    %c0_10 = arith.constant 0 : index
    %17 = vector.load %arg5[%c0_8, %c0_9, %c0_10] : memref<1x2x32xf32, #tpu.memory_space<vmem>>, vector<1x2x32xf32>
    tpu.vector_store %arg5[%c0_8, %c0_9, %c0_10], %16 {strides = array<i32>} : memref<1x2x32xf32, #tpu.memory_space<vmem>>, vector<1x2x32xf32>,
    %18 = arith.truncf %5 : vector<8x32xf32> to vector<8x32xbf16>
    %c0_11 = arith.constant 0 : index
    %c0_12 = arith.constant 0 : index
    %19 = vector.load %arg4[%c0_11, %c0_12] : memref<8x32xbf16, #tpu.memory_space<vmem>>, vector<8x32xbf16>
    tpu.vector_store %arg4[%c0_11, %c0_12], %18 {strides = array<i32>} : memref<8x32xbf16, #tpu.memory_space<vmem>>, vector<8x32xbf16>,
    return
  }
  func.func @transform_0(%arg0: i32) -> (i32, i32) {
    %c0_i32 = arith.constant 0 : i32
    %c0_i32_0 = arith.constant 0 : i32
    return %arg0, %c0_i32 : i32, i32
  }
  func.func @transform_1(%arg0: i32) -> (i32, i32) {
    %c0_i32 = arith.constant 0 : i32
    %c0_i32_0 = arith.constant 0 : i32
    %c0_i32_1 = arith.constant 0 : i32
    return %c0_i32, %c0_i32_0 : i32, i32
  }
  func.func @transform_2(%arg0: i32) -> (i32, i32) {
    %c0_i32 = arith.constant 0 : i32
    %c0_i32_0 = arith.constant 0 : i32
    %c0_i32_1 = arith.constant 0 : i32
    return %c0_i32, %c0_i32_0 : i32, i32
  }
  func.func @transform_3(%arg0: i32) -> (i32, i32) {
    %c0_i32 = arith.constant 0 : i32
    %c0_i32_0 = arith.constant 0 : i32
    return %arg0, %c0_i32 : i32, i32
  }
  func.func @transform_4(%arg0: i32) -> (i32, i32, i32) {
    %c0_i32 = arith.constant 0 : i32
    %c0_i32_0 = arith.constant 0 : i32
    %c0_i32_1 = arith.constant 0 : i32
    return %arg0, %c0_i32, %c0_i32_0 : i32, i32, i32
  }
}

module attributes {stable_mosaic.version = 11 : i64} {
  func.func @_scale_shift_lrelu_kernel(%arg0: i32, %arg1: memref<8x32xbf16, #tpu.memory_space<vmem>>, %arg2: memref<1x32xf32, #tpu.memory_space<vmem>>, %arg3: memref<1x32xf32, #tpu.memory_space<vmem>>, %arg4: memref<8x32xbf16, #tpu.memory_space<vmem>>) attributes {dimension_semantics = [#tpu.dimension_semantics<parallel>], iteration_bounds = array<i64: 1>, scalar_prefetch = 0 : i64, scratch_operands = 0 : i64, tpu.core_type = #tpu.core_type<tc>, window_params = [{transform_indices = @transform_0, window_bounds = array<i64: 8, 32>}, {pipeline_mode = #tpu.pipeline_mode<synchronous>, transform_indices = @transform_1, window_bounds = array<i64: 1, 32>}, {pipeline_mode = #tpu.pipeline_mode<synchronous>, transform_indices = @transform_2, window_bounds = array<i64: 1, 32>}, {transform_indices = @transform_3, window_bounds = array<i64: 8, 32>}]} {
    %c0 = arith.constant 0 : index
    %c0_0 = arith.constant 0 : index
    %0 = vector.load %arg1[%c0, %c0_0] : memref<8x32xbf16, #tpu.memory_space<vmem>>, vector<8x32xbf16>
    %1 = arith.extf %0 : vector<8x32xbf16> to vector<8x32xf32>
    %c0_1 = arith.constant 0 : index
    %c0_2 = arith.constant 0 : index
    %2 = vector.load %arg2[%c0_1, %c0_2] : memref<1x32xf32, #tpu.memory_space<vmem>>, vector<1x32xf32>
    %3 = vector.broadcast %2 : vector<1x32xf32> to vector<8x32xf32>
    %4 = arith.mulf %1, %3 : vector<8x32xf32>
    %c0_3 = arith.constant 0 : index
    %c0_4 = arith.constant 0 : index
    %5 = vector.load %arg3[%c0_3, %c0_4] : memref<1x32xf32, #tpu.memory_space<vmem>>, vector<1x32xf32>
    %6 = vector.broadcast %5 : vector<1x32xf32> to vector<8x32xf32>
    %7 = arith.addf %4, %6 : vector<8x32xf32>
    %cst = arith.constant 0.000000e+00 : f32
    %8 = vector.broadcast %cst : f32 to vector<8x32xf32>
    %9 = arith.cmpf oge, %7, %8 : vector<8x32xf32>
    %cst_5 = arith.constant 0.00999999977 : f32
    %10 = vector.broadcast %cst_5 : f32 to vector<8x32xf32>
    %11 = arith.mulf %10, %7 : vector<8x32xf32>
    %12 = arith.select %9, %7, %11 : vector<8x32xi1>, vector<8x32xf32>
    %13 = arith.truncf %12 : vector<8x32xf32> to vector<8x32xbf16>
    %c0_6 = arith.constant 0 : index
    %c0_7 = arith.constant 0 : index
    %14 = vector.load %arg4[%c0_6, %c0_7] : memref<8x32xbf16, #tpu.memory_space<vmem>>, vector<8x32xbf16>
    tpu.vector_store %arg4[%c0_6, %c0_7], %13 {strides = array<i32>} : memref<8x32xbf16, #tpu.memory_space<vmem>>, vector<8x32xbf16>,
    return
  }
  func.func @transform_0(%arg0: i32) -> (i32, i32) {
    %c0_i32 = arith.constant 0 : i32
    %c0_i32_0 = arith.constant 0 : i32
    return %arg0, %c0_i32 : i32, i32
  }
  func.func @transform_1(%arg0: i32) -> (i32, i32) {
    %c0_i32 = arith.constant 0 : i32
    %c0_i32_0 = arith.constant 0 : i32
    %c0_i32_1 = arith.constant 0 : i32
    return %c0_i32, %c0_i32_0 : i32, i32
  }
  func.func @transform_2(%arg0: i32) -> (i32, i32) {
    %c0_i32 = arith.constant 0 : i32
    %c0_i32_0 = arith.constant 0 : i32
    %c0_i32_1 = arith.constant 0 : i32
    return %c0_i32, %c0_i32_0 : i32, i32
  }
  func.func @transform_3(%arg0: i32) -> (i32, i32) {
    %c0_i32 = arith.constant 0 : i32
    %c0_i32_0 = arith.constant 0 : i32
    return %arg0, %c0_i32 : i32, i32
  }
}

module attributes {stable_mosaic.version = 11 : i64} {
  func.func @_mm_bias_stats_kernel(%arg0: i32, %arg1: memref<2x288xbf16, #tpu.memory_space<vmem>>, %arg2: memref<288x64xbf16, #tpu.memory_space<vmem>>, %arg3: memref<1x64xf32, #tpu.memory_space<vmem>>, %arg4: memref<2x64xbf16, #tpu.memory_space<vmem>>, %arg5: memref<1x2x64xf32, #tpu.memory_space<vmem>>) attributes {dimension_semantics = [#tpu.dimension_semantics<parallel>], iteration_bounds = array<i64: 1>, scalar_prefetch = 0 : i64, scratch_operands = 0 : i64, tpu.core_type = #tpu.core_type<tc>, window_params = [{transform_indices = @transform_0, window_bounds = array<i64: 2, 288>}, {pipeline_mode = #tpu.pipeline_mode<synchronous>, transform_indices = @transform_1, window_bounds = array<i64: 288, 64>}, {pipeline_mode = #tpu.pipeline_mode<synchronous>, transform_indices = @transform_2, window_bounds = array<i64: 1, 64>}, {transform_indices = @transform_3, window_bounds = array<i64: 2, 64>}, {transform_indices = @transform_4, window_bounds = array<i64: 1, 2, 64>}]} {
    %c0 = arith.constant 0 : index
    %c0_0 = arith.constant 0 : index
    %0 = vector.load %arg1[%c0, %c0_0] : memref<2x288xbf16, #tpu.memory_space<vmem>>, vector<2x288xbf16>
    %c0_1 = arith.constant 0 : index
    %c0_2 = arith.constant 0 : index
    %1 = vector.load %arg2[%c0_1, %c0_2] : memref<288x64xbf16, #tpu.memory_space<vmem>>, vector<288x64xbf16>
    %cst = arith.constant dense<0.000000e+00> : vector<2x64xf32>
    %2 = tpu.matmul %0, %1, %cst {dimension_numbers = #tpu.dot_dimension_numbers<[1], [0], [0], [1], [0, 0, 1, 1], [], []>} : vector<2x288xbf16>, vector<288x64xbf16>, vector<2x64xf32> -> vector<2x64xf32>
    %c0_3 = arith.constant 0 : index
    %c0_4 = arith.constant 0 : index
    %3 = vector.load %arg3[%c0_3, %c0_4] : memref<1x64xf32, #tpu.memory_space<vmem>>, vector<1x64xf32>
    %4 = vector.broadcast %3 : vector<1x64xf32> to vector<2x64xf32>
    %5 = arith.addf %2, %4 : vector<2x64xf32>
    %cst_5 = arith.constant dense<0.000000e+00> : vector<64xf32>
    %6 = vector.multi_reduction <add>, %5, %cst_5 [0] : vector<2x64xf32> to vector<64xf32>
    %7 = vector.shape_cast %6 : vector<64xf32> to vector<1x64xf32>
    %cst_6 = arith.constant 5.000000e-01 : f32
    %8 = vector.broadcast %cst_6 : f32 to vector<1x64xf32>
    %9 = arith.mulf %7, %8 : vector<1x64xf32>
    %10 = vector.broadcast %9 : vector<1x64xf32> to vector<2x64xf32>
    %11 = arith.subf %5, %10 : vector<2x64xf32>
    %12 = arith.mulf %11, %11 : vector<2x64xf32>
    %cst_7 = arith.constant dense<0.000000e+00> : vector<64xf32>
    %13 = vector.multi_reduction <add>, %12, %cst_7 [0] : vector<2x64xf32> to vector<64xf32>
    %14 = vector.shape_cast %13 : vector<64xf32> to vector<1x64xf32>
    %15 = tpu.concatenate %7, %14 in 0 : vector<1x64xf32>, vector<1x64xf32> -> vector<2x64xf32>
    %16 = vector.shape_cast %15 : vector<2x64xf32> to vector<1x2x64xf32>
    %c0_8 = arith.constant 0 : index
    %c0_9 = arith.constant 0 : index
    %c0_10 = arith.constant 0 : index
    %17 = vector.load %arg5[%c0_8, %c0_9, %c0_10] : memref<1x2x64xf32, #tpu.memory_space<vmem>>, vector<1x2x64xf32>
    tpu.vector_store %arg5[%c0_8, %c0_9, %c0_10], %16 {strides = array<i32>} : memref<1x2x64xf32, #tpu.memory_space<vmem>>, vector<1x2x64xf32>,
    %18 = arith.truncf %5 : vector<2x64xf32> to vector<2x64xbf16>
    %c0_11 = arith.constant 0 : index
    %c0_12 = arith.constant 0 : index
    %19 = vector.load %arg4[%c0_11, %c0_12] : memref<2x64xbf16, #tpu.memory_space<vmem>>, vector<2x64xbf16>
    tpu.vector_store %arg4[%c0_11, %c0_12], %18 {strides = array<i32>} : memref<2x64xbf16, #tpu.memory_space<vmem>>, vector<2x64xbf16>,
    return
  }
  func.func @transform_0(%arg0: i32) -> (i32, i32) {
    %c0_i32 = arith.constant 0 : i32
    %c0_i32_0 = arith.constant 0 : i32
    return %arg0, %c0_i32 : i32, i32
  }
  func.func @transform_1(%arg0: i32) -> (i32, i32) {
    %c0_i32 = arith.constant 0 : i32
    %c0_i32_0 = arith.constant 0 : i32
    %c0_i32_1 = arith.constant 0 : i32
    return %c0_i32, %c0_i32_0 : i32, i32
  }
  func.func @transform_2(%arg0: i32) -> (i32, i32) {
    %c0_i32 = arith.constant 0 : i32
    %c0_i32_0 = arith.constant 0 : i32
    %c0_i32_1 = arith.constant 0 : i32
    return %c0_i32, %c0_i32_0 : i32, i32
  }
  func.func @transform_3(%arg0: i32) -> (i32, i32) {
    %c0_i32 = arith.constant 0 : i32
    %c0_i32_0 = arith.constant 0 : i32
    return %arg0, %c0_i32 : i32, i32
  }
  func.func @transform_4(%arg0: i32) -> (i32, i32, i32) {
    %c0_i32 = arith.constant 0 : i32
    %c0_i32_0 = arith.constant 0 : i32
    %c0_i32_1 = arith.constant 0 : i32
    return %arg0, %c0_i32, %c0_i32_0 : i32, i32, i32
  }
}

module attributes {stable_mosaic.version = 11 : i64} {
  func.func @_scale_shift_lrelu_kernel(%arg0: i32, %arg1: memref<2x64xbf16, #tpu.memory_space<vmem>>, %arg2: memref<1x64xf32, #tpu.memory_space<vmem>>, %arg3: memref<1x64xf32, #tpu.memory_space<vmem>>, %arg4: memref<2x64xbf16, #tpu.memory_space<vmem>>) attributes {dimension_semantics = [#tpu.dimension_semantics<parallel>], iteration_bounds = array<i64: 1>, scalar_prefetch = 0 : i64, scratch_operands = 0 : i64, tpu.core_type = #tpu.core_type<tc>, window_params = [{transform_indices = @transform_0, window_bounds = array<i64: 2, 64>}, {pipeline_mode = #tpu.pipeline_mode<synchronous>, transform_indices = @transform_1, window_bounds = array<i64: 1, 64>}, {pipeline_mode = #tpu.pipeline_mode<synchronous>, transform_indices = @transform_2, window_bounds = array<i64: 1, 64>}, {transform_indices = @transform_3, window_bounds = array<i64: 2, 64>}]} {
    %c0 = arith.constant 0 : index
    %c0_0 = arith.constant 0 : index
    %0 = vector.load %arg1[%c0, %c0_0] : memref<2x64xbf16, #tpu.memory_space<vmem>>, vector<2x64xbf16>
    %1 = arith.extf %0 : vector<2x64xbf16> to vector<2x64xf32>
    %c0_1 = arith.constant 0 : index
    %c0_2 = arith.constant 0 : index
    %2 = vector.load %arg2[%c0_1, %c0_2] : memref<1x64xf32, #tpu.memory_space<vmem>>, vector<1x64xf32>
    %3 = vector.broadcast %2 : vector<1x64xf32> to vector<2x64xf32>
    %4 = arith.mulf %1, %3 : vector<2x64xf32>
    %c0_3 = arith.constant 0 : index
    %c0_4 = arith.constant 0 : index
    %5 = vector.load %arg3[%c0_3, %c0_4] : memref<1x64xf32, #tpu.memory_space<vmem>>, vector<1x64xf32>
    %6 = vector.broadcast %5 : vector<1x64xf32> to vector<2x64xf32>
    %7 = arith.addf %4, %6 : vector<2x64xf32>
    %cst = arith.constant 0.000000e+00 : f32
    %8 = vector.broadcast %cst : f32 to vector<2x64xf32>
    %9 = arith.cmpf oge, %7, %8 : vector<2x64xf32>
    %cst_5 = arith.constant 0.00999999977 : f32
    %10 = vector.broadcast %cst_5 : f32 to vector<2x64xf32>
    %11 = arith.mulf %10, %7 : vector<2x64xf32>
    %12 = arith.select %9, %7, %11 : vector<2x64xi1>, vector<2x64xf32>
    %13 = arith.truncf %12 : vector<2x64xf32> to vector<2x64xbf16>
    %c0_6 = arith.constant 0 : index
    %c0_7 = arith.constant 0 : index
    %14 = vector.load %arg4[%c0_6, %c0_7] : memref<2x64xbf16, #tpu.memory_space<vmem>>, vector<2x64xbf16>
    tpu.vector_store %arg4[%c0_6, %c0_7], %13 {strides = array<i32>} : memref<2x64xbf16, #tpu.memory_space<vmem>>, vector<2x64xbf16>,
    return
  }
  func.func @transform_0(%arg0: i32) -> (i32, i32) {
    %c0_i32 = arith.constant 0 : i32
    %c0_i32_0 = arith.constant 0 : i32
    return %arg0, %c0_i32 : i32, i32
  }
  func.func @transform_1(%arg0: i32) -> (i32, i32) {
    %c0_i32 = arith.constant 0 : i32
    %c0_i32_0 = arith.constant 0 : i32
    %c0_i32_1 = arith.constant 0 : i32
    return %c0_i32, %c0_i32_0 : i32, i32
  }
  func.func @transform_2(%arg0: i32) -> (i32, i32) {
    %c0_i32 = arith.constant 0 : i32
    %c0_i32_0 = arith.constant 0 : i32
    %c0_i32_1 = arith.constant 0 : i32
    return %c0_i32, %c0_i32_0 : i32, i32
  }
  func.func @transform_3(%arg0: i32) -> (i32, i32) {
    %c0_i32 = arith.constant 0 : i32
    %c0_i32_0 = arith.constant 0 : i32
    return %arg0, %c0_i32 : i32, i32
  }
}

module attributes {stable_mosaic.version = 11 : i64} {
  func.func @_head_kernel(%arg0: memref<2x64xbf16, #tpu.memory_space<vmem>>, %arg1: memref<64x32xbf16, #tpu.memory_space<vmem>>, %arg2: memref<1x32xf32, #tpu.memory_space<vmem>>, %arg3: memref<2x16xf32, #tpu.memory_space<vmem>>, %arg4: memref<16x64xbf16, #tpu.memory_space<vmem>>, %arg5: memref<1x64xf32, #tpu.memory_space<vmem>>, %arg6: memref<2x32xf32, #tpu.memory_space<vmem>>, %arg7: memref<2x64xbf16, #tpu.memory_space<vmem>>) attributes {dimension_semantics = [], scalar_prefetch = 0 : i64, scratch_operands = 0 : i64, tpu.core_type = #tpu.core_type<tc>} {
    %c0 = arith.constant 0 : index
    %c0_0 = arith.constant 0 : index
    %0 = vector.load %arg0[%c0, %c0_0] : memref<2x64xbf16, #tpu.memory_space<vmem>>, vector<2x64xbf16>
    %c0_1 = arith.constant 0 : index
    %c0_2 = arith.constant 0 : index
    %1 = vector.load %arg1[%c0_1, %c0_2] : memref<64x32xbf16, #tpu.memory_space<vmem>>, vector<64x32xbf16>
    %cst = arith.constant dense<0.000000e+00> : vector<2x32xf32>
    %2 = tpu.matmul %0, %1, %cst {dimension_numbers = #tpu.dot_dimension_numbers<[1], [0], [0], [1], [0, 0, 1, 1], [], []>} : vector<2x64xbf16>, vector<64x32xbf16>, vector<2x32xf32> -> vector<2x32xf32>
    %c0_3 = arith.constant 0 : index
    %c0_4 = arith.constant 0 : index
    %3 = vector.load %arg2[%c0_3, %c0_4] : memref<1x32xf32, #tpu.memory_space<vmem>>, vector<1x32xf32>
    %4 = vector.broadcast %3 : vector<1x32xf32> to vector<2x32xf32>
    %5 = arith.addf %2, %4 : vector<2x32xf32>
    %c0_5 = arith.constant 0 : index
    %c0_6 = arith.constant 0 : index
    %6 = vector.load %arg6[%c0_5, %c0_6] : memref<2x32xf32, #tpu.memory_space<vmem>>, vector<2x32xf32>
    tpu.vector_store %arg6[%c0_5, %c0_6], %5 {strides = array<i32>} : memref<2x32xf32, #tpu.memory_space<vmem>>, vector<2x32xf32>,
    %7 = vector.extract_strided_slice %5 {offsets = [0, 0], sizes = [2, 16], strides = [1, 1]} : vector<2x32xf32> to vector<2x16xf32>
    %8 = vector.extract_strided_slice %5 {offsets = [0, 16], sizes = [2, 16], strides = [1, 1]} : vector<2x32xf32> to vector<2x16xf32>
    %cst_7 = arith.constant 5.000000e-01 : f32
    %9 = vector.broadcast %cst_7 : f32 to vector<2x16xf32>
    %10 = arith.mulf %9, %8 : vector<2x16xf32>
    %11 = math.exp %10 : vector<2x16xf32>
    %c0_8 = arith.constant 0 : index
    %c0_9 = arith.constant 0 : index
    %12 = vector.load %arg3[%c0_8, %c0_9] : memref<2x16xf32, #tpu.memory_space<vmem>>, vector<2x16xf32>
    %13 = arith.mulf %11, %12 : vector<2x16xf32>
    %14 = arith.addf %7, %13 : vector<2x16xf32>
    %15 = arith.truncf %14 : vector<2x16xf32> to vector<2x16xbf16>
    %c0_10 = arith.constant 0 : index
    %c0_11 = arith.constant 0 : index
    %16 = vector.load %arg4[%c0_10, %c0_11] : memref<16x64xbf16, #tpu.memory_space<vmem>>, vector<16x64xbf16>
    %cst_12 = arith.constant dense<0.000000e+00> : vector<2x64xf32>
    %17 = tpu.matmul %15, %16, %cst_12 {dimension_numbers = #tpu.dot_dimension_numbers<[1], [0], [0], [1], [0, 0, 1, 1], [], []>} : vector<2x16xbf16>, vector<16x64xbf16>, vector<2x64xf32> -> vector<2x64xf32>
    %c0_13 = arith.constant 0 : index
    %c0_14 = arith.constant 0 : index
    %18 = vector.load %arg5[%c0_13, %c0_14] : memref<1x64xf32, #tpu.memory_space<vmem>>, vector<1x64xf32>
    %19 = vector.broadcast %18 : vector<1x64xf32> to vector<2x64xf32>
    %20 = arith.addf %17, %19 : vector<2x64xf32>
    %21 = arith.truncf %20 : vector<2x64xf32> to vector<2x64xbf16>
    %c0_15 = arith.constant 0 : index
    %c0_16 = arith.constant 0 : index
    %22 = vector.load %arg7[%c0_15, %c0_16] : memref<2x64xbf16, #tpu.memory_space<vmem>>, vector<2x64xbf16>
    tpu.vector_store %arg7[%c0_15, %c0_16], %21 {strides = array<i32>} : memref<2x64xbf16, #tpu.memory_space<vmem>>, vector<2x64xbf16>,
    return
  }
}

module attributes {stable_mosaic.version = 11 : i64} {
  func.func @_convt_phase_kernel(%arg0: i32, %arg1: memref<1x2x2x64xbf16, #tpu.memory_space<vmem>>, %arg2: memref<4x64x128xbf16, #tpu.memory_space<vmem>>, %arg3: memref<1x128xf32, #tpu.memory_space<vmem>>, %arg4: memref<1x1x2x1x64xbf16, #tpu.memory_space<vmem>>, %arg5: memref<1x2x128xf32, #tpu.memory_space<vmem>>) attributes {dimension_semantics = [#tpu.dimension_semantics<parallel>], iteration_bounds = array<i64: 2>, scalar_prefetch = 0 : i64, scratch_operands = 0 : i64, tpu.core_type = #tpu.core_type<tc>, window_params = [{transform_indices = @transform_0, window_bounds = array<i64: 1, 2, 2, 64>}, {pipeline_mode = #tpu.pipeline_mode<synchronous>, transform_indices = @transform_1, window_bounds = array<i64: 4, 64, 128>}, {pipeline_mode = #tpu.pipeline_mode<synchronous>, transform_indices = @transform_2, window_bounds = array<i64: 1, 128>}, {transform_indices = @transform_3, window_bounds = array<i64: 1, 1, 2, 1, 64>}, {transform_indices = @transform_4, window_bounds = array<i64: 1, 2, 128>}]} {
    %c0 = arith.constant 0 : index
    %c0_0 = arith.constant 0 : index
    %c0_1 = arith.constant 0 : index
    %c0_2 = arith.constant 0 : index
    %0 = vector.load %arg1[%c0, %c0_0, %c0_1, %c0_2] : memref<1x2x2x64xbf16, #tpu.memory_space<vmem>>, vector<1x2x2x64xbf16>
    %1 = vector.shape_cast %0 : vector<1x2x2x64xbf16> to vector<2x2x64xbf16>
    %2 = vector.extract_strided_slice %1 {offsets = [0, 0, 0], sizes = [1, 1, 64], strides = [1, 1, 1]} : vector<2x2x64xbf16> to vector<1x1x64xbf16>
    %3 = vector.shape_cast %2 : vector<1x1x64xbf16> to vector<1x64xbf16>
    %c0_3 = arith.constant 0 : index
    %c0_4 = arith.constant 0 : index
    %c0_5 = arith.constant 0 : index
    %4 = vector.load %arg2[%c0_3, %c0_4, %c0_5] : memref<4x64x128xbf16, #tpu.memory_space<vmem>>, vector<1x64x128xbf16>
    %5 = vector.shape_cast %4 : vector<1x64x128xbf16> to vector<64x128xbf16>
    %cst = arith.constant dense<0.000000e+00> : vector<1x128xf32>
    %6 = tpu.matmul %3, %5, %cst {dimension_numbers = #tpu.dot_dimension_numbers<[1], [0], [0], [1], [0, 0, 1, 1], [], []>} : vector<1x64xbf16>, vector<64x128xbf16>, vector<1x128xf32> -> vector<1x128xf32>
    %7 = vector.extract_strided_slice %1 {offsets = [0, 1, 0], sizes = [1, 1, 64], strides = [1, 1, 1]} : vector<2x2x64xbf16> to vector<1x1x64xbf16>
    %8 = vector.shape_cast %7 : vector<1x1x64xbf16> to vector<1x64xbf16>
    %c1 = arith.constant 1 : index
    %c0_6 = arith.constant 0 : index
    %c0_7 = arith.constant 0 : index
    %9 = vector.load %arg2[%c1, %c0_6, %c0_7] : memref<4x64x128xbf16, #tpu.memory_space<vmem>>, vector<1x64x128xbf16>
    %10 = vector.shape_cast %9 : vector<1x64x128xbf16> to vector<64x128xbf16>
    %cst_8 = arith.constant dense<0.000000e+00> : vector<1x128xf32>
    %11 = tpu.matmul %8, %10, %cst_8 {dimension_numbers = #tpu.dot_dimension_numbers<[1], [0], [0], [1], [0, 0, 1, 1], [], []>} : vector<1x64xbf16>, vector<64x128xbf16>, vector<1x128xf32> -> vector<1x128xf32>
    %12 = arith.addf %6, %11 : vector<1x128xf32>
    %13 = vector.extract_strided_slice %1 {offsets = [1, 0, 0], sizes = [1, 1, 64], strides = [1, 1, 1]} : vector<2x2x64xbf16> to vector<1x1x64xbf16>
    %14 = vector.shape_cast %13 : vector<1x1x64xbf16> to vector<1x64xbf16>
    %c2 = arith.constant 2 : index
    %c0_9 = arith.constant 0 : index
    %c0_10 = arith.constant 0 : index
    %15 = vector.load %arg2[%c2, %c0_9, %c0_10] : memref<4x64x128xbf16, #tpu.memory_space<vmem>>, vector<1x64x128xbf16>
    %16 = vector.shape_cast %15 : vector<1x64x128xbf16> to vector<64x128xbf16>
    %cst_11 = arith.constant dense<0.000000e+00> : vector<1x128xf32>
    %17 = tpu.matmul %14, %16, %cst_11 {dimension_numbers = #tpu.dot_dimension_numbers<[1], [0], [0], [1], [0, 0, 1, 1], [], []>} : vector<1x64xbf16>, vector<64x128xbf16>, vector<1x128xf32> -> vector<1x128xf32>
    %18 = arith.addf %12, %17 : vector<1x128xf32>
    %19 = vector.extract_strided_slice %1 {offsets = [1, 1, 0], sizes = [1, 1, 64], strides = [1, 1, 1]} : vector<2x2x64xbf16> to vector<1x1x64xbf16>
    %20 = vector.shape_cast %19 : vector<1x1x64xbf16> to vector<1x64xbf16>
    %c3 = arith.constant 3 : index
    %c0_12 = arith.constant 0 : index
    %c0_13 = arith.constant 0 : index
    %21 = vector.load %arg2[%c3, %c0_12, %c0_13] : memref<4x64x128xbf16, #tpu.memory_space<vmem>>, vector<1x64x128xbf16>
    %22 = vector.shape_cast %21 : vector<1x64x128xbf16> to vector<64x128xbf16>
    %cst_14 = arith.constant dense<0.000000e+00> : vector<1x128xf32>
    %23 = tpu.matmul %20, %22, %cst_14 {dimension_numbers = #tpu.dot_dimension_numbers<[1], [0], [0], [1], [0, 0, 1, 1], [], []>} : vector<1x64xbf16>, vector<64x128xbf16>, vector<1x128xf32> -> vector<1x128xf32>
    %24 = arith.addf %18, %23 : vector<1x128xf32>
    %c0_15 = arith.constant 0 : index
    %c0_16 = arith.constant 0 : index
    %25 = vector.load %arg3[%c0_15, %c0_16] : memref<1x128xf32, #tpu.memory_space<vmem>>, vector<1x128xf32>
    %26 = arith.addf %24, %25 : vector<1x128xf32>
    %cst_17 = arith.constant dense<0.000000e+00> : vector<128xf32>
    %27 = vector.multi_reduction <add>, %26, %cst_17 [0] : vector<1x128xf32> to vector<128xf32>
    %28 = vector.shape_cast %27 : vector<128xf32> to vector<1x128xf32>
    %cst_18 = arith.constant 1.000000e+00 : f32
    %29 = vector.broadcast %cst_18 : f32 to vector<1x128xf32>
    %30 = arith.mulf %28, %29 : vector<1x128xf32>
    %31 = arith.subf %26, %30 : vector<1x128xf32>
    %32 = arith.mulf %31, %31 : vector<1x128xf32>
    %cst_19 = arith.constant dense<0.000000e+00> : vector<128xf32>
    %33 = vector.multi_reduction <add>, %32, %cst_19 [0] : vector<1x128xf32> to vector<128xf32>
    %34 = vector.shape_cast %33 : vector<128xf32> to vector<1x128xf32>
    %35 = tpu.concatenate %28, %34 in 0 : vector<1x128xf32>, vector<1x128xf32> -> vector<2x128xf32>
    %36 = vector.shape_cast %35 : vector<2x128xf32> to vector<1x2x128xf32>
    %c0_20 = arith.constant 0 : index
    %c0_21 = arith.constant 0 : index
    %c0_22 = arith.constant 0 : index
    %37 = vector.load %arg5[%c0_20, %c0_21, %c0_22] : memref<1x2x128xf32, #tpu.memory_space<vmem>>, vector<1x2x128xf32>
    tpu.vector_store %arg5[%c0_20, %c0_21, %c0_22], %36 {strides = array<i32>} : memref<1x2x128xf32, #tpu.memory_space<vmem>>, vector<1x2x128xf32>,
    %38 = arith.truncf %26 : vector<1x128xf32> to vector<1x128xbf16>
    %39 = vector.extract_strided_slice %38 {offsets = [0, 0], sizes = [1, 64], strides = [1, 1]} : vector<1x128xbf16> to vector<1x64xbf16>
    %40 = vector.shape_cast %39 : vector<1x64xbf16> to vector<1x1x64xbf16>
    %c0_23 = arith.constant 0 : index
    %c0_24 = arith.constant 0 : index
    %c0_25 = arith.constant 0 : index
    %c0_26 = arith.constant 0 : index
    %c0_27 = arith.constant 0 : index
    %41 = vector.load %arg4[%c0_23, %c0_24, %c0_25, %c0_26, %c0_27] : memref<1x1x2x1x64xbf16, #tpu.memory_space<vmem>>, vector<1x1x1x1x64xbf16>
    %42 = vector.shape_cast %41 : vector<1x1x1x1x64xbf16> to vector<1x1x64xbf16>
    %43 = vector.shape_cast %40 : vector<1x1x64xbf16> to vector<1x1x1x1x64xbf16>
    tpu.vector_store %arg4[%c0_23, %c0_24, %c0_25, %c0_26, %c0_27], %43 {strides = array<i32>} : memref<1x1x2x1x64xbf16, #tpu.memory_space<vmem>>, vector<1x1x1x1x64xbf16>,
    %44 = vector.extract_strided_slice %38 {offsets = [0, 64], sizes = [1, 64], strides = [1, 1]} : vector<1x128xbf16> to vector<1x64xbf16>
    %45 = vector.shape_cast %44 : vector<1x64xbf16> to vector<1x1x64xbf16>
    %c0_28 = arith.constant 0 : index
    %c0_29 = arith.constant 0 : index
    %c1_30 = arith.constant 1 : index
    %c0_31 = arith.constant 0 : index
    %c0_32 = arith.constant 0 : index
    %46 = vector.load %arg4[%c0_28, %c0_29, %c1_30, %c0_31, %c0_32] : memref<1x1x2x1x64xbf16, #tpu.memory_space<vmem>>, vector<1x1x1x1x64xbf16>
    %47 = vector.shape_cast %46 : vector<1x1x1x1x64xbf16> to vector<1x1x64xbf16>
    %48 = vector.shape_cast %45 : vector<1x1x64xbf16> to vector<1x1x1x1x64xbf16>
    tpu.vector_store %arg4[%c0_28, %c0_29, %c1_30, %c0_31, %c0_32], %48 {strides = array<i32>} : memref<1x1x2x1x64xbf16, #tpu.memory_space<vmem>>, vector<1x1x1x1x64xbf16>,
    return
  }
  func.func @transform_0(%arg0: i32) -> (i32, i32, i32, i32) {
    %c0_i32 = arith.constant 0 : i32
    %c0_i32_0 = arith.constant 0 : i32
    %c0_i32_1 = arith.constant 0 : i32
    %c0_i32_2 = arith.constant 0 : i32
    return %arg0, %c0_i32, %c0_i32_0, %c0_i32_1 : i32, i32, i32, i32
  }
  func.func @transform_1(%arg0: i32) -> (i32, i32, i32) {
    %c0_i32 = arith.constant 0 : i32
    %c0_i32_0 = arith.constant 0 : i32
    %c0_i32_1 = arith.constant 0 : i32
    %c0_i32_2 = arith.constant 0 : i32
    return %c0_i32, %c0_i32_0, %c0_i32_1 : i32, i32, i32
  }
  func.func @transform_2(%arg0: i32) -> (i32, i32) {
    %c0_i32 = arith.constant 0 : i32
    %c0_i32_0 = arith.constant 0 : i32
    %c0_i32_1 = arith.constant 0 : i32
    return %c0_i32, %c0_i32_0 : i32, i32
  }
  func.func @transform_3(%arg0: i32) -> (i32, i32, i32, i32, i32) {
    %c0_i32 = arith.constant 0 : i32
    %c0_i32_0 = arith.constant 0 : i32
    %c0_i32_1 = arith.constant 0 : i32
    %c0_i32_2 = arith.constant 0 : i32
    %c0_i32_3 = arith.constant 0 : i32
    return %arg0, %c0_i32, %c0_i32_0, %c0_i32_1, %c0_i32_2 : i32, i32, i32, i32, i32
  }
  func.func @transform_4(%arg0: i32) -> (i32, i32, i32) {
    %c0_i32 = arith.constant 0 : i32
    %c0_i32_0 = arith.constant 0 : i32
    %c0_i32_1 = arith.constant 0 : i32
    return %arg0, %c0_i32, %c0_i32_0 : i32, i32, i32
  }
}

module attributes {stable_mosaic.version = 11 : i64} {
  func.func @_scale_shift_lrelu_kernel(%arg0: i32, %arg1: memref<4x64xbf16, #tpu.memory_space<vmem>>, %arg2: memref<1x64xf32, #tpu.memory_space<vmem>>, %arg3: memref<1x64xf32, #tpu.memory_space<vmem>>, %arg4: memref<4x64xbf16, #tpu.memory_space<vmem>>) attributes {dimension_semantics = [#tpu.dimension_semantics<parallel>], iteration_bounds = array<i64: 1>, scalar_prefetch = 0 : i64, scratch_operands = 0 : i64, tpu.core_type = #tpu.core_type<tc>, window_params = [{transform_indices = @transform_0, window_bounds = array<i64: 4, 64>}, {pipeline_mode = #tpu.pipeline_mode<synchronous>, transform_indices = @transform_1, window_bounds = array<i64: 1, 64>}, {pipeline_mode = #tpu.pipeline_mode<synchronous>, transform_indices = @transform_2, window_bounds = array<i64: 1, 64>}, {transform_indices = @transform_3, window_bounds = array<i64: 4, 64>}]} {
    %c0 = arith.constant 0 : index
    %c0_0 = arith.constant 0 : index
    %0 = vector.load %arg1[%c0, %c0_0] : memref<4x64xbf16, #tpu.memory_space<vmem>>, vector<4x64xbf16>
    %1 = arith.extf %0 : vector<4x64xbf16> to vector<4x64xf32>
    %c0_1 = arith.constant 0 : index
    %c0_2 = arith.constant 0 : index
    %2 = vector.load %arg2[%c0_1, %c0_2] : memref<1x64xf32, #tpu.memory_space<vmem>>, vector<1x64xf32>
    %3 = vector.broadcast %2 : vector<1x64xf32> to vector<4x64xf32>
    %4 = arith.mulf %1, %3 : vector<4x64xf32>
    %c0_3 = arith.constant 0 : index
    %c0_4 = arith.constant 0 : index
    %5 = vector.load %arg3[%c0_3, %c0_4] : memref<1x64xf32, #tpu.memory_space<vmem>>, vector<1x64xf32>
    %6 = vector.broadcast %5 : vector<1x64xf32> to vector<4x64xf32>
    %7 = arith.addf %4, %6 : vector<4x64xf32>
    %cst = arith.constant 0.000000e+00 : f32
    %8 = vector.broadcast %cst : f32 to vector<4x64xf32>
    %9 = arith.cmpf oge, %7, %8 : vector<4x64xf32>
    %cst_5 = arith.constant 0.00999999977 : f32
    %10 = vector.broadcast %cst_5 : f32 to vector<4x64xf32>
    %11 = arith.mulf %10, %7 : vector<4x64xf32>
    %12 = arith.select %9, %7, %11 : vector<4x64xi1>, vector<4x64xf32>
    %13 = arith.truncf %12 : vector<4x64xf32> to vector<4x64xbf16>
    %c0_6 = arith.constant 0 : index
    %c0_7 = arith.constant 0 : index
    %14 = vector.load %arg4[%c0_6, %c0_7] : memref<4x64xbf16, #tpu.memory_space<vmem>>, vector<4x64xbf16>
    tpu.vector_store %arg4[%c0_6, %c0_7], %13 {strides = array<i32>} : memref<4x64xbf16, #tpu.memory_space<vmem>>, vector<4x64xbf16>,
    return
  }
  func.func @transform_0(%arg0: i32) -> (i32, i32) {
    %c0_i32 = arith.constant 0 : i32
    %c0_i32_0 = arith.constant 0 : i32
    return %arg0, %c0_i32 : i32, i32
  }
  func.func @transform_1(%arg0: i32) -> (i32, i32) {
    %c0_i32 = arith.constant 0 : i32
    %c0_i32_0 = arith.constant 0 : i32
    %c0_i32_1 = arith.constant 0 : i32
    return %c0_i32, %c0_i32_0 : i32, i32
  }
  func.func @transform_2(%arg0: i32) -> (i32, i32) {
    %c0_i32 = arith.constant 0 : i32
    %c0_i32_0 = arith.constant 0 : i32
    %c0_i32_1 = arith.constant 0 : i32
    return %c0_i32, %c0_i32_0 : i32, i32
  }
  func.func @transform_3(%arg0: i32) -> (i32, i32) {
    %c0_i32 = arith.constant 0 : i32
    %c0_i32_0 = arith.constant 0 : i32
    return %arg0, %c0_i32 : i32, i32
  }
}

module attributes {stable_mosaic.version = 11 : i64} {
  func.func @_convt_phase_kernel(%arg0: i32, %arg1: memref<1x3x3x32xbf16, #tpu.memory_space<vmem>>, %arg2: memref<4x32x64xbf16, #tpu.memory_space<vmem>>, %arg3: memref<1x64xf32, #tpu.memory_space<vmem>>, %arg4: memref<1x2x2x2x32xbf16, #tpu.memory_space<vmem>>, %arg5: memref<1x2x64xf32, #tpu.memory_space<vmem>>) attributes {dimension_semantics = [#tpu.dimension_semantics<parallel>], iteration_bounds = array<i64: 2>, scalar_prefetch = 0 : i64, scratch_operands = 0 : i64, tpu.core_type = #tpu.core_type<tc>, window_params = [{transform_indices = @transform_0, window_bounds = array<i64: 1, 3, 3, 32>}, {pipeline_mode = #tpu.pipeline_mode<synchronous>, transform_indices = @transform_1, window_bounds = array<i64: 4, 32, 64>}, {pipeline_mode = #tpu.pipeline_mode<synchronous>, transform_indices = @transform_2, window_bounds = array<i64: 1, 64>}, {transform_indices = @transform_3, window_bounds = array<i64: 1, 2, 2, 2, 32>}, {transform_indices = @transform_4, window_bounds = array<i64: 1, 2, 64>}]} {
    %c0 = arith.constant 0 : index
    %c0_0 = arith.constant 0 : index
    %c0_1 = arith.constant 0 : index
    %c0_2 = arith.constant 0 : index
    %0 = vector.load %arg1[%c0, %c0_0, %c0_1, %c0_2] : memref<1x3x3x32xbf16, #tpu.memory_space<vmem>>, vector<1x3x3x32xbf16>
    %1 = vector.shape_cast %0 : vector<1x3x3x32xbf16> to vector<3x3x32xbf16>
    %2 = vector.extract_strided_slice %1 {offsets = [0, 0, 0], sizes = [2, 2, 32], strides = [1, 1, 1]} : vector<3x3x32xbf16> to vector<2x2x32xbf16>
    %3 = vector.shape_cast %2 : vector<2x2x32xbf16> to vector<4x32xbf16>
    %c0_3 = arith.constant 0 : index
    %c0_4 = arith.constant 0 : index
    %c0_5 = arith.constant 0 : index
    %4 = vector.load %arg2[%c0_3, %c0_4, %c0_5] : memref<4x32x64xbf16, #tpu.memory_space<vmem>>, vector<1x32x64xbf16>
    %5 = vector.shape_cast %4 : vector<1x32x64xbf16> to vector<32x64xbf16>
    %cst = arith.constant dense<0.000000e+00> : vector<4x64xf32>
    %6 = tpu.matmul %3, %5, %cst {dimension_numbers = #tpu.dot_dimension_numbers<[1], [0], [0], [1], [0, 0, 1, 1], [], []>} : vector<4x32xbf16>, vector<32x64xbf16>, vector<4x64xf32> -> vector<4x64xf32>
    %7 = vector.extract_strided_slice %1 {offsets = [0, 1, 0], sizes = [2, 2, 32], strides = [1, 1, 1]} : vector<3x3x32xbf16> to vector<2x2x32xbf16>
    %8 = vector.shape_cast %7 : vector<2x2x32xbf16> to vector<4x32xbf16>
    %c1 = arith.constant 1 : index
    %c0_6 = arith.constant 0 : index
    %c0_7 = arith.constant 0 : index
    %9 = vector.load %arg2[%c1, %c0_6, %c0_7] : memref<4x32x64xbf16, #tpu.memory_space<vmem>>, vector<1x32x64xbf16>
    %10 = vector.shape_cast %9 : vector<1x32x64xbf16> to vector<32x64xbf16>
    %cst_8 = arith.constant dense<0.000000e+00> : vector<4x64xf32>
    %11 = tpu.matmul %8, %10, %cst_8 {dimension_numbers = #tpu.dot_dimension_numbers<[1], [0], [0], [1], [0, 0, 1, 1], [], []>} : vector<4x32xbf16>, vector<32x64xbf16>, vector<4x64xf32> -> vector<4x64xf32>
    %12 = arith.addf %6, %11 : vector<4x64xf32>
    %13 = vector.extract_strided_slice %1 {offsets = [1, 0, 0], sizes = [2, 2, 32], strides = [1, 1, 1]} : vector<3x3x32xbf16> to vector<2x2x32xbf16>
    %14 = vector.shape_cast %13 : vector<2x2x32xbf16> to vector<4x32xbf16>
    %c2 = arith.constant 2 : index
    %c0_9 = arith.constant 0 : index
    %c0_10 = arith.constant 0 : index
    %15 = vector.load %arg2[%c2, %c0_9, %c0_10] : memref<4x32x64xbf16, #tpu.memory_space<vmem>>, vector<1x32x64xbf16>
    %16 = vector.shape_cast %15 : vector<1x32x64xbf16> to vector<32x64xbf16>
    %cst_11 = arith.constant dense<0.000000e+00> : vector<4x64xf32>
    %17 = tpu.matmul %14, %16, %cst_11 {dimension_numbers = #tpu.dot_dimension_numbers<[1], [0], [0], [1], [0, 0, 1, 1], [], []>} : vector<4x32xbf16>, vector<32x64xbf16>, vector<4x64xf32> -> vector<4x64xf32>
    %18 = arith.addf %12, %17 : vector<4x64xf32>
    %19 = vector.extract_strided_slice %1 {offsets = [1, 1, 0], sizes = [2, 2, 32], strides = [1, 1, 1]} : vector<3x3x32xbf16> to vector<2x2x32xbf16>
    %20 = vector.shape_cast %19 : vector<2x2x32xbf16> to vector<4x32xbf16>
    %c3 = arith.constant 3 : index
    %c0_12 = arith.constant 0 : index
    %c0_13 = arith.constant 0 : index
    %21 = vector.load %arg2[%c3, %c0_12, %c0_13] : memref<4x32x64xbf16, #tpu.memory_space<vmem>>, vector<1x32x64xbf16>
    %22 = vector.shape_cast %21 : vector<1x32x64xbf16> to vector<32x64xbf16>
    %cst_14 = arith.constant dense<0.000000e+00> : vector<4x64xf32>
    %23 = tpu.matmul %20, %22, %cst_14 {dimension_numbers = #tpu.dot_dimension_numbers<[1], [0], [0], [1], [0, 0, 1, 1], [], []>} : vector<4x32xbf16>, vector<32x64xbf16>, vector<4x64xf32> -> vector<4x64xf32>
    %24 = arith.addf %18, %23 : vector<4x64xf32>
    %c0_15 = arith.constant 0 : index
    %c0_16 = arith.constant 0 : index
    %25 = vector.load %arg3[%c0_15, %c0_16] : memref<1x64xf32, #tpu.memory_space<vmem>>, vector<1x64xf32>
    %26 = vector.broadcast %25 : vector<1x64xf32> to vector<4x64xf32>
    %27 = arith.addf %24, %26 : vector<4x64xf32>
    %cst_17 = arith.constant dense<0.000000e+00> : vector<64xf32>
    %28 = vector.multi_reduction <add>, %27, %cst_17 [0] : vector<4x64xf32> to vector<64xf32>
    %29 = vector.shape_cast %28 : vector<64xf32> to vector<1x64xf32>
    %cst_18 = arith.constant 2.500000e-01 : f32
    %30 = vector.broadcast %cst_18 : f32 to vector<1x64xf32>
    %31 = arith.mulf %29, %30 : vector<1x64xf32>
    %32 = vector.broadcast %31 : vector<1x64xf32> to vector<4x64xf32>
    %33 = arith.subf %27, %32 : vector<4x64xf32>
    %34 = arith.mulf %33, %33 : vector<4x64xf32>
    %cst_19 = arith.constant dense<0.000000e+00> : vector<64xf32>
    %35 = vector.multi_reduction <add>, %34, %cst_19 [0] : vector<4x64xf32> to vector<64xf32>
    %36 = vector.shape_cast %35 : vector<64xf32> to vector<1x64xf32>
    %37 = tpu.concatenate %29, %36 in 0 : vector<1x64xf32>, vector<1x64xf32> -> vector<2x64xf32>
    %38 = vector.shape_cast %37 : vector<2x64xf32> to vector<1x2x64xf32>
    %c0_20 = arith.constant 0 : index
    %c0_21 = arith.constant 0 : index
    %c0_22 = arith.constant 0 : index
    %39 = vector.load %arg5[%c0_20, %c0_21, %c0_22] : memref<1x2x64xf32, #tpu.memory_space<vmem>>, vector<1x2x64xf32>
    tpu.vector_store %arg5[%c0_20, %c0_21, %c0_22], %38 {strides = array<i32>} : memref<1x2x64xf32, #tpu.memory_space<vmem>>, vector<1x2x64xf32>,
    %40 = arith.truncf %27 : vector<4x64xf32> to vector<4x64xbf16>
    %41 = vector.extract_strided_slice %40 {offsets = [0, 0], sizes = [4, 32], strides = [1, 1]} : vector<4x64xbf16> to vector<4x32xbf16>
    %42 = vector.shape_cast %41 : vector<4x32xbf16> to vector<2x2x32xbf16>
    %c0_23 = arith.constant 0 : index
    %c0_24 = arith.constant 0 : index
    %c0_25 = arith.constant 0 : index
    %c0_26 = arith.constant 0 : index
    %c0_27 = arith.constant 0 : index
    %43 = vector.load %arg4[%c0_23, %c0_24, %c0_25, %c0_26, %c0_27] : memref<1x2x2x2x32xbf16, #tpu.memory_space<vmem>>, vector<1x2x1x2x32xbf16>
    %44 = vector.shape_cast %43 : vector<1x2x1x2x32xbf16> to vector<2x2x32xbf16>
    %45 = vector.shape_cast %42 : vector<2x2x32xbf16> to vector<1x2x1x2x32xbf16>
    tpu.vector_store %arg4[%c0_23, %c0_24, %c0_25, %c0_26, %c0_27], %45 {strides = array<i32>} : memref<1x2x2x2x32xbf16, #tpu.memory_space<vmem>>, vector<1x2x1x2x32xbf16>,
    %46 = vector.extract_strided_slice %40 {offsets = [0, 32], sizes = [4, 32], strides = [1, 1]} : vector<4x64xbf16> to vector<4x32xbf16>
    %47 = vector.shape_cast %46 : vector<4x32xbf16> to vector<2x2x32xbf16>
    %c0_28 = arith.constant 0 : index
    %c0_29 = arith.constant 0 : index
    %c1_30 = arith.constant 1 : index
    %c0_31 = arith.constant 0 : index
    %c0_32 = arith.constant 0 : index
    %48 = vector.load %arg4[%c0_28, %c0_29, %c1_30, %c0_31, %c0_32] : memref<1x2x2x2x32xbf16, #tpu.memory_space<vmem>>, vector<1x2x1x2x32xbf16>
    %49 = vector.shape_cast %48 : vector<1x2x1x2x32xbf16> to vector<2x2x32xbf16>
    %50 = vector.shape_cast %47 : vector<2x2x32xbf16> to vector<1x2x1x2x32xbf16>
    tpu.vector_store %arg4[%c0_28, %c0_29, %c1_30, %c0_31, %c0_32], %50 {strides = array<i32>} : memref<1x2x2x2x32xbf16, #tpu.memory_space<vmem>>, vector<1x2x1x2x32xbf16>,
    return
  }
  func.func @transform_0(%arg0: i32) -> (i32, i32, i32, i32) {
    %c0_i32 = arith.constant 0 : i32
    %c0_i32_0 = arith.constant 0 : i32
    %c0_i32_1 = arith.constant 0 : i32
    %c0_i32_2 = arith.constant 0 : i32
    return %arg0, %c0_i32, %c0_i32_0, %c0_i32_1 : i32, i32, i32, i32
  }
  func.func @transform_1(%arg0: i32) -> (i32, i32, i32) {
    %c0_i32 = arith.constant 0 : i32
    %c0_i32_0 = arith.constant 0 : i32
    %c0_i32_1 = arith.constant 0 : i32
    %c0_i32_2 = arith.constant 0 : i32
    return %c0_i32, %c0_i32_0, %c0_i32_1 : i32, i32, i32
  }
  func.func @transform_2(%arg0: i32) -> (i32, i32) {
    %c0_i32 = arith.constant 0 : i32
    %c0_i32_0 = arith.constant 0 : i32
    %c0_i32_1 = arith.constant 0 : i32
    return %c0_i32, %c0_i32_0 : i32, i32
  }
  func.func @transform_3(%arg0: i32) -> (i32, i32, i32, i32, i32) {
    %c0_i32 = arith.constant 0 : i32
    %c0_i32_0 = arith.constant 0 : i32
    %c0_i32_1 = arith.constant 0 : i32
    %c0_i32_2 = arith.constant 0 : i32
    %c0_i32_3 = arith.constant 0 : i32
    return %arg0, %c0_i32, %c0_i32_0, %c0_i32_1, %c0_i32_2 : i32, i32, i32, i32, i32
  }
  func.func @transform_4(%arg0: i32) -> (i32, i32, i32) {
    %c0_i32 = arith.constant 0 : i32
    %c0_i32_0 = arith.constant 0 : i32
    %c0_i32_1 = arith.constant 0 : i32
    return %arg0, %c0_i32, %c0_i32_0 : i32, i32, i32
  }
}

module attributes {stable_mosaic.version = 11 : i64} {
  func.func @_scale_shift_lrelu_kernel(%arg0: i32, %arg1: memref<16x32xbf16, #tpu.memory_space<vmem>>, %arg2: memref<1x32xf32, #tpu.memory_space<vmem>>, %arg3: memref<1x32xf32, #tpu.memory_space<vmem>>, %arg4: memref<16x32xbf16, #tpu.memory_space<vmem>>) attributes {dimension_semantics = [#tpu.dimension_semantics<parallel>], iteration_bounds = array<i64: 1>, scalar_prefetch = 0 : i64, scratch_operands = 0 : i64, tpu.core_type = #tpu.core_type<tc>, window_params = [{transform_indices = @transform_0, window_bounds = array<i64: 16, 32>}, {pipeline_mode = #tpu.pipeline_mode<synchronous>, transform_indices = @transform_1, window_bounds = array<i64: 1, 32>}, {pipeline_mode = #tpu.pipeline_mode<synchronous>, transform_indices = @transform_2, window_bounds = array<i64: 1, 32>}, {transform_indices = @transform_3, window_bounds = array<i64: 16, 32>}]} {
    %c0 = arith.constant 0 : index
    %c0_0 = arith.constant 0 : index
    %0 = vector.load %arg1[%c0, %c0_0] : memref<16x32xbf16, #tpu.memory_space<vmem>>, vector<16x32xbf16>
    %1 = arith.extf %0 : vector<16x32xbf16> to vector<16x32xf32>
    %c0_1 = arith.constant 0 : index
    %c0_2 = arith.constant 0 : index
    %2 = vector.load %arg2[%c0_1, %c0_2] : memref<1x32xf32, #tpu.memory_space<vmem>>, vector<1x32xf32>
    %3 = vector.broadcast %2 : vector<1x32xf32> to vector<16x32xf32>
    %4 = arith.mulf %1, %3 : vector<16x32xf32>
    %c0_3 = arith.constant 0 : index
    %c0_4 = arith.constant 0 : index
    %5 = vector.load %arg3[%c0_3, %c0_4] : memref<1x32xf32, #tpu.memory_space<vmem>>, vector<1x32xf32>
    %6 = vector.broadcast %5 : vector<1x32xf32> to vector<16x32xf32>
    %7 = arith.addf %4, %6 : vector<16x32xf32>
    %cst = arith.constant 0.000000e+00 : f32
    %8 = vector.broadcast %cst : f32 to vector<16x32xf32>
    %9 = arith.cmpf oge, %7, %8 : vector<16x32xf32>
    %cst_5 = arith.constant 0.00999999977 : f32
    %10 = vector.broadcast %cst_5 : f32 to vector<16x32xf32>
    %11 = arith.mulf %10, %7 : vector<16x32xf32>
    %12 = arith.select %9, %7, %11 : vector<16x32xi1>, vector<16x32xf32>
    %13 = arith.truncf %12 : vector<16x32xf32> to vector<16x32xbf16>
    %c0_6 = arith.constant 0 : index
    %c0_7 = arith.constant 0 : index
    %14 = vector.load %arg4[%c0_6, %c0_7] : memref<16x32xbf16, #tpu.memory_space<vmem>>, vector<16x32xbf16>
    tpu.vector_store %arg4[%c0_6, %c0_7], %13 {strides = array<i32>} : memref<16x32xbf16, #tpu.memory_space<vmem>>, vector<16x32xbf16>,
    return
  }
  func.func @transform_0(%arg0: i32) -> (i32, i32) {
    %c0_i32 = arith.constant 0 : i32
    %c0_i32_0 = arith.constant 0 : i32
    return %arg0, %c0_i32 : i32, i32
  }
  func.func @transform_1(%arg0: i32) -> (i32, i32) {
    %c0_i32 = arith.constant 0 : i32
    %c0_i32_0 = arith.constant 0 : i32
    %c0_i32_1 = arith.constant 0 : i32
    return %c0_i32, %c0_i32_0 : i32, i32
  }
  func.func @transform_2(%arg0: i32) -> (i32, i32) {
    %c0_i32 = arith.constant 0 : i32
    %c0_i32_0 = arith.constant 0 : i32
    %c0_i32_1 = arith.constant 0 : i32
    return %c0_i32, %c0_i32_0 : i32, i32
  }
  func.func @transform_3(%arg0: i32) -> (i32, i32) {
    %c0_i32 = arith.constant 0 : i32
    %c0_i32_0 = arith.constant 0 : i32
    return %arg0, %c0_i32 : i32, i32
  }
}

module attributes {stable_mosaic.version = 11 : i64} {
  func.func @_convt_phase_kernel(%arg0: i32, %arg1: memref<1x5x5x16xbf16, #tpu.memory_space<vmem>>, %arg2: memref<4x16x32xbf16, #tpu.memory_space<vmem>>, %arg3: memref<1x32xf32, #tpu.memory_space<vmem>>, %arg4: memref<1x4x2x4x16xbf16, #tpu.memory_space<vmem>>, %arg5: memref<1x2x32xf32, #tpu.memory_space<vmem>>) attributes {dimension_semantics = [#tpu.dimension_semantics<parallel>], iteration_bounds = array<i64: 2>, scalar_prefetch = 0 : i64, scratch_operands = 0 : i64, tpu.core_type = #tpu.core_type<tc>, window_params = [{transform_indices = @transform_0, window_bounds = array<i64: 1, 5, 5, 16>}, {pipeline_mode = #tpu.pipeline_mode<synchronous>, transform_indices = @transform_1, window_bounds = array<i64: 4, 16, 32>}, {pipeline_mode = #tpu.pipeline_mode<synchronous>, transform_indices = @transform_2, window_bounds = array<i64: 1, 32>}, {transform_indices = @transform_3, window_bounds = array<i64: 1, 4, 2, 4, 16>}, {transform_indices = @transform_4, window_bounds = array<i64: 1, 2, 32>}]} {
    %c0 = arith.constant 0 : index
    %c0_0 = arith.constant 0 : index
    %c0_1 = arith.constant 0 : index
    %c0_2 = arith.constant 0 : index
    %0 = vector.load %arg1[%c0, %c0_0, %c0_1, %c0_2] : memref<1x5x5x16xbf16, #tpu.memory_space<vmem>>, vector<1x5x5x16xbf16>
    %1 = vector.shape_cast %0 : vector<1x5x5x16xbf16> to vector<5x5x16xbf16>
    %2 = vector.extract_strided_slice %1 {offsets = [0, 0, 0], sizes = [4, 4, 16], strides = [1, 1, 1]} : vector<5x5x16xbf16> to vector<4x4x16xbf16>
    %3 = vector.shape_cast %2 : vector<4x4x16xbf16> to vector<16x16xbf16>
    %c0_3 = arith.constant 0 : index
    %c0_4 = arith.constant 0 : index
    %c0_5 = arith.constant 0 : index
    %4 = vector.load %arg2[%c0_3, %c0_4, %c0_5] : memref<4x16x32xbf16, #tpu.memory_space<vmem>>, vector<1x16x32xbf16>
    %5 = vector.shape_cast %4 : vector<1x16x32xbf16> to vector<16x32xbf16>
    %cst = arith.constant dense<0.000000e+00> : vector<16x32xf32>
    %6 = tpu.matmul %3, %5, %cst {dimension_numbers = #tpu.dot_dimension_numbers<[1], [0], [0], [1], [0, 0, 1, 1], [], []>} : vector<16x16xbf16>, vector<16x32xbf16>, vector<16x32xf32> -> vector<16x32xf32>
    %7 = vector.extract_strided_slice %1 {offsets = [0, 1, 0], sizes = [4, 4, 16], strides = [1, 1, 1]} : vector<5x5x16xbf16> to vector<4x4x16xbf16>
    %8 = vector.shape_cast %7 : vector<4x4x16xbf16> to vector<16x16xbf16>
    %c1 = arith.constant 1 : index
    %c0_6 = arith.constant 0 : index
    %c0_7 = arith.constant 0 : index
    %9 = vector.load %arg2[%c1, %c0_6, %c0_7] : memref<4x16x32xbf16, #tpu.memory_space<vmem>>, vector<1x16x32xbf16>
    %10 = vector.shape_cast %9 : vector<1x16x32xbf16> to vector<16x32xbf16>
    %cst_8 = arith.constant dense<0.000000e+00> : vector<16x32xf32>
    %11 = tpu.matmul %8, %10, %cst_8 {dimension_numbers = #tpu.dot_dimension_numbers<[1], [0], [0], [1], [0, 0, 1, 1], [], []>} : vector<16x16xbf16>, vector<16x32xbf16>, vector<16x32xf32> -> vector<16x32xf32>
    %12 = arith.addf %6, %11 : vector<16x32xf32>
    %13 = vector.extract_strided_slice %1 {offsets = [1, 0, 0], sizes = [4, 4, 16], strides = [1, 1, 1]} : vector<5x5x16xbf16> to vector<4x4x16xbf16>
    %14 = vector.shape_cast %13 : vector<4x4x16xbf16> to vector<16x16xbf16>
    %c2 = arith.constant 2 : index
    %c0_9 = arith.constant 0 : index
    %c0_10 = arith.constant 0 : index
    %15 = vector.load %arg2[%c2, %c0_9, %c0_10] : memref<4x16x32xbf16, #tpu.memory_space<vmem>>, vector<1x16x32xbf16>
    %16 = vector.shape_cast %15 : vector<1x16x32xbf16> to vector<16x32xbf16>
    %cst_11 = arith.constant dense<0.000000e+00> : vector<16x32xf32>
    %17 = tpu.matmul %14, %16, %cst_11 {dimension_numbers = #tpu.dot_dimension_numbers<[1], [0], [0], [1], [0, 0, 1, 1], [], []>} : vector<16x16xbf16>, vector<16x32xbf16>, vector<16x32xf32> -> vector<16x32xf32>
    %18 = arith.addf %12, %17 : vector<16x32xf32>
    %19 = vector.extract_strided_slice %1 {offsets = [1, 1, 0], sizes = [4, 4, 16], strides = [1, 1, 1]} : vector<5x5x16xbf16> to vector<4x4x16xbf16>
    %20 = vector.shape_cast %19 : vector<4x4x16xbf16> to vector<16x16xbf16>
    %c3 = arith.constant 3 : index
    %c0_12 = arith.constant 0 : index
    %c0_13 = arith.constant 0 : index
    %21 = vector.load %arg2[%c3, %c0_12, %c0_13] : memref<4x16x32xbf16, #tpu.memory_space<vmem>>, vector<1x16x32xbf16>
    %22 = vector.shape_cast %21 : vector<1x16x32xbf16> to vector<16x32xbf16>
    %cst_14 = arith.constant dense<0.000000e+00> : vector<16x32xf32>
    %23 = tpu.matmul %20, %22, %cst_14 {dimension_numbers = #tpu.dot_dimension_numbers<[1], [0], [0], [1], [0, 0, 1, 1], [], []>} : vector<16x16xbf16>, vector<16x32xbf16>, vector<16x32xf32> -> vector<16x32xf32>
    %24 = arith.addf %18, %23 : vector<16x32xf32>
    %c0_15 = arith.constant 0 : index
    %c0_16 = arith.constant 0 : index
    %25 = vector.load %arg3[%c0_15, %c0_16] : memref<1x32xf32, #tpu.memory_space<vmem>>, vector<1x32xf32>
    %26 = vector.broadcast %25 : vector<1x32xf32> to vector<16x32xf32>
    %27 = arith.addf %24, %26 : vector<16x32xf32>
    %cst_17 = arith.constant dense<0.000000e+00> : vector<32xf32>
    %28 = vector.multi_reduction <add>, %27, %cst_17 [0] : vector<16x32xf32> to vector<32xf32>
    %29 = vector.shape_cast %28 : vector<32xf32> to vector<1x32xf32>
    %cst_18 = arith.constant 6.250000e-02 : f32
    %30 = vector.broadcast %cst_18 : f32 to vector<1x32xf32>
    %31 = arith.mulf %29, %30 : vector<1x32xf32>
    %32 = vector.broadcast %31 : vector<1x32xf32> to vector<16x32xf32>
    %33 = arith.subf %27, %32 : vector<16x32xf32>
    %34 = arith.mulf %33, %33 : vector<16x32xf32>
    %cst_19 = arith.constant dense<0.000000e+00> : vector<32xf32>
    %35 = vector.multi_reduction <add>, %34, %cst_19 [0] : vector<16x32xf32> to vector<32xf32>
    %36 = vector.shape_cast %35 : vector<32xf32> to vector<1x32xf32>
    %37 = tpu.concatenate %29, %36 in 0 : vector<1x32xf32>, vector<1x32xf32> -> vector<2x32xf32>
    %38 = vector.shape_cast %37 : vector<2x32xf32> to vector<1x2x32xf32>
    %c0_20 = arith.constant 0 : index
    %c0_21 = arith.constant 0 : index
    %c0_22 = arith.constant 0 : index
    %39 = vector.load %arg5[%c0_20, %c0_21, %c0_22] : memref<1x2x32xf32, #tpu.memory_space<vmem>>, vector<1x2x32xf32>
    tpu.vector_store %arg5[%c0_20, %c0_21, %c0_22], %38 {strides = array<i32>} : memref<1x2x32xf32, #tpu.memory_space<vmem>>, vector<1x2x32xf32>,
    %40 = arith.truncf %27 : vector<16x32xf32> to vector<16x32xbf16>
    %41 = vector.extract_strided_slice %40 {offsets = [0, 0], sizes = [16, 16], strides = [1, 1]} : vector<16x32xbf16> to vector<16x16xbf16>
    %42 = vector.shape_cast %41 : vector<16x16xbf16> to vector<4x4x16xbf16>
    %c0_23 = arith.constant 0 : index
    %c0_24 = arith.constant 0 : index
    %c0_25 = arith.constant 0 : index
    %c0_26 = arith.constant 0 : index
    %c0_27 = arith.constant 0 : index
    %43 = vector.load %arg4[%c0_23, %c0_24, %c0_25, %c0_26, %c0_27] : memref<1x4x2x4x16xbf16, #tpu.memory_space<vmem>>, vector<1x4x1x4x16xbf16>
    %44 = vector.shape_cast %43 : vector<1x4x1x4x16xbf16> to vector<4x4x16xbf16>
    %45 = vector.shape_cast %42 : vector<4x4x16xbf16> to vector<1x4x1x4x16xbf16>
    tpu.vector_store %arg4[%c0_23, %c0_24, %c0_25, %c0_26, %c0_27], %45 {strides = array<i32>} : memref<1x4x2x4x16xbf16, #tpu.memory_space<vmem>>, vector<1x4x1x4x16xbf16>,
    %46 = vector.extract_strided_slice %40 {offsets = [0, 16], sizes = [16, 16], strides = [1, 1]} : vector<16x32xbf16> to vector<16x16xbf16>
    %47 = vector.shape_cast %46 : vector<16x16xbf16> to vector<4x4x16xbf16>
    %c0_28 = arith.constant 0 : index
    %c0_29 = arith.constant 0 : index
    %c1_30 = arith.constant 1 : index
    %c0_31 = arith.constant 0 : index
    %c0_32 = arith.constant 0 : index
    %48 = vector.load %arg4[%c0_28, %c0_29, %c1_30, %c0_31, %c0_32] : memref<1x4x2x4x16xbf16, #tpu.memory_space<vmem>>, vector<1x4x1x4x16xbf16>
    %49 = vector.shape_cast %48 : vector<1x4x1x4x16xbf16> to vector<4x4x16xbf16>
    %50 = vector.shape_cast %47 : vector<4x4x16xbf16> to vector<1x4x1x4x16xbf16>
    tpu.vector_store %arg4[%c0_28, %c0_29, %c1_30, %c0_31, %c0_32], %50 {strides = array<i32>} : memref<1x4x2x4x16xbf16, #tpu.memory_space<vmem>>, vector<1x4x1x4x16xbf16>,
    return
  }
  func.func @transform_0(%arg0: i32) -> (i32, i32, i32, i32) {
    %c0_i32 = arith.constant 0 : i32
    %c0_i32_0 = arith.constant 0 : i32
    %c0_i32_1 = arith.constant 0 : i32
    %c0_i32_2 = arith.constant 0 : i32
    return %arg0, %c0_i32, %c0_i32_0, %c0_i32_1 : i32, i32, i32, i32
  }
  func.func @transform_1(%arg0: i32) -> (i32, i32, i32) {
    %c0_i32 = arith.constant 0 : i32
    %c0_i32_0 = arith.constant 0 : i32
    %c0_i32_1 = arith.constant 0 : i32
    %c0_i32_2 = arith.constant 0 : i32
    return %c0_i32, %c0_i32_0, %c0_i32_1 : i32, i32, i32
  }
  func.func @transform_2(%arg0: i32) -> (i32, i32) {
    %c0_i32 = arith.constant 0 : i32
    %c0_i32_0 = arith.constant 0 : i32
    %c0_i32_1 = arith.constant 0 : i32
    return %c0_i32, %c0_i32_0 : i32, i32
  }
  func.func @transform_3(%arg0: i32) -> (i32, i32, i32, i32, i32) {
    %c0_i32 = arith.constant 0 : i32
    %c0_i32_0 = arith.constant 0 : i32
    %c0_i32_1 = arith.constant 0 : i32
    %c0_i32_2 = arith.constant 0 : i32
    %c0_i32_3 = arith.constant 0 : i32
    return %arg0, %c0_i32, %c0_i32_0, %c0_i32_1, %c0_i32_2 : i32, i32, i32, i32, i32
  }
  func.func @transform_4(%arg0: i32) -> (i32, i32, i32) {
    %c0_i32 = arith.constant 0 : i32
    %c0_i32_0 = arith.constant 0 : i32
    %c0_i32_1 = arith.constant 0 : i32
    return %arg0, %c0_i32, %c0_i32_0 : i32, i32, i32
  }
}

module attributes {stable_mosaic.version = 11 : i64} {
  func.func @_scale_shift_lrelu_kernel(%arg0: i32, %arg1: memref<32x16xbf16, #tpu.memory_space<vmem>>, %arg2: memref<1x16xf32, #tpu.memory_space<vmem>>, %arg3: memref<1x16xf32, #tpu.memory_space<vmem>>, %arg4: memref<32x16xbf16, #tpu.memory_space<vmem>>) attributes {dimension_semantics = [#tpu.dimension_semantics<parallel>], iteration_bounds = array<i64: 2>, scalar_prefetch = 0 : i64, scratch_operands = 0 : i64, tpu.core_type = #tpu.core_type<tc>, window_params = [{transform_indices = @transform_0, window_bounds = array<i64: 32, 16>}, {pipeline_mode = #tpu.pipeline_mode<synchronous>, transform_indices = @transform_1, window_bounds = array<i64: 1, 16>}, {pipeline_mode = #tpu.pipeline_mode<synchronous>, transform_indices = @transform_2, window_bounds = array<i64: 1, 16>}, {transform_indices = @transform_3, window_bounds = array<i64: 32, 16>}]} {
    %c0 = arith.constant 0 : index
    %c0_0 = arith.constant 0 : index
    %0 = vector.load %arg1[%c0, %c0_0] : memref<32x16xbf16, #tpu.memory_space<vmem>>, vector<32x16xbf16>
    %1 = arith.extf %0 : vector<32x16xbf16> to vector<32x16xf32>
    %c0_1 = arith.constant 0 : index
    %c0_2 = arith.constant 0 : index
    %2 = vector.load %arg2[%c0_1, %c0_2] : memref<1x16xf32, #tpu.memory_space<vmem>>, vector<1x16xf32>
    %3 = vector.broadcast %2 : vector<1x16xf32> to vector<32x16xf32>
    %4 = arith.mulf %1, %3 : vector<32x16xf32>
    %c0_3 = arith.constant 0 : index
    %c0_4 = arith.constant 0 : index
    %5 = vector.load %arg3[%c0_3, %c0_4] : memref<1x16xf32, #tpu.memory_space<vmem>>, vector<1x16xf32>
    %6 = vector.broadcast %5 : vector<1x16xf32> to vector<32x16xf32>
    %7 = arith.addf %4, %6 : vector<32x16xf32>
    %cst = arith.constant 0.000000e+00 : f32
    %8 = vector.broadcast %cst : f32 to vector<32x16xf32>
    %9 = arith.cmpf oge, %7, %8 : vector<32x16xf32>
    %cst_5 = arith.constant 0.00999999977 : f32
    %10 = vector.broadcast %cst_5 : f32 to vector<32x16xf32>
    %11 = arith.mulf %10, %7 : vector<32x16xf32>
    %12 = arith.select %9, %7, %11 : vector<32x16xi1>, vector<32x16xf32>
    %13 = arith.truncf %12 : vector<32x16xf32> to vector<32x16xbf16>
    %c0_6 = arith.constant 0 : index
    %c0_7 = arith.constant 0 : index
    %14 = vector.load %arg4[%c0_6, %c0_7] : memref<32x16xbf16, #tpu.memory_space<vmem>>, vector<32x16xbf16>
    tpu.vector_store %arg4[%c0_6, %c0_7], %13 {strides = array<i32>} : memref<32x16xbf16, #tpu.memory_space<vmem>>, vector<32x16xbf16>,
    return
  }
  func.func @transform_0(%arg0: i32) -> (i32, i32) {
    %c0_i32 = arith.constant 0 : i32
    %c0_i32_0 = arith.constant 0 : i32
    return %arg0, %c0_i32 : i32, i32
  }
  func.func @transform_1(%arg0: i32) -> (i32, i32) {
    %c0_i32 = arith.constant 0 : i32
    %c0_i32_0 = arith.constant 0 : i32
    %c0_i32_1 = arith.constant 0 : i32
    return %c0_i32, %c0_i32_0 : i32, i32
  }
  func.func @transform_2(%arg0: i32) -> (i32, i32) {
    %c0_i32 = arith.constant 0 : i32
    %c0_i32_0 = arith.constant 0 : i32
    %c0_i32_1 = arith.constant 0 : i32
    return %c0_i32, %c0_i32_0 : i32, i32
  }
  func.func @transform_3(%arg0: i32) -> (i32, i32) {
    %c0_i32 = arith.constant 0 : i32
    %c0_i32_0 = arith.constant 0 : i32
    return %arg0, %c0_i32 : i32, i32
  }
}

module attributes {stable_mosaic.version = 11 : i64} {
  func.func @_convt_phase_kernel(%arg0: i32, %arg1: memref<1x9x9x8xbf16, #tpu.memory_space<vmem>>, %arg2: memref<4x8x32xbf16, #tpu.memory_space<vmem>>, %arg3: memref<1x32xf32, #tpu.memory_space<vmem>>, %arg4: memref<1x8x2x8x16xbf16, #tpu.memory_space<vmem>>, %arg5: memref<1x2x32xf32, #tpu.memory_space<vmem>>) attributes {dimension_semantics = [#tpu.dimension_semantics<parallel>], iteration_bounds = array<i64: 2>, scalar_prefetch = 0 : i64, scratch_operands = 0 : i64, tpu.core_type = #tpu.core_type<tc>, window_params = [{transform_indices = @transform_0, window_bounds = array<i64: 1, 9, 9, 8>}, {pipeline_mode = #tpu.pipeline_mode<synchronous>, transform_indices = @transform_1, window_bounds = array<i64: 4, 8, 32>}, {pipeline_mode = #tpu.pipeline_mode<synchronous>, transform_indices = @transform_2, window_bounds = array<i64: 1, 32>}, {transform_indices = @transform_3, window_bounds = array<i64: 1, 8, 2, 8, 16>}, {transform_indices = @transform_4, window_bounds = array<i64: 1, 2, 32>}]} {
    %c0 = arith.constant 0 : index
    %c0_0 = arith.constant 0 : index
    %c0_1 = arith.constant 0 : index
    %c0_2 = arith.constant 0 : index
    %0 = vector.load %arg1[%c0, %c0_0, %c0_1, %c0_2] : memref<1x9x9x8xbf16, #tpu.memory_space<vmem>>, vector<1x9x9x8xbf16>
    %1 = vector.shape_cast %0 : vector<1x9x9x8xbf16> to vector<9x9x8xbf16>
    %2 = vector.extract_strided_slice %1 {offsets = [0, 0, 0], sizes = [8, 8, 8], strides = [1, 1, 1]} : vector<9x9x8xbf16> to vector<8x8x8xbf16>
    %3 = vector.shape_cast %2 : vector<8x8x8xbf16> to vector<64x8xbf16>
    %c0_3 = arith.constant 0 : index
    %c0_4 = arith.constant 0 : index
    %c0_5 = arith.constant 0 : index
    %4 = vector.load %arg2[%c0_3, %c0_4, %c0_5] : memref<4x8x32xbf16, #tpu.memory_space<vmem>>, vector<1x8x32xbf16>
    %5 = vector.shape_cast %4 : vector<1x8x32xbf16> to vector<8x32xbf16>
    %cst = arith.constant dense<0.000000e+00> : vector<64x32xf32>
    %6 = tpu.matmul %3, %5, %cst {dimension_numbers = #tpu.dot_dimension_numbers<[1], [0], [0], [1], [0, 0, 1, 1], [], []>} : vector<64x8xbf16>, vector<8x32xbf16>, vector<64x32xf32> -> vector<64x32xf32>
    %7 = vector.extract_strided_slice %1 {offsets = [0, 1, 0], sizes = [8, 8, 8], strides = [1, 1, 1]} : vector<9x9x8xbf16> to vector<8x8x8xbf16>
    %8 = vector.shape_cast %7 : vector<8x8x8xbf16> to vector<64x8xbf16>
    %c1 = arith.constant 1 : index
    %c0_6 = arith.constant 0 : index
    %c0_7 = arith.constant 0 : index
    %9 = vector.load %arg2[%c1, %c0_6, %c0_7] : memref<4x8x32xbf16, #tpu.memory_space<vmem>>, vector<1x8x32xbf16>
    %10 = vector.shape_cast %9 : vector<1x8x32xbf16> to vector<8x32xbf16>
    %cst_8 = arith.constant dense<0.000000e+00> : vector<64x32xf32>
    %11 = tpu.matmul %8, %10, %cst_8 {dimension_numbers = #tpu.dot_dimension_numbers<[1], [0], [0], [1], [0, 0, 1, 1], [], []>} : vector<64x8xbf16>, vector<8x32xbf16>, vector<64x32xf32> -> vector<64x32xf32>
    %12 = arith.addf %6, %11 : vector<64x32xf32>
    %13 = vector.extract_strided_slice %1 {offsets = [1, 0, 0], sizes = [8, 8, 8], strides = [1, 1, 1]} : vector<9x9x8xbf16> to vector<8x8x8xbf16>
    %14 = vector.shape_cast %13 : vector<8x8x8xbf16> to vector<64x8xbf16>
    %c2 = arith.constant 2 : index
    %c0_9 = arith.constant 0 : index
    %c0_10 = arith.constant 0 : index
    %15 = vector.load %arg2[%c2, %c0_9, %c0_10] : memref<4x8x32xbf16, #tpu.memory_space<vmem>>, vector<1x8x32xbf16>
    %16 = vector.shape_cast %15 : vector<1x8x32xbf16> to vector<8x32xbf16>
    %cst_11 = arith.constant dense<0.000000e+00> : vector<64x32xf32>
    %17 = tpu.matmul %14, %16, %cst_11 {dimension_numbers = #tpu.dot_dimension_numbers<[1], [0], [0], [1], [0, 0, 1, 1], [], []>} : vector<64x8xbf16>, vector<8x32xbf16>, vector<64x32xf32> -> vector<64x32xf32>
    %18 = arith.addf %12, %17 : vector<64x32xf32>
    %19 = vector.extract_strided_slice %1 {offsets = [1, 1, 0], sizes = [8, 8, 8], strides = [1, 1, 1]} : vector<9x9x8xbf16> to vector<8x8x8xbf16>
    %20 = vector.shape_cast %19 : vector<8x8x8xbf16> to vector<64x8xbf16>
    %c3 = arith.constant 3 : index
    %c0_12 = arith.constant 0 : index
    %c0_13 = arith.constant 0 : index
    %21 = vector.load %arg2[%c3, %c0_12, %c0_13] : memref<4x8x32xbf16, #tpu.memory_space<vmem>>, vector<1x8x32xbf16>
    %22 = vector.shape_cast %21 : vector<1x8x32xbf16> to vector<8x32xbf16>
    %cst_14 = arith.constant dense<0.000000e+00> : vector<64x32xf32>
    %23 = tpu.matmul %20, %22, %cst_14 {dimension_numbers = #tpu.dot_dimension_numbers<[1], [0], [0], [1], [0, 0, 1, 1], [], []>} : vector<64x8xbf16>, vector<8x32xbf16>, vector<64x32xf32> -> vector<64x32xf32>
    %24 = arith.addf %18, %23 : vector<64x32xf32>
    %c0_15 = arith.constant 0 : index
    %c0_16 = arith.constant 0 : index
    %25 = vector.load %arg3[%c0_15, %c0_16] : memref<1x32xf32, #tpu.memory_space<vmem>>, vector<1x32xf32>
    %26 = vector.broadcast %25 : vector<1x32xf32> to vector<64x32xf32>
    %27 = arith.addf %24, %26 : vector<64x32xf32>
    %cst_17 = arith.constant dense<0.000000e+00> : vector<32xf32>
    %28 = vector.multi_reduction <add>, %27, %cst_17 [0] : vector<64x32xf32> to vector<32xf32>
    %29 = vector.shape_cast %28 : vector<32xf32> to vector<1x32xf32>
    %cst_18 = arith.constant 1.562500e-02 : f32
    %30 = vector.broadcast %cst_18 : f32 to vector<1x32xf32>
    %31 = arith.mulf %29, %30 : vector<1x32xf32>
    %32 = vector.broadcast %31 : vector<1x32xf32> to vector<64x32xf32>
    %33 = arith.subf %27, %32 : vector<64x32xf32>
    %34 = arith.mulf %33, %33 : vector<64x32xf32>
    %cst_19 = arith.constant dense<0.000000e+00> : vector<32xf32>
    %35 = vector.multi_reduction <add>, %34, %cst_19 [0] : vector<64x32xf32> to vector<32xf32>
    %36 = vector.shape_cast %35 : vector<32xf32> to vector<1x32xf32>
    %37 = tpu.concatenate %29, %36 in 0 : vector<1x32xf32>, vector<1x32xf32> -> vector<2x32xf32>
    %38 = vector.shape_cast %37 : vector<2x32xf32> to vector<1x2x32xf32>
    %c0_20 = arith.constant 0 : index
    %c0_21 = arith.constant 0 : index
    %c0_22 = arith.constant 0 : index
    %39 = vector.load %arg5[%c0_20, %c0_21, %c0_22] : memref<1x2x32xf32, #tpu.memory_space<vmem>>, vector<1x2x32xf32>
    tpu.vector_store %arg5[%c0_20, %c0_21, %c0_22], %38 {strides = array<i32>} : memref<1x2x32xf32, #tpu.memory_space<vmem>>, vector<1x2x32xf32>,
    %40 = arith.truncf %27 : vector<64x32xf32> to vector<64x32xbf16>
    %41 = vector.extract_strided_slice %40 {offsets = [0, 0], sizes = [64, 16], strides = [1, 1]} : vector<64x32xbf16> to vector<64x16xbf16>
    %42 = vector.shape_cast %41 : vector<64x16xbf16> to vector<8x8x16xbf16>
    %c0_23 = arith.constant 0 : index
    %c0_24 = arith.constant 0 : index
    %c0_25 = arith.constant 0 : index
    %c0_26 = arith.constant 0 : index
    %c0_27 = arith.constant 0 : index
    %43 = vector.load %arg4[%c0_23, %c0_24, %c0_25, %c0_26, %c0_27] : memref<1x8x2x8x16xbf16, #tpu.memory_space<vmem>>, vector<1x8x1x8x16xbf16>
    %44 = vector.shape_cast %43 : vector<1x8x1x8x16xbf16> to vector<8x8x16xbf16>
    %45 = vector.shape_cast %42 : vector<8x8x16xbf16> to vector<1x8x1x8x16xbf16>
    tpu.vector_store %arg4[%c0_23, %c0_24, %c0_25, %c0_26, %c0_27], %45 {strides = array<i32>} : memref<1x8x2x8x16xbf16, #tpu.memory_space<vmem>>, vector<1x8x1x8x16xbf16>,
    %46 = vector.extract_strided_slice %40 {offsets = [0, 16], sizes = [64, 16], strides = [1, 1]} : vector<64x32xbf16> to vector<64x16xbf16>
    %47 = vector.shape_cast %46 : vector<64x16xbf16> to vector<8x8x16xbf16>
    %c0_28 = arith.constant 0 : index
    %c0_29 = arith.constant 0 : index
    %c1_30 = arith.constant 1 : index
    %c0_31 = arith.constant 0 : index
    %c0_32 = arith.constant 0 : index
    %48 = vector.load %arg4[%c0_28, %c0_29, %c1_30, %c0_31, %c0_32] : memref<1x8x2x8x16xbf16, #tpu.memory_space<vmem>>, vector<1x8x1x8x16xbf16>
    %49 = vector.shape_cast %48 : vector<1x8x1x8x16xbf16> to vector<8x8x16xbf16>
    %50 = vector.shape_cast %47 : vector<8x8x16xbf16> to vector<1x8x1x8x16xbf16>
    tpu.vector_store %arg4[%c0_28, %c0_29, %c1_30, %c0_31, %c0_32], %50 {strides = array<i32>} : memref<1x8x2x8x16xbf16, #tpu.memory_space<vmem>>, vector<1x8x1x8x16xbf16>,
    return
  }
  func.func @transform_0(%arg0: i32) -> (i32, i32, i32, i32) {
    %c0_i32 = arith.constant 0 : i32
    %c0_i32_0 = arith.constant 0 : i32
    %c0_i32_1 = arith.constant 0 : i32
    %c0_i32_2 = arith.constant 0 : i32
    return %arg0, %c0_i32, %c0_i32_0, %c0_i32_1 : i32, i32, i32, i32
  }
  func.func @transform_1(%arg0: i32) -> (i32, i32, i32) {
    %c0_i32 = arith.constant 0 : i32
    %c0_i32_0 = arith.constant 0 : i32
    %c0_i32_1 = arith.constant 0 : i32
    %c0_i32_2 = arith.constant 0 : i32
    return %c0_i32, %c0_i32_0, %c0_i32_1 : i32, i32, i32
  }
  func.func @transform_2(%arg0: i32) -> (i32, i32) {
    %c0_i32 = arith.constant 0 : i32
    %c0_i32_0 = arith.constant 0 : i32
    %c0_i32_1 = arith.constant 0 : i32
    return %c0_i32, %c0_i32_0 : i32, i32
  }
  func.func @transform_3(%arg0: i32) -> (i32, i32, i32, i32, i32) {
    %c0_i32 = arith.constant 0 : i32
    %c0_i32_0 = arith.constant 0 : i32
    %c0_i32_1 = arith.constant 0 : i32
    %c0_i32_2 = arith.constant 0 : i32
    %c0_i32_3 = arith.constant 0 : i32
    return %arg0, %c0_i32, %c0_i32_0, %c0_i32_1, %c0_i32_2 : i32, i32, i32, i32, i32
  }
  func.func @transform_4(%arg0: i32) -> (i32, i32, i32) {
    %c0_i32 = arith.constant 0 : i32
    %c0_i32_0 = arith.constant 0 : i32
    %c0_i32_1 = arith.constant 0 : i32
    return %arg0, %c0_i32, %c0_i32_0 : i32, i32, i32
  }
}

module attributes {stable_mosaic.version = 11 : i64} {
  func.func @_scale_shift_lrelu_kernel(%arg0: i32, %arg1: memref<128x16xbf16, #tpu.memory_space<vmem>>, %arg2: memref<1x16xf32, #tpu.memory_space<vmem>>, %arg3: memref<1x16xf32, #tpu.memory_space<vmem>>, %arg4: memref<128x16xbf16, #tpu.memory_space<vmem>>) attributes {dimension_semantics = [#tpu.dimension_semantics<parallel>], iteration_bounds = array<i64: 2>, scalar_prefetch = 0 : i64, scratch_operands = 0 : i64, tpu.core_type = #tpu.core_type<tc>, window_params = [{transform_indices = @transform_0, window_bounds = array<i64: 128, 16>}, {pipeline_mode = #tpu.pipeline_mode<synchronous>, transform_indices = @transform_1, window_bounds = array<i64: 1, 16>}, {pipeline_mode = #tpu.pipeline_mode<synchronous>, transform_indices = @transform_2, window_bounds = array<i64: 1, 16>}, {transform_indices = @transform_3, window_bounds = array<i64: 128, 16>}]} {
    %c0 = arith.constant 0 : index
    %c0_0 = arith.constant 0 : index
    %0 = vector.load %arg1[%c0, %c0_0] : memref<128x16xbf16, #tpu.memory_space<vmem>>, vector<128x16xbf16>
    %1 = arith.extf %0 : vector<128x16xbf16> to vector<128x16xf32>
    %c0_1 = arith.constant 0 : index
    %c0_2 = arith.constant 0 : index
    %2 = vector.load %arg2[%c0_1, %c0_2] : memref<1x16xf32, #tpu.memory_space<vmem>>, vector<1x16xf32>
    %3 = vector.broadcast %2 : vector<1x16xf32> to vector<128x16xf32>
    %4 = arith.mulf %1, %3 : vector<128x16xf32>
    %c0_3 = arith.constant 0 : index
    %c0_4 = arith.constant 0 : index
    %5 = vector.load %arg3[%c0_3, %c0_4] : memref<1x16xf32, #tpu.memory_space<vmem>>, vector<1x16xf32>
    %6 = vector.broadcast %5 : vector<1x16xf32> to vector<128x16xf32>
    %7 = arith.addf %4, %6 : vector<128x16xf32>
    %cst = arith.constant 0.000000e+00 : f32
    %8 = vector.broadcast %cst : f32 to vector<128x16xf32>
    %9 = arith.cmpf oge, %7, %8 : vector<128x16xf32>
    %cst_5 = arith.constant 0.00999999977 : f32
    %10 = vector.broadcast %cst_5 : f32 to vector<128x16xf32>
    %11 = arith.mulf %10, %7 : vector<128x16xf32>
    %12 = arith.select %9, %7, %11 : vector<128x16xi1>, vector<128x16xf32>
    %13 = arith.truncf %12 : vector<128x16xf32> to vector<128x16xbf16>
    %c0_6 = arith.constant 0 : index
    %c0_7 = arith.constant 0 : index
    %14 = vector.load %arg4[%c0_6, %c0_7] : memref<128x16xbf16, #tpu.memory_space<vmem>>, vector<128x16xbf16>
    tpu.vector_store %arg4[%c0_6, %c0_7], %13 {strides = array<i32>} : memref<128x16xbf16, #tpu.memory_space<vmem>>, vector<128x16xbf16>,
    return
  }
  func.func @transform_0(%arg0: i32) -> (i32, i32) {
    %c0_i32 = arith.constant 0 : i32
    %c0_i32_0 = arith.constant 0 : i32
    return %arg0, %c0_i32 : i32, i32
  }
  func.func @transform_1(%arg0: i32) -> (i32, i32) {
    %c0_i32 = arith.constant 0 : i32
    %c0_i32_0 = arith.constant 0 : i32
    %c0_i32_1 = arith.constant 0 : i32
    return %c0_i32, %c0_i32_0 : i32, i32
  }
  func.func @transform_2(%arg0: i32) -> (i32, i32) {
    %c0_i32 = arith.constant 0 : i32
    %c0_i32_0 = arith.constant 0 : i32
    %c0_i32_1 = arith.constant 0 : i32
    return %c0_i32, %c0_i32_0 : i32, i32
  }
  func.func @transform_3(%arg0: i32) -> (i32, i32) {
    %c0_i32 = arith.constant 0 : i32
    %c0_i32_0 = arith.constant 0 : i32
    return %arg0, %c0_i32 : i32, i32
  }
}

module attributes {stable_mosaic.version = 11 : i64} {
  func.func @_final_conv_kernel(%arg0: i32, %arg1: memref<1x18x18x8xbf16, #tpu.memory_space<vmem>>, %arg2: memref<3x3x8x3xbf16, #tpu.memory_space<vmem>>, %arg3: memref<1x3xf32, #tpu.memory_space<vmem>>, %arg4: memref<1x16x16x3xf32, #tpu.memory_space<vmem>>) attributes {dimension_semantics = [#tpu.dimension_semantics<parallel>], iteration_bounds = array<i64: 2>, scalar_prefetch = 0 : i64, scratch_operands = 0 : i64, tpu.core_type = #tpu.core_type<tc>, window_params = [{transform_indices = @transform_0, window_bounds = array<i64: 1, 18, 18, 8>}, {pipeline_mode = #tpu.pipeline_mode<synchronous>, transform_indices = @transform_1, window_bounds = array<i64: 3, 3, 8, 3>}, {pipeline_mode = #tpu.pipeline_mode<synchronous>, transform_indices = @transform_2, window_bounds = array<i64: 1, 3>}, {transform_indices = @transform_3, window_bounds = array<i64: 1, 16, 16, 3>}]} {
    %c0 = arith.constant 0 : index
    %c0_0 = arith.constant 0 : index
    %c0_1 = arith.constant 0 : index
    %c0_2 = arith.constant 0 : index
    %0 = vector.load %arg1[%c0, %c0_0, %c0_1, %c0_2] : memref<1x18x18x8xbf16, #tpu.memory_space<vmem>>, vector<1x18x18x8xbf16>
    %1 = vector.shape_cast %0 : vector<1x18x18x8xbf16> to vector<18x18x8xbf16>
    %cst = arith.constant 0.000000e+00 : f32
    %2 = vector.broadcast %cst : f32 to vector<256x3xf32>
    %3 = vector.extract_strided_slice %1 {offsets = [0, 0, 0], sizes = [16, 16, 8], strides = [1, 1, 1]} : vector<18x18x8xbf16> to vector<16x16x8xbf16>
    %4 = vector.shape_cast %3 : vector<16x16x8xbf16> to vector<256x8xbf16>
    %c0_3 = arith.constant 0 : index
    %c0_4 = arith.constant 0 : index
    %c0_5 = arith.constant 0 : index
    %c0_6 = arith.constant 0 : index
    %5 = vector.load %arg2[%c0_3, %c0_4, %c0_5, %c0_6] : memref<3x3x8x3xbf16, #tpu.memory_space<vmem>>, vector<1x1x8x3xbf16>
    %6 = vector.shape_cast %5 : vector<1x1x8x3xbf16> to vector<8x3xbf16>
    %cst_7 = arith.constant dense<0.000000e+00> : vector<256x3xf32>
    %7 = tpu.matmul %4, %6, %cst_7 {dimension_numbers = #tpu.dot_dimension_numbers<[1], [0], [0], [1], [0, 0, 1, 1], [], []>} : vector<256x8xbf16>, vector<8x3xbf16>, vector<256x3xf32> -> vector<256x3xf32>
    %8 = arith.addf %2, %7 : vector<256x3xf32>
    %9 = vector.extract_strided_slice %1 {offsets = [0, 1, 0], sizes = [16, 16, 8], strides = [1, 1, 1]} : vector<18x18x8xbf16> to vector<16x16x8xbf16>
    %10 = vector.shape_cast %9 : vector<16x16x8xbf16> to vector<256x8xbf16>
    %c0_8 = arith.constant 0 : index
    %c1 = arith.constant 1 : index
    %c0_9 = arith.constant 0 : index
    %c0_10 = arith.constant 0 : index
    %11 = vector.load %arg2[%c0_8, %c1, %c0_9, %c0_10] : memref<3x3x8x3xbf16, #tpu.memory_space<vmem>>, vector<1x1x8x3xbf16>
    %12 = vector.shape_cast %11 : vector<1x1x8x3xbf16> to vector<8x3xbf16>
    %cst_11 = arith.constant dense<0.000000e+00> : vector<256x3xf32>
    %13 = tpu.matmul %10, %12, %cst_11 {dimension_numbers = #tpu.dot_dimension_numbers<[1], [0], [0], [1], [0, 0, 1, 1], [], []>} : vector<256x8xbf16>, vector<8x3xbf16>, vector<256x3xf32> -> vector<256x3xf32>
    %14 = arith.addf %8, %13 : vector<256x3xf32>
    %15 = vector.extract_strided_slice %1 {offsets = [0, 2, 0], sizes = [16, 16, 8], strides = [1, 1, 1]} : vector<18x18x8xbf16> to vector<16x16x8xbf16>
    %16 = vector.shape_cast %15 : vector<16x16x8xbf16> to vector<256x8xbf16>
    %c0_12 = arith.constant 0 : index
    %c2 = arith.constant 2 : index
    %c0_13 = arith.constant 0 : index
    %c0_14 = arith.constant 0 : index
    %17 = vector.load %arg2[%c0_12, %c2, %c0_13, %c0_14] : memref<3x3x8x3xbf16, #tpu.memory_space<vmem>>, vector<1x1x8x3xbf16>
    %18 = vector.shape_cast %17 : vector<1x1x8x3xbf16> to vector<8x3xbf16>
    %cst_15 = arith.constant dense<0.000000e+00> : vector<256x3xf32>
    %19 = tpu.matmul %16, %18, %cst_15 {dimension_numbers = #tpu.dot_dimension_numbers<[1], [0], [0], [1], [0, 0, 1, 1], [], []>} : vector<256x8xbf16>, vector<8x3xbf16>, vector<256x3xf32> -> vector<256x3xf32>
    %20 = arith.addf %14, %19 : vector<256x3xf32>
    %21 = vector.extract_strided_slice %1 {offsets = [1, 0, 0], sizes = [16, 16, 8], strides = [1, 1, 1]} : vector<18x18x8xbf16> to vector<16x16x8xbf16>
    %22 = vector.shape_cast %21 : vector<16x16x8xbf16> to vector<256x8xbf16>
    %c1_16 = arith.constant 1 : index
    %c0_17 = arith.constant 0 : index
    %c0_18 = arith.constant 0 : index
    %c0_19 = arith.constant 0 : index
    %23 = vector.load %arg2[%c1_16, %c0_17, %c0_18, %c0_19] : memref<3x3x8x3xbf16, #tpu.memory_space<vmem>>, vector<1x1x8x3xbf16>
    %24 = vector.shape_cast %23 : vector<1x1x8x3xbf16> to vector<8x3xbf16>
    %cst_20 = arith.constant dense<0.000000e+00> : vector<256x3xf32>
    %25 = tpu.matmul %22, %24, %cst_20 {dimension_numbers = #tpu.dot_dimension_numbers<[1], [0], [0], [1], [0, 0, 1, 1], [], []>} : vector<256x8xbf16>, vector<8x3xbf16>, vector<256x3xf32> -> vector<256x3xf32>
    %26 = arith.addf %20, %25 : vector<256x3xf32>
    %27 = vector.extract_strided_slice %1 {offsets = [1, 1, 0], sizes = [16, 16, 8], strides = [1, 1, 1]} : vector<18x18x8xbf16> to vector<16x16x8xbf16>
    %28 = vector.shape_cast %27 : vector<16x16x8xbf16> to vector<256x8xbf16>
    %c1_21 = arith.constant 1 : index
    %c1_22 = arith.constant 1 : index
    %c0_23 = arith.constant 0 : index
    %c0_24 = arith.constant 0 : index
    %29 = vector.load %arg2[%c1_21, %c1_22, %c0_23, %c0_24] : memref<3x3x8x3xbf16, #tpu.memory_space<vmem>>, vector<1x1x8x3xbf16>
    %30 = vector.shape_cast %29 : vector<1x1x8x3xbf16> to vector<8x3xbf16>
    %cst_25 = arith.constant dense<0.000000e+00> : vector<256x3xf32>
    %31 = tpu.matmul %28, %30, %cst_25 {dimension_numbers = #tpu.dot_dimension_numbers<[1], [0], [0], [1], [0, 0, 1, 1], [], []>} : vector<256x8xbf16>, vector<8x3xbf16>, vector<256x3xf32> -> vector<256x3xf32>
    %32 = arith.addf %26, %31 : vector<256x3xf32>
    %33 = vector.extract_strided_slice %1 {offsets = [1, 2, 0], sizes = [16, 16, 8], strides = [1, 1, 1]} : vector<18x18x8xbf16> to vector<16x16x8xbf16>
    %34 = vector.shape_cast %33 : vector<16x16x8xbf16> to vector<256x8xbf16>
    %c1_26 = arith.constant 1 : index
    %c2_27 = arith.constant 2 : index
    %c0_28 = arith.constant 0 : index
    %c0_29 = arith.constant 0 : index
    %35 = vector.load %arg2[%c1_26, %c2_27, %c0_28, %c0_29] : memref<3x3x8x3xbf16, #tpu.memory_space<vmem>>, vector<1x1x8x3xbf16>
    %36 = vector.shape_cast %35 : vector<1x1x8x3xbf16> to vector<8x3xbf16>
    %cst_30 = arith.constant dense<0.000000e+00> : vector<256x3xf32>
    %37 = tpu.matmul %34, %36, %cst_30 {dimension_numbers = #tpu.dot_dimension_numbers<[1], [0], [0], [1], [0, 0, 1, 1], [], []>} : vector<256x8xbf16>, vector<8x3xbf16>, vector<256x3xf32> -> vector<256x3xf32>
    %38 = arith.addf %32, %37 : vector<256x3xf32>
    %39 = vector.extract_strided_slice %1 {offsets = [2, 0, 0], sizes = [16, 16, 8], strides = [1, 1, 1]} : vector<18x18x8xbf16> to vector<16x16x8xbf16>
    %40 = vector.shape_cast %39 : vector<16x16x8xbf16> to vector<256x8xbf16>
    %c2_31 = arith.constant 2 : index
    %c0_32 = arith.constant 0 : index
    %c0_33 = arith.constant 0 : index
    %c0_34 = arith.constant 0 : index
    %41 = vector.load %arg2[%c2_31, %c0_32, %c0_33, %c0_34] : memref<3x3x8x3xbf16, #tpu.memory_space<vmem>>, vector<1x1x8x3xbf16>
    %42 = vector.shape_cast %41 : vector<1x1x8x3xbf16> to vector<8x3xbf16>
    %cst_35 = arith.constant dense<0.000000e+00> : vector<256x3xf32>
    %43 = tpu.matmul %40, %42, %cst_35 {dimension_numbers = #tpu.dot_dimension_numbers<[1], [0], [0], [1], [0, 0, 1, 1], [], []>} : vector<256x8xbf16>, vector<8x3xbf16>, vector<256x3xf32> -> vector<256x3xf32>
    %44 = arith.addf %38, %43 : vector<256x3xf32>
    %45 = vector.extract_strided_slice %1 {offsets = [2, 1, 0], sizes = [16, 16, 8], strides = [1, 1, 1]} : vector<18x18x8xbf16> to vector<16x16x8xbf16>
    %46 = vector.shape_cast %45 : vector<16x16x8xbf16> to vector<256x8xbf16>
    %c2_36 = arith.constant 2 : index
    %c1_37 = arith.constant 1 : index
    %c0_38 = arith.constant 0 : index
    %c0_39 = arith.constant 0 : index
    %47 = vector.load %arg2[%c2_36, %c1_37, %c0_38, %c0_39] : memref<3x3x8x3xbf16, #tpu.memory_space<vmem>>, vector<1x1x8x3xbf16>
    %48 = vector.shape_cast %47 : vector<1x1x8x3xbf16> to vector<8x3xbf16>
    %cst_40 = arith.constant dense<0.000000e+00> : vector<256x3xf32>
    %49 = tpu.matmul %46, %48, %cst_40 {dimension_numbers = #tpu.dot_dimension_numbers<[1], [0], [0], [1], [0, 0, 1, 1], [], []>} : vector<256x8xbf16>, vector<8x3xbf16>, vector<256x3xf32> -> vector<256x3xf32>
    %50 = arith.addf %44, %49 : vector<256x3xf32>
    %51 = vector.extract_strided_slice %1 {offsets = [2, 2, 0], sizes = [16, 16, 8], strides = [1, 1, 1]} : vector<18x18x8xbf16> to vector<16x16x8xbf16>
    %52 = vector.shape_cast %51 : vector<16x16x8xbf16> to vector<256x8xbf16>
    %c2_41 = arith.constant 2 : index
    %c2_42 = arith.constant 2 : index
    %c0_43 = arith.constant 0 : index
    %c0_44 = arith.constant 0 : index
    %53 = vector.load %arg2[%c2_41, %c2_42, %c0_43, %c0_44] : memref<3x3x8x3xbf16, #tpu.memory_space<vmem>>, vector<1x1x8x3xbf16>
    %54 = vector.shape_cast %53 : vector<1x1x8x3xbf16> to vector<8x3xbf16>
    %cst_45 = arith.constant dense<0.000000e+00> : vector<256x3xf32>
    %55 = tpu.matmul %52, %54, %cst_45 {dimension_numbers = #tpu.dot_dimension_numbers<[1], [0], [0], [1], [0, 0, 1, 1], [], []>} : vector<256x8xbf16>, vector<8x3xbf16>, vector<256x3xf32> -> vector<256x3xf32>
    %56 = arith.addf %50, %55 : vector<256x3xf32>
    %c0_46 = arith.constant 0 : index
    %c0_47 = arith.constant 0 : index
    %57 = vector.load %arg3[%c0_46, %c0_47] : memref<1x3xf32, #tpu.memory_space<vmem>>, vector<1x3xf32>
    %58 = vector.broadcast %57 : vector<1x3xf32> to vector<256x3xf32>
    %59 = arith.addf %56, %58 : vector<256x3xf32>
    %60 = math.tanh %59 : vector<256x3xf32>
    %61 = vector.shape_cast %60 : vector<256x3xf32> to vector<16x16x3xf32>
    %c0_48 = arith.constant 0 : index
    %c0_49 = arith.constant 0 : index
    %c0_50 = arith.constant 0 : index
    %c0_51 = arith.constant 0 : index
    %62 = vector.load %arg4[%c0_48, %c0_49, %c0_50, %c0_51] : memref<1x16x16x3xf32, #tpu.memory_space<vmem>>, vector<1x16x16x3xf32>
    %63 = vector.shape_cast %62 : vector<1x16x16x3xf32> to vector<16x16x3xf32>
    %64 = vector.shape_cast %61 : vector<16x16x3xf32> to vector<1x16x16x3xf32>
    tpu.vector_store %arg4[%c0_48, %c0_49, %c0_50, %c0_51], %64 {strides = array<i32>} : memref<1x16x16x3xf32, #tpu.memory_space<vmem>>, vector<1x16x16x3xf32>,
    return
  }
  func.func @transform_0(%arg0: i32) -> (i32, i32, i32, i32) {
    %c0_i32 = arith.constant 0 : i32
    %c0_i32_0 = arith.constant 0 : i32
    %c0_i32_1 = arith.constant 0 : i32
    %c0_i32_2 = arith.constant 0 : i32
    return %arg0, %c0_i32, %c0_i32_0, %c0_i32_1 : i32, i32, i32, i32
  }
  func.func @transform_1(%arg0: i32) -> (i32, i32, i32, i32) {
    %c0_i32 = arith.constant 0 : i32
    %c0_i32_0 = arith.constant 0 : i32
    %c0_i32_1 = arith.constant 0 : i32
    %c0_i32_2 = arith.constant 0 : i32
    %c0_i32_3 = arith.constant 0 : i32
    return %c0_i32, %c0_i32_0, %c0_i32_1, %c0_i32_2 : i32, i32, i32, i32
  }
  func.func @transform_2(%arg0: i32) -> (i32, i32) {
    %c0_i32 = arith.constant 0 : i32
    %c0_i32_0 = arith.constant 0 : i32
    %c0_i32_1 = arith.constant 0 : i32
    return %c0_i32, %c0_i32_0 : i32, i32
  }
  func.func @transform_3(%arg0: i32) -> (i32, i32, i32, i32) {
    %c0_i32 = arith.constant 0 : i32
    %c0_i32_0 = arith.constant 0 : i32
    %c0_i32_1 = arith.constant 0 : i32
    %c0_i32_2 = arith.constant 0 : i32
    return %arg0, %c0_i32, %c0_i32_0, %c0_i32_1 : i32, i32, i32, i32
  }
}

</mosaic_0001>

<llo_original>
// kernel: tpu_custom_call.1
$region0: #{tpu_custom_call.1}
  #allocation0 [shape = 'u32[]', space=smem, size = 0x4, offset = 0x4, fixed_abs, tag = 'smem constant byte address 0x4 - core index']
  #allocation1 [shape = 'u32[144,128]{1,0:T(1,128)}', space=vmem, size = 0x12000, scoped, tag = 'internal scratch']
  %s0 = inlined_call_operand.hbm [shape: f32[8,128], index: 0, kind: input, shape index: {}]
  %s1 = inlined_call_operand.hbm [shape: f32[16,128], index: 1, kind: output, shape index: {}]
  %s2 = sld [smem:[#allocation0]]
  $region41: #{tpu_custom_call.1} parent=0
    _
  %s4 = ssub.s32 1, %s2
  %s5 = scalar_select 0, %s4, %s2
  $region1: #{tpu_custom_call.1} parent=0
    #allocation2 [shape = 'u8[4096]{0}', space=vmem, size = 0x1000, scoped, tag = 'input window, operand 0, single buffered']
    #allocation3 [shape = 's32[2]{0}', space=sflag, size = 0x8, scoped, tag = 'scoped memory for tpu_custom_call.1']
    #allocation4 [shape = 's32[2]{0}', space=sflag, size = 0x8, scoped, tag = 'scoped memory for tpu_custom_call.1']
    #allocation5 [shape = 'u8[8192]{0}', space=vmem, size = 0x2000, scoped, tag = 'output window, operand 0']
    %6 = vsyncpa [#allocation3], 0
    %7 = vsyncpa [#allocation4], 0
    %s8 = scalar_lea.sflag [#allocation4], 1
    %9 = vsyncpa %s8, 0
    loop: start=0, step=1, limit=4
    $region2: #{tpu_custom_call.1} parent=1 // loop_pre_header
      _
    $region3: #{tpu_custom_call.1} parent=1 // loop_header
      %s11 = sphi 0, %s15
      %p12 = scmp.ge.s32.totalorder %s11, 4
      %s19 = sphi 0, %s19
      %s21 = sphi 0, %s19
      %s22 = sphi 0, %s21
      %s36 = sphi 0, %s22
      %s42 = sphi 0, %s44
      %s45 = sphi 0, %s42
      %s46 = sphi 0, %s45
      %s62 = sphi 0, %s46
    $region4: #{tpu_custom_call.1} parent=1 // loop_header_branch
      %14 = sbr.rel (%p12) target = $region8
    $region5: #{tpu_custom_call.1} parent=1 // loop_body
      %s16 = ssub.s32 %s11, 1
      %s17 = ssub.s32 %s11, 2
      %s18 = sadd.s32 %s11, 1
      %s20 = sadd.s32 %s19, 1
      %p23 = scmp.eq.s32.totalorder %s11, 1
      %p24 = scmp.ne.s32.totalorder %s19, %s21
      %p25 = scmp.eq.s32.totalorder %s11, 0
      %p26 = por %p24, %p25
      %p27 = scmp.ne.s32.totalorder %s19, %s21
      %p28 = scmp.eq.s32.totalorder %s16, 1
      %p29 = por %p27, %p28
      %p30 = scmp.ne.s32.totalorder %s21, %s22
      %p31 = scmp.eq.s32.totalorder %s16, 0
      %p32 = por %p30, %p31
      %p33 = scmp.ne.s32.totalorder %s21, %s22
      %p34 = scmp.eq.s32.totalorder %s17, 1
      %p35 = por %p33, %p34
      %p37 = scmp.ne.s32.totalorder %s22, %s36
      %p38 = scmp.eq.s32.totalorder %s17, 0
      %p39 = por %p37, %p38
      %s40 = ssub.s32 %s11, %s18
      %p41 = scmp.eq.s32.totalorder %s40, 0
      %s43 = sadd.s32 %s42, 1
      %s44 = scalar_select %p41, %s42, %s43
      %p47 = pneg %p41
      %p48 = scmp.eq.s32.totalorder %s11, 1
      %p49 = por %p47, %p48
      %p50 = scmp.ne.s32.totalorder %s42, %s45
      %p51 = scmp.eq.s32.totalorder %s11, 0
      %p52 = por %p50, %p51
      %p53 = scmp.ne.s32.totalorder %s42, %s45
      %p54 = scmp.eq.s32.totalorder %s16, 1
      %p55 = por %p53, %p54
      %p56 = scmp.ne.s32.totalorder %s45, %s46
      %p57 = scmp.eq.s32.totalorder %s16, 0
      %p58 = por %p56, %p57
      %p59 = scmp.ne.s32.totalorder %s45, %s46
      %p60 = scmp.eq.s32.totalorder %s17, 1
      %p61 = por %p59, %p60
      %p63 = scmp.ne.s32.totalorder %s46, %s62
      %p64 = scmp.eq.s32.totalorder %s17, 0
      %p65 = por %p63, %p64
      %p66 = scmp.le.s32.totalorder 1, %s11
      %p67 = scmp.lt.s32.totalorder %s11, 3
      %p68 = pnand %p66, %p67
      %p69 = pneg %p68
      // Predicated region
      $region9: #{tpu_custom_call.1} parent=5 // pred_check
        _
      $region10: #{tpu_custom_call.1} parent=5 // pred_check_branch
        %71 = sbr.rel (%p68) target = $region12
      $region11: #{tpu_custom_call.1} parent=5 // pred_region
        %s72 = ssub.s32 %s11, 1
        // Predicated region
        $region13: #{tpu_custom_call.1} parent=11 // pred_check
          %p73 = pneg %p32
        $region14: #{tpu_custom_call.1} parent=11 // pred_check_branch
          %75 = sbr.rel (%p73) target = $region16
        $region15: #{tpu_custom_call.1} parent=11 // pred_region
          %s77 = ssub.s32 128, 128
          %78 = vsyncadd [#allocation3], %s77
          %s80 = sshll.u32 [#allocation2], 4
          %s81 = int_to_ptr.vmem [resolvable:$true] %s80
          %83 = dma.hbm_to_vmem [thread:$0]  %s0, 128, %s81, [#allocation3]
        $region16: #{tpu_custom_call.1} parent=11 // pred_fallthru
          _
      $region12: #{tpu_custom_call.1} parent=5 // pred_fallthru
        _
      %p84 = scmp.lt.s32.totalorder %s11, 2
      // Predicated region
      $region17: #{tpu_custom_call.1} parent=5 // pred_check
        %p85 = pneg %p84
      $region18: #{tpu_custom_call.1} parent=5 // pred_check_branch
        %87 = sbr.rel (%p85) target = $region20
      $region19: #{tpu_custom_call.1} parent=5 // pred_region
        _
      $region20: #{tpu_custom_call.1} parent=5 // pred_fallthru
        _
      %p88 = scmp.le.s32.totalorder 1, %s11
      %p89 = scmp.lt.s32.totalorder %s11, 3
      %p90 = pnand %p88, %p89
      %p91 = pneg %p90
      // Predicated region
      $region21: #{tpu_custom_call.1} parent=5 // pred_check
        _
      $region22: #{tpu_custom_call.1} parent=5 // pred_check_branch
        %93 = sbr.rel (%p90) target = $region24
      $region23: #{tpu_custom_call.1} parent=5 // pred_region
        %s94 = ssub.s32 %s11, 1
        // Predicated region
        $region25: #{tpu_custom_call.1} parent=23 // pred_check
          %p95 = pneg %p32
        $region26: #{tpu_custom_call.1} parent=23 // pred_check_branch
          %97 = sbr.rel (%p95) target = $region28
        $region27: #{tpu_custom_call.1} parent=23 // pred_region
          %98 = dma.done [#allocation3], 128
        $region28: #{tpu_custom_call.1} parent=23 // pred_fallthru
          _
        %p99 = pneg %p32
        %p100 = pneg %p29
        %p101 = pneg %p58
        %p102 = pneg %p55
        %s103 = sand.u32 %s45, 1
        %s104 = scalar_lea.sflag [#allocation4], %s103
        %s105 = sand.u32 %s45, 1
        %s106 = smul.addr %s105, 8
        %s107 = scalar_lea.vmem [#allocation5], %s106
        %v108 = vld [vmem:[#allocation2] sm:$0xff]
        %109 = vst [vmem:[%s107] sm:$0xff] %v108
        %s110 = sand.u32 %s45, 1
        %s111 = scalar_lea.sflag [#allocation4], %s110
        %s112 = sand.u32 %s45, 1
        %s113 = smul.addr %s112, 8
        %s114 = scalar_lea.vmem [#allocation5], %s113
        // Predicated region
        $region29: #{tpu_custom_call.1} parent=23 // pred_check
          %p115 = pneg %p55
        $region30: #{tpu_custom_call.1} parent=23 // pred_check_branch
          %117 = sbr.rel (%p115) target = $region32
        $region31: #{tpu_custom_call.1} parent=23 // pred_region
          %s119 = ssub.s32 128, 128
          %120 = vsyncadd %s111, %s119
          %s121 = smul.addr %s16, 128
          %s122 = scalar_lea.hbm %s1, %s121
          %s124 = sshll.u32 %s114, 4
          %s125 = int_to_ptr.vmem [resolvable:$true] %s124
          %127 = dma.vmem_to_hbm [thread:$0]  %s125, 128, %s122, %s111
        $region32: #{tpu_custom_call.1} parent=23 // pred_fallthru
          _
      $region24: #{tpu_custom_call.1} parent=5 // pred_fallthru
        _
      %p128 = scmp.le.s32.totalorder 2, %s11
      // Predicated region
      $region33: #{tpu_custom_call.1} parent=5 // pred_check
        %p129 = pneg %p128
      $region34: #{tpu_custom_call.1} parent=5 // pred_check_branch
        %131 = sbr.rel (%p129) target = $region36
      $region35: #{tpu_custom_call.1} parent=5 // pred_region
        %s132 = ssub.s32 %s11, 2
        // Predicated region
        $region37: #{tpu_custom_call.1} parent=35 // pred_check
          %p133 = pneg %p61
        $region38: #{tpu_custom_call.1} parent=35 // pred_check_branch
          %135 = sbr.rel (%p133) target = $region40
        $region39: #{tpu_custom_call.1} parent=35 // pred_region
          %s136 = sand.u32 %s46, 1
          %s137 = scalar_lea.sflag [#allocation4], %s136
          %s138 = sand.u32 %s46, 1
          %s139 = smul.addr %s138, 8
          %s140 = scalar_lea.vmem [#allocation5], %s139
          %141 = dma.done %s137, 128
        $region40: #{tpu_custom_call.1} parent=35 // pred_fallthru
          _
      $region36: #{tpu_custom_call.1} parent=5 // pred_fallthru
        _
    $region6: #{tpu_custom_call.1} parent=1 // loop_footer
      %s15 = sadd.s32 1, %s11
    $region7: #{tpu_custom_call.1} parent=1 // loop_footer_branch
      %10 = sbr.rel target = $region3
    $region8: #{tpu_custom_call.1} parent=1 // loop_exit
      _
    %142 = vsyncpa [#allocation3], 1
    %s143 = scalar_lea.sflag [#allocation3], 1
    %144 = vsyncpa %s143, 1
    %145 = vsyncpa [#allocation4], 1
    %s146 = scalar_lea.sflag [#allocation4], 1
    %147 = vsyncpa %s146, 1

// kernel: forward.18
$region0: #{forward.18}
  #allocation0 [shape = 'u32[]', space=smem, size = 0x4, offset = 0x4, fixed_abs, tag = 'smem constant byte address 0x4 - core index']
  #allocation1 [shape = 'u32[144,128]{1,0:T(1,128)}', space=vmem, size = 0x12000, scoped, tag = 'internal scratch']
  %s0 = inlined_call_operand.vmem [shape: bf16[128,27], index: 0, kind: input, shape index: {}]
  %s1 = inlined_call_operand.vmem [shape: bf16[27,8], index: 1, kind: input, shape index: {}]
  %s2 = inlined_call_operand.vmem [shape: f32[1,8], index: 2, kind: input, shape index: {}]
  %s3 = inlined_call_operand.vmem [shape: bf16[128,8], index: 3, kind: output, shape index: {0}]
  %s4 = inlined_call_operand.vmem [shape: f32[2,2,8], index: 4, kind: output, shape index: {1}]
  %5 = xla_tuple %s3, %s4
  %s6 = sld [smem:[#allocation0]]
  $region53: #{forward.18} parent=0
    _
  %s8 = ssub.s32 1, %s6
  %s9 = scalar_select 0, %s8, %s6
  loop: start=0, step=1, limit=4
  $region2: #{forward.18} parent=0 // loop_pre_header
    _
  $region3: #{forward.18} parent=0 // loop_header
    %s11 = sphi 0, %s15
    %p12 = scmp.ge.s32.totalorder %s11, 4
    %s21 = sphi 0, %s23
    %s24 = sphi 0, %s21
    %s25 = sphi 0, %s24
    %s41 = sphi 0, %s25
    %s45 = sphi 0, %s45
    %s47 = sphi 0, %s45
    %s48 = sphi 0, %s47
    %s62 = sphi 0, %s48
    %s66 = sphi 0, %s66
    %s68 = sphi 0, %s66
    %s69 = sphi 0, %s68
    %s83 = sphi 0, %s69
    %s89 = sphi 0, %s91
    %s92 = sphi 0, %s89
    %s93 = sphi 0, %s92
    %s109 = sphi 0, %s93
    %s115 = sphi 0, %s117
    %s118 = sphi 0, %s115
    %s119 = sphi 0, %s118
    %s135 = sphi 0, %s119
  $region4: #{forward.18} parent=0 // loop_header_branch
    %14 = sbr.rel (%p12) target = $region8
  $region5: #{forward.18} parent=0 // loop_body
    %s16 = ssub.s32 %s11, 1
    %s17 = ssub.s32 %s11, 2
    %s18 = sadd.s32 %s11, 1
    %s19 = ssub.s32 %s11, %s18
    %p20 = scmp.eq.s32.totalorder %s19, 0
    %s22 = sadd.s32 %s21, 1
    %s23 = scalar_select %p20, %s21, %s22
    %p26 = pneg %p20
    %p27 = scmp.eq.s32.totalorder %s11, 1
    %p28 = por %p26, %p27
    %p29 = scmp.ne.s32.totalorder %s21, %s24
    %p30 = scmp.eq.s32.totalorder %s11, 0
    %p31 = por %p29, %p30
    %p32 = scmp.ne.s32.totalorder %s21, %s24
    %p33 = scmp.eq.s32.totalorder %s16, 1
    %p34 = por %p32, %p33
    %p35 = scmp.ne.s32.totalorder %s24, %s25
    %p36 = scmp.eq.s32.totalorder %s16, 0
    %p37 = por %p35, %p36
    %p38 = scmp.ne.s32.totalorder %s24, %s25
    %p39 = scmp.eq.s32.totalorder %s17, 1
    %p40 = por %p38, %p39
    %p42 = scmp.ne.s32.totalorder %s25, %s41
    %p43 = scmp.eq.s32.totalorder %s17, 0
    %p44 = por %p42, %p43
    %s46 = sadd.s32 %s45, 1
    %p49 = scmp.eq.s32.totalorder %s11, 1
    %p50 = scmp.ne.s32.totalorder %s45, %s47
    %p51 = scmp.eq.s32.totalorder %s11, 0
    %p52 = por %p50, %p51
    %p53 = scmp.ne.s32.totalorder %s45, %s47
    %p54 = scmp.eq.s32.totalorder %s16, 1
    %p55 = por %p53, %p54
    %p56 = scmp.ne.s32.totalorder %s47, %s48
    %p57 = scmp.eq.s32.totalorder %s16, 0
    %p58 = por %p56, %p57
    %p59 = scmp.ne.s32.totalorder %s47, %s48
    %p60 = scmp.eq.s32.totalorder %s17, 1
    %p61 = por %p59, %p60
    %p63 = scmp.ne.s32.totalorder %s48, %s62
    %p64 = scmp.eq.s32.totalorder %s17, 0
    %p65 = por %p63, %p64
    %s67 = sadd.s32 %s66, 1
    %p70 = scmp.eq.s32.totalorder %s11, 1
    %p71 = scmp.ne.s32.totalorder %s66, %s68
    %p72 = scmp.eq.s32.totalorder %s11, 0
    %p73 = por %p71, %p72
    %p74 = scmp.ne.s32.totalorder %s66, %s68
    %p75 = scmp.eq.s32.totalorder %s16, 1
    %p76 = por %p74, %p75
    %p77 = scmp.ne.s32.totalorder %s68, %s69
    %p78 = scmp.eq.s32.totalorder %s16, 0
    %p79 = por %p77, %p78
    %p80 = scmp.ne.s32.totalorder %s68, %s69
    %p81 = scmp.eq.s32.totalorder %s17, 1
    %p82 = por %p80, %p81
    %p84 = scmp.ne.s32.totalorder %s69, %s83
    %p85 = scmp.eq.s32.totalorder %s17, 0
    %p86 = por %p84, %p85
    %s87 = ssub.s32 %s11, %s18
    %p88 = scmp.eq.s32.totalorder %s87, 0
    %s90 = sadd.s32 %s89, 1
    %s91 = scalar_select %p88, %s89, %s90
    %p94 = pneg %p88
    %p95 = scmp.eq.s32.totalorder %s11, 1
    %p96 = por %p94, %p95
    %p97 = scmp.ne.s32.totalorder %s89, %s92
    %p98 = scmp.eq.s32.totalorder %s11, 0
    %p99 = por %p97, %p98
    %p100 = scmp.ne.s32.totalorder %s89, %s92
    %p101 = scmp.eq.s32.totalorder %s16, 1
    %p102 = por %p100, %p101
    %p103 = scmp.ne.s32.totalorder %s92, %s93
    %p104 = scmp.eq.s32.totalorder %s16, 0
    %p105 = por %p103, %p104
    %p106 = scmp.ne.s32.totalorder %s92, %s93
    %p107 = scmp.eq.s32.totalorder %s17, 1
    %p108 = por %p106, %p107
    %p110 = scmp.ne.s32.totalorder %s93, %s109
    %p111 = scmp.eq.s32.totalorder %s17, 0
    %p112 = por %p110, %p111
    %s113 = ssub.s32 %s11, %s18
    %p114 = scmp.eq.s32.totalorder %s113, 0
    %s116 = sadd.s32 %s115, 1
    %s117 = scalar_select %p114, %s115, %s116
    %p120 = pneg %p114
    %p121 = scmp.eq.s32.totalorder %s11, 1
    %p122 = por %p120, %p121
    %p123 = scmp.ne.s32.totalorder %s115, %s118
    %p124 = scmp.eq.s32.totalorder %s11, 0
    %p125 = por %p123, %p124
    %p126 = scmp.ne.s32.totalorder %s115, %s118
    %p127 = scmp.eq.s32.totalorder %s16, 1
    %p128 = por %p126, %p127
    %p129 = scmp.ne.s32.totalorder %s118, %s119
    %p130 = scmp.eq.s32.totalorder %s16, 0
    %p131 = por %p129, %p130
    %p132 = scmp.ne.s32.totalorder %s118, %s119
    %p133 = scmp.eq.s32.totalorder %s17, 1
    %p134 = por %p132, %p133
    %p136 = scmp.ne.s32.totalorder %s119, %s135
    %p137 = scmp.eq.s32.totalorder %s17, 0
    %p138 = por %p136, %p137
    %p139 = scmp.le.s32.totalorder 1, %s11
    %p140 = scmp.lt.s32.totalorder %s11, 3
    %p141 = pnand %p139, %p140
    %p142 = pneg %p141
    // Predicated region
    $region9: #{forward.18} parent=5 // pred_check
      _
    $region10: #{forward.18} parent=5 // pred_check_branch
      %144 = sbr.rel (%p141) target = $region12
    $region11: #{forward.18} parent=5 // pred_region
      %s145 = ssub.s32 %s11, 1
      // Predicated region
      $region13: #{forward.18} parent=11 // pred_check
        %p146 = pneg %p58
      $region14: #{forward.18} parent=11 // pred_check_branch
        %148 = sbr.rel (%p146) target = $region16
      $region15: #{forward.18} parent=11 // pred_region
        _
      $region16: #{forward.18} parent=11 // pred_fallthru
        _
      // Predicated region
      $region17: #{forward.18} parent=11 // pred_check
        %p149 = pneg %p79
      $region18: #{forward.18} parent=11 // pred_check_branch
        %151 = sbr.rel (%p149) target = $region20
      $region19: #{forward.18} parent=11 // pred_region
        _
      $region20: #{forward.18} parent=11 // pred_fallthru
        _
    $region12: #{forward.18} parent=5 // pred_fallthru
      _
    %p152 = scmp.lt.s32.totalorder %s11, 2
    // Predicated region
    $region21: #{forward.18} parent=5 // pred_check
      %p153 = pneg %p152
    $region22: #{forward.18} parent=5 // pred_check_branch
      %155 = sbr.rel (%p153) target = $region24
    $region23: #{forward.18} parent=5 // pred_region
      // Predicated region
      $region25: #{forward.18} parent=23 // pred_check
        %p156 = pneg %p31
      $region26: #{forward.18} parent=23 // pred_check_branch
        %158 = sbr.rel (%p156) target = $region28
      $region27: #{forward.18} parent=23 // pred_region
        %s159 = smul.u32 8, %s11
        %p160 = scmp.lt.s32.totalorder %s159, 15
        %s161 = scalar_select %p160, %s159, 15
        %s162 = smul.addr %s161, 4
        %s163 = scalar_lea.vmem %s0, %s162
        %s164 = smul.u32 8, %s11
      $region28: #{forward.18} parent=23 // pred_fallthru
        _
    $region24: #{forward.18} parent=5 // pred_fallthru
      _
    %p165 = scmp.le.s32.totalorder 1, %s11
    %p166 = scmp.lt.s32.totalorder %s11, 3
    %p167 = pnand %p165, %p166
    %p168 = pneg %p167
    // Predicated region
    $region29: #{forward.18} parent=5 // pred_check
      _
    $region30: #{forward.18} parent=5 // pred_check_branch
      %170 = sbr.rel (%p167) target = $region32
    $region31: #{forward.18} parent=5 // pred_region
      %s171 = ssub.s32 %s11, 1
      %s172 = smul.u32 8, %s16
      %p173 = scmp.lt.s32.totalorder %s172, 15
      %s174 = scalar_select %p173, %s172, 15
      %s175 = smul.addr %s174, 4
      %s176 = scalar_lea.vmem %s0, %s175
      %p177 = pneg %p37
      %p178 = pneg %p34
      %p179 = pneg %p58
      %p180 = pneg %p55
      %p181 = pneg %p79
      %p182 = pneg %p76
      %p183 = pneg %p105
      %p184 = pneg %p102
      %s185 = smul.u32 8, %s16
      %p186 = scmp.lt.s32.totalorder %s185, 15
      %s187 = scalar_select %p186, %s185, 15
      %s188 = smul.addr %s187, 4
      %s189 = scalar_lea.vmem %s3, %s188
      %p190 = pneg %p131
      %p191 = pneg %p128
      %p192 = scmp.lt.s32.totalorder %s16, 1
      %s193 = scalar_select %p192, %s16, 1
      %s194 = smul.addr %s193, 2
      %s195 = scalar_lea.vmem %s4, %s194
      %s196 = smul.u32 8, %s16
      %p197 = scmp.lt.s32.totalorder %s196, 15
      %s198 = scalar_select %p197, %s196, 15
      %s199 = smul.addr %s198, 4
      %s200 = scalar_lea.vmem %s0, %s199
      %s201 = smul.u32 8, %s16
      %s202 = smul.u32 8, %s16
      %p203 = scmp.lt.s32.totalorder %s202, 15
      %s204 = scalar_select %p203, %s202, 15
      %s205 = smul.addr %s204, 4
      %s206 = scalar_lea.vmem %s3, %s205
      %s207 = smul.u32 8, %s16
      %p208 = scmp.lt.s32.totalorder %s16, 1
      %s209 = scalar_select %p208, %s16, 1
      %s210 = smul.addr %s209, 2
      %s211 = scalar_lea.vmem %s4, %s210
      %v213 = vld [vmem:[%s200] sm:$0xf]
      %v214 = vld [vmem:[%s200 + $0x4] sm:$0xf]
      %v215 = vld [vmem:[%s200 + $0x8] sm:$0xf]
      %v216 = vld [vmem:[%s200 + $0xc] sm:$0xf]
      %v217 = vld [vmem:[%s200 + $0x10] sm:$0xf]
      %v218 = vld [vmem:[%s200 + $0x14] sm:$0xf]
      %v219 = vld [vmem:[%s200 + $0x18] sm:$0xf]
      %v220 = vld [vmem:[%s200 + $0x1c] sm:$0xf]
      %v221 = vld [vmem:[%s1] sm:$0xf]
      %v222 = vld [vmem:[%s1 + $0x4] sm:$0xf]
      %v223 = vld [vmem:[%s1 + $0x8] sm:$0xf]
      %v224 = vld [vmem:[%s1 + $0xc] sm:$0x3]
      %v225 = vld [vmem:[%s2] sm:$0x1]
      %v227 = vlaneseq
      %v228 = vshrl.u32 %v227, 7
      %v229 = vsub.s32 0, %v228
      %v230 = vrot.slane %v225, %v229
      %v240 = vunpack.c.l.b16 %v213
      %v241 = vunpack.c.l.b16 %v214
      %v242 = vunpack.c.l.b16 %v215
      %v243 = vunpack.c.l.b16 %v216
      %v244 = vunpack.c.l.b16 %v217
      %v245 = vunpack.c.l.b16 %v218
      %v246 = vunpack.c.l.b16 %v219
      %v247 = vunpack.c.l.b16 %v220
      %v248 = vpack.c.b16 %v241, %v240
      %v249 = vpack.c.b16 %v243, %v242
      %v250 = vpack.c.b16 %v245, %v244
      %v251 = vpack.c.b16 %v247, %v246
      %v256 = vunpack.c.l.b16 %v221
      %v257 = vunpack.c.l.b16 %v222
      %v258 = vunpack.c.l.b16 %v223
      %v259 = vunpack.c.l.b16 %v224
      %v260 = vpack.c.b16 %v257, %v256
      %v261 = vpack.c.b16 %v259, %v258
      %vm263 = vcmask 220160
      %v265 = vsel %vm263, %v248, 0
      %v268 = vsel %vm263, %v249, 0
      %v271 = vsel %vm263, %v250, 0
      %v274 = vsel %vm263, %v251, 0
      %vm276 = vcmask 1044480
      %vm277 = vcmask 1045504
      %v278 = vsel %vm276, 4294967295, 65535
      %v279 = vsel %vm277, %v278, 0
      %v281 = vand.u32 %v261, %v279
      %283 = vmatprep.subr.bf16.mxu0 0
      %284 = vmatpush1.bf16.msra.mxu0 0
      %285 = vmatprep.subr.bf16.mxu0 0
      %286 = vmatpush1.bf16.msra.mxu0 0
      %287 = vmatprep.subr.bf16.mxu0 0
      %288 = vmatpush1.bf16.msra.mxu0 0
      %289 = vmatprep.subr.bf16.mxu0 0
      %290 = vmatpush1.bf16.msra.mxu0 0
      %291 = vmatprep.subr.bf16.mxu0 0
      %292 = vmatpush1.bf16.msra.mxu0 0
      %293 = vmatprep.subr.bf16.mxu0 0
      %294 = vmatpush1.bf16.msra.mxu0 0
      %295 = vmatprep.subr.bf16.mxu0 0
      %296 = vmatpush1.bf16.msra.mxu0 %v281
      %297 = vmatprep.subr.bf16.mxu0 0
      %298 = vmatpush1.bf16.msra.mxu0 %v260
      %299 = vmatprep.subr.bf16.mxu0 0
      %300 = vmatpush2.bf16.msra.mxu0 0
      %301 = vmatprep.subr.bf16.mxu0 0
      %302 = vmatpush2.bf16.msra.mxu0 0
      %303 = vmatprep.subr.bf16.mxu0 0
      %304 = vmatpush2.bf16.msra.mxu0 0
      %305 = vmatprep.subr.bf16.mxu0 0
      %306 = vmatpush2.bf16.msra.mxu0 0
      %307 = vmatprep.subr.bf16.mxu0 0
      %308 = vmatpush2.bf16.msra.mxu0 0
      %309 = vmatprep.subr.bf16.mxu0 0
      %310 = vmatpush2.bf16.msra.mxu0 0
      %311 = vmatprep.subr.bf16.mxu0 0
      %312 = vmatpush2.bf16.msra.mxu0 0
      %313 = vmatprep.subr.bf16.mxu0 0
      %314 = vmatpush2.bf16.msra.mxu0 0
      %315 = vmatprep.mubr.bf16.mxu0 0
      %316 = vmatmul.mubr.bf16.gmra.mxu0 %v265
      %v317 = vpop.f32.mrf.mxu0
      %v318 = vadd.f32 %v230, %v317
      %v319 = vpop.f32.mrf.mxu0
      %v320 = vpop.f32.mrf.mxu0
      %v321 = vadd.f32 %v230, %v320
      %v322 = vpop.f32.mrf.mxu0
      %323 = vmatprep.mubr.bf16.mxu0 0
      %324 = vmatmul.mubr.bf16.gmra.mxu0 %v268
      %v325 = vpop.f32.mrf.mxu0
      %v326 = vadd.f32 %v230, %v325
      %v327 = vpop.f32.mrf.mxu0
      %v328 = vpop.f32.mrf.mxu0
      %v329 = vadd.f32 %v230, %v328
      %v330 = vpop.f32.mrf.mxu0
      %331 = vmatprep.mubr.bf16.mxu0 0
      %332 = vmatmul.mubr.bf16.gmra.mxu0 %v271
      %v333 = vpop.f32.mrf.mxu0
      %v334 = vadd.f32 %v230, %v333
      %v335 = vpop.f32.mrf.mxu0
      %v336 = vpop.f32.mrf.mxu0
      %v337 = vadd.f32 %v230, %v336
      %v338 = vpop.f32.mrf.mxu0
      %339 = vmatprep.mubr.bf16.mxu0 0
      %340 = vmatmul.mubr.bf16.gmra.mxu0 %v274
      %v341 = vpop.f32.mrf.mxu0
      %v342 = vadd.f32 %v230, %v341
      %v343 = vpop.f32.mrf.mxu0
      %v344 = vpop.f32.mrf.mxu0
      %v345 = vadd.f32 %v230, %v344
      %v346 = vpop.f32.mrf.mxu0
      %347 = vdwg.mxu0
      %vm348 = vcmask 64512
      %v349 = vsel %vm348, %v318, 0.0
      %v350 = vsel %vm348, %v321, 0.0
      %v351 = vadd.f32 %v349, %v350
      %v352 = vsel %vm348, %v326, 0.0
      %v353 = vadd.f32 %v351, %v352
      %v354 = vsel %vm348, %v329, 0.0
      %v355 = vadd.f32 %v353, %v354
      %v356 = vsel %vm348, %v334, 0.0
      %v357 = vadd.f32 %v355, %v356
      %v358 = vsel %vm348, %v337, 0.0
      %v359 = vadd.f32 %v357, %v358
      %v360 = vsel %vm348, %v342, 0.0
      %v361 = vadd.f32 %v359, %v360
      %v362 = vsel %vm348, %v345, 0.0
      %v363 = vadd.f32 %v361, %v362
      %v364 = vrot.slane %v363, 4
      %v365 = vadd.f32 %v363, %v364
      %v366 = vrot.slane %v365, 2
      %v367 = vadd.f32 %v365, %v366
      %v368 = vrot.slane %v367, 1
      %v369 = vadd.f32 %v367, %v368
      %v370 = vmul.f32 %v369, 0.015625
      %v371 = vsub.f32 %v318, %v370
      %v372 = vsub.f32 %v321, %v370
      %v373 = vsub.f32 %v326, %v370
      %v374 = vsub.f32 %v329, %v370
      %v375 = vsub.f32 %v334, %v370
      %v376 = vsub.f32 %v337, %v370
      %v377 = vsub.f32 %v342, %v370
      %v378 = vsub.f32 %v345, %v370
      %v379 = vmul.f32 %v371, %v371
      %v380 = vmul.f32 %v372, %v372
      %v381 = vmul.f32 %v373, %v373
      %v382 = vmul.f32 %v374, %v374
      %v383 = vmul.f32 %v375, %v375
      %v384 = vmul.f32 %v376, %v376
      %v385 = vmul.f32 %v377, %v377
      %v386 = vmul.f32 %v378, %v378
      %v387 = vsel %vm348, %v379, 0.0
      %v388 = vsel %vm348, %v380, 0.0
      %v389 = vadd.f32 %v387, %v388
      %v390 = vsel %vm348, %v381, 0.0
      %v391 = vadd.f32 %v389, %v390
      %v392 = vsel %vm348, %v382, 0.0
      %v393 = vadd.f32 %v391, %v392
      %v394 = vsel %vm348, %v383, 0.0
      %v395 = vadd.f32 %v393, %v394
      %v396 = vsel %vm348, %v384, 0.0
      %v397 = vadd.f32 %v395, %v396
      %v398 = vsel %vm348, %v385, 0.0
      %v399 = vadd.f32 %v397, %v398
      %v400 = vsel %vm348, %v386, 0.0
      %v401 = vadd.f32 %v399, %v400
      %v402 = vrot.slane %v401, 4
      %v403 = vadd.f32 %v401, %v402
      %v404 = vrot.slane %v403, 2
      %v405 = vadd.f32 %v403, %v404
      %v406 = vrot.slane %v405, 1
      %v407 = vadd.f32 %v405, %v406
      %vm408 = vcmask 1040384
      %v409 = vsel %vm408, %v369, %v407
      %vm410 = vcmask 58368
      %411 = vst.msk [vmem:[%s211] sm:$0x3] %vm410, %v409
      %v412 = vpack.c.bf16 %v321, %v318
      %v413 = vpack.c.bf16 %v329, %v326
      %v414 = vpack.c.bf16 %v337, %v334
      %v415 = vpack.c.bf16 %v345, %v342
      %v420 = vunpack.c.l.b16 %v412
      %v421 = vunpack.c.h.b16 %v412
      %v422 = vunpack.c.l.b16 %v413
      %v423 = vunpack.c.h.b16 %v413
      %v424 = vunpack.c.l.b16 %v414
      %v425 = vunpack.c.h.b16 %v414
      %v426 = vunpack.c.l.b16 %v415
      %v427 = vunpack.c.h.b16 %v415
      %v428 = vpack.c.b16 %v420, %v420
      %v429 = vpack.c.b16 %v421, %v421
      %v430 = vpack.c.b16 %v422, %v422
      %v431 = vpack.c.b16 %v423, %v423
      %v432 = vpack.c.b16 %v424, %v424
      %v433 = vpack.c.b16 %v425, %v425
      %v434 = vpack.c.b16 %v426, %v426
      %v435 = vpack.c.b16 %v427, %v427
      %vm444 = vcmask 60416
      %445 = vst.msk [vmem:[%s206] sm:$0xf] %vm444, %v428
      %446 = vst.msk [vmem:[%s206 + $0x4] sm:$0xf] %vm444, %v429
      %447 = vst.msk [vmem:[%s206 + $0x8] sm:$0xf] %vm444, %v430
      %448 = vst.msk [vmem:[%s206 + $0xc] sm:$0xf] %vm444, %v431
      %449 = vst.msk [vmem:[%s206 + $0x10] sm:$0xf] %vm444, %v432
      %450 = vst.msk [vmem:[%s206 + $0x14] sm:$0xf] %vm444, %v433
      %451 = vst.msk [vmem:[%s206 + $0x18] sm:$0xf] %vm444, %v434
      %452 = vst.msk [vmem:[%s206 + $0x1c] sm:$0xf] %vm444, %v435
      %s453 = smul.u32 8, %s16
      %p454 = scmp.lt.s32.totalorder %s453, 15
      %s455 = scalar_select %p454, %s453, 15
      %s456 = smul.addr %s455, 4
      %s457 = scalar_lea.vmem %s3, %s456
      %p458 = scmp.lt.s32.totalorder %s16, 1
      %s459 = scalar_select %p458, %s16, 1
      %s460 = smul.addr %s459, 2
      %s461 = scalar_lea.vmem %s4, %s460
      // Predicated region
      $region33: #{forward.18} parent=31 // pred_check
        %p462 = pneg %p102
      $region34: #{forward.18} parent=31 // pred_check_branch
        %464 = sbr.rel (%p462) target = $region36
      $region35: #{forward.18} parent=31 // pred_region
        %s465 = smul.u32 8, %s16
      $region36: #{forward.18} parent=31 // pred_fallthru
        _
      // Predicated region
      $region37: #{forward.18} parent=31 // pred_check
        %p466 = pneg %p128
      $region38: #{forward.18} parent=31 // pred_check_branch
        %468 = sbr.rel (%p466) target = $region40
      $region39: #{forward.18} parent=31 // pred_region
        _
      $region40: #{forward.18} parent=31 // pred_fallthru
        _
    $region32: #{forward.18} parent=5 // pred_fallthru
      _
    %p469 = scmp.le.s32.totalorder 2, %s11
    // Predicated region
    $region41: #{forward.18} parent=5 // pred_check
      %p470 = pneg %p469
    $region42: #{forward.18} parent=5 // pred_check_branch
      %472 = sbr.rel (%p470) target = $region44
    $region43: #{forward.18} parent=5 // pred_region
      %s473 = ssub.s32 %s11, 2
      // Predicated region
      $region45: #{forward.18} parent=43 // pred_check
        %p474 = pneg %p108
      $region46: #{forward.18} parent=43 // pred_check_branch
        %476 = sbr.rel (%p474) target = $region48
      $region47: #{forward.18} parent=43 // pred_region
        %s477 = smul.u32 8, %s17
        %p478 = scmp.lt.s32.totalorder %s477, 15
        %s479 = scalar_select %p478, %s477, 15
        %s480 = smul.addr %s479, 4
        %s481 = scalar_lea.vmem %s3, %s480
      $region48: #{forward.18} parent=43 // pred_fallthru
        _
      // Predicated region
      $region49: #{forward.18} parent=43 // pred_check
        %p482 = pneg %p134
      $region50: #{forward.18} parent=43 // pred_check_branch
        %484 = sbr.rel (%p482) target = $region52
      $region51: #{forward.18} parent=43 // pred_region
        %p485 = scmp.lt.s32.totalorder %s17, 1
        %s486 = scalar_select %p485, %s17, 1
        %s487 = smul.addr %s486, 2
        %s488 = scalar_lea.vmem %s4, %s487
      $region52: #{forward.18} parent=43 // pred_fallthru
        _
    $region44: #{forward.18} parent=5 // pred_fallthru
      _
  $region6: #{forward.18} parent=0 // loop_footer
    %s15 = sadd.s32 1, %s11
  $region7: #{forward.18} parent=0 // loop_footer_branch
    %10 = sbr.rel target = $region3
  $region8: #{forward.18} parent=0 // loop_exit
    _

// kernel: forward.19
$region0: #{forward.19}
  #allocation0 [shape = 'u32[]', space=smem, size = 0x4, offset = 0x4, fixed_abs, tag = 'smem constant byte address 0x4 - core index']
  #allocation1 [shape = 'u32[144,128]{1,0:T(1,128)}', space=vmem, size = 0x12000, scoped, tag = 'internal scratch']
  %s0 = inlined_call_operand.vmem [shape: bf16[128,8], index: 0, kind: input, shape index: {}]
  %s1 = inlined_call_operand.vmem [shape: f32[1,8], index: 1, kind: input, shape index: {}]
  %s2 = inlined_call_operand.vmem [shape: f32[1,8], index: 2, kind: input, shape index: {}]
  %s3 = inlined_call_operand.vmem [shape: bf16[128,8], index: 3, kind: output, shape index: {}]
  %s4 = sld [smem:[#allocation0]]
  $region45: #{forward.19} parent=0
    _
  %s6 = ssub.s32 1, %s4
  %s7 = scalar_select 0, %s6, %s4
  loop: start=0, step=1, limit=4
  $region2: #{forward.19} parent=0 // loop_pre_header
    _
  $region3: #{forward.19} parent=0 // loop_header
    %s9 = sphi 0, %s13
    %p10 = scmp.ge.s32.totalorder %s9, 4
    %s19 = sphi 0, %s21
    %s22 = sphi 0, %s19
    %s23 = sphi 0, %s22
    %s39 = sphi 0, %s23
    %s43 = sphi 0, %s43
    %s45 = sphi 0, %s43
    %s46 = sphi 0, %s45
    %s60 = sphi 0, %s46
    %s64 = sphi 0, %s64
    %s66 = sphi 0, %s64
    %s67 = sphi 0, %s66
    %s81 = sphi 0, %s67
    %s87 = sphi 0, %s89
    %s90 = sphi 0, %s87
    %s91 = sphi 0, %s90
    %s107 = sphi 0, %s91
  $region4: #{forward.19} parent=0 // loop_header_branch
    %12 = sbr.rel (%p10) target = $region8
  $region5: #{forward.19} parent=0 // loop_body
    %s14 = ssub.s32 %s9, 1
    %s15 = ssub.s32 %s9, 2
    %s16 = sadd.s32 %s9, 1
    %s17 = ssub.s32 %s9, %s16
    %p18 = scmp.eq.s32.totalorder %s17, 0
    %s20 = sadd.s32 %s19, 1
    %s21 = scalar_select %p18, %s19, %s20
    %p24 = pneg %p18
    %p25 = scmp.eq.s32.totalorder %s9, 1
    %p26 = por %p24, %p25
    %p27 = scmp.ne.s32.totalorder %s19, %s22
    %p28 = scmp.eq.s32.totalorder %s9, 0
    %p29 = por %p27, %p28
    %p30 = scmp.ne.s32.totalorder %s19, %s22
    %p31 = scmp.eq.s32.totalorder %s14, 1
    %p32 = por %p30, %p31
    %p33 = scmp.ne.s32.totalorder %s22, %s23
    %p34 = scmp.eq.s32.totalorder %s14, 0
    %p35 = por %p33, %p34
    %p36 = scmp.ne.s32.totalorder %s22, %s23
    %p37 = scmp.eq.s32.totalorder %s15, 1
    %p38 = por %p36, %p37
    %p40 = scmp.ne.s32.totalorder %s23, %s39
    %p41 = scmp.eq.s32.totalorder %s15, 0
    %p42 = por %p40, %p41
    %s44 = sadd.s32 %s43, 1
    %p47 = scmp.eq.s32.totalorder %s9, 1
    %p48 = scmp.ne.s32.totalorder %s43, %s45
    %p49 = scmp.eq.s32.totalorder %s9, 0
    %p50 = por %p48, %p49
    %p51 = scmp.ne.s32.totalorder %s43, %s45
    %p52 = scmp.eq.s32.totalorder %s14, 1
    %p53 = por %p51, %p52
    %p54 = scmp.ne.s32.totalorder %s45, %s46
    %p55 = scmp.eq.s32.totalorder %s14, 0
    %p56 = por %p54, %p55
    %p57 = scmp.ne.s32.totalorder %s45, %s46
    %p58 = scmp.eq.s32.totalorder %s15, 1
    %p59 = por %p57, %p58
    %p61 = scmp.ne.s32.totalorder %s46, %s60
    %p62 = scmp.eq.s32.totalorder %s15, 0
    %p63 = por %p61, %p62
    %s65 = sadd.s32 %s64, 1
    %p68 = scmp.eq.s32.totalorder %s9, 1
    %p69 = scmp.ne.s32.totalorder %s64, %s66
    %p70 = scmp.eq.s32.totalorder %s9, 0
    %p71 = por %p69, %p70
    %p72 = scmp.ne.s32.totalorder %s64, %s66
    %p73 = scmp.eq.s32.totalorder %s14, 1
    %p74 = por %p72, %p73
    %p75 = scmp.ne.s32.totalorder %s66, %s67
    %p76 = scmp.eq.s32.totalorder %s14, 0
    %p77 = por %p75, %p76
    %p78 = scmp.ne.s32.totalorder %s66, %s67
    %p79 = scmp.eq.s32.totalorder %s15, 1
    %p80 = por %p78, %p79
    %p82 = scmp.ne.s32.totalorder %s67, %s81
    %p83 = scmp.eq.s32.totalorder %s15, 0
    %p84 = por %p82, %p83
    %s85 = ssub.s32 %s9, %s16
    %p86 = scmp.eq.s32.totalorder %s85, 0
    %s88 = sadd.s32 %s87, 1
    %s89 = scalar_select %p86, %s87, %s88
    %p92 = pneg %p86
    %p93 = scmp.eq.s32.totalorder %s9, 1
    %p94 = por %p92, %p93
    %p95 = scmp.ne.s32.totalorder %s87, %s90
    %p96 = scmp.eq.s32.totalorder %s9, 0
    %p97 = por %p95, %p96
    %p98 = scmp.ne.s32.totalorder %s87, %s90
    %p99 = scmp.eq.s32.totalorder %s14, 1
    %p100 = por %p98, %p99
    %p101 = scmp.ne.s32.totalorder %s90, %s91
    %p102 = scmp.eq.s32.totalorder %s14, 0
    %p103 = por %p101, %p102
    %p104 = scmp.ne.s32.totalorder %s90, %s91
    %p105 = scmp.eq.s32.totalorder %s15, 1
    %p106 = por %p104, %p105
    %p108 = scmp.ne.s32.totalorder %s91, %s107
    %p109 = scmp.eq.s32.totalorder %s15, 0
    %p110 = por %p108, %p109
    %p111 = scmp.le.s32.totalorder 1, %s9
    %p112 = scmp.lt.s32.totalorder %s9, 3
    %p113 = pnand %p111, %p112
    %p114 = pneg %p113
    // Predicated region
    $region9: #{forward.19} parent=5 // pred_check
      _
    $region10: #{forward.19} parent=5 // pred_check_branch
      %116 = sbr.rel (%p113) target = $region12
    $region11: #{forward.19} parent=5 // pred_region
      %s117 = ssub.s32 %s9, 1
      // Predicated region
      $region13: #{forward.19} parent=11 // pred_check
        %p118 = pneg %p56
      $region14: #{forward.19} parent=11 // pred_check_branch
        %120 = sbr.rel (%p118) target = $region16
      $region15: #{forward.19} parent=11 // pred_region
        _
      $region16: #{forward.19} parent=11 // pred_fallthru
        _
      // Predicated region
      $region17: #{forward.19} parent=11 // pred_check
        %p121 = pneg %p77
      $region18: #{forward.19} parent=11 // pred_check_branch
        %123 = sbr.rel (%p121) target = $region20
      $region19: #{forward.19} parent=11 // pred_region
        _
      $region20: #{forward.19} parent=11 // pred_fallthru
        _
    $region12: #{forward.19} parent=5 // pred_fallthru
      _
    %p124 = scmp.lt.s32.totalorder %s9, 2
    // Predicated region
    $region21: #{forward.19} parent=5 // pred_check
      %p125 = pneg %p124
    $region22: #{forward.19} parent=5 // pred_check_branch
      %127 = sbr.rel (%p125) target = $region24
    $region23: #{forward.19} parent=5 // pred_region
      // Predicated region
      $region25: #{forward.19} parent=23 // pred_check
        %p128 = pneg %p29
      $region26: #{forward.19} parent=23 // pred_check_branch
        %130 = sbr.rel (%p128) target = $region28
      $region27: #{forward.19} parent=23 // pred_region
        %s131 = smul.u32 8, %s9
        %p132 = scmp.lt.s32.totalorder %s131, 15
        %s133 = scalar_select %p132, %s131, 15
        %s134 = smul.addr %s133, 4
        %s135 = scalar_lea.vmem %s0, %s134
        %s136 = smul.u32 8, %s9
      $region28: #{forward.19} parent=23 // pred_fallthru
        _
    $region24: #{forward.19} parent=5 // pred_fallthru
      _
    %p137 = scmp.le.s32.totalorder 1, %s9
    %p138 = scmp.lt.s32.totalorder %s9, 3
    %p139 = pnand %p137, %p138
    %p140 = pneg %p139
    // Predicated region
    $region29: #{forward.19} parent=5 // pred_check
      _
    $region30: #{forward.19} parent=5 // pred_check_branch
      %142 = sbr.rel (%p139) target = $region32
    $region31: #{forward.19} parent=5 // pred_region
      %s143 = ssub.s32 %s9, 1
      %s144 = smul.u32 8, %s14
      %p145 = scmp.lt.s32.totalorder %s144, 15
      %s146 = scalar_select %p145, %s144, 15
      %s147 = smul.addr %s146, 4
      %s148 = scalar_lea.vmem %s0, %s147
      %p149 = pneg %p35
      %p150 = pneg %p32
      %p151 = pneg %p56
      %p152 = pneg %p53
      %p153 = pneg %p77
      %p154 = pneg %p74
      %p155 = pneg %p103
      %p156 = pneg %p100
      %s157 = smul.u32 8, %s14
      %p158 = scmp.lt.s32.totalorder %s157, 15
      %s159 = scalar_select %p158, %s157, 15
      %s160 = smul.addr %s159, 4
      %s161 = scalar_lea.vmem %s3, %s160
      %s162 = smul.u32 8, %s14
      %p163 = scmp.lt.s32.totalorder %s162, 15
      %s164 = scalar_select %p163, %s162, 15
      %s165 = smul.addr %s164, 4
      %s166 = scalar_lea.vmem %s0, %s165
      %s167 = smul.u32 8, %s14
      %s168 = smul.u32 8, %s14
      %p169 = scmp.lt.s32.totalorder %s168, 15
      %s170 = scalar_select %p169, %s168, 15
      %s171 = smul.addr %s170, 4
      %s172 = scalar_lea.vmem %s3, %s171
      %s173 = smul.u32 8, %s14
      %v174 = vld [vmem:[%s166] sm:$0xf]
      %v175 = vld [vmem:[%s166 + $0x4] sm:$0xf]
      %v176 = vld [vmem:[%s166 + $0x8] sm:$0xf]
      %v177 = vld [vmem:[%s166 + $0xc] sm:$0xf]
      %v178 = vld [vmem:[%s166 + $0x10] sm:$0xf]
      %v179 = vld [vmem:[%s166 + $0x14] sm:$0xf]
      %v180 = vld [vmem:[%s166 + $0x18] sm:$0xf]
      %v181 = vld [vmem:[%s166 + $0x1c] sm:$0xf]
      %v182 = vunpack.c.l.bf16 %v174
      %v183 = vunpack.c.l.bf16 %v175
      %v184 = vunpack.c.l.bf16 %v176
      %v185 = vunpack.c.l.bf16 %v177
      %v186 = vunpack.c.l.bf16 %v178
      %v187 = vunpack.c.l.bf16 %v179
      %v188 = vunpack.c.l.bf16 %v180
      %v189 = vunpack.c.l.bf16 %v181
      %v190 = vld [vmem:[%s1] sm:$0x1]
      %v192 = vlaneseq
      %v193 = vshrl.u32 %v192, 7
      %v194 = vsub.s32 0, %v193
      %v195 = vrot.slane %v190, %v194
      %v197 = vmul.f32 %v182, %v195
      %v198 = vmul.f32 %v183, %v195
      %v199 = vmul.f32 %v184, %v195
      %v200 = vmul.f32 %v185, %v195
      %v201 = vmul.f32 %v186, %v195
      %v202 = vmul.f32 %v187, %v195
      %v203 = vmul.f32 %v188, %v195
      %v204 = vmul.f32 %v189, %v195
      %v205 = vld [vmem:[%s2] sm:$0x1]
      %v207 = vlaneseq
      %v208 = vshrl.u32 %v207, 7
      %v209 = vsub.s32 0, %v208
      %v210 = vrot.slane %v205, %v209
      %v212 = vadd.f32 %v197, %v210
      %v213 = vadd.f32 %v198, %v210
      %v214 = vadd.f32 %v199, %v210
      %v215 = vadd.f32 %v200, %v210
      %v216 = vadd.f32 %v201, %v210
      %v217 = vadd.f32 %v202, %v210
      %v218 = vadd.f32 %v203, %v210
      %v219 = vadd.f32 %v204, %v210
      %vm220 = vcmp.ge.f32.partialorder %v212, 0.0
      %vm221 = vcmp.ge.f32.partialorder %v213, 0.0
      %vm222 = vcmp.ge.f32.partialorder %v214, 0.0
      %vm223 = vcmp.ge.f32.partialorder %v215, 0.0
      %vm224 = vcmp.ge.f32.partialorder %v216, 0.0
      %vm225 = vcmp.ge.f32.partialorder %v217, 0.0
      %vm226 = vcmp.ge.f32.partialorder %v218, 0.0
      %vm227 = vcmp.ge.f32.partialorder %v219, 0.0
      %v228 = vmul.f32 %v212, 0.01
      %v229 = vmul.f32 %v213, 0.01
      %v230 = vmul.f32 %v214, 0.01
      %v231 = vmul.f32 %v215, 0.01
      %v232 = vmul.f32 %v216, 0.01
      %v233 = vmul.f32 %v217, 0.01
      %v234 = vmul.f32 %v218, 0.01
      %v235 = vmul.f32 %v219, 0.01
      %v236 = vsel %vm220, %v212, %v228
      %v237 = vsel %vm221, %v213, %v229
      %v238 = vsel %vm222, %v214, %v230
      %v239 = vsel %vm223, %v215, %v231
      %v240 = vsel %vm224, %v216, %v232
      %v241 = vsel %vm225, %v217, %v233
      %v242 = vsel %vm226, %v218, %v234
      %v243 = vsel %vm227, %v219, %v235
      %v244 = vpack.c.bf16 %v237, %v236
      %v245 = vpack.c.bf16 %v239, %v238
      %v246 = vpack.c.bf16 %v241, %v240
      %v247 = vpack.c.bf16 %v243, %v242
      %v252 = vunpack.c.l.b16 %v244
      %v253 = vunpack.c.h.b16 %v244
      %v254 = vunpack.c.l.b16 %v245
      %v255 = vunpack.c.h.b16 %v245
      %v256 = vunpack.c.l.b16 %v246
      %v257 = vunpack.c.h.b16 %v246
      %v258 = vunpack.c.l.b16 %v247
      %v259 = vunpack.c.h.b16 %v247
      %v260 = vpack.c.b16 %v252, %v252
      %v261 = vpack.c.b16 %v253, %v253
      %v262 = vpack.c.b16 %v254, %v254
      %v263 = vpack.c.b16 %v255, %v255
      %v264 = vpack.c.b16 %v256, %v256
      %v265 = vpack.c.b16 %v257, %v257
      %v266 = vpack.c.b16 %v258, %v258
      %v267 = vpack.c.b16 %v259, %v259
      %vm276 = vcmask 60416
      %277 = vst.msk [vmem:[%s172] sm:$0xf] %vm276, %v260
      %278 = vst.msk [vmem:[%s172 + $0x4] sm:$0xf] %vm276, %v261
      %279 = vst.msk [vmem:[%s172 + $0x8] sm:$0xf] %vm276, %v262
      %280 = vst.msk [vmem:[%s172 + $0xc] sm:$0xf] %vm276, %v263
      %281 = vst.msk [vmem:[%s172 + $0x10] sm:$0xf] %vm276, %v264
      %282 = vst.msk [vmem:[%s172 + $0x14] sm:$0xf] %vm276, %v265
      %283 = vst.msk [vmem:[%s172 + $0x18] sm:$0xf] %vm276, %v266
      %284 = vst.msk [vmem:[%s172 + $0x1c] sm:$0xf] %vm276, %v267
      %s285 = smul.u32 8, %s14
      %p286 = scmp.lt.s32.totalorder %s285, 15
      %s287 = scalar_select %p286, %s285, 15
      %s288 = smul.addr %s287, 4
      %s289 = scalar_lea.vmem %s3, %s288
      // Predicated region
      $region33: #{forward.19} parent=31 // pred_check
        %p290 = pneg %p100
      $region34: #{forward.19} parent=31 // pred_check_branch
        %292 = sbr.rel (%p290) target = $region36
      $region35: #{forward.19} parent=31 // pred_region
        %s293 = smul.u32 8, %s14
      $region36: #{forward.19} parent=31 // pred_fallthru
        _
    $region32: #{forward.19} parent=5 // pred_fallthru
      _
    %p294 = scmp.le.s32.totalorder 2, %s9
    // Predicated region
    $region37: #{forward.19} parent=5 // pred_check
      %p295 = pneg %p294
    $region38: #{forward.19} parent=5 // pred_check_branch
      %297 = sbr.rel (%p295) target = $region40
    $region39: #{forward.19} parent=5 // pred_region
      %s298 = ssub.s32 %s9, 2
      // Predicated region
      $region41: #{forward.19} parent=39 // pred_check
        %p299 = pneg %p106
      $region42: #{forward.19} parent=39 // pred_check_branch
        %301 = sbr.rel (%p299) target = $region44
      $region43: #{forward.19} parent=39 // pred_region
        %s302 = smul.u32 8, %s15
        %p303 = scmp.lt.s32.totalorder %s302, 15
        %s304 = scalar_select %p303, %s302, 15
        %s305 = smul.addr %s304, 4
        %s306 = scalar_lea.vmem %s3, %s305
      $region44: #{forward.19} parent=39 // pred_fallthru
        _
    $region40: #{forward.19} parent=5 // pred_fallthru
      _
  $region6: #{forward.19} parent=0 // loop_footer
    %s13 = sadd.s32 1, %s9
  $region7: #{forward.19} parent=0 // loop_footer_branch
    %8 = sbr.rel target = $region3
  $region8: #{forward.19} parent=0 // loop_exit
    _

// kernel: forward.20
$region0: #{forward.20}
  #allocation0 [shape = 'u32[]', space=smem, size = 0x4, offset = 0x4, fixed_abs, tag = 'smem constant byte address 0x4 - core index']
  #allocation1 [shape = 'u32[144,128]{1,0:T(1,128)}', space=vmem, size = 0x12000, scoped, tag = 'internal scratch']
  %s0 = inlined_call_operand.vmem [shape: bf16[32,72], index: 0, kind: input, shape index: {}]
  %s1 = inlined_call_operand.vmem [shape: bf16[72,16], index: 1, kind: input, shape index: {}]
  %s2 = inlined_call_operand.vmem [shape: f32[1,16], index: 2, kind: input, shape index: {}]
  %s3 = inlined_call_operand.vmem [shape: bf16[32,16], index: 3, kind: output, shape index: {0}]
  %s4 = inlined_call_operand.vmem [shape: f32[2,2,16], index: 4, kind: output, shape index: {1}]
  %5 = xla_tuple %s3, %s4
  %s6 = sld [smem:[#allocation0]]
  $region53: #{forward.20} parent=0
    _
  %s8 = ssub.s32 1, %s6
  %s9 = scalar_select 0, %s8, %s6
  loop: start=0, step=1, limit=4
  $region2: #{forward.20} parent=0 // loop_pre_header
    _
  $region3: #{forward.20} parent=0 // loop_header
    %s11 = sphi 0, %s15
    %p12 = scmp.ge.s32.totalorder %s11, 4
    %s21 = sphi 0, %s23
    %s24 = sphi 0, %s21
    %s25 = sphi 0, %s24
    %s41 = sphi 0, %s25
    %s45 = sphi 0, %s45
    %s47 = sphi 0, %s45
    %s48 = sphi 0, %s47
    %s62 = sphi 0, %s48
    %s66 = sphi 0, %s66
    %s68 = sphi 0, %s66
    %s69 = sphi 0, %s68
    %s83 = sphi 0, %s69
    %s89 = sphi 0, %s91
    %s92 = sphi 0, %s89
    %s93 = sphi 0, %s92
    %s109 = sphi 0, %s93
    %s115 = sphi 0, %s117
    %s118 = sphi 0, %s115
    %s119 = sphi 0, %s118
    %s135 = sphi 0, %s119
  $region4: #{forward.20} parent=0 // loop_header_branch
    %14 = sbr.rel (%p12) target = $region8
  $region5: #{forward.20} parent=0 // loop_body
    %s16 = ssub.s32 %s11, 1
    %s17 = ssub.s32 %s11, 2
    %s18 = sadd.s32 %s11, 1
    %s19 = ssub.s32 %s11, %s18
    %p20 = scmp.eq.s32.totalorder %s19, 0
    %s22 = sadd.s32 %s21, 1
    %s23 = scalar_select %p20, %s21, %s22
    %p26 = pneg %p20
    %p27 = scmp.eq.s32.totalorder %s11, 1
    %p28 = por %p26, %p27
    %p29 = scmp.ne.s32.totalorder %s21, %s24
    %p30 = scmp.eq.s32.totalorder %s11, 0
    %p31 = por %p29, %p30
    %p32 = scmp.ne.s32.totalorder %s21, %s24
    %p33 = scmp.eq.s32.totalorder %s16, 1
    %p34 = por %p32, %p33
    %p35 = scmp.ne.s32.totalorder %s24, %s25
    %p36 = scmp.eq.s32.totalorder %s16, 0
    %p37 = por %p35, %p36
    %p38 = scmp.ne.s32.totalorder %s24, %s25
    %p39 = scmp.eq.s32.totalorder %s17, 1
    %p40 = por %p38, %p39
    %p42 = scmp.ne.s32.totalorder %s25, %s41
    %p43 = scmp.eq.s32.totalorder %s17, 0
    %p44 = por %p42, %p43
    %s46 = sadd.s32 %s45, 1
    %p49 = scmp.eq.s32.totalorder %s11, 1
    %p50 = scmp.ne.s32.totalorder %s45, %s47
    %p51 = scmp.eq.s32.totalorder %s11, 0
    %p52 = por %p50, %p51
    %p53 = scmp.ne.s32.totalorder %s45, %s47
    %p54 = scmp.eq.s32.totalorder %s16, 1
    %p55 = por %p53, %p54
    %p56 = scmp.ne.s32.totalorder %s47, %s48
    %p57 = scmp.eq.s32.totalorder %s16, 0
    %p58 = por %p56, %p57
    %p59 = scmp.ne.s32.totalorder %s47, %s48
    %p60 = scmp.eq.s32.totalorder %s17, 1
    %p61 = por %p59, %p60
    %p63 = scmp.ne.s32.totalorder %s48, %s62
    %p64 = scmp.eq.s32.totalorder %s17, 0
    %p65 = por %p63, %p64
    %s67 = sadd.s32 %s66, 1
    %p70 = scmp.eq.s32.totalorder %s11, 1
    %p71 = scmp.ne.s32.totalorder %s66, %s68
    %p72 = scmp.eq.s32.totalorder %s11, 0
    %p73 = por %p71, %p72
    %p74 = scmp.ne.s32.totalorder %s66, %s68
    %p75 = scmp.eq.s32.totalorder %s16, 1
    %p76 = por %p74, %p75
    %p77 = scmp.ne.s32.totalorder %s68, %s69
    %p78 = scmp.eq.s32.totalorder %s16, 0
    %p79 = por %p77, %p78
    %p80 = scmp.ne.s32.totalorder %s68, %s69
    %p81 = scmp.eq.s32.totalorder %s17, 1
    %p82 = por %p80, %p81
    %p84 = scmp.ne.s32.totalorder %s69, %s83
    %p85 = scmp.eq.s32.totalorder %s17, 0
    %p86 = por %p84, %p85
    %s87 = ssub.s32 %s11, %s18
    %p88 = scmp.eq.s32.totalorder %s87, 0
    %s90 = sadd.s32 %s89, 1
    %s91 = scalar_select %p88, %s89, %s90
    %p94 = pneg %p88
    %p95 = scmp.eq.s32.totalorder %s11, 1
    %p96 = por %p94, %p95
    %p97 = scmp.ne.s32.totalorder %s89, %s92
    %p98 = scmp.eq.s32.totalorder %s11, 0
    %p99 = por %p97, %p98
    %p100 = scmp.ne.s32.totalorder %s89, %s92
    %p101 = scmp.eq.s32.totalorder %s16, 1
    %p102 = por %p100, %p101
    %p103 = scmp.ne.s32.totalorder %s92, %s93
    %p104 = scmp.eq.s32.totalorder %s16, 0
    %p105 = por %p103, %p104
    %p106 = scmp.ne.s32.totalorder %s92, %s93
    %p107 = scmp.eq.s32.totalorder %s17, 1
    %p108 = por %p106, %p107
    %p110 = scmp.ne.s32.totalorder %s93, %s109
    %p111 = scmp.eq.s32.totalorder %s17, 0
    %p112 = por %p110, %p111
    %s113 = ssub.s32 %s11, %s18
    %p114 = scmp.eq.s32.totalorder %s113, 0
    %s116 = sadd.s32 %s115, 1
    %s117 = scalar_select %p114, %s115, %s116
    %p120 = pneg %p114
    %p121 = scmp.eq.s32.totalorder %s11, 1
    %p122 = por %p120, %p121
    %p123 = scmp.ne.s32.totalorder %s115, %s118
    %p124 = scmp.eq.s32.totalorder %s11, 0
    %p125 = por %p123, %p124
    %p126 = scmp.ne.s32.totalorder %s115, %s118
    %p127 = scmp.eq.s32.totalorder %s16, 1
    %p128 = por %p126, %p127
    %p129 = scmp.ne.s32.totalorder %s118, %s119
    %p130 = scmp.eq.s32.totalorder %s16, 0
    %p131 = por %p129, %p130
    %p132 = scmp.ne.s32.totalorder %s118, %s119
    %p133 = scmp.eq.s32.totalorder %s17, 1
    %p134 = por %p132, %p133
    %p136 = scmp.ne.s32.totalorder %s119, %s135
    %p137 = scmp.eq.s32.totalorder %s17, 0
    %p138 = por %p136, %p137
    %p139 = scmp.le.s32.totalorder 1, %s11
    %p140 = scmp.lt.s32.totalorder %s11, 3
    %p141 = pnand %p139, %p140
    %p142 = pneg %p141
    // Predicated region
    $region9: #{forward.20} parent=5 // pred_check
      _
    $region10: #{forward.20} parent=5 // pred_check_branch
      %144 = sbr.rel (%p141) target = $region12
    $region11: #{forward.20} parent=5 // pred_region
      %s145 = ssub.s32 %s11, 1
      // Predicated region
      $region13: #{forward.20} parent=11 // pred_check
        %p146 = pneg %p58
      $region14: #{forward.20} parent=11 // pred_check_branch
        %148 = sbr.rel (%p146) target = $region16
      $region15: #{forward.20} parent=11 // pred_region
        _
      $region16: #{forward.20} parent=11 // pred_fallthru
        _
      // Predicated region
      $region17: #{forward.20} parent=11 // pred_check
        %p149 = pneg %p79
      $region18: #{forward.20} parent=11 // pred_check_branch
        %151 = sbr.rel (%p149) target = $region20
      $region19: #{forward.20} parent=11 // pred_region
        _
      $region20: #{forward.20} parent=11 // pred_fallthru
        _
    $region12: #{forward.20} parent=5 // pred_fallthru
      _
    %p152 = scmp.lt.s32.totalorder %s11, 2
    // Predicated region
    $region21: #{forward.20} parent=5 // pred_check
      %p153 = pneg %p152
    $region22: #{forward.20} parent=5 // pred_check_branch
      %155 = sbr.rel (%p153) target = $region24
    $region23: #{forward.20} parent=5 // pred_region
      // Predicated region
      $region25: #{forward.20} parent=23 // pred_check
        %p156 = pneg %p31
      $region26: #{forward.20} parent=23 // pred_check_branch
        %158 = sbr.rel (%p156) target = $region28
      $region27: #{forward.20} parent=23 // pred_region
        %s159 = smul.u32 2, %s11
        %p160 = scmp.lt.s32.totalorder %s159, 3
        %s161 = scalar_select %p160, %s159, 3
        %s162 = smul.addr %s161, 4
        %s163 = scalar_lea.vmem %s0, %s162
        %s164 = smul.u32 2, %s11
      $region28: #{forward.20} parent=23 // pred_fallthru
        _
    $region24: #{forward.20} parent=5 // pred_fallthru
      _
    %p165 = scmp.le.s32.totalorder 1, %s11
    %p166 = scmp.lt.s32.totalorder %s11, 3
    %p167 = pnand %p165, %p166
    %p168 = pneg %p167
    // Predicated region
    $region29: #{forward.20} parent=5 // pred_check
      _
    $region30: #{forward.20} parent=5 // pred_check_branch
      %170 = sbr.rel (%p167) target = $region32
    $region31: #{forward.20} parent=5 // pred_region
      %s171 = ssub.s32 %s11, 1
      %s172 = smul.u32 2, %s16
      %p173 = scmp.lt.s32.totalorder %s172, 3
      %s174 = scalar_select %p173, %s172, 3
      %s175 = smul.addr %s174, 4
      %s176 = scalar_lea.vmem %s0, %s175
      %p177 = pneg %p37
      %p178 = pneg %p34
      %p179 = pneg %p58
      %p180 = pneg %p55
      %p181 = pneg %p79
      %p182 = pneg %p76
      %p183 = pneg %p105
      %p184 = pneg %p102
      %s185 = smul.u32 2, %s16
      %p186 = scmp.lt.s32.totalorder %s185, 3
      %s187 = scalar_select %p186, %s185, 3
      %s188 = smul.addr %s187, 4
      %s189 = scalar_lea.vmem %s3, %s188
      %p190 = pneg %p131
      %p191 = pneg %p128
      %p192 = scmp.lt.s32.totalorder %s16, 1
      %s193 = scalar_select %p192, %s16, 1
      %s194 = smul.addr %s193, 2
      %s195 = scalar_lea.vmem %s4, %s194
      %s196 = smul.u32 2, %s16
      %p197 = scmp.lt.s32.totalorder %s196, 3
      %s198 = scalar_select %p197, %s196, 3
      %s199 = smul.addr %s198, 4
      %s200 = scalar_lea.vmem %s0, %s199
      %s201 = smul.u32 2, %s16
      %s202 = smul.u32 2, %s16
      %p203 = scmp.lt.s32.totalorder %s202, 3
      %s204 = scalar_select %p203, %s202, 3
      %s205 = smul.addr %s204, 4
      %s206 = scalar_lea.vmem %s3, %s205
      %s207 = smul.u32 2, %s16
      %p208 = scmp.lt.s32.totalorder %s16, 1
      %s209 = scalar_select %p208, %s16, 1
      %s210 = smul.addr %s209, 2
      %s211 = scalar_lea.vmem %s4, %s210
      %v213 = vld [vmem:[%s200] sm:$0xf]
      %v214 = vld [vmem:[%s200 + $0x4] sm:$0xf]
      %v215 = vld [vmem:[%s1] sm:$0xf]
      %v216 = vld [vmem:[%s1 + $0x4] sm:$0xf]
      %v217 = vld [vmem:[%s1 + $0x8] sm:$0xf]
      %v218 = vld [vmem:[%s1 + $0xc] sm:$0xf]
      %v219 = vld [vmem:[%s1 + $0x10] sm:$0xf]
      %v220 = vld [vmem:[%s1 + $0x14] sm:$0xf]
      %v221 = vld [vmem:[%s1 + $0x18] sm:$0xf]
      %v222 = vld [vmem:[%s1 + $0x1c] sm:$0xf]
      %v223 = vld [vmem:[%s1 + $0x20] sm:$0xf]
      %v224 = vld [vmem:[%s2] sm:$0x1]
      %v226 = vlaneseq
      %v227 = vshrl.u32 %v226, 7
      %v228 = vsub.s32 0, %v227
      %v229 = vrot.slane %v224, %v228
      %v233 = vunpack.c.l.b16 %v213
      %v234 = vunpack.c.l.b16 %v214
      %v235 = vpack.c.b16 %v234, %v233
      %v245 = vunpack.c.l.b16 %v215
      %v246 = vunpack.c.l.b16 %v216
      %v247 = vunpack.c.l.b16 %v217
      %v248 = vunpack.c.l.b16 %v218
      %v249 = vunpack.c.l.b16 %v219
      %v250 = vunpack.c.l.b16 %v220
      %v251 = vunpack.c.l.b16 %v221
      %v252 = vunpack.c.l.b16 %v222
      %v253 = vunpack.c.l.b16 %v223
      %v254 = vpack.c.b16 %v246, %v245
      %v255 = vpack.c.b16 %v248, %v247
      %v256 = vpack.c.b16 %v250, %v249
      %v257 = vpack.c.b16 %v252, %v251
      %v258 = vpack.c.b16 %v253, %v253
      %vm263 = vcmask 588800
      %v265 = vsel %vm263, %v235, 0
      %vm267 = vcmask 1043456
      %v269 = vsel %vm267, %v258, 0
      %271 = vmatprep.subr.bf16.mxu0 0
      %272 = vmatpush1.bf16.msra.mxu0 0
      %273 = vmatprep.subr.bf16.mxu0 0
      %274 = vmatpush1.bf16.msra.mxu0 0
      %275 = vmatprep.subr.bf16.mxu0 0
      %276 = vmatpush1.bf16.msra.mxu0 0
      %277 = vmatprep.subr.bf16.mxu0 0
      %278 = vmatpush1.bf16.msra.mxu0 %v269
      %279 = vmatprep.subr.bf16.mxu0 0
      %280 = vmatpush1.bf16.msra.mxu0 %v257
      %281 = vmatprep.subr.bf16.mxu0 0
      %282 = vmatpush1.bf16.msra.mxu0 %v256
      %283 = vmatprep.subr.bf16.mxu0 0
      %284 = vmatpush1.bf16.msra.mxu0 %v255
      %285 = vmatprep.subr.bf16.mxu0 0
      %286 = vmatpush1.bf16.msra.mxu0 %v254
      %287 = vmatprep.subr.bf16.mxu0 0
      %288 = vmatpush2.bf16.msra.mxu0 0
      %289 = vmatprep.subr.bf16.mxu0 0
      %290 = vmatpush2.bf16.msra.mxu0 0
      %291 = vmatprep.subr.bf16.mxu0 0
      %292 = vmatpush2.bf16.msra.mxu0 0
      %293 = vmatprep.subr.bf16.mxu0 0
      %294 = vmatpush2.bf16.msra.mxu0 0
      %295 = vmatprep.subr.bf16.mxu0 0
      %296 = vmatpush2.bf16.msra.mxu0 0
      %297 = vmatprep.subr.bf16.mxu0 0
      %298 = vmatpush2.bf16.msra.mxu0 0
      %299 = vmatprep.subr.bf16.mxu0 0
      %300 = vmatpush2.bf16.msra.mxu0 0
      %301 = vmatprep.subr.bf16.mxu0 0
      %302 = vmatpush2.bf16.msra.mxu0 0
      %303 = vmatprep.mubr.bf16.mxu0 0
      %304 = vmatmul.mubr.bf16.gmra.mxu0 %v265
      %v305 = vpop.f32.mrf.mxu0
      %v306 = vadd.f32 %v229, %v305
      %v307 = vpop.f32.mrf.mxu0
      %v308 = vpop.f32.mrf.mxu0
      %v309 = vadd.f32 %v229, %v308
      %v310 = vpop.f32.mrf.mxu0
      %311 = vdwg.mxu0
      %vm312 = vcmask 130048
      %v313 = vsel %vm312, %v306, 0.0
      %v314 = vsel %vm312, %v309, 0.0
      %v315 = vadd.f32 %v313, %v314
      %v316 = vrot.slane %v315, 4
      %v317 = vadd.f32 %v315, %v316
      %v318 = vrot.slane %v317, 2
      %v319 = vadd.f32 %v317, %v318
      %v320 = vrot.slane %v319, 1
      %v321 = vadd.f32 %v319, %v320
      %v322 = vmul.f32 %v321, 0.0625
      %v323 = vsub.f32 %v306, %v322
      %v324 = vsub.f32 %v309, %v322
      %v325 = vmul.f32 %v323, %v323
      %v326 = vmul.f32 %v324, %v324
      %v327 = vsel %vm312, %v325, 0.0
      %v328 = vsel %vm312, %v326, 0.0
      %v329 = vadd.f32 %v327, %v328
      %v330 = vrot.slane %v329, 4
      %v331 = vadd.f32 %v329, %v330
      %v332 = vrot.slane %v331, 2
      %v333 = vadd.f32 %v331, %v332
      %v334 = vrot.slane %v333, 1
      %v335 = vadd.f32 %v333, %v334
      %vm336 = vcmask 1040384
      %v337 = vsel %vm336, %v321, %v335
      %vm338 = vcmask 123904
      %339 = vst.msk [vmem:[%s211] sm:$0x3] %vm338, %v337
      %v340 = vpack.c.bf16 %v309, %v306
      %v342 = vunpack.c.l.b16 %v340
      %v343 = vunpack.c.h.b16 %v340
      %v344 = vpack.c.b16 %v342, %v342
      %v345 = vpack.c.b16 %v343, %v343
      %vm348 = vcmask 125952
      %349 = vst.msk [vmem:[%s206] sm:$0xf] %vm348, %v344
      %350 = vst.msk [vmem:[%s206 + $0x4] sm:$0xf] %vm348, %v345
      %s351 = smul.u32 2, %s16
      %p352 = scmp.lt.s32.totalorder %s351, 3
      %s353 = scalar_select %p352, %s351, 3
      %s354 = smul.addr %s353, 4
      %s355 = scalar_lea.vmem %s3, %s354
      %p356 = scmp.lt.s32.totalorder %s16, 1
      %s357 = scalar_select %p356, %s16, 1
      %s358 = smul.addr %s357, 2
      %s359 = scalar_lea.vmem %s4, %s358
      // Predicated region
      $region33: #{forward.20} parent=31 // pred_check
        %p360 = pneg %p102
      $region34: #{forward.20} parent=31 // pred_check_branch
        %362 = sbr.rel (%p360) target = $region36
      $region35: #{forward.20} parent=31 // pred_region
        %s363 = smul.u32 2, %s16
      $region36: #{forward.20} parent=31 // pred_fallthru
        _
      // Predicated region
      $region37: #{forward.20} parent=31 // pred_check
        %p364 = pneg %p128
      $region38: #{forward.20} parent=31 // pred_check_branch
        %366 = sbr.rel (%p364) target = $region40
      $region39: #{forward.20} parent=31 // pred_region
        _
      $region40: #{forward.20} parent=31 // pred_fallthru
        _
    $region32: #{forward.20} parent=5 // pred_fallthru
      _
    %p367 = scmp.le.s32.totalorder 2, %s11
    // Predicated region
    $region41: #{forward.20} parent=5 // pred_check
      %p368 = pneg %p367
    $region42: #{forward.20} parent=5 // pred_check_branch
      %370 = sbr.rel (%p368) target = $region44
    $region43: #{forward.20} parent=5 // pred_region
      %s371 = ssub.s32 %s11, 2
      // Predicated region
      $region45: #{forward.20} parent=43 // pred_check
        %p372 = pneg %p108
      $region46: #{forward.20} parent=43 // pred_check_branch
        %374 = sbr.rel (%p372) target = $region48
      $region47: #{forward.20} parent=43 // pred_region
        %s375 = smul.u32 2, %s17
        %p376 = scmp.lt.s32.totalorder %s375, 3
        %s377 = scalar_select %p376, %s375, 3
        %s378 = smul.addr %s377, 4
        %s379 = scalar_lea.vmem %s3, %s378
      $region48: #{forward.20} parent=43 // pred_fallthru
        _
      // Predicated region
      $region49: #{forward.20} parent=43 // pred_check
        %p380 = pneg %p134
      $region50: #{forward.20} parent=43 // pred_check_branch
        %382 = sbr.rel (%p380) target = $region52
      $region51: #{forward.20} parent=43 // pred_region
        %p383 = scmp.lt.s32.totalorder %s17, 1
        %s384 = scalar_select %p383, %s17, 1
        %s385 = smul.addr %s384, 2
        %s386 = scalar_lea.vmem %s4, %s385
      $region52: #{forward.20} parent=43 // pred_fallthru
        _
    $region44: #{forward.20} parent=5 // pred_fallthru
      _
  $region6: #{forward.20} parent=0 // loop_footer
    %s15 = sadd.s32 1, %s11
  $region7: #{forward.20} parent=0 // loop_footer_branch
    %10 = sbr.rel target = $region3
  $region8: #{forward.20} parent=0 // loop_exit
    _

// kernel: forward.21
$region0: #{forward.21}
  #allocation0 [shape = 'u32[]', space=smem, size = 0x4, offset = 0x4, fixed_abs, tag = 'smem constant byte address 0x4 - core index']
  #allocation1 [shape = 'u32[144,128]{1,0:T(1,128)}', space=vmem, size = 0x12000, scoped, tag = 'internal scratch']
  %s0 = inlined_call_operand.vmem [shape: bf16[32,16], index: 0, kind: input, shape index: {}]
  %s1 = inlined_call_operand.vmem [shape: f32[1,16], index: 1, kind: input, shape index: {}]
  %s2 = inlined_call_operand.vmem [shape: f32[1,16], index: 2, kind: input, shape index: {}]
  %s3 = inlined_call_operand.vmem [shape: bf16[32,16], index: 3, kind: output, shape index: {}]
  %s4 = sld [smem:[#allocation0]]
  $region45: #{forward.21} parent=0
    _
  %s6 = ssub.s32 1, %s4
  %s7 = scalar_select 0, %s6, %s4
  loop: start=0, step=1, limit=4
  $region2: #{forward.21} parent=0 // loop_pre_header
    _
  $region3: #{forward.21} parent=0 // loop_header
    %s9 = sphi 0, %s13
    %p10 = scmp.ge.s32.totalorder %s9, 4
    %s19 = sphi 0, %s21
    %s22 = sphi 0, %s19
    %s23 = sphi 0, %s22
    %s39 = sphi 0, %s23
    %s43 = sphi 0, %s43
    %s45 = sphi 0, %s43
    %s46 = sphi 0, %s45
    %s60 = sphi 0, %s46
    %s64 = sphi 0, %s64
    %s66 = sphi 0, %s64
    %s67 = sphi 0, %s66
    %s81 = sphi 0, %s67
    %s87 = sphi 0, %s89
    %s90 = sphi 0, %s87
    %s91 = sphi 0, %s90
    %s107 = sphi 0, %s91
  $region4: #{forward.21} parent=0 // loop_header_branch
    %12 = sbr.rel (%p10) target = $region8
  $region5: #{forward.21} parent=0 // loop_body
    %s14 = ssub.s32 %s9, 1
    %s15 = ssub.s32 %s9, 2
    %s16 = sadd.s32 %s9, 1
    %s17 = ssub.s32 %s9, %s16
    %p18 = scmp.eq.s32.totalorder %s17, 0
    %s20 = sadd.s32 %s19, 1
    %s21 = scalar_select %p18, %s19, %s20
    %p24 = pneg %p18
    %p25 = scmp.eq.s32.totalorder %s9, 1
    %p26 = por %p24, %p25
    %p27 = scmp.ne.s32.totalorder %s19, %s22
    %p28 = scmp.eq.s32.totalorder %s9, 0
    %p29 = por %p27, %p28
    %p30 = scmp.ne.s32.totalorder %s19, %s22
    %p31 = scmp.eq.s32.totalorder %s14, 1
    %p32 = por %p30, %p31
    %p33 = scmp.ne.s32.totalorder %s22, %s23
    %p34 = scmp.eq.s32.totalorder %s14, 0
    %p35 = por %p33, %p34
    %p36 = scmp.ne.s32.totalorder %s22, %s23
    %p37 = scmp.eq.s32.totalorder %s15, 1
    %p38 = por %p36, %p37
    %p40 = scmp.ne.s32.totalorder %s23, %s39
    %p41 = scmp.eq.s32.totalorder %s15, 0
    %p42 = por %p40, %p41
    %s44 = sadd.s32 %s43, 1
    %p47 = scmp.eq.s32.totalorder %s9, 1
    %p48 = scmp.ne.s32.totalorder %s43, %s45
    %p49 = scmp.eq.s32.totalorder %s9, 0
    %p50 = por %p48, %p49
    %p51 = scmp.ne.s32.totalorder %s43, %s45
    %p52 = scmp.eq.s32.totalorder %s14, 1
    %p53 = por %p51, %p52
    %p54 = scmp.ne.s32.totalorder %s45, %s46
    %p55 = scmp.eq.s32.totalorder %s14, 0
    %p56 = por %p54, %p55
    %p57 = scmp.ne.s32.totalorder %s45, %s46
    %p58 = scmp.eq.s32.totalorder %s15, 1
    %p59 = por %p57, %p58
    %p61 = scmp.ne.s32.totalorder %s46, %s60
    %p62 = scmp.eq.s32.totalorder %s15, 0
    %p63 = por %p61, %p62
    %s65 = sadd.s32 %s64, 1
    %p68 = scmp.eq.s32.totalorder %s9, 1
    %p69 = scmp.ne.s32.totalorder %s64, %s66
    %p70 = scmp.eq.s32.totalorder %s9, 0
    %p71 = por %p69, %p70
    %p72 = scmp.ne.s32.totalorder %s64, %s66
    %p73 = scmp.eq.s32.totalorder %s14, 1
    %p74 = por %p72, %p73
    %p75 = scmp.ne.s32.totalorder %s66, %s67
    %p76 = scmp.eq.s32.totalorder %s14, 0
    %p77 = por %p75, %p76
    %p78 = scmp.ne.s32.totalorder %s66, %s67
    %p79 = scmp.eq.s32.totalorder %s15, 1
    %p80 = por %p78, %p79
    %p82 = scmp.ne.s32.totalorder %s67, %s81
    %p83 = scmp.eq.s32.totalorder %s15, 0
    %p84 = por %p82, %p83
    %s85 = ssub.s32 %s9, %s16
    %p86 = scmp.eq.s32.totalorder %s85, 0
    %s88 = sadd.s32 %s87, 1
    %s89 = scalar_select %p86, %s87, %s88
    %p92 = pneg %p86
    %p93 = scmp.eq.s32.totalorder %s9, 1
    %p94 = por %p92, %p93
    %p95 = scmp.ne.s32.totalorder %s87, %s90
    %p96 = scmp.eq.s32.totalorder %s9, 0
    %p97 = por %p95, %p96
    %p98 = scmp.ne.s32.totalorder %s87, %s90
    %p99 = scmp.eq.s32.totalorder %s14, 1
    %p100 = por %p98, %p99
    %p101 = scmp.ne.s32.totalorder %s90, %s91
    %p102 = scmp.eq.s32.totalorder %s14, 0
    %p103 = por %p101, %p102
    %p104 = scmp.ne.s32.totalorder %s90, %s91
    %p105 = scmp.eq.s32.totalorder %s15, 1
    %p106 = por %p104, %p105
    %p108 = scmp.ne.s32.totalorder %s91, %s107
    %p109 = scmp.eq.s32.totalorder %s15, 0
    %p110 = por %p108, %p109
    %p111 = scmp.le.s32.totalorder 1, %s9
    %p112 = scmp.lt.s32.totalorder %s9, 3
    %p113 = pnand %p111, %p112
    %p114 = pneg %p113
    // Predicated region
    $region9: #{forward.21} parent=5 // pred_check
      _
    $region10: #{forward.21} parent=5 // pred_check_branch
      %116 = sbr.rel (%p113) target = $region12
    $region11: #{forward.21} parent=5 // pred_region
      %s117 = ssub.s32 %s9, 1
      // Predicated region
      $region13: #{forward.21} parent=11 // pred_check
        %p118 = pneg %p56
      $region14: #{forward.21} parent=11 // pred_check_branch
        %120 = sbr.rel (%p118) target = $region16
      $region15: #{forward.21} parent=11 // pred_region
        _
      $region16: #{forward.21} parent=11 // pred_fallthru
        _
      // Predicated region
      $region17: #{forward.21} parent=11 // pred_check
        %p121 = pneg %p77
      $region18: #{forward.21} parent=11 // pred_check_branch
        %123 = sbr.rel (%p121) target = $region20
      $region19: #{forward.21} parent=11 // pred_region
        _
      $region20: #{forward.21} parent=11 // pred_fallthru
        _
    $region12: #{forward.21} parent=5 // pred_fallthru
      _
    %p124 = scmp.lt.s32.totalorder %s9, 2
    // Predicated region
    $region21: #{forward.21} parent=5 // pred_check
      %p125 = pneg %p124
    $region22: #{forward.21} parent=5 // pred_check_branch
      %127 = sbr.rel (%p125) target = $region24
    $region23: #{forward.21} parent=5 // pred_region
      // Predicated region
      $region25: #{forward.21} parent=23 // pred_check
        %p128 = pneg %p29
      $region26: #{forward.21} parent=23 // pred_check_branch
        %130 = sbr.rel (%p128) target = $region28
      $region27: #{forward.21} parent=23 // pred_region
        %s131 = smul.u32 2, %s9
        %p132 = scmp.lt.s32.totalorder %s131, 3
        %s133 = scalar_select %p132, %s131, 3
        %s134 = smul.addr %s133, 4
        %s135 = scalar_lea.vmem %s0, %s134
        %s136 = smul.u32 2, %s9
      $region28: #{forward.21} parent=23 // pred_fallthru
        _
    $region24: #{forward.21} parent=5 // pred_fallthru
      _
    %p137 = scmp.le.s32.totalorder 1, %s9
    %p138 = scmp.lt.s32.totalorder %s9, 3
    %p139 = pnand %p137, %p138
    %p140 = pneg %p139
    // Predicated region
    $region29: #{forward.21} parent=5 // pred_check
      _
    $region30: #{forward.21} parent=5 // pred_check_branch
      %142 = sbr.rel (%p139) target = $region32
    $region31: #{forward.21} parent=5 // pred_region
      %s143 = ssub.s32 %s9, 1
      %s144 = smul.u32 2, %s14
      %p145 = scmp.lt.s32.totalorder %s144, 3
      %s146 = scalar_select %p145, %s144, 3
      %s147 = smul.addr %s146, 4
      %s148 = scalar_lea.vmem %s0, %s147
      %p149 = pneg %p35
      %p150 = pneg %p32
      %p151 = pneg %p56
      %p152 = pneg %p53
      %p153 = pneg %p77
      %p154 = pneg %p74
      %p155 = pneg %p103
      %p156 = pneg %p100
      %s157 = smul.u32 2, %s14
      %p158 = scmp.lt.s32.totalorder %s157, 3
      %s159 = scalar_select %p158, %s157, 3
      %s160 = smul.addr %s159, 4
      %s161 = scalar_lea.vmem %s3, %s160
      %s162 = smul.u32 2, %s14
      %p163 = scmp.lt.s32.totalorder %s162, 3
      %s164 = scalar_select %p163, %s162, 3
      %s165 = smul.addr %s164, 4
      %s166 = scalar_lea.vmem %s0, %s165
      %s167 = smul.u32 2, %s14
      %s168 = smul.u32 2, %s14
      %p169 = scmp.lt.s32.totalorder %s168, 3
      %s170 = scalar_select %p169, %s168, 3
      %s171 = smul.addr %s170, 4
      %s172 = scalar_lea.vmem %s3, %s171
      %s173 = smul.u32 2, %s14
      %v174 = vld [vmem:[%s166] sm:$0xf]
      %v175 = vld [vmem:[%s166 + $0x4] sm:$0xf]
      %v176 = vunpack.c.l.bf16 %v174
      %v177 = vunpack.c.l.bf16 %v175
      %v178 = vld [vmem:[%s1] sm:$0x1]
      %v180 = vlaneseq
      %v181 = vshrl.u32 %v180, 7
      %v182 = vsub.s32 0, %v181
      %v183 = vrot.slane %v178, %v182
      %v185 = vmul.f32 %v176, %v183
      %v186 = vmul.f32 %v177, %v183
      %v187 = vld [vmem:[%s2] sm:$0x1]
      %v189 = vlaneseq
      %v190 = vshrl.u32 %v189, 7
      %v191 = vsub.s32 0, %v190
      %v192 = vrot.slane %v187, %v191
      %v194 = vadd.f32 %v185, %v192
      %v195 = vadd.f32 %v186, %v192
      %vm196 = vcmp.ge.f32.partialorder %v194, 0.0
      %vm197 = vcmp.ge.f32.partialorder %v195, 0.0
      %v198 = vmul.f32 %v194, 0.01
      %v199 = vmul.f32 %v195, 0.01
      %v200 = vsel %vm196, %v194, %v198
      %v201 = vsel %vm197, %v195, %v199
      %v202 = vpack.c.bf16 %v201, %v200
      %v204 = vunpack.c.l.b16 %v202
      %v205 = vunpack.c.h.b16 %v202
      %v206 = vpack.c.b16 %v204, %v204
      %v207 = vpack.c.b16 %v205, %v205
      %vm210 = vcmask 125952
      %211 = vst.msk [vmem:[%s172] sm:$0xf] %vm210, %v206
      %212 = vst.msk [vmem:[%s172 + $0x4] sm:$0xf] %vm210, %v207
      %s213 = smul.u32 2, %s14
      %p214 = scmp.lt.s32.totalorder %s213, 3
      %s215 = scalar_select %p214, %s213, 3
      %s216 = smul.addr %s215, 4
      %s217 = scalar_lea.vmem %s3, %s216
      // Predicated region
      $region33: #{forward.21} parent=31 // pred_check
        %p218 = pneg %p100
      $region34: #{forward.21} parent=31 // pred_check_branch
        %220 = sbr.rel (%p218) target = $region36
      $region35: #{forward.21} parent=31 // pred_region
        %s221 = smul.u32 2, %s14
      $region36: #{forward.21} parent=31 // pred_fallthru
        _
    $region32: #{forward.21} parent=5 // pred_fallthru
      _
    %p222 = scmp.le.s32.totalorder 2, %s9
    // Predicated region
    $region37: #{forward.21} parent=5 // pred_check
      %p223 = pneg %p222
    $region38: #{forward.21} parent=5 // pred_check_branch
      %225 = sbr.rel (%p223) target = $region40
    $region39: #{forward.21} parent=5 // pred_region
      %s226 = ssub.s32 %s9, 2
      // Predicated region
      $region41: #{forward.21} parent=39 // pred_check
        %p227 = pneg %p106
      $region42: #{forward.21} parent=39 // pred_check_branch
        %229 = sbr.rel (%p227) target = $region44
      $region43: #{forward.21} parent=39 // pred_region
        %s230 = smul.u32 2, %s15
        %p231 = scmp.lt.s32.totalorder %s230, 3
        %s232 = scalar_select %p231, %s230, 3
        %s233 = smul.addr %s232, 4
        %s234 = scalar_lea.vmem %s3, %s233
      $region44: #{forward.21} parent=39 // pred_fallthru
        _
    $region40: #{forward.21} parent=5 // pred_fallthru
      _
  $region6: #{forward.21} parent=0 // loop_footer
    %s13 = sadd.s32 1, %s9
  $region7: #{forward.21} parent=0 // loop_footer_branch
    %8 = sbr.rel target = $region3
  $region8: #{forward.21} parent=0 // loop_exit
    _

// kernel: forward.23
$region0: #{forward.23}
  #allocation0 [shape = 'u32[]', space=smem, size = 0x4, offset = 0x4, fixed_abs, tag = 'smem constant byte address 0x4 - core index']
  #allocation1 [shape = 'u32[144,128]{1,0:T(1,128)}', space=vmem, size = 0x12000, scoped, tag = 'internal scratch']
  %s0 = inlined_call_operand.vmem [shape: bf16[8,32], index: 0, kind: input, shape index: {}]
  %s1 = inlined_call_operand.vmem [shape: f32[1,32], index: 1, kind: input, shape index: {}]
  %s2 = inlined_call_operand.vmem [shape: f32[1,32], index: 2, kind: input, shape index: {}]
  %s3 = inlined_call_operand.vmem [shape: bf16[8,32], index: 3, kind: output, shape index: {}]
  %s4 = sld [smem:[#allocation0]]
  $region22: #{forward.23} parent=0
    _
  %s6 = ssub.s32 1, %s4
  %s7 = scalar_select 0, %s6, %s4
  // Predicated region
  $region2: #{forward.23} parent=0 // pred_check
    _
  $region3: #{forward.23} parent=0 // pred_check_branch
    %9 = sbr.rel (0) target = $region5
  $region4: #{forward.23} parent=0 // pred_region
    _
  $region5: #{forward.23} parent=0 // pred_fallthru
    _
  // Predicated region
  $region6: #{forward.23} parent=0 // pred_check
    _
  $region7: #{forward.23} parent=0 // pred_check_branch
    %11 = sbr.rel (0) target = $region9
  $region8: #{forward.23} parent=0 // pred_region
    _
  $region9: #{forward.23} parent=0 // pred_fallthru
    _
  // Predicated region
  $region10: #{forward.23} parent=0 // pred_check
    _
  $region11: #{forward.23} parent=0 // pred_check_branch
    %13 = sbr.rel (0) target = $region13
  $region12: #{forward.23} parent=0 // pred_region
    _
  $region13: #{forward.23} parent=0 // pred_fallthru
    _
  %v14 = vld [vmem:[%s0] sm:$0xf]
  %v15 = vunpack.c.l.bf16 %v14
  %v16 = vld [vmem:[%s1] sm:$0x1]
  %v18 = vlaneseq
  %v19 = vshrl.u32 %v18, 7
  %v20 = vsub.s32 0, %v19
  %v21 = vrot.slane %v16, %v20
  %v23 = vmul.f32 %v15, %v21
  %v24 = vld [vmem:[%s2] sm:$0x1]
  %v26 = vlaneseq
  %v27 = vshrl.u32 %v26, 7
  %v28 = vsub.s32 0, %v27
  %v29 = vrot.slane %v24, %v28
  %v31 = vadd.f32 %v23, %v29
  %vm32 = vcmp.ge.f32.partialorder %v31, 0.0
  %v33 = vmul.f32 %v31, 0.01
  %v34 = vsel %vm32, %v31, %v33
  %v35 = vpack.c.bf16 %v34, %v34
  %vm36 = vcmask 257024
  %37 = vst.msk [vmem:[%s3] sm:$0xf] %vm36, %v35
  // Predicated region
  $region14: #{forward.23} parent=0 // pred_check
    _
  $region15: #{forward.23} parent=0 // pred_check_branch
    %39 = sbr.rel (0) target = $region17
  $region16: #{forward.23} parent=0 // pred_region
    _
  $region17: #{forward.23} parent=0 // pred_fallthru
    _
  // Predicated region
  $region18: #{forward.23} parent=0 // pred_check
    _
  $region19: #{forward.23} parent=0 // pred_check_branch
    %41 = sbr.rel (0) target = $region21
  $region20: #{forward.23} parent=0 // pred_region
    _
  $region21: #{forward.23} parent=0 // pred_fallthru
    _

// kernel: forward.22
$region0: #{forward.22}
  #allocation0 [shape = 'u32[]', space=smem, size = 0x4, offset = 0x4, fixed_abs, tag = 'smem constant byte address 0x4 - core index']
  #allocation1 [shape = 'u32[144,128]{1,0:T(1,128)}', space=vmem, size = 0x12000, scoped, tag = 'internal scratch']
  %s0 = inlined_call_operand.vmem [shape: bf16[8,144], index: 0, kind: input, shape index: {}]
  %s1 = inlined_call_operand.vmem [shape: bf16[144,32], index: 1, kind: input, shape index: {}]
  %s2 = inlined_call_operand.vmem [shape: f32[1,32], index: 2, kind: input, shape index: {}]
  %s3 = inlined_call_operand.vmem [shape: bf16[8,32], index: 3, kind: output, shape index: {0}]
  %s4 = inlined_call_operand.vmem [shape: f32[1,2,32], index: 4, kind: output, shape index: {1}]
  %5 = xla_tuple %s3, %s4
  %s6 = sld [smem:[#allocation0]]
  $region30: #{forward.22} parent=0
    _
  %s8 = ssub.s32 1, %s6
  %s9 = scalar_select 0, %s8, %s6
  // Predicated region
  $region2: #{forward.22} parent=0 // pred_check
    _
  $region3: #{forward.22} parent=0 // pred_check_branch
    %11 = sbr.rel (0) target = $region5
  $region4: #{forward.22} parent=0 // pred_region
    _
  $region5: #{forward.22} parent=0 // pred_fallthru
    _
  // Predicated region
  $region6: #{forward.22} parent=0 // pred_check
    _
  $region7: #{forward.22} parent=0 // pred_check_branch
    %13 = sbr.rel (0) target = $region9
  $region8: #{forward.22} parent=0 // pred_region
    _
  $region9: #{forward.22} parent=0 // pred_fallthru
    _
  // Predicated region
  $region10: #{forward.22} parent=0 // pred_check
    _
  $region11: #{forward.22} parent=0 // pred_check_branch
    %15 = sbr.rel (0) target = $region13
  $region12: #{forward.22} parent=0 // pred_region
    _
  $region13: #{forward.22} parent=0 // pred_fallthru
    _
  %v17 = vld [vmem:[%s0] sm:$0xff]
  %v18 = vld [vmem:[%s1] sm:$0xf]
  %v19 = vld [vmem:[%s1 + $0x4] sm:$0xf]
  %v20 = vld [vmem:[%s1 + $0x8] sm:$0xf]
  %v21 = vld [vmem:[%s1 + $0xc] sm:$0xf]
  %v22 = vld [vmem:[%s1 + $0x10] sm:$0xf]
  %v23 = vld [vmem:[%s1 + $0x14] sm:$0xf]
  %v24 = vld [vmem:[%s1 + $0x18] sm:$0xf]
  %v25 = vld [vmem:[%s1 + $0x1c] sm:$0xf]
  %v26 = vld [vmem:[%s1 + $0x20] sm:$0xf]
  %v27 = vld [vmem:[%s1 + $0x24] sm:$0xf]
  %v28 = vld [vmem:[%s1 + $0x28] sm:$0xf]
  %v29 = vld [vmem:[%s1 + $0x2c] sm:$0xf]
  %v30 = vld [vmem:[%s1 + $0x30] sm:$0xf]
  %v31 = vld [vmem:[%s1 + $0x34] sm:$0xf]
  %v32 = vld [vmem:[%s1 + $0x38] sm:$0xf]
  %v33 = vld [vmem:[%s1 + $0x3c] sm:$0xf]
  %v34 = vld [vmem:[%s1 + $0x40] sm:$0xf]
  %v35 = vld [vmem:[%s1 + $0x44] sm:$0xf]
  %v36 = vld [vmem:[%s2] sm:$0x1]
  %v38 = vlaneseq
  %v39 = vshrl.u32 %v38, 7
  %v40 = vsub.s32 0, %v39
  %v41 = vrot.slane %v36, %v40
  %v44 = vunpack.c.l.b16 %v17
  %v45 = vunpack.c.h.b16 %v17
  %v46 = vpack.c.b16 %v44, %v44
  %v47 = vpack.c.b16 %v45, %v45
  %v67 = vunpack.c.l.b16 %v18
  %v68 = vunpack.c.l.b16 %v19
  %v69 = vunpack.c.l.b16 %v20
  %v70 = vunpack.c.l.b16 %v21
  %v71 = vunpack.c.l.b16 %v22
  %v72 = vunpack.c.l.b16 %v23
  %v73 = vunpack.c.l.b16 %v24
  %v74 = vunpack.c.l.b16 %v25
  %v75 = vunpack.c.l.b16 %v26
  %v76 = vunpack.c.l.b16 %v27
  %v77 = vunpack.c.l.b16 %v28
  %v78 = vunpack.c.l.b16 %v29
  %v79 = vunpack.c.l.b16 %v30
  %v80 = vunpack.c.l.b16 %v31
  %v81 = vunpack.c.l.b16 %v32
  %v82 = vunpack.c.l.b16 %v33
  %v83 = vunpack.c.l.b16 %v34
  %v84 = vunpack.c.l.b16 %v35
  %v85 = vpack.c.b16 %v68, %v67
  %v86 = vpack.c.b16 %v70, %v69
  %v87 = vpack.c.b16 %v72, %v71
  %v88 = vpack.c.b16 %v74, %v73
  %v89 = vpack.c.b16 %v76, %v75
  %v90 = vpack.c.b16 %v78, %v77
  %v91 = vpack.c.b16 %v80, %v79
  %v92 = vpack.c.b16 %v82, %v81
  %v93 = vpack.c.b16 %v84, %v83
  %vm103 = vcmask 130048
  %v105 = vsel %vm103, %v47, 0
  %107 = vmatprep.subr.bf16.mxu0 0
  %108 = vmatpush1.bf16.msra.mxu0 %v92
  %109 = vmatprep.subr.bf16.mxu0 0
  %110 = vmatpush1.bf16.msra.mxu0 %v91
  %111 = vmatprep.subr.bf16.mxu0 0
  %112 = vmatpush1.bf16.msra.mxu0 %v90
  %113 = vmatprep.subr.bf16.mxu0 0
  %114 = vmatpush1.bf16.msra.mxu0 %v89
  %115 = vmatprep.subr.bf16.mxu0 0
  %116 = vmatpush1.bf16.msra.mxu0 %v88
  %117 = vmatprep.subr.bf16.mxu0 0
  %118 = vmatpush1.bf16.msra.mxu0 %v87
  %119 = vmatprep.subr.bf16.mxu0 0
  %120 = vmatpush1.bf16.msra.mxu0 %v86
  %121 = vmatprep.subr.bf16.mxu0 0
  %122 = vmatpush1.bf16.msra.mxu0 %v85
  %123 = vmatprep.subr.bf16.mxu0 0
  %124 = vmatpush2.bf16.msra.mxu0 0
  %125 = vmatprep.subr.bf16.mxu0 0
  %126 = vmatpush2.bf16.msra.mxu0 0
  %127 = vmatprep.subr.bf16.mxu0 0
  %128 = vmatpush2.bf16.msra.mxu0 0
  %129 = vmatprep.subr.bf16.mxu0 0
  %130 = vmatpush2.bf16.msra.mxu0 0
  %131 = vmatprep.subr.bf16.mxu0 0
  %132 = vmatpush2.bf16.msra.mxu0 0
  %133 = vmatprep.subr.bf16.mxu0 0
  %134 = vmatpush2.bf16.msra.mxu0 0
  %135 = vmatprep.subr.bf16.mxu0 0
  %136 = vmatpush2.bf16.msra.mxu0 0
  %137 = vmatprep.subr.bf16.mxu0 0
  %138 = vmatpush2.bf16.msra.mxu0 %v93
  %139 = vmatprep.mubr.bf16.mxu0 %v105
  %140 = vmatmul.mubr.bf16.gmra.mxu0 %v46
  %v141 = vpop.f32.mrf.mxu0
  %v142 = vadd.f32 %v41, %v141
  %v143 = vpop.f32.mrf.mxu0
  %v144 = vpop.f32.mrf.mxu0
  %v145 = vpop.f32.mrf.mxu0
  %146 = vdwg.mxu0
  %vm147 = vcmask 261120
  %v148 = vsel %vm147, %v142, 0.0
  %v149 = vrot.slane %v148, 4
  %v150 = vadd.f32 %v148, %v149
  %v151 = vrot.slane %v150, 2
  %v152 = vadd.f32 %v150, %v151
  %v153 = vrot.slane %v152, 1
  %v154 = vadd.f32 %v152, %v153
  %v155 = vmul.f32 %v154, 0.125
  %v156 = vsub.f32 %v142, %v155
  %v157 = vmul.f32 %v156, %v156
  %v158 = vsel %vm147, %v157, 0.0
  %v159 = vrot.slane %v158, 4
  %v160 = vadd.f32 %v158, %v159
  %v161 = vrot.slane %v160, 2
  %v162 = vadd.f32 %v160, %v161
  %v163 = vrot.slane %v162, 1
  %v164 = vadd.f32 %v162, %v163
  %vm165 = vcmask 1040384
  %v166 = vsel %vm165, %v154, %v164
  %vm167 = vcmask 254976
  %168 = vst.msk [vmem:[%s4] sm:$0x3] %vm167, %v166
  %v169 = vpack.c.bf16 %v142, %v142
  %vm170 = vcmask 257024
  %171 = vst.msk [vmem:[%s3] sm:$0xf] %vm170, %v169
  // Predicated region
  $region14: #{forward.22} parent=0 // pred_check
    _
  $region15: #{forward.22} parent=0 // pred_check_branch
    %173 = sbr.rel (0) target = $region17
  $region16: #{forward.22} parent=0 // pred_region
    _
  $region17: #{forward.22} parent=0 // pred_fallthru
    _
  // Predicated region
  $region18: #{forward.22} parent=0 // pred_check
    _
  $region19: #{forward.22} parent=0 // pred_check_branch
    %175 = sbr.rel (0) target = $region21
  $region20: #{forward.22} parent=0 // pred_region
    _
  $region21: #{forward.22} parent=0 // pred_fallthru
    _
  // Predicated region
  $region22: #{forward.22} parent=0 // pred_check
    _
  $region23: #{forward.22} parent=0 // pred_check_branch
    %177 = sbr.rel (0) target = $region25
  $region24: #{forward.22} parent=0 // pred_region
    _
  $region25: #{forward.22} parent=0 // pred_fallthru
    _
  // Predicated region
  $region26: #{forward.22} parent=0 // pred_check
    _
  $region27: #{forward.22} parent=0 // pred_check_branch
    %179 = sbr.rel (0) target = $region29
  $region28: #{forward.22} parent=0 // pred_region
    _
  $region29: #{forward.22} parent=0 // pred_fallthru
    _

// kernel: forward.24
$region0: #{forward.24}
  #allocation0 [shape = 'u32[]', space=smem, size = 0x4, offset = 0x4, fixed_abs, tag = 'smem constant byte address 0x4 - core index']
  #allocation1 [shape = 'u32[144,128]{1,0:T(1,128)}', space=vmem, size = 0x12000, scoped, tag = 'internal scratch']
  %s0 = inlined_call_operand.vmem [shape: bf16[2,288], index: 0, kind: input, shape index: {}]
  %s1 = inlined_call_operand.vmem [shape: bf16[288,64], index: 1, kind: input, shape index: {}]
  %s2 = inlined_call_operand.vmem [shape: f32[1,64], index: 2, kind: input, shape index: {}]
  %s3 = inlined_call_operand.vmem [shape: bf16[2,64], index: 3, kind: output, shape index: {0}]
  %s4 = inlined_call_operand.vmem [shape: f32[1,2,64], index: 4, kind: output, shape index: {1}]
  %5 = xla_tuple %s3, %s4
  %s6 = sld [smem:[#allocation0]]
  $region30: #{forward.24} parent=0
    _
  %s8 = ssub.s32 1, %s6
  %s9 = scalar_select 0, %s8, %s6
  // Predicated region
  $region2: #{forward.24} parent=0 // pred_check
    _
  $region3: #{forward.24} parent=0 // pred_check_branch
    %11 = sbr.rel (0) target = $region5
  $region4: #{forward.24} parent=0 // pred_region
    _
  $region5: #{forward.24} parent=0 // pred_fallthru
    _
  // Predicated region
  $region6: #{forward.24} parent=0 // pred_check
    _
  $region7: #{forward.24} parent=0 // pred_check_branch
    %13 = sbr.rel (0) target = $region9
  $region8: #{forward.24} parent=0 // pred_region
    _
  $region9: #{forward.24} parent=0 // pred_fallthru
    _
  // Predicated region
  $region10: #{forward.24} parent=0 // pred_check
    _
  $region11: #{forward.24} parent=0 // pred_check_branch
    %15 = sbr.rel (0) target = $region13
  $region12: #{forward.24} parent=0 // pred_region
    _
  $region13: #{forward.24} parent=0 // pred_fallthru
    _
  %v17 = vld [vmem:[%s0] sm:$0x7]
  %v18 = vld [vmem:[%s1] sm:$0xf]
  %v19 = vld [vmem:[%s1 + $0x4] sm:$0xf]
  %v20 = vld [vmem:[%s1 + $0x8] sm:$0xf]
  %v21 = vld [vmem:[%s1 + $0xc] sm:$0xf]
  %v22 = vld [vmem:[%s1 + $0x10] sm:$0xf]
  %v23 = vld [vmem:[%s1 + $0x14] sm:$0xf]
  %v24 = vld [vmem:[%s1 + $0x18] sm:$0xf]
  %v25 = vld [vmem:[%s1 + $0x1c] sm:$0xf]
  %v26 = vld [vmem:[%s1 + $0x20] sm:$0xf]
  %v27 = vld [vmem:[%s1 + $0x24] sm:$0xf]
  %v28 = vld [vmem:[%s1 + $0x28] sm:$0xf]
  %v29 = vld [vmem:[%s1 + $0x2c] sm:$0xf]
  %v30 = vld [vmem:[%s1 + $0x30] sm:$0xf]
  %v31 = vld [vmem:[%s1 + $0x34] sm:$0xf]
  %v32 = vld [vmem:[%s1 + $0x38] sm:$0xf]
  %v33 = vld [vmem:[%s1 + $0x3c] sm:$0xf]
  %v34 = vld [vmem:[%s1 + $0x40] sm:$0xf]
  %v35 = vld [vmem:[%s1 + $0x44] sm:$0xf]
  %v36 = vld [vmem:[%s1 + $0x48] sm:$0xf]
  %v37 = vld [vmem:[%s1 + $0x4c] sm:$0xf]
  %v38 = vld [vmem:[%s1 + $0x50] sm:$0xf]
  %v39 = vld [vmem:[%s1 + $0x54] sm:$0xf]
  %v40 = vld [vmem:[%s1 + $0x58] sm:$0xf]
  %v41 = vld [vmem:[%s1 + $0x5c] sm:$0xf]
  %v42 = vld [vmem:[%s1 + $0x60] sm:$0xf]
  %v43 = vld [vmem:[%s1 + $0x64] sm:$0xf]
  %v44 = vld [vmem:[%s1 + $0x68] sm:$0xf]
  %v45 = vld [vmem:[%s1 + $0x6c] sm:$0xf]
  %v46 = vld [vmem:[%s1 + $0x70] sm:$0xf]
  %v47 = vld [vmem:[%s1 + $0x74] sm:$0xf]
  %v48 = vld [vmem:[%s1 + $0x78] sm:$0xf]
  %v49 = vld [vmem:[%s1 + $0x7c] sm:$0xf]
  %v50 = vld [vmem:[%s1 + $0x80] sm:$0xf]
  %v51 = vld [vmem:[%s1 + $0x84] sm:$0xf]
  %v52 = vld [vmem:[%s1 + $0x88] sm:$0xf]
  %v53 = vld [vmem:[%s1 + $0x8c] sm:$0xf]
  %v54 = vld [vmem:[%s2] sm:$0x1]
  %v56 = vlaneseq
  %v57 = vshrl.u32 %v56, 7
  %v58 = vsub.s32 0, %v57
  %v59 = vrot.slane %v54, %v58
  %v63 = vunpack.c.l.s4 1966171168
  %v64 = vunpack.c.0.s8 %v63
  %v65 = vlaneseq
  %v66 = vshrl.u32 %v65, 7
  %v67 = vsub.s32 %v64, %v66
  %v68 = vrot.slane %v17, %v67
  %v69 = vcombine.high %v68, %v68
  %v71 = vunpack.c.l.s4 1966171168
  %v72 = vunpack.c.0.s8 %v71
  %v73 = vlaneseq
  %v74 = vshrl.u32 %v73, 7
  %v75 = vsub.s32 %v72, %v74
  %v76 = vrot.slane %v68, %v75
  %v78 = vunpack.c.l.s4 1966171168
  %v79 = vunpack.c.0.s8 %v78
  %v80 = vlaneseq
  %v81 = vshrl.u32 %v80, 7
  %v82 = vsub.s32 %v79, %v81
  %v83 = vrot.slane %v69, %v82
  %v84 = vcombine.high %v76, %v76
  %v123 = vunpack.c.l.b16 %v18
  %v124 = vunpack.c.l.b16 %v19
  %v125 = vunpack.c.l.b16 %v20
  %v126 = vunpack.c.l.b16 %v21
  %v127 = vunpack.c.l.b16 %v22
  %v128 = vunpack.c.l.b16 %v23
  %v129 = vunpack.c.l.b16 %v24
  %v130 = vunpack.c.l.b16 %v25
  %v131 = vunpack.c.l.b16 %v26
  %v132 = vunpack.c.l.b16 %v27
  %v133 = vunpack.c.l.b16 %v28
  %v134 = vunpack.c.l.b16 %v29
  %v135 = vunpack.c.l.b16 %v30
  %v136 = vunpack.c.l.b16 %v31
  %v137 = vunpack.c.l.b16 %v32
  %v138 = vunpack.c.l.b16 %v33
  %v139 = vunpack.c.l.b16 %v34
  %v140 = vunpack.c.l.b16 %v35
  %v141 = vunpack.c.l.b16 %v36
  %v142 = vunpack.c.l.b16 %v37
  %v143 = vunpack.c.l.b16 %v38
  %v144 = vunpack.c.l.b16 %v39
  %v145 = vunpack.c.l.b16 %v40
  %v146 = vunpack.c.l.b16 %v41
  %v147 = vunpack.c.l.b16 %v42
  %v148 = vunpack.c.l.b16 %v43
  %v149 = vunpack.c.l.b16 %v44
  %v150 = vunpack.c.l.b16 %v45
  %v151 = vunpack.c.l.b16 %v46
  %v152 = vunpack.c.l.b16 %v47
  %v153 = vunpack.c.l.b16 %v48
  %v154 = vunpack.c.l.b16 %v49
  %v155 = vunpack.c.l.b16 %v50
  %v156 = vunpack.c.l.b16 %v51
  %v157 = vunpack.c.l.b16 %v52
  %v158 = vunpack.c.l.b16 %v53
  %v159 = vpack.c.b16 %v124, %v123
  %v160 = vpack.c.b16 %v126, %v125
  %v161 = vpack.c.b16 %v128, %v127
  %v162 = vpack.c.b16 %v130, %v129
  %v163 = vpack.c.b16 %v132, %v131
  %v164 = vpack.c.b16 %v134, %v133
  %v165 = vpack.c.b16 %v136, %v135
  %v166 = vpack.c.b16 %v138, %v137
  %v167 = vpack.c.b16 %v140, %v139
  %v168 = vpack.c.b16 %v142, %v141
  %v169 = vpack.c.b16 %v144, %v143
  %v170 = vpack.c.b16 %v146, %v145
  %v171 = vpack.c.b16 %v148, %v147
  %v172 = vpack.c.b16 %v150, %v149
  %v173 = vpack.c.b16 %v152, %v151
  %v174 = vpack.c.b16 %v154, %v153
  %v175 = vpack.c.b16 %v156, %v155
  %v176 = vpack.c.b16 %v158, %v157
  %vm195 = vcmask 261120
  %v197 = vsel %vm195, %v84, 0
  %199 = vmatprep.subr.bf16.mxu0 0
  %200 = vmatpush1.bf16.msra.mxu0 %v166
  %201 = vmatprep.subr.bf16.mxu0 0
  %202 = vmatpush1.bf16.msra.mxu0 %v165
  %203 = vmatprep.subr.bf16.mxu0 0
  %204 = vmatpush1.bf16.msra.mxu0 %v164
  %205 = vmatprep.subr.bf16.mxu0 0
  %206 = vmatpush1.bf16.msra.mxu0 %v163
  %207 = vmatprep.subr.bf16.mxu0 0
  %208 = vmatpush1.bf16.msra.mxu0 %v162
  %209 = vmatprep.subr.bf16.mxu0 0
  %210 = vmatpush1.bf16.msra.mxu0 %v161
  %211 = vmatprep.subr.bf16.mxu0 0
  %212 = vmatpush1.bf16.msra.mxu0 %v160
  %213 = vmatprep.subr.bf16.mxu0 0
  %214 = vmatpush1.bf16.msra.mxu0 %v159
  %215 = vmatprep.subr.bf16.mxu0 0
  %216 = vmatpush2.bf16.msra.mxu0 %v174
  %217 = vmatprep.subr.bf16.mxu0 0
  %218 = vmatpush2.bf16.msra.mxu0 %v173
  %219 = vmatprep.subr.bf16.mxu0 0
  %220 = vmatpush2.bf16.msra.mxu0 %v172
  %221 = vmatprep.subr.bf16.mxu0 0
  %222 = vmatpush2.bf16.msra.mxu0 %v171
  %223 = vmatprep.subr.bf16.mxu0 0
  %224 = vmatpush2.bf16.msra.mxu0 %v170
  %225 = vmatprep.subr.bf16.mxu0 0
  %226 = vmatpush2.bf16.msra.mxu0 %v169
  %227 = vmatprep.subr.bf16.mxu0 0
  %228 = vmatpush2.bf16.msra.mxu0 %v168
  %229 = vmatprep.subr.bf16.mxu0 0
  %230 = vmatpush2.bf16.msra.mxu0 %v167
  %231 = vmatprep.mubr.bf16.mxu0 %v83
  %232 = vmatmul.mubr.bf16.gmra.mxu0 %v76
  %v233 = vpop.f32.mrf.mxu0
  %v234 = vadd.f32 %v59, %v233
  %v235 = vpop.f32.mrf.mxu0
  %v236 = vpop.f32.mrf.mxu0
  %v237 = vpop.f32.mrf.mxu0
  %238 = vdwg.mxu0
  %239 = vmatprep.subr.bf16.mxu0 0
  %240 = vmatpush1.bf16.msra.mxu0 0
  %241 = vmatprep.subr.bf16.mxu0 0
  %242 = vmatpush1.bf16.msra.mxu0 0
  %243 = vmatprep.subr.bf16.mxu0 0
  %244 = vmatpush1.bf16.msra.mxu0 0
  %245 = vmatprep.subr.bf16.mxu0 0
  %246 = vmatpush1.bf16.msra.mxu0 0
  %247 = vmatprep.subr.bf16.mxu0 0
  %248 = vmatpush1.bf16.msra.mxu0 0
  %249 = vmatprep.subr.bf16.mxu0 0
  %250 = vmatpush1.bf16.msra.mxu0 0
  %251 = vmatprep.subr.bf16.mxu0 0
  %252 = vmatpush1.bf16.msra.mxu0 %v176
  %253 = vmatprep.subr.bf16.mxu0 0
  %254 = vmatpush1.bf16.msra.mxu0 %v175
  %255 = vmatprep.subr.bf16.mxu0 0
  %256 = vmatpush2.bf16.msra.mxu0 0
  %257 = vmatprep.subr.bf16.mxu0 0
  %258 = vmatpush2.bf16.msra.mxu0 0
  %259 = vmatprep.subr.bf16.mxu0 0
  %260 = vmatpush2.bf16.msra.mxu0 0
  %261 = vmatprep.subr.bf16.mxu0 0
  %262 = vmatpush2.bf16.msra.mxu0 0
  %263 = vmatprep.subr.bf16.mxu0 0
  %264 = vmatpush2.bf16.msra.mxu0 0
  %265 = vmatprep.subr.bf16.mxu0 0
  %266 = vmatpush2.bf16.msra.mxu0 0
  %267 = vmatprep.subr.bf16.mxu0 0
  %268 = vmatpush2.bf16.msra.mxu0 0
  %269 = vmatprep.subr.bf16.mxu0 0
  %270 = vmatpush2.bf16.msra.mxu0 0
  %271 = vmatprep.mubr.bf16.mxu0 0
  %272 = vmatmul.mubr.bf16.gmra.mxu0 %v197
  %v273 = vpop.f32.mrf.mxu0
  %v274 = vadd.f32 %v234, %v273
  %v275 = vpop.f32.mrf.mxu0
  %v276 = vpop.f32.mrf.mxu0
  %v277 = vpop.f32.mrf.mxu0
  %278 = vdwg.mxu0
  %vm279 = vcmask 517120
  %v280 = vsel %vm279, %v274, 0.0
  %v281 = vrot.slane %v280, 4
  %v282 = vadd.f32 %v280, %v281
  %v283 = vrot.slane %v282, 2
  %v284 = vadd.f32 %v282, %v283
  %v285 = vrot.slane %v284, 1
  %v286 = vadd.f32 %v284, %v285
  %v287 = vmul.f32 %v286, 0.5
  %v288 = vsub.f32 %v274, %v287
  %v289 = vmul.f32 %v288, %v288
  %v290 = vsel %vm279, %v289, 0.0
  %v291 = vrot.slane %v290, 4
  %v292 = vadd.f32 %v290, %v291
  %v293 = vrot.slane %v292, 2
  %v294 = vadd.f32 %v292, %v293
  %v295 = vrot.slane %v294, 1
  %v296 = vadd.f32 %v294, %v295
  %vm297 = vcmask 1040384
  %v298 = vsel %vm297, %v286, %v296
  %299 = vst.msk [vmem:[%s4] sm:$0x3] %vm279, %v298
  %v300 = vpack.c.bf16 %v274, %v274
  %vm301 = vcmask 516096
  %302 = vst.msk [vmem:[%s3] sm:$0x1] %vm301, %v300
  // Predicated region
  $region14: #{forward.24} parent=0 // pred_check
    _
  $region15: #{forward.24} parent=0 // pred_check_branch
    %304 = sbr.rel (0) target = $region17
  $region16: #{forward.24} parent=0 // pred_region
    _
  $region17: #{forward.24} parent=0 // pred_fallthru
    _
  // Predicated region
  $region18: #{forward.24} parent=0 // pred_check
    _
  $region19: #{forward.24} parent=0 // pred_check_branch
    %306 = sbr.rel (0) target = $region21
  $region20: #{forward.24} parent=0 // pred_region
    _
  $region21: #{forward.24} parent=0 // pred_fallthru
    _
  // Predicated region
  $region22: #{forward.24} parent=0 // pred_check
    _
  $region23: #{forward.24} parent=0 // pred_check_branch
    %308 = sbr.rel (0) target = $region25
  $region24: #{forward.24} parent=0 // pred_region
    _
  $region25: #{forward.24} parent=0 // pred_fallthru
    _
  // Predicated region
  $region26: #{forward.24} parent=0 // pred_check
    _
  $region27: #{forward.24} parent=0 // pred_check_branch
    %310 = sbr.rel (0) target = $region29
  $region28: #{forward.24} parent=0 // pred_region
    _
  $region29: #{forward.24} parent=0 // pred_fallthru
    _

// kernel: forward.25
$region0: #{forward.25}
  #allocation0 [shape = 'u32[]', space=smem, size = 0x4, offset = 0x4, fixed_abs, tag = 'smem constant byte address 0x4 - core index']
  #allocation1 [shape = 'u32[144,128]{1,0:T(1,128)}', space=vmem, size = 0x12000, scoped, tag = 'internal scratch']
  %s0 = inlined_call_operand.vmem [shape: bf16[2,64], index: 0, kind: input, shape index: {}]
  %s1 = inlined_call_operand.vmem [shape: f32[1,64], index: 1, kind: input, shape index: {}]
  %s2 = inlined_call_operand.vmem [shape: f32[1,64], index: 2, kind: input, shape index: {}]
  %s3 = inlined_call_operand.vmem [shape: bf16[2,64], index: 3, kind: output, shape index: {}]
  %s4 = sld [smem:[#allocation0]]
  $region22: #{forward.25} parent=0
    _
  %s6 = ssub.s32 1, %s4
  %s7 = scalar_select 0, %s6, %s4
  // Predicated region
  $region2: #{forward.25} parent=0 // pred_check
    _
  $region3: #{forward.25} parent=0 // pred_check_branch
    %9 = sbr.rel (0) target = $region5
  $region4: #{forward.25} parent=0 // pred_region
    _
  $region5: #{forward.25} parent=0 // pred_fallthru
    _
  // Predicated region
  $region6: #{forward.25} parent=0 // pred_check
    _
  $region7: #{forward.25} parent=0 // pred_check_branch
    %11 = sbr.rel (0) target = $region9
  $region8: #{forward.25} parent=0 // pred_region
    _
  $region9: #{forward.25} parent=0 // pred_fallthru
    _
  // Predicated region
  $region10: #{forward.25} parent=0 // pred_check
    _
  $region11: #{forward.25} parent=0 // pred_check_branch
    %13 = sbr.rel (0) target = $region13
  $region12: #{forward.25} parent=0 // pred_region
    _
  $region13: #{forward.25} parent=0 // pred_fallthru
    _
  %v14 = vld [vmem:[%s0] sm:$0x1]
  %v15 = vunpack.c.l.bf16 %v14
  %v16 = vld [vmem:[%s1] sm:$0x1]
  %v18 = vlaneseq
  %v19 = vshrl.u32 %v18, 7
  %v20 = vsub.s32 0, %v19
  %v21 = vrot.slane %v16, %v20
  %v23 = vmul.f32 %v15, %v21
  %v24 = vld [vmem:[%s2] sm:$0x1]
  %v26 = vlaneseq
  %v27 = vshrl.u32 %v26, 7
  %v28 = vsub.s32 0, %v27
  %v29 = vrot.slane %v24, %v28
  %v31 = vadd.f32 %v23, %v29
  %vm32 = vcmp.ge.f32.partialorder %v31, 0.0
  %v33 = vmul.f32 %v31, 0.01
  %v34 = vsel %vm32, %v31, %v33
  %v35 = vpack.c.bf16 %v34, %v34
  %vm36 = vcmask 516096
  %37 = vst.msk [vmem:[%s3] sm:$0x1] %vm36, %v35
  // Predicated region
  $region14: #{forward.25} parent=0 // pred_check
    _
  $region15: #{forward.25} parent=0 // pred_check_branch
    %39 = sbr.rel (0) target = $region17
  $region16: #{forward.25} parent=0 // pred_region
    _
  $region17: #{forward.25} parent=0 // pred_fallthru
    _
  // Predicated region
  $region18: #{forward.25} parent=0 // pred_check
    _
  $region19: #{forward.25} parent=0 // pred_check_branch
    %41 = sbr.rel (0) target = $region21
  $region20: #{forward.25} parent=0 // pred_region
    _
  $region21: #{forward.25} parent=0 // pred_fallthru
    _

// kernel: tile.43
$region0: #{tile.43}
  #allocation0 [shape = 's32[1]{0}', space=sflag, size = 0x4, scoped, tag = 'scoped memory for tile.43']
  %s0 = inlined_call_operand.vmem [shape: f32[32], index: 0, kind: input, shape index: {}]
  %s1 = inlined_call_operand.vmem [shape: f32[2,32], index: 1, kind: output, shape index: {}]
  // Predicated region
  $region2: #{tile.43} parent=0 // pred_check
    _
  $region3: #{tile.43} parent=0 // pred_check_branch
    %3 = sbr.rel (0) target = $region5
  $region4: #{tile.43} parent=0 // pred_region
    _
  $region5: #{tile.43} parent=0 // pred_fallthru
    _
  %v4 = vld [vmem:[%s0] ss:$0 sm:$0xff]
  %5 = vst [vmem:[%s1] sm:$0x3] %v4

// kernel: tile.48
$region0: #{tile.48}
  %s0 = inlined_call_operand.vmem [shape: f32[2,32], index: 0, kind: input, shape index: {}]
  %s1 = inlined_call_operand.vmem [shape: f32[1,64], index: 1, kind: output, shape index: {}]
  $region1: #{tile.48} parent=0
    #allocation0 [shape = 'u8[4096]{0}', space=vmem, size = 0x1000, scoped, tag = 'scoped mem for output reshape']
    #allocation1 [shape = 'u8[4096]{0}', space=vmem, size = 0x1000, scoped, tag = 'scoped mem for input reshape']
    %s3 = sshll.u32 1, 2
    %s4 = ssub.s32 %s3, 1
    %v5 = vld [vmem:[%s0] sm:%s4]
    %6 = vst [vmem:[#allocation1] sm:%s4] %v5
    %v7 = vld [vmem:[#allocation1] sm:$0x1]
    %vm8 = vcmask 261120
    %9 = vst.msk [vmem:[#allocation0] sm:$0x1] %vm8, %v7
    %s10 = scalar_lea.vmem [#allocation1], 1
    %v11 = vld [vmem:[%s10] sm:$0x1]
    %12 = vrot.lane.b32.xlu0 %v11, 32
    %v13 = vpop.permute.xlu0 %12
    %vm14 = vcmask 523520
    %15 = vst.msk [vmem:[#allocation0] sm:$0x1] %vm14, %v13
    %s17 = sshll.u32 1, 1
    %s18 = ssub.s32 %s17, 1
    %v20 = vld [vmem:[#allocation0] sm:%s18]
    %s21 = sshll.u32 1, 1
    %s22 = ssub.s32 %s21, 1
    %23 = vst [vmem:[%s1] sm:%s22] %v20

// kernel: forward.26
$region0: #{forward.26}
  #allocation0 [shape = 'u32[]', space=smem, size = 0x4, offset = 0x4, fixed_abs, tag = 'smem constant byte address 0x4 - core index']
  #allocation1 [shape = 'u32[144,128]{1,0:T(1,128)}', space=vmem, size = 0x12000, scoped, tag = 'internal scratch']
  %s0 = inlined_call_operand.vmem [shape: bf16[2,64], index: 0, kind: input, shape index: {}]
  %s1 = inlined_call_operand.vmem [shape: bf16[64,32], index: 1, kind: input, shape index: {}]
  %s2 = inlined_call_operand.vmem [shape: f32[1,32], index: 2, kind: input, shape index: {}]
  %s3 = inlined_call_operand.vmem [shape: f32[2,16], index: 3, kind: input, shape index: {}]
  %s4 = inlined_call_operand.vmem [shape: bf16[16,64], index: 4, kind: input, shape index: {}]
  %s5 = inlined_call_operand.vmem [shape: f32[1,64], index: 5, kind: input, shape index: {}]
  %s6 = inlined_call_operand.vmem [shape: f32[2,32], index: 6, kind: output, shape index: {0}]
  %s7 = inlined_call_operand.vmem [shape: bf16[2,64], index: 7, kind: output, shape index: {1}]
  %8 = xla_tuple %s6, %s7
  %s9 = sld [smem:[#allocation0]]
  $region42: #{forward.26} parent=0
    _
  %s11 = ssub.s32 1, %s9
  %s12 = scalar_select 0, %s11, %s9
  // Predicated region
  $region2: #{forward.26} parent=0 // pred_check
    _
  $region3: #{forward.26} parent=0 // pred_check_branch
    %14 = sbr.rel (0) target = $region5
  $region4: #{forward.26} parent=0 // pred_region
    _
  $region5: #{forward.26} parent=0 // pred_fallthru
    _
  // Predicated region
  $region6: #{forward.26} parent=0 // pred_check
    _
  $region7: #{forward.26} parent=0 // pred_check_branch
    %16 = sbr.rel (0) target = $region9
  $region8: #{forward.26} parent=0 // pred_region
    _
  $region9: #{forward.26} parent=0 // pred_fallthru
    _
  // Predicated region
  $region10: #{forward.26} parent=0 // pred_check
    _
  $region11: #{forward.26} parent=0 // pred_check_branch
    %18 = sbr.rel (0) target = $region13
  $region12: #{forward.26} parent=0 // pred_region
    _
  $region13: #{forward.26} parent=0 // pred_fallthru
    _
  // Predicated region
  $region14: #{forward.26} parent=0 // pred_check
    _
  $region15: #{forward.26} parent=0 // pred_check_branch
    %20 = sbr.rel (0) target = $region17
  $region16: #{forward.26} parent=0 // pred_region
    _
  $region17: #{forward.26} parent=0 // pred_fallthru
    _
  // Predicated region
  $region18: #{forward.26} parent=0 // pred_check
    _
  $region19: #{forward.26} parent=0 // pred_check_branch
    %22 = sbr.rel (0) target = $region21
  $region20: #{forward.26} parent=0 // pred_region
    _
  $region21: #{forward.26} parent=0 // pred_fallthru
    _
  // Predicated region
  $region22: #{forward.26} parent=0 // pred_check
    _
  $region23: #{forward.26} parent=0 // pred_check_branch
    %24 = sbr.rel (0) target = $region25
  $region24: #{forward.26} parent=0 // pred_region
    _
  $region25: #{forward.26} parent=0 // pred_fallthru
    _
  %v26 = vld [vmem:[%s0] sm:$0x1]
  %v27 = vld [vmem:[%s1] sm:$0xf]
  %v28 = vld [vmem:[%s1 + $0x4] sm:$0xf]
  %v29 = vld [vmem:[%s1 + $0x8] sm:$0xf]
  %v30 = vld [vmem:[%s1 + $0xc] sm:$0xf]
  %v31 = vld [vmem:[%s1 + $0x10] sm:$0xf]
  %v32 = vld [vmem:[%s1 + $0x14] sm:$0xf]
  %v33 = vld [vmem:[%s1 + $0x18] sm:$0xf]
  %v34 = vld [vmem:[%s1 + $0x1c] sm:$0xf]
  %v35 = vld [vmem:[%s2] sm:$0x1]
  %v37 = vlaneseq
  %v38 = vshrl.u32 %v37, 7
  %v39 = vsub.s32 0, %v38
  %v40 = vrot.slane %v35, %v39
  %v50 = vunpack.c.l.b16 %v27
  %v51 = vunpack.c.l.b16 %v28
  %v52 = vunpack.c.l.b16 %v29
  %v53 = vunpack.c.l.b16 %v30
  %v54 = vunpack.c.l.b16 %v31
  %v55 = vunpack.c.l.b16 %v32
  %v56 = vunpack.c.l.b16 %v33
  %v57 = vunpack.c.l.b16 %v34
  %v58 = vpack.c.b16 %v51, %v50
  %v59 = vpack.c.b16 %v53, %v52
  %v60 = vpack.c.b16 %v55, %v54
  %v61 = vpack.c.b16 %v57, %v56
  %vm66 = vcmask 523264
  %v68 = vsel %vm66, %v26, 0
  %70 = vmatprep.subr.bf16.mxu0 0
  %71 = vmatpush1.bf16.msra.mxu0 0
  %72 = vmatprep.subr.bf16.mxu0 0
  %73 = vmatpush1.bf16.msra.mxu0 0
  %74 = vmatprep.subr.bf16.mxu0 0
  %75 = vmatpush1.bf16.msra.mxu0 0
  %76 = vmatprep.subr.bf16.mxu0 0
  %77 = vmatpush1.bf16.msra.mxu0 0
  %78 = vmatprep.subr.bf16.mxu0 0
  %79 = vmatpush1.bf16.msra.mxu0 %v61
  %80 = vmatprep.subr.bf16.mxu0 0
  %81 = vmatpush1.bf16.msra.mxu0 %v60
  %82 = vmatprep.subr.bf16.mxu0 0
  %83 = vmatpush1.bf16.msra.mxu0 %v59
  %84 = vmatprep.subr.bf16.mxu0 0
  %85 = vmatpush1.bf16.msra.mxu0 %v58
  %86 = vmatprep.subr.bf16.mxu0 0
  %87 = vmatpush2.bf16.msra.mxu0 0
  %88 = vmatprep.subr.bf16.mxu0 0
  %89 = vmatpush2.bf16.msra.mxu0 0
  %90 = vmatprep.subr.bf16.mxu0 0
  %91 = vmatpush2.bf16.msra.mxu0 0
  %92 = vmatprep.subr.bf16.mxu0 0
  %93 = vmatpush2.bf16.msra.mxu0 0
  %94 = vmatprep.subr.bf16.mxu0 0
  %95 = vmatpush2.bf16.msra.mxu0 0
  %96 = vmatprep.subr.bf16.mxu0 0
  %97 = vmatpush2.bf16.msra.mxu0 0
  %98 = vmatprep.subr.bf16.mxu0 0
  %99 = vmatpush2.bf16.msra.mxu0 0
  %100 = vmatprep.subr.bf16.mxu0 0
  %101 = vmatpush2.bf16.msra.mxu0 0
  %102 = vmatprep.mubr.bf16.mxu0 0
  %103 = vmatmul.mubr.bf16.gmra.mxu0 %v68
  %v104 = vpop.f32.mrf.mxu0
  %v105 = vadd.f32 %v40, %v104
  %v106 = vpop.f32.mrf.mxu0
  %v107 = vpop.f32.mrf.mxu0
  %v108 = vpop.f32.mrf.mxu0
  %109 = vdwg.mxu0
  %vm110 = vcmask 254976
  %111 = vst.msk [vmem:[%s6] sm:$0x3] %vm110, %v105
  %v112 = vmul.f32 %v105, 0.5
  %v113 = vmul.f32 %v112, 1.442695
  %v114 = vpow.pop %v113
  %v115 = vld [vmem:[%s3] sm:$0x3]
  %117 = vrot.lane.b32.xlu0 %v115, 16
  %v118 = vpop.permute.xlu0 %117
  %v120 = vmul.f32 %v114, %v118
  %122 = vrot.lane.b32.xlu0 %v120, 112
  %v123 = vpop.permute.xlu0 %122
  %v125 = vadd.f32 %v105, %v123
  %v126 = vpack.c.bf16 %v125, %v125
  %v127 = vld [vmem:[%s4] sm:$0xf]
  %v128 = vld [vmem:[%s4 + $0x4] sm:$0xf]
  %v129 = vld [vmem:[%s5] sm:$0x1]
  %v131 = vlaneseq
  %v132 = vshrl.u32 %v131, 7
  %v133 = vsub.s32 0, %v132
  %v134 = vrot.slane %v129, %v133
  %v138 = vunpack.c.l.b16 %v127
  %v139 = vunpack.c.l.b16 %v128
  %v140 = vpack.c.b16 %v139, %v138
  %vm142 = vcmask 130048
  %v144 = vsel %vm142, %v126, 0
  %146 = vmatprep.subr.bf16.mxu0 0
  %147 = vmatpush1.bf16.msra.mxu0 0
  %148 = vmatprep.subr.bf16.mxu0 0
  %149 = vmatpush1.bf16.msra.mxu0 0
  %150 = vmatprep.subr.bf16.mxu0 0
  %151 = vmatpush1.bf16.msra.mxu0 0
  %152 = vmatprep.subr.bf16.mxu0 0
  %153 = vmatpush1.bf16.msra.mxu0 0
  %154 = vmatprep.subr.bf16.mxu0 0
  %155 = vmatpush1.bf16.msra.mxu0 0
  %156 = vmatprep.subr.bf16.mxu0 0
  %157 = vmatpush1.bf16.msra.mxu0 0
  %158 = vmatprep.subr.bf16.mxu0 0
  %159 = vmatpush1.bf16.msra.mxu0 0
  %160 = vmatprep.subr.bf16.mxu0 0
  %161 = vmatpush1.bf16.msra.mxu0 %v140
  %162 = vmatprep.subr.bf16.mxu0 0
  %163 = vmatpush2.bf16.msra.mxu0 0
  %164 = vmatprep.subr.bf16.mxu0 0
  %165 = vmatpush2.bf16.msra.mxu0 0
  %166 = vmatprep.subr.bf16.mxu0 0
  %167 = vmatpush2.bf16.msra.mxu0 0
  %168 = vmatprep.subr.bf16.mxu0 0
  %169 = vmatpush2.bf16.msra.mxu0 0
  %170 = vmatprep.subr.bf16.mxu0 0
  %171 = vmatpush2.bf16.msra.mxu0 0
  %172 = vmatprep.subr.bf16.mxu0 0
  %173 = vmatpush2.bf16.msra.mxu0 0
  %174 = vmatprep.subr.bf16.mxu0 0
  %175 = vmatpush2.bf16.msra.mxu0 0
  %176 = vmatprep.subr.bf16.mxu0 0
  %177 = vmatpush2.bf16.msra.mxu0 0
  %178 = vmatprep.mubr.bf16.mxu0 0
  %179 = vmatmul.mubr.bf16.gmra.mxu0 %v144
  %v180 = vpop.f32.mrf.mxu0
  %v181 = vadd.f32 %v134, %v180
  %v182 = vpop.f32.mrf.mxu0
  %v183 = vpop.f32.mrf.mxu0
  %v184 = vpop.f32.mrf.mxu0
  %185 = vdwg.mxu0
  %v186 = vpack.c.bf16 %v181, %v181
  %vm187 = vcmask 516096
  %188 = vst.msk [vmem:[%s7] sm:$0x1] %vm187, %v186
  // Predicated region
  $region26: #{forward.26} parent=0 // pred_check
    _
  $region27: #{forward.26} parent=0 // pred_check_branch
    %190 = sbr.rel (0) target = $region29
  $region28: #{forward.26} parent=0 // pred_region
    _
  $region29: #{forward.26} parent=0 // pred_fallthru
    _
  // Predicated region
  $region30: #{forward.26} parent=0 // pred_check
    _
  $region31: #{forward.26} parent=0 // pred_check_branch
    %192 = sbr.rel (0) target = $region33
  $region32: #{forward.26} parent=0 // pred_region
    _
  $region33: #{forward.26} parent=0 // pred_fallthru
    _
  // Predicated region
  $region34: #{forward.26} parent=0 // pred_check
    _
  $region35: #{forward.26} parent=0 // pred_check_branch
    %194 = sbr.rel (0) target = $region37
  $region36: #{forward.26} parent=0 // pred_region
    _
  $region37: #{forward.26} parent=0 // pred_fallthru
    _
  // Predicated region
  $region38: #{forward.26} parent=0 // pred_check
    _
  $region39: #{forward.26} parent=0 // pred_check_branch
    %196 = sbr.rel (0) target = $region41
  $region40: #{forward.26} parent=0 // pred_region
    _
  $region41: #{forward.26} parent=0 // pred_fallthru
    _

// kernel: forward.27
$region0: #{forward.27}
  #allocation0 [shape = 'u32[]', space=smem, size = 0x4, offset = 0x4, fixed_abs, tag = 'smem constant byte address 0x4 - core index']
  #allocation1 [shape = 'u32[144,128]{1,0:T(1,128)}', space=vmem, size = 0x12000, scoped, tag = 'internal scratch']
  %s0 = inlined_call_operand.vmem [shape: bf16[2,2,2,64], index: 0, kind: input, shape index: {}]
  %s1 = inlined_call_operand.vmem [shape: bf16[4,64,128], index: 1, kind: input, shape index: {}]
  %s2 = inlined_call_operand.vmem [shape: f32[1,128], index: 2, kind: input, shape index: {}]
  %s3 = inlined_call_operand.vmem [shape: bf16[2,1,2,1,64], index: 3, kind: output, shape index: {0}]
  %s4 = inlined_call_operand.vmem [shape: f32[2,2,128], index: 4, kind: output, shape index: {1}]
  %5 = xla_tuple %s3, %s4
  %s6 = sld [smem:[#allocation0]]
  $region53: #{forward.27} parent=0
    _
  %s8 = ssub.s32 1, %s6
  %s9 = scalar_select 0, %s8, %s6
  loop: start=0, step=1, limit=4
  $region2: #{forward.27} parent=0 // loop_pre_header
    _
  $region3: #{forward.27} parent=0 // loop_header
    %s11 = sphi 0, %s15
    %p12 = scmp.ge.s32.totalorder %s11, 4
    %s21 = sphi 0, %s23
    %s24 = sphi 0, %s21
    %s25 = sphi 0, %s24
    %s41 = sphi 0, %s25
    %s45 = sphi 0, %s45
    %s47 = sphi 0, %s45
    %s48 = sphi 0, %s47
    %s62 = sphi 0, %s48
    %s66 = sphi 0, %s66
    %s68 = sphi 0, %s66
    %s69 = sphi 0, %s68
    %s83 = sphi 0, %s69
    %s89 = sphi 0, %s91
    %s92 = sphi 0, %s89
    %s93 = sphi 0, %s92
    %s109 = sphi 0, %s93
    %s115 = sphi 0, %s117
    %s118 = sphi 0, %s115
    %s119 = sphi 0, %s118
    %s135 = sphi 0, %s119
  $region4: #{forward.27} parent=0 // loop_header_branch
    %14 = sbr.rel (%p12) target = $region8
  $region5: #{forward.27} parent=0 // loop_body
    %s16 = ssub.s32 %s11, 1
    %s17 = ssub.s32 %s11, 2
    %s18 = sadd.s32 %s11, 1
    %s19 = ssub.s32 %s11, %s18
    %p20 = scmp.eq.s32.totalorder %s19, 0
    %s22 = sadd.s32 %s21, 1
    %s23 = scalar_select %p20, %s21, %s22
    %p26 = pneg %p20
    %p27 = scmp.eq.s32.totalorder %s11, 1
    %p28 = por %p26, %p27
    %p29 = scmp.ne.s32.totalorder %s21, %s24
    %p30 = scmp.eq.s32.totalorder %s11, 0
    %p31 = por %p29, %p30
    %p32 = scmp.ne.s32.totalorder %s21, %s24
    %p33 = scmp.eq.s32.totalorder %s16, 1
    %p34 = por %p32, %p33
    %p35 = scmp.ne.s32.totalorder %s24, %s25
    %p36 = scmp.eq.s32.totalorder %s16, 0
    %p37 = por %p35, %p36
    %p38 = scmp.ne.s32.totalorder %s24, %s25
    %p39 = scmp.eq.s32.totalorder %s17, 1
    %p40 = por %p38, %p39
    %p42 = scmp.ne.s32.totalorder %s25, %s41
    %p43 = scmp.eq.s32.totalorder %s17, 0
    %p44 = por %p42, %p43
    %s46 = sadd.s32 %s45, 1
    %p49 = scmp.eq.s32.totalorder %s11, 1
    %p50 = scmp.ne.s32.totalorder %s45, %s47
    %p51 = scmp.eq.s32.totalorder %s11, 0
    %p52 = por %p50, %p51
    %p53 = scmp.ne.s32.totalorder %s45, %s47
    %p54 = scmp.eq.s32.totalorder %s16, 1
    %p55 = por %p53, %p54
    %p56 = scmp.ne.s32.totalorder %s47, %s48
    %p57 = scmp.eq.s32.totalorder %s16, 0
    %p58 = por %p56, %p57
    %p59 = scmp.ne.s32.totalorder %s47, %s48
    %p60 = scmp.eq.s32.totalorder %s17, 1
    %p61 = por %p59, %p60
    %p63 = scmp.ne.s32.totalorder %s48, %s62
    %p64 = scmp.eq.s32.totalorder %s17, 0
    %p65 = por %p63, %p64
    %s67 = sadd.s32 %s66, 1
    %p70 = scmp.eq.s32.totalorder %s11, 1
    %p71 = scmp.ne.s32.totalorder %s66, %s68
    %p72 = scmp.eq.s32.totalorder %s11, 0
    %p73 = por %p71, %p72
    %p74 = scmp.ne.s32.totalorder %s66, %s68
    %p75 = scmp.eq.s32.totalorder %s16, 1
    %p76 = por %p74, %p75
    %p77 = scmp.ne.s32.totalorder %s68, %s69
    %p78 = scmp.eq.s32.totalorder %s16, 0
    %p79 = por %p77, %p78
    %p80 = scmp.ne.s32.totalorder %s68, %s69
    %p81 = scmp.eq.s32.totalorder %s17, 1
    %p82 = por %p80, %p81
    %p84 = scmp.ne.s32.totalorder %s69, %s83
    %p85 = scmp.eq.s32.totalorder %s17, 0
    %p86 = por %p84, %p85
    %s87 = ssub.s32 %s11, %s18
    %p88 = scmp.eq.s32.totalorder %s87, 0
    %s90 = sadd.s32 %s89, 1
    %s91 = scalar_select %p88, %s89, %s90
    %p94 = pneg %p88
    %p95 = scmp.eq.s32.totalorder %s11, 1
    %p96 = por %p94, %p95
    %p97 = scmp.ne.s32.totalorder %s89, %s92
    %p98 = scmp.eq.s32.totalorder %s11, 0
    %p99 = por %p97, %p98
    %p100 = scmp.ne.s32.totalorder %s89, %s92
    %p101 = scmp.eq.s32.totalorder %s16, 1
    %p102 = por %p100, %p101
    %p103 = scmp.ne.s32.totalorder %s92, %s93
    %p104 = scmp.eq.s32.totalorder %s16, 0
    %p105 = por %p103, %p104
    %p106 = scmp.ne.s32.totalorder %s92, %s93
    %p107 = scmp.eq.s32.totalorder %s17, 1
    %p108 = por %p106, %p107
    %p110 = scmp.ne.s32.totalorder %s93, %s109
    %p111 = scmp.eq.s32.totalorder %s17, 0
    %p112 = por %p110, %p111
    %s113 = ssub.s32 %s11, %s18
    %p114 = scmp.eq.s32.totalorder %s113, 0
    %s116 = sadd.s32 %s115, 1
    %s117 = scalar_select %p114, %s115, %s116
    %p120 = pneg %p114
    %p121 = scmp.eq.s32.totalorder %s11, 1
    %p122 = por %p120, %p121
    %p123 = scmp.ne.s32.totalorder %s115, %s118
    %p124 = scmp.eq.s32.totalorder %s11, 0
    %p125 = por %p123, %p124
    %p126 = scmp.ne.s32.totalorder %s115, %s118
    %p127 = scmp.eq.s32.totalorder %s16, 1
    %p128 = por %p126, %p127
    %p129 = scmp.ne.s32.totalorder %s118, %s119
    %p130 = scmp.eq.s32.totalorder %s16, 0
    %p131 = por %p129, %p130
    %p132 = scmp.ne.s32.totalorder %s118, %s119
    %p133 = scmp.eq.s32.totalorder %s17, 1
    %p134 = por %p132, %p133
    %p136 = scmp.ne.s32.totalorder %s119, %s135
    %p137 = scmp.eq.s32.totalorder %s17, 0
    %p138 = por %p136, %p137
    %p139 = scmp.le.s32.totalorder 1, %s11
    %p140 = scmp.lt.s32.totalorder %s11, 3
    %p141 = pnand %p139, %p140
    %p142 = pneg %p141
    // Predicated region
    $region9: #{forward.27} parent=5 // pred_check
      _
    $region10: #{forward.27} parent=5 // pred_check_branch
      %144 = sbr.rel (%p141) target = $region12
    $region11: #{forward.27} parent=5 // pred_region
      %s145 = ssub.s32 %s11, 1
      // Predicated region
      $region13: #{forward.27} parent=11 // pred_check
        %p146 = pneg %p58
      $region14: #{forward.27} parent=11 // pred_check_branch
        %148 = sbr.rel (%p146) target = $region16
      $region15: #{forward.27} parent=11 // pred_region
        _
      $region16: #{forward.27} parent=11 // pred_fallthru
        _
      // Predicated region
      $region17: #{forward.27} parent=11 // pred_check
        %p149 = pneg %p79
      $region18: #{forward.27} parent=11 // pred_check_branch
        %151 = sbr.rel (%p149) target = $region20
      $region19: #{forward.27} parent=11 // pred_region
        _
      $region20: #{forward.27} parent=11 // pred_fallthru
        _
    $region12: #{forward.27} parent=5 // pred_fallthru
      _
    %p152 = scmp.lt.s32.totalorder %s11, 2
    // Predicated region
    $region21: #{forward.27} parent=5 // pred_check
      %p153 = pneg %p152
    $region22: #{forward.27} parent=5 // pred_check_branch
      %155 = sbr.rel (%p153) target = $region24
    $region23: #{forward.27} parent=5 // pred_region
      // Predicated region
      $region25: #{forward.27} parent=23 // pred_check
        %p156 = pneg %p31
      $region26: #{forward.27} parent=23 // pred_check_branch
        %158 = sbr.rel (%p156) target = $region28
      $region27: #{forward.27} parent=23 // pred_region
        %p159 = scmp.lt.s32.totalorder %s11, 1
        %s160 = scalar_select %p159, %s11, 1
        %s161 = smul.addr %s160, 2
        %s162 = scalar_lea.vmem %s0, %s161
      $region28: #{forward.27} parent=23 // pred_fallthru
        _
    $region24: #{forward.27} parent=5 // pred_fallthru
      _
    %p163 = scmp.le.s32.totalorder 1, %s11
    %p164 = scmp.lt.s32.totalorder %s11, 3
    %p165 = pnand %p163, %p164
    %p166 = pneg %p165
    // Predicated region
    $region29: #{forward.27} parent=5 // pred_check
      _
    $region30: #{forward.27} parent=5 // pred_check_branch
      %168 = sbr.rel (%p165) target = $region32
    $region31: #{forward.27} parent=5 // pred_region
      %s169 = ssub.s32 %s11, 1
      %p170 = scmp.lt.s32.totalorder %s16, 1
      %s171 = scalar_select %p170, %s16, 1
      %s172 = smul.addr %s171, 2
      %s173 = scalar_lea.vmem %s0, %s172
      %p174 = pneg %p37
      %p175 = pneg %p34
      %p176 = pneg %p58
      %p177 = pneg %p55
      %p178 = pneg %p79
      %p179 = pneg %p76
      %p180 = pneg %p105
      %p181 = pneg %p102
      %p182 = scmp.lt.s32.totalorder %s16, 1
      %s183 = scalar_select %p182, %s16, 1
      %s184 = smul.addr %s183, 2
      %s185 = scalar_lea.vmem %s3, %s184
      %p186 = pneg %p131
      %p187 = pneg %p128
      %p188 = scmp.lt.s32.totalorder %s16, 1
      %s189 = scalar_select %p188, %s16, 1
      %s190 = smul.addr %s189, 2
      %s191 = scalar_lea.vmem %s4, %s190
      %p192 = scmp.lt.s32.totalorder %s16, 1
      %s193 = scalar_select %p192, %s16, 1
      %s194 = smul.addr %s193, 2
      %s195 = scalar_lea.vmem %s0, %s194
      %p196 = scmp.lt.s32.totalorder %s16, 1
      %s197 = scalar_select %p196, %s16, 1
      %s198 = smul.addr %s197, 2
      %s199 = scalar_lea.vmem %s3, %s198
      %p200 = scmp.lt.s32.totalorder %s16, 1
      %s201 = scalar_select %p200, %s16, 1
      %s202 = smul.addr %s201, 2
      %s203 = scalar_lea.vmem %s4, %s202
      %v205 = vld [vmem:[%s195] sm:$0x1]
      %v206 = vld [vmem:[%s195 + $0x1] sm:$0x1]
      %v207 = vld [vmem:[%s1] sm:$0xf]
      %v208 = vld [vmem:[%s1 + $0x4] sm:$0xf]
      %v209 = vld [vmem:[%s1 + $0x8] sm:$0xf]
      %v210 = vld [vmem:[%s1 + $0xc] sm:$0xf]
      %v211 = vld [vmem:[%s1 + $0x10] sm:$0xf]
      %v212 = vld [vmem:[%s1 + $0x14] sm:$0xf]
      %v213 = vld [vmem:[%s1 + $0x18] sm:$0xf]
      %v214 = vld [vmem:[%s1 + $0x1c] sm:$0xf]
      %s215 = scalar_lea.vmem %s1, 32
      %v216 = vld [vmem:[%s215] sm:$0xf]
      %v217 = vld [vmem:[%s215 + $0x4] sm:$0xf]
      %v218 = vld [vmem:[%s215 + $0x8] sm:$0xf]
      %v219 = vld [vmem:[%s215 + $0xc] sm:$0xf]
      %v220 = vld [vmem:[%s215 + $0x10] sm:$0xf]
      %v221 = vld [vmem:[%s215 + $0x14] sm:$0xf]
      %v222 = vld [vmem:[%s215 + $0x18] sm:$0xf]
      %v223 = vld [vmem:[%s215 + $0x1c] sm:$0xf]
      %v226 = vunpack.c.l.s4 1966171168
      %v227 = vunpack.c.0.s8 %v226
      %v228 = vlaneseq
      %v229 = vshrl.u32 %v228, 7
      %v230 = vsub.s32 %v227, %v229
      %v231 = vrot.slane %v205, %v230
      %v233 = vunpack.c.l.s4 1966171168
      %v234 = vunpack.c.0.s8 %v233
      %v235 = vlaneseq
      %v236 = vshrl.u32 %v235, 7
      %v237 = vsub.s32 %v234, %v236
      %v238 = vrot.slane %v231, %v237
      %v240 = vshrl.u32 %v238, 16
      %v250 = vunpack.c.l.b16 %v216
      %v251 = vunpack.c.l.b16 %v217
      %v252 = vunpack.c.l.b16 %v218
      %v253 = vunpack.c.l.b16 %v219
      %v254 = vunpack.c.l.b16 %v220
      %v255 = vunpack.c.l.b16 %v221
      %v256 = vunpack.c.l.b16 %v222
      %v257 = vunpack.c.l.b16 %v223
      %v258 = vpack.c.b16 %v251, %v250
      %v259 = vpack.c.b16 %v253, %v252
      %v260 = vpack.c.b16 %v255, %v254
      %v261 = vpack.c.b16 %v257, %v256
      %vm266 = vcmask 523264
      %v268 = vsel %vm266, %v240, 0
      %270 = vmatprep.subr.bf16.mxu0 0
      %271 = vmatpush1.bf16.msra.mxu0 0
      %272 = vmatprep.subr.bf16.mxu0 0
      %273 = vmatpush1.bf16.msra.mxu0 0
      %274 = vmatprep.subr.bf16.mxu0 0
      %275 = vmatpush1.bf16.msra.mxu0 0
      %276 = vmatprep.subr.bf16.mxu0 0
      %277 = vmatpush1.bf16.msra.mxu0 0
      %278 = vmatprep.subr.bf16.mxu0 0
      %279 = vmatpush1.bf16.msra.mxu0 %v261
      %280 = vmatprep.subr.bf16.mxu0 0
      %281 = vmatpush1.bf16.msra.mxu0 %v260
      %282 = vmatprep.subr.bf16.mxu0 0
      %283 = vmatpush1.bf16.msra.mxu0 %v259
      %284 = vmatprep.subr.bf16.mxu0 0
      %285 = vmatpush1.bf16.msra.mxu0 %v258
      %286 = vmatprep.subr.bf16.mxu0 0
      %287 = vmatpush2.bf16.msra.mxu0 0
      %288 = vmatprep.subr.bf16.mxu0 0
      %289 = vmatpush2.bf16.msra.mxu0 0
      %290 = vmatprep.subr.bf16.mxu0 0
      %291 = vmatpush2.bf16.msra.mxu0 0
      %292 = vmatprep.subr.bf16.mxu0 0
      %293 = vmatpush2.bf16.msra.mxu0 0
      %294 = vmatprep.subr.bf16.mxu0 0
      %295 = vmatpush2.bf16.msra.mxu0 0
      %296 = vmatprep.subr.bf16.mxu0 0
      %297 = vmatpush2.bf16.msra.mxu0 0
      %298 = vmatprep.subr.bf16.mxu0 0
      %299 = vmatpush2.bf16.msra.mxu0 0
      %300 = vmatprep.subr.bf16.mxu0 0
      %301 = vmatpush2.bf16.msra.mxu0 0
      %302 = vmatprep.mubr.bf16.mxu0 0
      %303 = vmatmul.mubr.bf16.gmra.mxu0 %v268
      %v304 = vpop.f32.mrf.mxu0
      %v305 = vadd.f32 0.0, %v304
      %v306 = vpop.f32.mrf.mxu0
      %v307 = vpop.f32.mrf.mxu0
      %v308 = vpop.f32.mrf.mxu0
      %309 = vdwg.mxu0
      %v318 = vunpack.c.l.b16 %v207
      %v319 = vunpack.c.l.b16 %v208
      %v320 = vunpack.c.l.b16 %v209
      %v321 = vunpack.c.l.b16 %v210
      %v322 = vunpack.c.l.b16 %v211
      %v323 = vunpack.c.l.b16 %v212
      %v324 = vunpack.c.l.b16 %v213
      %v325 = vunpack.c.l.b16 %v214
      %v326 = vpack.c.b16 %v319, %v318
      %v327 = vpack.c.b16 %v321, %v320
      %v328 = vpack.c.b16 %v323, %v322
      %v329 = vpack.c.b16 %v325, %v324
      %v335 = vsel %vm266, %v205, 0
      %337 = vmatprep.subr.bf16.mxu0 0
      %338 = vmatpush1.bf16.msra.mxu0 0
      %339 = vmatprep.subr.bf16.mxu0 0
      %340 = vmatpush1.bf16.msra.mxu0 0
      %341 = vmatprep.subr.bf16.mxu0 0
      %342 = vmatpush1.bf16.msra.mxu0 0
      %343 = vmatprep.subr.bf16.mxu0 0
      %344 = vmatpush1.bf16.msra.mxu0 0
      %345 = vmatprep.subr.bf16.mxu0 0
      %346 = vmatpush1.bf16.msra.mxu0 %v329
      %347 = vmatprep.subr.bf16.mxu0 0
      %348 = vmatpush1.bf16.msra.mxu0 %v328
      %349 = vmatprep.subr.bf16.mxu0 0
      %350 = vmatpush1.bf16.msra.mxu0 %v327
      %351 = vmatprep.subr.bf16.mxu0 0
      %352 = vmatpush1.bf16.msra.mxu0 %v326
      %353 = vmatprep.subr.bf16.mxu0 0
      %354 = vmatpush2.bf16.msra.mxu0 0
      %355 = vmatprep.subr.bf16.mxu0 0
      %356 = vmatpush2.bf16.msra.mxu0 0
      %357 = vmatprep.subr.bf16.mxu0 0
      %358 = vmatpush2.bf16.msra.mxu0 0
      %359 = vmatprep.subr.bf16.mxu0 0
      %360 = vmatpush2.bf16.msra.mxu0 0
      %361 = vmatprep.subr.bf16.mxu0 0
      %362 = vmatpush2.bf16.msra.mxu0 0
      %363 = vmatprep.subr.bf16.mxu0 0
      %364 = vmatpush2.bf16.msra.mxu0 0
      %365 = vmatprep.subr.bf16.mxu0 0
      %366 = vmatpush2.bf16.msra.mxu0 0
      %367 = vmatprep.subr.bf16.mxu0 0
      %368 = vmatpush2.bf16.msra.mxu0 0
      %369 = vmatprep.mubr.bf16.mxu0 0
      %370 = vmatmul.mubr.bf16.gmra.mxu0 %v335
      %v371 = vpop.f32.mrf.mxu0
      %v372 = vadd.f32 %v305, %v371
      %v373 = vpop.f32.mrf.mxu0
      %v374 = vpop.f32.mrf.mxu0
      %v375 = vpop.f32.mrf.mxu0
      %376 = vdwg.mxu0
      %s377 = scalar_lea.vmem %s1, 64
      %v378 = vld [vmem:[%s377] sm:$0xf]
      %v379 = vld [vmem:[%s377 + $0x4] sm:$0xf]
      %v380 = vld [vmem:[%s377 + $0x8] sm:$0xf]
      %v381 = vld [vmem:[%s377 + $0xc] sm:$0xf]
      %v382 = vld [vmem:[%s377 + $0x10] sm:$0xf]
      %v383 = vld [vmem:[%s377 + $0x14] sm:$0xf]
      %v384 = vld [vmem:[%s377 + $0x18] sm:$0xf]
      %v385 = vld [vmem:[%s377 + $0x1c] sm:$0xf]
      %v394 = vunpack.c.l.b16 %v378
      %v395 = vunpack.c.l.b16 %v379
      %v396 = vunpack.c.l.b16 %v380
      %v397 = vunpack.c.l.b16 %v381
      %v398 = vunpack.c.l.b16 %v382
      %v399 = vunpack.c.l.b16 %v383
      %v400 = vunpack.c.l.b16 %v384
      %v401 = vunpack.c.l.b16 %v385
      %v402 = vpack.c.b16 %v395, %v394
      %v403 = vpack.c.b16 %v397, %v396
      %v404 = vpack.c.b16 %v399, %v398
      %v405 = vpack.c.b16 %v401, %v400
      %v411 = vsel %vm266, %v206, 0
      %413 = vmatprep.subr.bf16.mxu0 0
      %414 = vmatpush1.bf16.msra.mxu0 0
      %415 = vmatprep.subr.bf16.mxu0 0
      %416 = vmatpush1.bf16.msra.mxu0 0
      %417 = vmatprep.subr.bf16.mxu0 0
      %418 = vmatpush1.bf16.msra.mxu0 0
      %419 = vmatprep.subr.bf16.mxu0 0
      %420 = vmatpush1.bf16.msra.mxu0 0
      %421 = vmatprep.subr.bf16.mxu0 0
      %422 = vmatpush1.bf16.msra.mxu0 %v405
      %423 = vmatprep.subr.bf16.mxu0 0
      %424 = vmatpush1.bf16.msra.mxu0 %v404
      %425 = vmatprep.subr.bf16.mxu0 0
      %426 = vmatpush1.bf16.msra.mxu0 %v403
      %427 = vmatprep.subr.bf16.mxu0 0
      %428 = vmatpush1.bf16.msra.mxu0 %v402
      %429 = vmatprep.subr.bf16.mxu0 0
      %430 = vmatpush2.bf16.msra.mxu0 0
      %431 = vmatprep.subr.bf16.mxu0 0
      %432 = vmatpush2.bf16.msra.mxu0 0
      %433 = vmatprep.subr.bf16.mxu0 0
      %434 = vmatpush2.bf16.msra.mxu0 0
      %435 = vmatprep.subr.bf16.mxu0 0
      %436 = vmatpush2.bf16.msra.mxu0 0
      %437 = vmatprep.subr.bf16.mxu0 0
      %438 = vmatpush2.bf16.msra.mxu0 0
      %439 = vmatprep.subr.bf16.mxu0 0
      %440 = vmatpush2.bf16.msra.mxu0 0
      %441 = vmatprep.subr.bf16.mxu0 0
      %442 = vmatpush2.bf16.msra.mxu0 0
      %443 = vmatprep.subr.bf16.mxu0 0
      %444 = vmatpush2.bf16.msra.mxu0 0
      %445 = vmatprep.mubr.bf16.mxu0 0
      %446 = vmatmul.mubr.bf16.gmra.mxu0 %v411
      %v447 = vpop.f32.mrf.mxu0
      %v448 = vadd.f32 0.0, %v447
      %v449 = vpop.f32.mrf.mxu0
      %v450 = vpop.f32.mrf.mxu0
      %v451 = vpop.f32.mrf.mxu0
      %452 = vdwg.mxu0
      %v453 = vadd.f32 %v372, %v448
      %s454 = scalar_lea.vmem %s1, 96
      %v455 = vld [vmem:[%s454] sm:$0xf]
      %v456 = vld [vmem:[%s454 + $0x4] sm:$0xf]
      %v457 = vld [vmem:[%s454 + $0x8] sm:$0xf]
      %v458 = vld [vmem:[%s454 + $0xc] sm:$0xf]
      %v459 = vld [vmem:[%s454 + $0x10] sm:$0xf]
      %v460 = vld [vmem:[%s454 + $0x14] sm:$0xf]
      %v461 = vld [vmem:[%s454 + $0x18] sm:$0xf]
      %v462 = vld [vmem:[%s454 + $0x1c] sm:$0xf]
      %v465 = vunpack.c.l.s4 1966171168
      %v466 = vunpack.c.0.s8 %v465
      %v467 = vlaneseq
      %v468 = vshrl.u32 %v467, 7
      %v469 = vsub.s32 %v466, %v468
      %v470 = vrot.slane %v206, %v469
      %v472 = vunpack.c.l.s4 1966171168
      %v473 = vunpack.c.0.s8 %v472
      %v474 = vlaneseq
      %v475 = vshrl.u32 %v474, 7
      %v476 = vsub.s32 %v473, %v475
      %v477 = vrot.slane %v470, %v476
      %v479 = vshrl.u32 %v477, 16
      %v489 = vunpack.c.l.b16 %v455
      %v490 = vunpack.c.l.b16 %v456
      %v491 = vunpack.c.l.b16 %v457
      %v492 = vunpack.c.l.b16 %v458
      %v493 = vunpack.c.l.b16 %v459
      %v494 = vunpack.c.l.b16 %v460
      %v495 = vunpack.c.l.b16 %v461
      %v496 = vunpack.c.l.b16 %v462
      %v497 = vpack.c.b16 %v490, %v489
      %v498 = vpack.c.b16 %v492, %v491
      %v499 = vpack.c.b16 %v494, %v493
      %v500 = vpack.c.b16 %v496, %v495
      %v506 = vsel %vm266, %v479, 0
      %508 = vmatprep.subr.bf16.mxu0 0
      %509 = vmatpush1.bf16.msra.mxu0 0
      %510 = vmatprep.subr.bf16.mxu0 0
      %511 = vmatpush1.bf16.msra.mxu0 0
      %512 = vmatprep.subr.bf16.mxu0 0
      %513 = vmatpush1.bf16.msra.mxu0 0
      %514 = vmatprep.subr.bf16.mxu0 0
      %515 = vmatpush1.bf16.msra.mxu0 0
      %516 = vmatprep.subr.bf16.mxu0 0
      %517 = vmatpush1.bf16.msra.mxu0 %v500
      %518 = vmatprep.subr.bf16.mxu0 0
      %519 = vmatpush1.bf16.msra.mxu0 %v499
      %520 = vmatprep.subr.bf16.mxu0 0
      %521 = vmatpush1.bf16.msra.mxu0 %v498
      %522 = vmatprep.subr.bf16.mxu0 0
      %523 = vmatpush1.bf16.msra.mxu0 %v497
      %524 = vmatprep.subr.bf16.mxu0 0
      %525 = vmatpush2.bf16.msra.mxu0 0
      %526 = vmatprep.subr.bf16.mxu0 0
      %527 = vmatpush2.bf16.msra.mxu0 0
      %528 = vmatprep.subr.bf16.mxu0 0
      %529 = vmatpush2.bf16.msra.mxu0 0
      %530 = vmatprep.subr.bf16.mxu0 0
      %531 = vmatpush2.bf16.msra.mxu0 0
      %532 = vmatprep.subr.bf16.mxu0 0
      %533 = vmatpush2.bf16.msra.mxu0 0
      %534 = vmatprep.subr.bf16.mxu0 0
      %535 = vmatpush2.bf16.msra.mxu0 0
      %536 = vmatprep.subr.bf16.mxu0 0
      %537 = vmatpush2.bf16.msra.mxu0 0
      %538 = vmatprep.subr.bf16.mxu0 0
      %539 = vmatpush2.bf16.msra.mxu0 0
      %540 = vmatprep.mubr.bf16.mxu0 0
      %541 = vmatmul.mubr.bf16.gmra.mxu0 %v506
      %v542 = vpop.f32.mrf.mxu0
      %v543 = vadd.f32 0.0, %v542
      %v544 = vpop.f32.mrf.mxu0
      %v545 = vpop.f32.mrf.mxu0
      %v546 = vpop.f32.mrf.mxu0
      %547 = vdwg.mxu0
      %v548 = vadd.f32 %v453, %v543
      %v549 = vld [vmem:[%s2] sm:$0x1]
      %v550 = vadd.f32 %v548, %v549
      %v551 = vadd.f32 %v550, 0.0
      %v552 = vsub.f32 %v550, %v551
      %v553 = vmul.f32 %v552, %v552
      %v554 = vadd.f32 %v553, 0.0
      %v556 = vrot.slane %v554, 7
      %vm558 = vcmask 1040384
      %v559 = vsel %vm558, %v551, %v556
      %560 = vst [vmem:[%s203] sm:$0x3] %v559
      %v561 = vpack.c.bf16 %v550, %v550
      %vm562 = vcmask 516096
      %vm563 = vsmask.f32 256
      %vm564 = vmand %vm562, %vm563
      %v565 = vld [vmem:[%s199] sm:$0x1]
      %v566 = vsel %vm564, %v561, %v565
      %567 = vst [vmem:[%s199] sm:$0x1] %v566
      %v570 = vunpack.c.l.s4 1966171168
      %v571 = vunpack.c.0.s8 %v570
      %v572 = vlaneseq
      %v573 = vshrl.u32 %v572, 7
      %v574 = vsub.s32 %v571, %v573
      %v575 = vrot.slane %v561, %v574
      %v577 = vunpack.c.l.s4 1966171168
      %v578 = vunpack.c.0.s8 %v577
      %v579 = vlaneseq
      %v580 = vshrl.u32 %v579, 7
      %v581 = vsub.s32 %v578, %v580
      %v582 = vrot.slane %v575, %v581
      %583 = vrot.lane.b32.xlu0 %v582, 64
      %v584 = vpop.permute.xlu0 %583
      %s586 = scalar_lea.vmem %s199, 1
      %v587 = vld [vmem:[%s586] sm:$0x1]
      %v588 = vsel %vm564, %v584, %v587
      %589 = vst [vmem:[%s586] sm:$0x1] %v588
      %p590 = scmp.lt.s32.totalorder %s16, 1
      %s591 = scalar_select %p590, %s16, 1
      %s592 = smul.addr %s591, 2
      %s593 = scalar_lea.vmem %s3, %s592
      %p594 = scmp.lt.s32.totalorder %s16, 1
      %s595 = scalar_select %p594, %s16, 1
      %s596 = smul.addr %s595, 2
      %s597 = scalar_lea.vmem %s4, %s596
      // Predicated region
      $region33: #{forward.27} parent=31 // pred_check
        %p598 = pneg %p102
      $region34: #{forward.27} parent=31 // pred_check_branch
        %600 = sbr.rel (%p598) target = $region36
      $region35: #{forward.27} parent=31 // pred_region
        _
      $region36: #{forward.27} parent=31 // pred_fallthru
        _
      // Predicated region
      $region37: #{forward.27} parent=31 // pred_check
        %p601 = pneg %p128
      $region38: #{forward.27} parent=31 // pred_check_branch
        %603 = sbr.rel (%p601) target = $region40
      $region39: #{forward.27} parent=31 // pred_region
        _
      $region40: #{forward.27} parent=31 // pred_fallthru
        _
    $region32: #{forward.27} parent=5 // pred_fallthru
      _
    %p604 = scmp.le.s32.totalorder 2, %s11
    // Predicated region
    $region41: #{forward.27} parent=5 // pred_check
      %p605 = pneg %p604
    $region42: #{forward.27} parent=5 // pred_check_branch
      %607 = sbr.rel (%p605) target = $region44
    $region43: #{forward.27} parent=5 // pred_region
      %s608 = ssub.s32 %s11, 2
      // Predicated region
      $region45: #{forward.27} parent=43 // pred_check
        %p609 = pneg %p108
      $region46: #{forward.27} parent=43 // pred_check_branch
        %611 = sbr.rel (%p609) target = $region48
      $region47: #{forward.27} parent=43 // pred_region
        %p612 = scmp.lt.s32.totalorder %s17, 1
        %s613 = scalar_select %p612, %s17, 1
        %s614 = smul.addr %s613, 2
        %s615 = scalar_lea.vmem %s3, %s614
      $region48: #{forward.27} parent=43 // pred_fallthru
        _
      // Predicated region
      $region49: #{forward.27} parent=43 // pred_check
        %p616 = pneg %p134
      $region50: #{forward.27} parent=43 // pred_check_branch
        %618 = sbr.rel (%p616) target = $region52
      $region51: #{forward.27} parent=43 // pred_region
        %p619 = scmp.lt.s32.totalorder %s17, 1
        %s620 = scalar_select %p619, %s17, 1
        %s621 = smul.addr %s620, 2
        %s622 = scalar_lea.vmem %s4, %s621
      $region52: #{forward.27} parent=43 // pred_fallthru
        _
    $region44: #{forward.27} parent=5 // pred_fallthru
      _
  $region6: #{forward.27} parent=0 // loop_footer
    %s15 = sadd.s32 1, %s11
  $region7: #{forward.27} parent=0 // loop_footer_branch
    %10 = sbr.rel target = $region3
  $region8: #{forward.27} parent=0 // loop_exit
    _

// kernel: tile.53
$region0: #{tile.53}
  #allocation0 [shape = 's32[1]{0}', space=sflag, size = 0x4, scoped, tag = 'scoped memory for tile.53']
  %s0 = inlined_call_operand.vmem [shape: f32[16], index: 0, kind: input, shape index: {}]
  %s1 = inlined_call_operand.vmem [shape: f32[2,16], index: 1, kind: output, shape index: {}]
  // Predicated region
  $region2: #{tile.53} parent=0 // pred_check
    _
  $region3: #{tile.53} parent=0 // pred_check_branch
    %3 = sbr.rel (0) target = $region5
  $region4: #{tile.53} parent=0 // pred_region
    _
  $region5: #{tile.53} parent=0 // pred_fallthru
    _
  %v4 = vld [vmem:[%s0] ss:$0 sm:$0xff]
  %5 = vst [vmem:[%s1] sm:$0x3] %v4

// kernel: tile.58
$region0: #{tile.58}
  %s0 = inlined_call_operand.vmem [shape: f32[2,16], index: 0, kind: input, shape index: {}]
  %s1 = inlined_call_operand.vmem [shape: f32[1,32], index: 1, kind: output, shape index: {}]
  $region1: #{tile.58} parent=0
    #allocation0 [shape = 'u8[4096]{0}', space=vmem, size = 0x1000, scoped, tag = 'scoped mem for output reshape']
    #allocation1 [shape = 'u8[4096]{0}', space=vmem, size = 0x1000, scoped, tag = 'scoped mem for input reshape']
    %s3 = sshll.u32 1, 2
    %s4 = ssub.s32 %s3, 1
    %v5 = vld [vmem:[%s0] sm:%s4]
    %6 = vst [vmem:[#allocation1] sm:%s4] %v5
    %v7 = vld [vmem:[#allocation1] sm:$0x1]
    %vm8 = vcmask 130048
    %9 = vst.msk [vmem:[#allocation0] sm:$0x1] %vm8, %v7
    %s10 = scalar_lea.vmem [#allocation1], 1
    %v11 = vld [vmem:[%s10] sm:$0x1]
    %12 = vrot.lane.b32.xlu0 %v11, 16
    %v13 = vpop.permute.xlu0 %12
    %vm14 = vcmask 261248
    %15 = vst.msk [vmem:[#allocation0] sm:$0x1] %vm14, %v13
    %s17 = sshll.u32 1, 1
    %s18 = ssub.s32 %s17, 1
    %v20 = vld [vmem:[#allocation0] sm:%s18]
    %s21 = sshll.u32 1, 1
    %s22 = ssub.s32 %s21, 1
    %23 = vst [vmem:[%s1] sm:%s22] %v20

// kernel: forward.28
$region0: #{forward.28}
  #allocation0 [shape = 'u32[]', space=smem, size = 0x4, offset = 0x4, fixed_abs, tag = 'smem constant byte address 0x4 - core index']
  #allocation1 [shape = 'u32[144,128]{1,0:T(1,128)}', space=vmem, size = 0x12000, scoped, tag = 'internal scratch']
  %s0 = inlined_call_operand.vmem [shape: bf16[4,64], index: 0, kind: input, shape index: {}]
  %s1 = inlined_call_operand.vmem [shape: f32[1,64], index: 1, kind: input, shape index: {}]
  %s2 = inlined_call_operand.vmem [shape: f32[1,64], index: 2, kind: input, shape index: {}]
  %s3 = inlined_call_operand.vmem [shape: bf16[4,64], index: 3, kind: output, shape index: {}]
  %s4 = sld [smem:[#allocation0]]
  $region22: #{forward.28} parent=0
    _
  %s6 = ssub.s32 1, %s4
  %s7 = scalar_select 0, %s6, %s4
  // Predicated region
  $region2: #{forward.28} parent=0 // pred_check
    _
  $region3: #{forward.28} parent=0 // pred_check_branch
    %9 = sbr.rel (0) target = $region5
  $region4: #{forward.28} parent=0 // pred_region
    _
  $region5: #{forward.28} parent=0 // pred_fallthru
    _
  // Predicated region
  $region6: #{forward.28} parent=0 // pred_check
    _
  $region7: #{forward.28} parent=0 // pred_check_branch
    %11 = sbr.rel (0) target = $region9
  $region8: #{forward.28} parent=0 // pred_region
    _
  $region9: #{forward.28} parent=0 // pred_fallthru
    _
  // Predicated region
  $region10: #{forward.28} parent=0 // pred_check
    _
  $region11: #{forward.28} parent=0 // pred_check_branch
    %13 = sbr.rel (0) target = $region13
  $region12: #{forward.28} parent=0 // pred_region
    _
  $region13: #{forward.28} parent=0 // pred_fallthru
    _
  %v14 = vld [vmem:[%s0] sm:$0x3]
  %v15 = vunpack.c.l.bf16 %v14
  %v16 = vld [vmem:[%s1] sm:$0x1]
  %v18 = vlaneseq
  %v19 = vshrl.u32 %v18, 7
  %v20 = vsub.s32 0, %v19
  %v21 = vrot.slane %v16, %v20
  %v23 = vmul.f32 %v15, %v21
  %v24 = vld [vmem:[%s2] sm:$0x1]
  %v26 = vlaneseq
  %v27 = vshrl.u32 %v26, 7
  %v28 = vsub.s32 0, %v27
  %v29 = vrot.slane %v24, %v28
  %v31 = vadd.f32 %v23, %v29
  %vm32 = vcmp.ge.f32.partialorder %v31, 0.0
  %v33 = vmul.f32 %v31, 0.01
  %v34 = vsel %vm32, %v31, %v33
  %v35 = vpack.c.bf16 %v34, %v34
  %vm36 = vcmask 517120
  %37 = vst.msk [vmem:[%s3] sm:$0x3] %vm36, %v35
  // Predicated region
  $region14: #{forward.28} parent=0 // pred_check
    _
  $region15: #{forward.28} parent=0 // pred_check_branch
    %39 = sbr.rel (0) target = $region17
  $region16: #{forward.28} parent=0 // pred_region
    _
  $region17: #{forward.28} parent=0 // pred_fallthru
    _
  // Predicated region
  $region18: #{forward.28} parent=0 // pred_check
    _
  $region19: #{forward.28} parent=0 // pred_check_branch
    %41 = sbr.rel (0) target = $region21
  $region20: #{forward.28} parent=0 // pred_region
    _
  $region21: #{forward.28} parent=0 // pred_fallthru
    _

// kernel: forward.29
$region0: #{forward.29}
  #allocation0 [shape = 'u32[]', space=smem, size = 0x4, offset = 0x4, fixed_abs, tag = 'smem constant byte address 0x4 - core index']
  #allocation1 [shape = 'u32[144,128]{1,0:T(1,128)}', space=vmem, size = 0x12000, scoped, tag = 'internal scratch']
  %s0 = inlined_call_operand.vmem [shape: bf16[2,3,3,32], index: 0, kind: input, shape index: {}]
  %s1 = inlined_call_operand.vmem [shape: bf16[4,32,64], index: 1, kind: input, shape index: {}]
  %s2 = inlined_call_operand.vmem [shape: f32[1,64], index: 2, kind: input, shape index: {}]
  %s3 = inlined_call_operand.vmem [shape: bf16[2,2,2,2,32], index: 3, kind: output, shape index: {0}]
  %s4 = inlined_call_operand.vmem [shape: f32[2,2,64], index: 4, kind: output, shape index: {1}]
  %5 = xla_tuple %s3, %s4
  %s6 = sld [smem:[#allocation0]]
  $region53: #{forward.29} parent=0
    _
  %s8 = ssub.s32 1, %s6
  %s9 = scalar_select 0, %s8, %s6
  loop: start=0, step=1, limit=4
  $region2: #{forward.29} parent=0 // loop_pre_header
    _
  $region3: #{forward.29} parent=0 // loop_header
    %s11 = sphi 0, %s15
    %p12 = scmp.ge.s32.totalorder %s11, 4
    %s21 = sphi 0, %s23
    %s24 = sphi 0, %s21
    %s25 = sphi 0, %s24
    %s41 = sphi 0, %s25
    %s45 = sphi 0, %s45
    %s47 = sphi 0, %s45
    %s48 = sphi 0, %s47
    %s62 = sphi 0, %s48
    %s66 = sphi 0, %s66
    %s68 = sphi 0, %s66
    %s69 = sphi 0, %s68
    %s83 = sphi 0, %s69
    %s89 = sphi 0, %s91
    %s92 = sphi 0, %s89
    %s93 = sphi 0, %s92
    %s109 = sphi 0, %s93
    %s115 = sphi 0, %s117
    %s118 = sphi 0, %s115
    %s119 = sphi 0, %s118
    %s135 = sphi 0, %s119
  $region4: #{forward.29} parent=0 // loop_header_branch
    %14 = sbr.rel (%p12) target = $region8
  $region5: #{forward.29} parent=0 // loop_body
    %s16 = ssub.s32 %s11, 1
    %s17 = ssub.s32 %s11, 2
    %s18 = sadd.s32 %s11, 1
    %s19 = ssub.s32 %s11, %s18
    %p20 = scmp.eq.s32.totalorder %s19, 0
    %s22 = sadd.s32 %s21, 1
    %s23 = scalar_select %p20, %s21, %s22
    %p26 = pneg %p20
    %p27 = scmp.eq.s32.totalorder %s11, 1
    %p28 = por %p26, %p27
    %p29 = scmp.ne.s32.totalorder %s21, %s24
    %p30 = scmp.eq.s32.totalorder %s11, 0
    %p31 = por %p29, %p30
    %p32 = scmp.ne.s32.totalorder %s21, %s24
    %p33 = scmp.eq.s32.totalorder %s16, 1
    %p34 = por %p32, %p33
    %p35 = scmp.ne.s32.totalorder %s24, %s25
    %p36 = scmp.eq.s32.totalorder %s16, 0
    %p37 = por %p35, %p36
    %p38 = scmp.ne.s32.totalorder %s24, %s25
    %p39 = scmp.eq.s32.totalorder %s17, 1
    %p40 = por %p38, %p39
    %p42 = scmp.ne.s32.totalorder %s25, %s41
    %p43 = scmp.eq.s32.totalorder %s17, 0
    %p44 = por %p42, %p43
    %s46 = sadd.s32 %s45, 1
    %p49 = scmp.eq.s32.totalorder %s11, 1
    %p50 = scmp.ne.s32.totalorder %s45, %s47
    %p51 = scmp.eq.s32.totalorder %s11, 0
    %p52 = por %p50, %p51
    %p53 = scmp.ne.s32.totalorder %s45, %s47
    %p54 = scmp.eq.s32.totalorder %s16, 1
    %p55 = por %p53, %p54
    %p56 = scmp.ne.s32.totalorder %s47, %s48
    %p57 = scmp.eq.s32.totalorder %s16, 0
    %p58 = por %p56, %p57
    %p59 = scmp.ne.s32.totalorder %s47, %s48
    %p60 = scmp.eq.s32.totalorder %s17, 1
    %p61 = por %p59, %p60
    %p63 = scmp.ne.s32.totalorder %s48, %s62
    %p64 = scmp.eq.s32.totalorder %s17, 0
    %p65 = por %p63, %p64
    %s67 = sadd.s32 %s66, 1
    %p70 = scmp.eq.s32.totalorder %s11, 1
    %p71 = scmp.ne.s32.totalorder %s66, %s68
    %p72 = scmp.eq.s32.totalorder %s11, 0
    %p73 = por %p71, %p72
    %p74 = scmp.ne.s32.totalorder %s66, %s68
    %p75 = scmp.eq.s32.totalorder %s16, 1
    %p76 = por %p74, %p75
    %p77 = scmp.ne.s32.totalorder %s68, %s69
    %p78 = scmp.eq.s32.totalorder %s16, 0
    %p79 = por %p77, %p78
    %p80 = scmp.ne.s32.totalorder %s68, %s69
    %p81 = scmp.eq.s32.totalorder %s17, 1
    %p82 = por %p80, %p81
    %p84 = scmp.ne.s32.totalorder %s69, %s83
    %p85 = scmp.eq.s32.totalorder %s17, 0
    %p86 = por %p84, %p85
    %s87 = ssub.s32 %s11, %s18
    %p88 = scmp.eq.s32.totalorder %s87, 0
    %s90 = sadd.s32 %s89, 1
    %s91 = scalar_select %p88, %s89, %s90
    %p94 = pneg %p88
    %p95 = scmp.eq.s32.totalorder %s11, 1
    %p96 = por %p94, %p95
    %p97 = scmp.ne.s32.totalorder %s89, %s92
    %p98 = scmp.eq.s32.totalorder %s11, 0
    %p99 = por %p97, %p98
    %p100 = scmp.ne.s32.totalorder %s89, %s92
    %p101 = scmp.eq.s32.totalorder %s16, 1
    %p102 = por %p100, %p101
    %p103 = scmp.ne.s32.totalorder %s92, %s93
    %p104 = scmp.eq.s32.totalorder %s16, 0
    %p105 = por %p103, %p104
    %p106 = scmp.ne.s32.totalorder %s92, %s93
    %p107 = scmp.eq.s32.totalorder %s17, 1
    %p108 = por %p106, %p107
    %p110 = scmp.ne.s32.totalorder %s93, %s109
    %p111 = scmp.eq.s32.totalorder %s17, 0
    %p112 = por %p110, %p111
    %s113 = ssub.s32 %s11, %s18
    %p114 = scmp.eq.s32.totalorder %s113, 0
    %s116 = sadd.s32 %s115, 1
    %s117 = scalar_select %p114, %s115, %s116
    %p120 = pneg %p114
    %p121 = scmp.eq.s32.totalorder %s11, 1
    %p122 = por %p120, %p121
    %p123 = scmp.ne.s32.totalorder %s115, %s118
    %p124 = scmp.eq.s32.totalorder %s11, 0
    %p125 = por %p123, %p124
    %p126 = scmp.ne.s32.totalorder %s115, %s118
    %p127 = scmp.eq.s32.totalorder %s16, 1
    %p128 = por %p126, %p127
    %p129 = scmp.ne.s32.totalorder %s118, %s119
    %p130 = scmp.eq.s32.totalorder %s16, 0
    %p131 = por %p129, %p130
    %p132 = scmp.ne.s32.totalorder %s118, %s119
    %p133 = scmp.eq.s32.totalorder %s17, 1
    %p134 = por %p132, %p133
    %p136 = scmp.ne.s32.totalorder %s119, %s135
    %p137 = scmp.eq.s32.totalorder %s17, 0
    %p138 = por %p136, %p137
    %p139 = scmp.le.s32.totalorder 1, %s11
    %p140 = scmp.lt.s32.totalorder %s11, 3
    %p141 = pnand %p139, %p140
    %p142 = pneg %p141
    // Predicated region
    $region9: #{forward.29} parent=5 // pred_check
      _
    $region10: #{forward.29} parent=5 // pred_check_branch
      %144 = sbr.rel (%p141) target = $region12
    $region11: #{forward.29} parent=5 // pred_region
      %s145 = ssub.s32 %s11, 1
      // Predicated region
      $region13: #{forward.29} parent=11 // pred_check
        %p146 = pneg %p58
      $region14: #{forward.29} parent=11 // pred_check_branch
        %148 = sbr.rel (%p146) target = $region16
      $region15: #{forward.29} parent=11 // pred_region
        _
      $region16: #{forward.29} parent=11 // pred_fallthru
        _
      // Predicated region
      $region17: #{forward.29} parent=11 // pred_check
        %p149 = pneg %p79
      $region18: #{forward.29} parent=11 // pred_check_branch
        %151 = sbr.rel (%p149) target = $region20
      $region19: #{forward.29} parent=11 // pred_region
        _
      $region20: #{forward.29} parent=11 // pred_fallthru
        _
    $region12: #{forward.29} parent=5 // pred_fallthru
      _
    %p152 = scmp.lt.s32.totalorder %s11, 2
    // Predicated region
    $region21: #{forward.29} parent=5 // pred_check
      %p153 = pneg %p152
    $region22: #{forward.29} parent=5 // pred_check_branch
      %155 = sbr.rel (%p153) target = $region24
    $region23: #{forward.29} parent=5 // pred_region
      // Predicated region
      $region25: #{forward.29} parent=23 // pred_check
        %p156 = pneg %p31
      $region26: #{forward.29} parent=23 // pred_check_branch
        %158 = sbr.rel (%p156) target = $region28
      $region27: #{forward.29} parent=23 // pred_region
        %p159 = scmp.lt.s32.totalorder %s11, 1
        %s160 = scalar_select %p159, %s11, 1
        %s161 = smul.addr %s160, 3
        %s162 = smul.addr %s161, 2
        %s163 = scalar_lea.vmem %s0, %s162
      $region28: #{forward.29} parent=23 // pred_fallthru
        _
    $region24: #{forward.29} parent=5 // pred_fallthru
      _
    %p164 = scmp.le.s32.totalorder 1, %s11
    %p165 = scmp.lt.s32.totalorder %s11, 3
    %p166 = pnand %p164, %p165
    %p167 = pneg %p166
    // Predicated region
    $region29: #{forward.29} parent=5 // pred_check
      _
    $region30: #{forward.29} parent=5 // pred_check_branch
      %169 = sbr.rel (%p166) target = $region32
    $region31: #{forward.29} parent=5 // pred_region
      %s170 = ssub.s32 %s11, 1
      %p171 = scmp.lt.s32.totalorder %s16, 1
      %s172 = scalar_select %p171, %s16, 1
      %s173 = smul.addr %s172, 3
      %s174 = smul.addr %s173, 2
      %s175 = scalar_lea.vmem %s0, %s174
      %p176 = pneg %p37
      %p177 = pneg %p34
      %p178 = pneg %p58
      %p179 = pneg %p55
      %p180 = pneg %p79
      %p181 = pneg %p76
      %p182 = pneg %p105
      %p183 = pneg %p102
      %p184 = scmp.lt.s32.totalorder %s16, 1
      %s185 = scalar_select %p184, %s16, 1
      %s186 = smul.addr %s185, 4
      %s187 = scalar_lea.vmem %s3, %s186
      %p188 = pneg %p131
      %p189 = pneg %p128
      %p190 = scmp.lt.s32.totalorder %s16, 1
      %s191 = scalar_select %p190, %s16, 1
      %s192 = smul.addr %s191, 2
      %s193 = scalar_lea.vmem %s4, %s192
      %p194 = scmp.lt.s32.totalorder %s16, 1
      %s195 = scalar_select %p194, %s16, 1
      %s196 = smul.addr %s195, 3
      %s197 = smul.addr %s196, 2
      %s198 = scalar_lea.vmem %s0, %s197
      %p199 = scmp.lt.s32.totalorder %s16, 1
      %s200 = scalar_select %p199, %s16, 1
      %s201 = smul.addr %s200, 4
      %s202 = scalar_lea.vmem %s3, %s201
      %p203 = scmp.lt.s32.totalorder %s16, 1
      %s204 = scalar_select %p203, %s16, 1
      %s205 = smul.addr %s204, 2
      %s206 = scalar_lea.vmem %s4, %s205
      %v208 = vld [vmem:[%s198] sm:$0x3]
      %v209 = vld [vmem:[%s198 + $0x2] sm:$0x3]
      %v210 = vld [vmem:[%s198 + $0x4] sm:$0x3]
      %v211 = vld [vmem:[%s1] sm:$0xf]
      %v212 = vld [vmem:[%s1 + $0x4] sm:$0xf]
      %v213 = vld [vmem:[%s1 + $0x8] sm:$0xf]
      %v214 = vld [vmem:[%s1 + $0xc] sm:$0xf]
      %v218 = vunpack.c.l.s4 1966171168
      %v219 = vunpack.c.0.s8 %v218
      %v220 = vlaneseq
      %v221 = vshrl.u32 %v220, 7
      %v222 = vsub.s32 %v219, %v221
      %v223 = vrot.slane %v208, %v222
      %v224 = vcombine.high %v223, %v223
      %v226 = vunpack.c.l.s4 1966171168
      %v227 = vunpack.c.0.s8 %v226
      %v228 = vlaneseq
      %v229 = vshrl.u32 %v228, 7
      %v230 = vsub.s32 %v227, %v229
      %v231 = vrot.slane %v209, %v230
      %v232 = vcombine.high %v231, %v231
      %vm233 = vsmask.f32 256
      %vm234 = vsmask.f32 1284
      %vm235 = vmor %vm233, %vm234
      %vm236 = vsmask.f32 2312
      %vm237 = vmor %vm235, %vm236
      %vm238 = vsmask.f32 3340
      %vm239 = vmor %vm237, %vm238
      %vm240 = vsmask.f32 4368
      %vm241 = vmor %vm239, %vm240
      %vm242 = vsmask.f32 5396
      %vm243 = vmor %vm241, %vm242
      %vm244 = vsmask.f32 6424
      %vm245 = vmor %vm243, %vm244
      %vm246 = vsmask.f32 7452
      %vm247 = vmor %vm245, %vm246
      %v249 = vshrl.u32 %v223, 16
      %v251 = vrot.slane %v249, 7
      %v252 = vrot.slane %v251, 1
      %v254 = vshll.u32 %v224, 16
      %v256 = vsel %vm247, %v252, %v254
      %v258 = vshrl.u32 %v231, 16
      %v260 = vrot.slane %v258, 7
      %v261 = vrot.slane %v260, 1
      %v263 = vshll.u32 %v232, 16
      %v265 = vsel %vm247, %v261, %v263
      %s266 = scalar_lea.vmem %s1, 16
      %v267 = vld [vmem:[%s266] sm:$0xf]
      %v268 = vld [vmem:[%s266 + $0x4] sm:$0xf]
      %v269 = vld [vmem:[%s266 + $0x8] sm:$0xf]
      %v270 = vld [vmem:[%s266 + $0xc] sm:$0xf]
      %v271 = vcombine.low %v256, %v265
      %v273 = vunpack.c.l.s4 1966171168
      %v274 = vunpack.c.0.s8 %v273
      %v275 = vlaneseq
      %v276 = vshrl.u32 %v275, 7
      %v277 = vsub.s32 %v274, %v276
      %v278 = vrot.slane %v271, %v277
      %v280 = vunpack.c.l.s4 1966171168
      %v281 = vunpack.c.0.s8 %v280
      %v282 = vlaneseq
      %v283 = vshrl.u32 %v282, 7
      %v284 = vsub.s32 %v281, %v283
      %v285 = vrot.slane %v278, %v284
      %v290 = vunpack.c.l.b16 %v267
      %v291 = vunpack.c.l.b16 %v268
      %v292 = vunpack.c.l.b16 %v269
      %v293 = vunpack.c.l.b16 %v270
      %v294 = vpack.c.b16 %v291, %v290
      %v295 = vpack.c.b16 %v293, %v292
      %vm298 = vcmask 261120
      %v300 = vsel %vm298, %v285, 0
      %302 = vmatprep.subr.bf16.mxu0 0
      %303 = vmatpush1.bf16.msra.mxu0 0
      %304 = vmatprep.subr.bf16.mxu0 0
      %305 = vmatpush1.bf16.msra.mxu0 0
      %306 = vmatprep.subr.bf16.mxu0 0
      %307 = vmatpush1.bf16.msra.mxu0 0
      %308 = vmatprep.subr.bf16.mxu0 0
      %309 = vmatpush1.bf16.msra.mxu0 0
      %310 = vmatprep.subr.bf16.mxu0 0
      %311 = vmatpush1.bf16.msra.mxu0 0
      %312 = vmatprep.subr.bf16.mxu0 0
      %313 = vmatpush1.bf16.msra.mxu0 0
      %314 = vmatprep.subr.bf16.mxu0 0
      %315 = vmatpush1.bf16.msra.mxu0 %v295
      %316 = vmatprep.subr.bf16.mxu0 0
      %317 = vmatpush1.bf16.msra.mxu0 %v294
      %318 = vmatprep.subr.bf16.mxu0 0
      %319 = vmatpush2.bf16.msra.mxu0 0
      %320 = vmatprep.subr.bf16.mxu0 0
      %321 = vmatpush2.bf16.msra.mxu0 0
      %322 = vmatprep.subr.bf16.mxu0 0
      %323 = vmatpush2.bf16.msra.mxu0 0
      %324 = vmatprep.subr.bf16.mxu0 0
      %325 = vmatpush2.bf16.msra.mxu0 0
      %326 = vmatprep.subr.bf16.mxu0 0
      %327 = vmatpush2.bf16.msra.mxu0 0
      %328 = vmatprep.subr.bf16.mxu0 0
      %329 = vmatpush2.bf16.msra.mxu0 0
      %330 = vmatprep.subr.bf16.mxu0 0
      %331 = vmatpush2.bf16.msra.mxu0 0
      %332 = vmatprep.subr.bf16.mxu0 0
      %333 = vmatpush2.bf16.msra.mxu0 0
      %334 = vmatprep.mubr.bf16.mxu0 0
      %335 = vmatmul.mubr.bf16.gmra.mxu0 %v300
      %v336 = vpop.f32.mrf.mxu0
      %v337 = vadd.f32 0.0, %v336
      %v338 = vpop.f32.mrf.mxu0
      %v339 = vpop.f32.mrf.mxu0
      %v340 = vpop.f32.mrf.mxu0
      %341 = vdwg.mxu0
      %v342 = vcombine.low %v208, %v209
      %v344 = vunpack.c.l.s4 1966171168
      %v345 = vunpack.c.0.s8 %v344
      %v346 = vlaneseq
      %v347 = vshrl.u32 %v346, 7
      %v348 = vsub.s32 %v345, %v347
      %v349 = vrot.slane %v342, %v348
      %v351 = vunpack.c.l.s4 1966171168
      %v352 = vunpack.c.0.s8 %v351
      %v353 = vlaneseq
      %v354 = vshrl.u32 %v353, 7
      %v355 = vsub.s32 %v352, %v354
      %v356 = vrot.slane %v349, %v355
      %v361 = vunpack.c.l.b16 %v211
      %v362 = vunpack.c.l.b16 %v212
      %v363 = vunpack.c.l.b16 %v213
      %v364 = vunpack.c.l.b16 %v214
      %v365 = vpack.c.b16 %v362, %v361
      %v366 = vpack.c.b16 %v364, %v363
      %v370 = vsel %vm298, %v356, 0
      %372 = vmatprep.subr.bf16.mxu0 0
      %373 = vmatpush1.bf16.msra.mxu0 0
      %374 = vmatprep.subr.bf16.mxu0 0
      %375 = vmatpush1.bf16.msra.mxu0 0
      %376 = vmatprep.subr.bf16.mxu0 0
      %377 = vmatpush1.bf16.msra.mxu0 0
      %378 = vmatprep.subr.bf16.mxu0 0
      %379 = vmatpush1.bf16.msra.mxu0 0
      %380 = vmatprep.subr.bf16.mxu0 0
      %381 = vmatpush1.bf16.msra.mxu0 0
      %382 = vmatprep.subr.bf16.mxu0 0
      %383 = vmatpush1.bf16.msra.mxu0 0
      %384 = vmatprep.subr.bf16.mxu0 0
      %385 = vmatpush1.bf16.msra.mxu0 %v366
      %386 = vmatprep.subr.bf16.mxu0 0
      %387 = vmatpush1.bf16.msra.mxu0 %v365
      %388 = vmatprep.subr.bf16.mxu0 0
      %389 = vmatpush2.bf16.msra.mxu0 0
      %390 = vmatprep.subr.bf16.mxu0 0
      %391 = vmatpush2.bf16.msra.mxu0 0
      %392 = vmatprep.subr.bf16.mxu0 0
      %393 = vmatpush2.bf16.msra.mxu0 0
      %394 = vmatprep.subr.bf16.mxu0 0
      %395 = vmatpush2.bf16.msra.mxu0 0
      %396 = vmatprep.subr.bf16.mxu0 0
      %397 = vmatpush2.bf16.msra.mxu0 0
      %398 = vmatprep.subr.bf16.mxu0 0
      %399 = vmatpush2.bf16.msra.mxu0 0
      %400 = vmatprep.subr.bf16.mxu0 0
      %401 = vmatpush2.bf16.msra.mxu0 0
      %402 = vmatprep.subr.bf16.mxu0 0
      %403 = vmatpush2.bf16.msra.mxu0 0
      %404 = vmatprep.mubr.bf16.mxu0 0
      %405 = vmatmul.mubr.bf16.gmra.mxu0 %v370
      %v406 = vpop.f32.mrf.mxu0
      %v407 = vadd.f32 %v337, %v406
      %v408 = vpop.f32.mrf.mxu0
      %v409 = vpop.f32.mrf.mxu0
      %v410 = vpop.f32.mrf.mxu0
      %411 = vdwg.mxu0
      %s412 = scalar_lea.vmem %s1, 32
      %v413 = vld [vmem:[%s412] sm:$0xf]
      %v414 = vld [vmem:[%s412 + $0x4] sm:$0xf]
      %v415 = vld [vmem:[%s412 + $0x8] sm:$0xf]
      %v416 = vld [vmem:[%s412 + $0xc] sm:$0xf]
      %v418 = vcombine.low %v209, %v210
      %v420 = vunpack.c.l.s4 1966171168
      %v421 = vunpack.c.0.s8 %v420
      %v422 = vlaneseq
      %v423 = vshrl.u32 %v422, 7
      %v424 = vsub.s32 %v421, %v423
      %v425 = vrot.slane %v418, %v424
      %v427 = vunpack.c.l.s4 1966171168
      %v428 = vunpack.c.0.s8 %v427
      %v429 = vlaneseq
      %v430 = vshrl.u32 %v429, 7
      %v431 = vsub.s32 %v428, %v430
      %v432 = vrot.slane %v425, %v431
      %v437 = vunpack.c.l.b16 %v413
      %v438 = vunpack.c.l.b16 %v414
      %v439 = vunpack.c.l.b16 %v415
      %v440 = vunpack.c.l.b16 %v416
      %v441 = vpack.c.b16 %v438, %v437
      %v442 = vpack.c.b16 %v440, %v439
      %v446 = vsel %vm298, %v432, 0
      %448 = vmatprep.subr.bf16.mxu0 0
      %449 = vmatpush1.bf16.msra.mxu0 0
      %450 = vmatprep.subr.bf16.mxu0 0
      %451 = vmatpush1.bf16.msra.mxu0 0
      %452 = vmatprep.subr.bf16.mxu0 0
      %453 = vmatpush1.bf16.msra.mxu0 0
      %454 = vmatprep.subr.bf16.mxu0 0
      %455 = vmatpush1.bf16.msra.mxu0 0
      %456 = vmatprep.subr.bf16.mxu0 0
      %457 = vmatpush1.bf16.msra.mxu0 0
      %458 = vmatprep.subr.bf16.mxu0 0
      %459 = vmatpush1.bf16.msra.mxu0 0
      %460 = vmatprep.subr.bf16.mxu0 0
      %461 = vmatpush1.bf16.msra.mxu0 %v442
      %462 = vmatprep.subr.bf16.mxu0 0
      %463 = vmatpush1.bf16.msra.mxu0 %v441
      %464 = vmatprep.subr.bf16.mxu0 0
      %465 = vmatpush2.bf16.msra.mxu0 0
      %466 = vmatprep.subr.bf16.mxu0 0
      %467 = vmatpush2.bf16.msra.mxu0 0
      %468 = vmatprep.subr.bf16.mxu0 0
      %469 = vmatpush2.bf16.msra.mxu0 0
      %470 = vmatprep.subr.bf16.mxu0 0
      %471 = vmatpush2.bf16.msra.mxu0 0
      %472 = vmatprep.subr.bf16.mxu0 0
      %473 = vmatpush2.bf16.msra.mxu0 0
      %474 = vmatprep.subr.bf16.mxu0 0
      %475 = vmatpush2.bf16.msra.mxu0 0
      %476 = vmatprep.subr.bf16.mxu0 0
      %477 = vmatpush2.bf16.msra.mxu0 0
      %478 = vmatprep.subr.bf16.mxu0 0
      %479 = vmatpush2.bf16.msra.mxu0 0
      %480 = vmatprep.mubr.bf16.mxu0 0
      %481 = vmatmul.mubr.bf16.gmra.mxu0 %v446
      %v482 = vpop.f32.mrf.mxu0
      %v483 = vadd.f32 0.0, %v482
      %v484 = vpop.f32.mrf.mxu0
      %v485 = vpop.f32.mrf.mxu0
      %v486 = vpop.f32.mrf.mxu0
      %487 = vdwg.mxu0
      %v488 = vadd.f32 %v407, %v483
      %v490 = vunpack.c.l.s4 1966171168
      %v491 = vunpack.c.0.s8 %v490
      %v492 = vlaneseq
      %v493 = vshrl.u32 %v492, 7
      %v494 = vsub.s32 %v491, %v493
      %v495 = vrot.slane %v210, %v494
      %v496 = vcombine.high %v495, %v495
      %v498 = vshrl.u32 %v495, 16
      %v500 = vrot.slane %v498, 7
      %v501 = vrot.slane %v500, 1
      %v503 = vshll.u32 %v496, 16
      %v505 = vsel %vm247, %v501, %v503
      %s506 = scalar_lea.vmem %s1, 48
      %v507 = vld [vmem:[%s506] sm:$0xf]
      %v508 = vld [vmem:[%s506 + $0x4] sm:$0xf]
      %v509 = vld [vmem:[%s506 + $0x8] sm:$0xf]
      %v510 = vld [vmem:[%s506 + $0xc] sm:$0xf]
      %v511 = vcombine.low %v265, %v505
      %v513 = vunpack.c.l.s4 1966171168
      %v514 = vunpack.c.0.s8 %v513
      %v515 = vlaneseq
      %v516 = vshrl.u32 %v515, 7
      %v517 = vsub.s32 %v514, %v516
      %v518 = vrot.slane %v511, %v517
      %v520 = vunpack.c.l.s4 1966171168
      %v521 = vunpack.c.0.s8 %v520
      %v522 = vlaneseq
      %v523 = vshrl.u32 %v522, 7
      %v524 = vsub.s32 %v521, %v523
      %v525 = vrot.slane %v518, %v524
      %v530 = vunpack.c.l.b16 %v507
      %v531 = vunpack.c.l.b16 %v508
      %v532 = vunpack.c.l.b16 %v509
      %v533 = vunpack.c.l.b16 %v510
      %v534 = vpack.c.b16 %v531, %v530
      %v535 = vpack.c.b16 %v533, %v532
      %v539 = vsel %vm298, %v525, 0
      %541 = vmatprep.subr.bf16.mxu0 0
      %542 = vmatpush1.bf16.msra.mxu0 0
      %543 = vmatprep.subr.bf16.mxu0 0
      %544 = vmatpush1.bf16.msra.mxu0 0
      %545 = vmatprep.subr.bf16.mxu0 0
      %546 = vmatpush1.bf16.msra.mxu0 0
      %547 = vmatprep.subr.bf16.mxu0 0
      %548 = vmatpush1.bf16.msra.mxu0 0
      %549 = vmatprep.subr.bf16.mxu0 0
      %550 = vmatpush1.bf16.msra.mxu0 0
      %551 = vmatprep.subr.bf16.mxu0 0
      %552 = vmatpush1.bf16.msra.mxu0 0
      %553 = vmatprep.subr.bf16.mxu0 0
      %554 = vmatpush1.bf16.msra.mxu0 %v535
      %555 = vmatprep.subr.bf16.mxu0 0
      %556 = vmatpush1.bf16.msra.mxu0 %v534
      %557 = vmatprep.subr.bf16.mxu0 0
      %558 = vmatpush2.bf16.msra.mxu0 0
      %559 = vmatprep.subr.bf16.mxu0 0
      %560 = vmatpush2.bf16.msra.mxu0 0
      %561 = vmatprep.subr.bf16.mxu0 0
      %562 = vmatpush2.bf16.msra.mxu0 0
      %563 = vmatprep.subr.bf16.mxu0 0
      %564 = vmatpush2.bf16.msra.mxu0 0
      %565 = vmatprep.subr.bf16.mxu0 0
      %566 = vmatpush2.bf16.msra.mxu0 0
      %567 = vmatprep.subr.bf16.mxu0 0
      %568 = vmatpush2.bf16.msra.mxu0 0
      %569 = vmatprep.subr.bf16.mxu0 0
      %570 = vmatpush2.bf16.msra.mxu0 0
      %571 = vmatprep.subr.bf16.mxu0 0
      %572 = vmatpush2.bf16.msra.mxu0 0
      %573 = vmatprep.mubr.bf16.mxu0 0
      %574 = vmatmul.mubr.bf16.gmra.mxu0 %v539
      %v575 = vpop.f32.mrf.mxu0
      %v576 = vadd.f32 0.0, %v575
      %v577 = vpop.f32.mrf.mxu0
      %v578 = vpop.f32.mrf.mxu0
      %v579 = vpop.f32.mrf.mxu0
      %580 = vdwg.mxu0
      %v581 = vadd.f32 %v488, %v576
      %v582 = vld [vmem:[%s2] sm:$0x1]
      %v584 = vlaneseq
      %v585 = vshrl.u32 %v584, 7
      %v586 = vsub.s32 0, %v585
      %v587 = vrot.slane %v582, %v586
      %v589 = vadd.f32 %v581, %v587
      %vm590 = vcmask 519168
      %v591 = vsel %vm590, %v589, 0.0
      %v592 = vrot.slane %v591, 4
      %v593 = vadd.f32 %v591, %v592
      %v594 = vrot.slane %v593, 2
      %v595 = vadd.f32 %v593, %v594
      %v596 = vrot.slane %v595, 1
      %v597 = vadd.f32 %v595, %v596
      %v598 = vmul.f32 %v597, 0.25
      %v599 = vsub.f32 %v589, %v598
      %v600 = vmul.f32 %v599, %v599
      %v601 = vsel %vm590, %v600, 0.0
      %v602 = vrot.slane %v601, 4
      %v603 = vadd.f32 %v601, %v602
      %v604 = vrot.slane %v603, 2
      %v605 = vadd.f32 %v603, %v604
      %v606 = vrot.slane %v605, 1
      %v607 = vadd.f32 %v605, %v606
      %vm608 = vcmask 1040384
      %v609 = vsel %vm608, %v597, %v607
      %vm610 = vcmask 517120
      %611 = vst.msk [vmem:[%s206] sm:$0x3] %vm610, %v609
      %v612 = vpack.c.bf16 %v589, %v589
      %v615 = vunpack.c.l.s4 1966171168
      %v616 = vunpack.c.0.s8 %v615
      %v617 = vlaneseq
      %v618 = vshrl.u32 %v617, 7
      %v619 = vsub.s32 %v616, %v618
      %v620 = vrot.slane %v612, %v619
      %v621 = vcombine.high %v620, %v620
      %v623 = vunpack.c.l.s4 1966171168
      %v624 = vunpack.c.0.s8 %v623
      %v625 = vlaneseq
      %v626 = vshrl.u32 %v625, 7
      %v627 = vsub.s32 %v624, %v626
      %v628 = vrot.slane %v620, %v627
      %v630 = vunpack.c.l.s4 1966171168
      %v631 = vunpack.c.0.s8 %v630
      %v632 = vlaneseq
      %v633 = vshrl.u32 %v632, 7
      %v634 = vsub.s32 %v631, %v633
      %v635 = vrot.slane %v621, %v634
      %vm638 = vcmask 253952
      %639 = vst.msk [vmem:[%s202] sm:$0x1] %vm638, %v628
      %640 = vst.msk [vmem:[%s202 + $0x2] sm:$0x1] %vm638, %v635
      %641 = vrot.lane.b32.xlu0 %v628, 96
      %v642 = vpop.permute.xlu0 %641
      %643 = vrot.lane.b32.xlu0 %v635, 96
      %v644 = vpop.permute.xlu0 %643
      %s647 = scalar_lea.vmem %s202, 1
      %648 = vst.msk [vmem:[%s647] sm:$0x1] %vm638, %v642
      %649 = vst.msk [vmem:[%s647 + $0x2] sm:$0x1] %vm638, %v644
      %p650 = scmp.lt.s32.totalorder %s16, 1
      %s651 = scalar_select %p650, %s16, 1
      %s652 = smul.addr %s651, 4
      %s653 = scalar_lea.vmem %s3, %s652
      %p654 = scmp.lt.s32.totalorder %s16, 1
      %s655 = scalar_select %p654, %s16, 1
      %s656 = smul.addr %s655, 2
      %s657 = scalar_lea.vmem %s4, %s656
      // Predicated region
      $region33: #{forward.29} parent=31 // pred_check
        %p658 = pneg %p102
      $region34: #{forward.29} parent=31 // pred_check_branch
        %660 = sbr.rel (%p658) target = $region36
      $region35: #{forward.29} parent=31 // pred_region
        _
      $region36: #{forward.29} parent=31 // pred_fallthru
        _
      // Predicated region
      $region37: #{forward.29} parent=31 // pred_check
        %p661 = pneg %p128
      $region38: #{forward.29} parent=31 // pred_check_branch
        %663 = sbr.rel (%p661) target = $region40
      $region39: #{forward.29} parent=31 // pred_region
        _
      $region40: #{forward.29} parent=31 // pred_fallthru
        _
    $region32: #{forward.29} parent=5 // pred_fallthru
      _
    %p664 = scmp.le.s32.totalorder 2, %s11
    // Predicated region
    $region41: #{forward.29} parent=5 // pred_check
      %p665 = pneg %p664
    $region42: #{forward.29} parent=5 // pred_check_branch
      %667 = sbr.rel (%p665) target = $region44
    $region43: #{forward.29} parent=5 // pred_region
      %s668 = ssub.s32 %s11, 2
      // Predicated region
      $region45: #{forward.29} parent=43 // pred_check
        %p669 = pneg %p108
      $region46: #{forward.29} parent=43 // pred_check_branch
        %671 = sbr.rel (%p669) target = $region48
      $region47: #{forward.29} parent=43 // pred_region
        %p672 = scmp.lt.s32.totalorder %s17, 1
        %s673 = scalar_select %p672, %s17, 1
        %s674 = smul.addr %s673, 4
        %s675 = scalar_lea.vmem %s3, %s674
      $region48: #{forward.29} parent=43 // pred_fallthru
        _
      // Predicated region
      $region49: #{forward.29} parent=43 // pred_check
        %p676 = pneg %p134
      $region50: #{forward.29} parent=43 // pred_check_branch
        %678 = sbr.rel (%p676) target = $region52
      $region51: #{forward.29} parent=43 // pred_region
        %p679 = scmp.lt.s32.totalorder %s17, 1
        %s680 = scalar_select %p679, %s17, 1
        %s681 = smul.addr %s680, 2
        %s682 = scalar_lea.vmem %s4, %s681
      $region52: #{forward.29} parent=43 // pred_fallthru
        _
    $region44: #{forward.29} parent=5 // pred_fallthru
      _
  $region6: #{forward.29} parent=0 // loop_footer
    %s15 = sadd.s32 1, %s11
  $region7: #{forward.29} parent=0 // loop_footer_branch
    %10 = sbr.rel target = $region3
  $region8: #{forward.29} parent=0 // loop_exit
    _

// kernel: tile.63
$region0: #{tile.63}
  #allocation0 [shape = 's32[1]{0}', space=sflag, size = 0x4, scoped, tag = 'scoped memory for tile.63']
  %s0 = inlined_call_operand.vmem [shape: f32[8], index: 0, kind: input, shape index: {}]
  %s1 = inlined_call_operand.vmem [shape: f32[2,8], index: 1, kind: output, shape index: {}]
  // Predicated region
  $region2: #{tile.63} parent=0 // pred_check
    _
  $region3: #{tile.63} parent=0 // pred_check_branch
    %3 = sbr.rel (0) target = $region5
  $region4: #{tile.63} parent=0 // pred_region
    _
  $region5: #{tile.63} parent=0 // pred_fallthru
    _
  %v4 = vld [vmem:[%s0] ss:$0 sm:$0xff]
  %5 = vst [vmem:[%s1] sm:$0x3] %v4

// kernel: tile.68
$region0: #{tile.68}
  %s0 = inlined_call_operand.vmem [shape: f32[2,8], index: 0, kind: input, shape index: {}]
  %s1 = inlined_call_operand.vmem [shape: f32[1,16], index: 1, kind: output, shape index: {}]
  $region1: #{tile.68} parent=0
    #allocation0 [shape = 'u8[4096]{0}', space=vmem, size = 0x1000, scoped, tag = 'scoped mem for output reshape']
    #allocation1 [shape = 'u8[4096]{0}', space=vmem, size = 0x1000, scoped, tag = 'scoped mem for input reshape']
    %s3 = sshll.u32 1, 2
    %s4 = ssub.s32 %s3, 1
    %v5 = vld [vmem:[%s0] sm:%s4]
    %6 = vst [vmem:[#allocation1] sm:%s4] %v5
    %v7 = vld [vmem:[#allocation1] sm:$0x1]
    %vm8 = vcmask 64512
    %9 = vst.msk [vmem:[#allocation0] sm:$0x1] %vm8, %v7
    %s10 = scalar_lea.vmem [#allocation1], 1
    %v11 = vld [vmem:[%s10] sm:$0x1]
    %12 = vrot.lane.b32.xlu0 %v11, 8
    %v13 = vpop.permute.xlu0 %12
    %vm14 = vcmask 130112
    %15 = vst.msk [vmem:[#allocation0] sm:$0x1] %vm14, %v13
    %s17 = sshll.u32 1, 1
    %s18 = ssub.s32 %s17, 1
    %v20 = vld [vmem:[#allocation0] sm:%s18]
    %s21 = sshll.u32 1, 1
    %s22 = ssub.s32 %s21, 1
    %23 = vst [vmem:[%s1] sm:%s22] %v20

// kernel: forward.30
$region0: #{forward.30}
  #allocation0 [shape = 'u32[]', space=smem, size = 0x4, offset = 0x4, fixed_abs, tag = 'smem constant byte address 0x4 - core index']
  #allocation1 [shape = 'u32[144,128]{1,0:T(1,128)}', space=vmem, size = 0x12000, scoped, tag = 'internal scratch']
  %s0 = inlined_call_operand.vmem [shape: bf16[16,32], index: 0, kind: input, shape index: {}]
  %s1 = inlined_call_operand.vmem [shape: f32[1,32], index: 1, kind: input, shape index: {}]
  %s2 = inlined_call_operand.vmem [shape: f32[1,32], index: 2, kind: input, shape index: {}]
  %s3 = inlined_call_operand.vmem [shape: bf16[16,32], index: 3, kind: output, shape index: {}]
  %s4 = sld [smem:[#allocation0]]
  $region22: #{forward.30} parent=0
    _
  %s6 = ssub.s32 1, %s4
  %s7 = scalar_select 0, %s6, %s4
  // Predicated region
  $region2: #{forward.30} parent=0 // pred_check
    _
  $region3: #{forward.30} parent=0 // pred_check_branch
    %9 = sbr.rel (0) target = $region5
  $region4: #{forward.30} parent=0 // pred_region
    _
  $region5: #{forward.30} parent=0 // pred_fallthru
    _
  // Predicated region
  $region6: #{forward.30} parent=0 // pred_check
    _
  $region7: #{forward.30} parent=0 // pred_check_branch
    %11 = sbr.rel (0) target = $region9
  $region8: #{forward.30} parent=0 // pred_region
    _
  $region9: #{forward.30} parent=0 // pred_fallthru
    _
  // Predicated region
  $region10: #{forward.30} parent=0 // pred_check
    _
  $region11: #{forward.30} parent=0 // pred_check_branch
    %13 = sbr.rel (0) target = $region13
  $region12: #{forward.30} parent=0 // pred_region
    _
  $region13: #{forward.30} parent=0 // pred_fallthru
    _
  %v14 = vld [vmem:[%s0] sm:$0xf]
  %v15 = vld [vmem:[%s0 + $0x4] sm:$0xf]
  %v16 = vunpack.c.l.bf16 %v14
  %v17 = vunpack.c.l.bf16 %v15
  %v18 = vld [vmem:[%s1] sm:$0x1]
  %v20 = vlaneseq
  %v21 = vshrl.u32 %v20, 7
  %v22 = vsub.s32 0, %v21
  %v23 = vrot.slane %v18, %v22
  %v25 = vmul.f32 %v16, %v23
  %v26 = vmul.f32 %v17, %v23
  %v27 = vld [vmem:[%s2] sm:$0x1]
  %v29 = vlaneseq
  %v30 = vshrl.u32 %v29, 7
  %v31 = vsub.s32 0, %v30
  %v32 = vrot.slane %v27, %v31
  %v34 = vadd.f32 %v25, %v32
  %v35 = vadd.f32 %v26, %v32
  %vm36 = vcmp.ge.f32.partialorder %v34, 0.0
  %vm37 = vcmp.ge.f32.partialorder %v35, 0.0
  %v38 = vmul.f32 %v34, 0.01
  %v39 = vmul.f32 %v35, 0.01
  %v40 = vsel %vm36, %v34, %v38
  %v41 = vsel %vm37, %v35, %v39
  %v42 = vpack.c.bf16 %v41, %v40
  %v44 = vunpack.c.l.b16 %v42
  %v45 = vunpack.c.h.b16 %v42
  %v46 = vpack.c.b16 %v44, %v44
  %v47 = vpack.c.b16 %v45, %v45
  %vm50 = vcmask 257024
  %51 = vst.msk [vmem:[%s3] sm:$0xf] %vm50, %v46
  %52 = vst.msk [vmem:[%s3 + $0x4] sm:$0xf] %vm50, %v47
  // Predicated region
  $region14: #{forward.30} parent=0 // pred_check
    _
  $region15: #{forward.30} parent=0 // pred_check_branch
    %54 = sbr.rel (0) target = $region17
  $region16: #{forward.30} parent=0 // pred_region
    _
  $region17: #{forward.30} parent=0 // pred_fallthru
    _
  // Predicated region
  $region18: #{forward.30} parent=0 // pred_check
    _
  $region19: #{forward.30} parent=0 // pred_check_branch
    %56 = sbr.rel (0) target = $region21
  $region20: #{forward.30} parent=0 // pred_region
    _
  $region21: #{forward.30} parent=0 // pred_fallthru
    _

// kernel: forward.32
$region0: #{forward.32}
  #allocation0 [shape = 'u32[]', space=smem, size = 0x4, offset = 0x4, fixed_abs, tag = 'smem constant byte address 0x4 - core index']
  #allocation1 [shape = 'u32[144,128]{1,0:T(1,128)}', space=vmem, size = 0x12000, scoped, tag = 'internal scratch']
  %s0 = inlined_call_operand.vmem [shape: bf16[64,16], index: 0, kind: input, shape index: {}]
  %s1 = inlined_call_operand.vmem [shape: f32[1,16], index: 1, kind: input, shape index: {}]
  %s2 = inlined_call_operand.vmem [shape: f32[1,16], index: 2, kind: input, shape index: {}]
  %s3 = inlined_call_operand.vmem [shape: bf16[64,16], index: 3, kind: output, shape index: {}]
  %s4 = sld [smem:[#allocation0]]
  $region45: #{forward.32} parent=0
    _
  %s6 = ssub.s32 1, %s4
  %s7 = scalar_select 0, %s6, %s4
  loop: start=0, step=1, limit=4
  $region2: #{forward.32} parent=0 // loop_pre_header
    _
  $region3: #{forward.32} parent=0 // loop_header
    %s9 = sphi 0, %s13
    %p10 = scmp.ge.s32.totalorder %s9, 4
    %s19 = sphi 0, %s21
    %s22 = sphi 0, %s19
    %s23 = sphi 0, %s22
    %s39 = sphi 0, %s23
    %s43 = sphi 0, %s43
    %s45 = sphi 0, %s43
    %s46 = sphi 0, %s45
    %s60 = sphi 0, %s46
    %s64 = sphi 0, %s64
    %s66 = sphi 0, %s64
    %s67 = sphi 0, %s66
    %s81 = sphi 0, %s67
    %s87 = sphi 0, %s89
    %s90 = sphi 0, %s87
    %s91 = sphi 0, %s90
    %s107 = sphi 0, %s91
  $region4: #{forward.32} parent=0 // loop_header_branch
    %12 = sbr.rel (%p10) target = $region8
  $region5: #{forward.32} parent=0 // loop_body
    %s14 = ssub.s32 %s9, 1
    %s15 = ssub.s32 %s9, 2
    %s16 = sadd.s32 %s9, 1
    %s17 = ssub.s32 %s9, %s16
    %p18 = scmp.eq.s32.totalorder %s17, 0
    %s20 = sadd.s32 %s19, 1
    %s21 = scalar_select %p18, %s19, %s20
    %p24 = pneg %p18
    %p25 = scmp.eq.s32.totalorder %s9, 1
    %p26 = por %p24, %p25
    %p27 = scmp.ne.s32.totalorder %s19, %s22
    %p28 = scmp.eq.s32.totalorder %s9, 0
    %p29 = por %p27, %p28
    %p30 = scmp.ne.s32.totalorder %s19, %s22
    %p31 = scmp.eq.s32.totalorder %s14, 1
    %p32 = por %p30, %p31
    %p33 = scmp.ne.s32.totalorder %s22, %s23
    %p34 = scmp.eq.s32.totalorder %s14, 0
    %p35 = por %p33, %p34
    %p36 = scmp.ne.s32.totalorder %s22, %s23
    %p37 = scmp.eq.s32.totalorder %s15, 1
    %p38 = por %p36, %p37
    %p40 = scmp.ne.s32.totalorder %s23, %s39
    %p41 = scmp.eq.s32.totalorder %s15, 0
    %p42 = por %p40, %p41
    %s44 = sadd.s32 %s43, 1
    %p47 = scmp.eq.s32.totalorder %s9, 1
    %p48 = scmp.ne.s32.totalorder %s43, %s45
    %p49 = scmp.eq.s32.totalorder %s9, 0
    %p50 = por %p48, %p49
    %p51 = scmp.ne.s32.totalorder %s43, %s45
    %p52 = scmp.eq.s32.totalorder %s14, 1
    %p53 = por %p51, %p52
    %p54 = scmp.ne.s32.totalorder %s45, %s46
    %p55 = scmp.eq.s32.totalorder %s14, 0
    %p56 = por %p54, %p55
    %p57 = scmp.ne.s32.totalorder %s45, %s46
    %p58 = scmp.eq.s32.totalorder %s15, 1
    %p59 = por %p57, %p58
    %p61 = scmp.ne.s32.totalorder %s46, %s60
    %p62 = scmp.eq.s32.totalorder %s15, 0
    %p63 = por %p61, %p62
    %s65 = sadd.s32 %s64, 1
    %p68 = scmp.eq.s32.totalorder %s9, 1
    %p69 = scmp.ne.s32.totalorder %s64, %s66
    %p70 = scmp.eq.s32.totalorder %s9, 0
    %p71 = por %p69, %p70
    %p72 = scmp.ne.s32.totalorder %s64, %s66
    %p73 = scmp.eq.s32.totalorder %s14, 1
    %p74 = por %p72, %p73
    %p75 = scmp.ne.s32.totalorder %s66, %s67
    %p76 = scmp.eq.s32.totalorder %s14, 0
    %p77 = por %p75, %p76
    %p78 = scmp.ne.s32.totalorder %s66, %s67
    %p79 = scmp.eq.s32.totalorder %s15, 1
    %p80 = por %p78, %p79
    %p82 = scmp.ne.s32.totalorder %s67, %s81
    %p83 = scmp.eq.s32.totalorder %s15, 0
    %p84 = por %p82, %p83
    %s85 = ssub.s32 %s9, %s16
    %p86 = scmp.eq.s32.totalorder %s85, 0
    %s88 = sadd.s32 %s87, 1
    %s89 = scalar_select %p86, %s87, %s88
    %p92 = pneg %p86
    %p93 = scmp.eq.s32.totalorder %s9, 1
    %p94 = por %p92, %p93
    %p95 = scmp.ne.s32.totalorder %s87, %s90
    %p96 = scmp.eq.s32.totalorder %s9, 0
    %p97 = por %p95, %p96
    %p98 = scmp.ne.s32.totalorder %s87, %s90
    %p99 = scmp.eq.s32.totalorder %s14, 1
    %p100 = por %p98, %p99
    %p101 = scmp.ne.s32.totalorder %s90, %s91
    %p102 = scmp.eq.s32.totalorder %s14, 0
    %p103 = por %p101, %p102
    %p104 = scmp.ne.s32.totalorder %s90, %s91
    %p105 = scmp.eq.s32.totalorder %s15, 1
    %p106 = por %p104, %p105
    %p108 = scmp.ne.s32.totalorder %s91, %s107
    %p109 = scmp.eq.s32.totalorder %s15, 0
    %p110 = por %p108, %p109
    %p111 = scmp.le.s32.totalorder 1, %s9
    %p112 = scmp.lt.s32.totalorder %s9, 3
    %p113 = pnand %p111, %p112
    %p114 = pneg %p113
    // Predicated region
    $region9: #{forward.32} parent=5 // pred_check
      _
    $region10: #{forward.32} parent=5 // pred_check_branch
      %116 = sbr.rel (%p113) target = $region12
    $region11: #{forward.32} parent=5 // pred_region
      %s117 = ssub.s32 %s9, 1
      // Predicated region
      $region13: #{forward.32} parent=11 // pred_check
        %p118 = pneg %p56
      $region14: #{forward.32} parent=11 // pred_check_branch
        %120 = sbr.rel (%p118) target = $region16
      $region15: #{forward.32} parent=11 // pred_region
        _
      $region16: #{forward.32} parent=11 // pred_fallthru
        _
      // Predicated region
      $region17: #{forward.32} parent=11 // pred_check
        %p121 = pneg %p77
      $region18: #{forward.32} parent=11 // pred_check_branch
        %123 = sbr.rel (%p121) target = $region20
      $region19: #{forward.32} parent=11 // pred_region
        _
      $region20: #{forward.32} parent=11 // pred_fallthru
        _
    $region12: #{forward.32} parent=5 // pred_fallthru
      _
    %p124 = scmp.lt.s32.totalorder %s9, 2
    // Predicated region
    $region21: #{forward.32} parent=5 // pred_check
      %p125 = pneg %p124
    $region22: #{forward.32} parent=5 // pred_check_branch
      %127 = sbr.rel (%p125) target = $region24
    $region23: #{forward.32} parent=5 // pred_region
      // Predicated region
      $region25: #{forward.32} parent=23 // pred_check
        %p128 = pneg %p29
      $region26: #{forward.32} parent=23 // pred_check_branch
        %130 = sbr.rel (%p128) target = $region28
      $region27: #{forward.32} parent=23 // pred_region
        %s131 = smul.u32 4, %s9
        %p132 = scmp.lt.s32.totalorder %s131, 7
        %s133 = scalar_select %p132, %s131, 7
        %s134 = smul.addr %s133, 4
        %s135 = scalar_lea.vmem %s0, %s134
        %s136 = smul.u32 4, %s9
      $region28: #{forward.32} parent=23 // pred_fallthru
        _
    $region24: #{forward.32} parent=5 // pred_fallthru
      _
    %p137 = scmp.le.s32.totalorder 1, %s9
    %p138 = scmp.lt.s32.totalorder %s9, 3
    %p139 = pnand %p137, %p138
    %p140 = pneg %p139
    // Predicated region
    $region29: #{forward.32} parent=5 // pred_check
      _
    $region30: #{forward.32} parent=5 // pred_check_branch
      %142 = sbr.rel (%p139) target = $region32
    $region31: #{forward.32} parent=5 // pred_region
      %s143 = ssub.s32 %s9, 1
      %s144 = smul.u32 4, %s14
      %p145 = scmp.lt.s32.totalorder %s144, 7
      %s146 = scalar_select %p145, %s144, 7
      %s147 = smul.addr %s146, 4
      %s148 = scalar_lea.vmem %s0, %s147
      %p149 = pneg %p35
      %p150 = pneg %p32
      %p151 = pneg %p56
      %p152 = pneg %p53
      %p153 = pneg %p77
      %p154 = pneg %p74
      %p155 = pneg %p103
      %p156 = pneg %p100
      %s157 = smul.u32 4, %s14
      %p158 = scmp.lt.s32.totalorder %s157, 7
      %s159 = scalar_select %p158, %s157, 7
      %s160 = smul.addr %s159, 4
      %s161 = scalar_lea.vmem %s3, %s160
      %s162 = smul.u32 4, %s14
      %p163 = scmp.lt.s32.totalorder %s162, 7
      %s164 = scalar_select %p163, %s162, 7
      %s165 = smul.addr %s164, 4
      %s166 = scalar_lea.vmem %s0, %s165
      %s167 = smul.u32 4, %s14
      %s168 = smul.u32 4, %s14
      %p169 = scmp.lt.s32.totalorder %s168, 7
      %s170 = scalar_select %p169, %s168, 7
      %s171 = smul.addr %s170, 4
      %s172 = scalar_lea.vmem %s3, %s171
      %s173 = smul.u32 4, %s14
      %v174 = vld [vmem:[%s166] sm:$0xf]
      %v175 = vld [vmem:[%s166 + $0x4] sm:$0xf]
      %v176 = vld [vmem:[%s166 + $0x8] sm:$0xf]
      %v177 = vld [vmem:[%s166 + $0xc] sm:$0xf]
      %v178 = vunpack.c.l.bf16 %v174
      %v179 = vunpack.c.l.bf16 %v175
      %v180 = vunpack.c.l.bf16 %v176
      %v181 = vunpack.c.l.bf16 %v177
      %v182 = vld [vmem:[%s1] sm:$0x1]
      %v184 = vlaneseq
      %v185 = vshrl.u32 %v184, 7
      %v186 = vsub.s32 0, %v185
      %v187 = vrot.slane %v182, %v186
      %v189 = vmul.f32 %v178, %v187
      %v190 = vmul.f32 %v179, %v187
      %v191 = vmul.f32 %v180, %v187
      %v192 = vmul.f32 %v181, %v187
      %v193 = vld [vmem:[%s2] sm:$0x1]
      %v195 = vlaneseq
      %v196 = vshrl.u32 %v195, 7
      %v197 = vsub.s32 0, %v196
      %v198 = vrot.slane %v193, %v197
      %v200 = vadd.f32 %v189, %v198
      %v201 = vadd.f32 %v190, %v198
      %v202 = vadd.f32 %v191, %v198
      %v203 = vadd.f32 %v192, %v198
      %vm204 = vcmp.ge.f32.partialorder %v200, 0.0
      %vm205 = vcmp.ge.f32.partialorder %v201, 0.0
      %vm206 = vcmp.ge.f32.partialorder %v202, 0.0
      %vm207 = vcmp.ge.f32.partialorder %v203, 0.0
      %v208 = vmul.f32 %v200, 0.01
      %v209 = vmul.f32 %v201, 0.01
      %v210 = vmul.f32 %v202, 0.01
      %v211 = vmul.f32 %v203, 0.01
      %v212 = vsel %vm204, %v200, %v208
      %v213 = vsel %vm205, %v201, %v209
      %v214 = vsel %vm206, %v202, %v210
      %v215 = vsel %vm207, %v203, %v211
      %v216 = vpack.c.bf16 %v213, %v212
      %v217 = vpack.c.bf16 %v215, %v214
      %v220 = vunpack.c.l.b16 %v216
      %v221 = vunpack.c.h.b16 %v216
      %v222 = vunpack.c.l.b16 %v217
      %v223 = vunpack.c.h.b16 %v217
      %v224 = vpack.c.b16 %v220, %v220
      %v225 = vpack.c.b16 %v221, %v221
      %v226 = vpack.c.b16 %v222, %v222
      %v227 = vpack.c.b16 %v223, %v223
      %vm232 = vcmask 125952
      %233 = vst.msk [vmem:[%s172] sm:$0xf] %vm232, %v224
      %234 = vst.msk [vmem:[%s172 + $0x4] sm:$0xf] %vm232, %v225
      %235 = vst.msk [vmem:[%s172 + $0x8] sm:$0xf] %vm232, %v226
      %236 = vst.msk [vmem:[%s172 + $0xc] sm:$0xf] %vm232, %v227
      %s237 = smul.u32 4, %s14
      %p238 = scmp.lt.s32.totalorder %s237, 7
      %s239 = scalar_select %p238, %s237, 7
      %s240 = smul.addr %s239, 4
      %s241 = scalar_lea.vmem %s3, %s240
      // Predicated region
      $region33: #{forward.32} parent=31 // pred_check
        %p242 = pneg %p100
      $region34: #{forward.32} parent=31 // pred_check_branch
        %244 = sbr.rel (%p242) target = $region36
      $region35: #{forward.32} parent=31 // pred_region
        %s245 = smul.u32 4, %s14
      $region36: #{forward.32} parent=31 // pred_fallthru
        _
    $region32: #{forward.32} parent=5 // pred_fallthru
      _
    %p246 = scmp.le.s32.totalorder 2, %s9
    // Predicated region
    $region37: #{forward.32} parent=5 // pred_check
      %p247 = pneg %p246
    $region38: #{forward.32} parent=5 // pred_check_branch
      %249 = sbr.rel (%p247) target = $region40
    $region39: #{forward.32} parent=5 // pred_region
      %s250 = ssub.s32 %s9, 2
      // Predicated region
      $region41: #{forward.32} parent=39 // pred_check
        %p251 = pneg %p106
      $region42: #{forward.32} parent=39 // pred_check_branch
        %253 = sbr.rel (%p251) target = $region44
      $region43: #{forward.32} parent=39 // pred_region
        %s254 = smul.u32 4, %s15
        %p255 = scmp.lt.s32.totalorder %s254, 7
        %s256 = scalar_select %p255, %s254, 7
        %s257 = smul.addr %s256, 4
        %s258 = scalar_lea.vmem %s3, %s257
      $region44: #{forward.32} parent=39 // pred_fallthru
        _
    $region40: #{forward.32} parent=5 // pred_fallthru
      _
  $region6: #{forward.32} parent=0 // loop_footer
    %s13 = sadd.s32 1, %s9
  $region7: #{forward.32} parent=0 // loop_footer_branch
    %8 = sbr.rel target = $region3
  $region8: #{forward.32} parent=0 // loop_exit
    _

// kernel: forward.31
$region0: #{forward.31}
  #allocation0 [shape = 'u32[]', space=smem, size = 0x4, offset = 0x4, fixed_abs, tag = 'smem constant byte address 0x4 - core index']
  #allocation1 [shape = 'u32[144,128]{1,0:T(1,128)}', space=vmem, size = 0x12000, scoped, tag = 'internal scratch']
  %s0 = inlined_call_operand.vmem [shape: bf16[2,5,5,16], index: 0, kind: input, shape index: {}]
  %s1 = inlined_call_operand.vmem [shape: bf16[4,16,32], index: 1, kind: input, shape index: {}]
  %s2 = inlined_call_operand.vmem [shape: f32[1,32], index: 2, kind: input, shape index: {}]
  %s3 = inlined_call_operand.vmem [shape: bf16[2,4,2,4,16], index: 3, kind: output, shape index: {0}]
  %s4 = inlined_call_operand.vmem [shape: f32[2,2,32], index: 4, kind: output, shape index: {1}]
  %5 = xla_tuple %s3, %s4
  %s6 = sld [smem:[#allocation0]]
  $region53: #{forward.31} parent=0
    _
  %s8 = ssub.s32 1, %s6
  %s9 = scalar_select 0, %s8, %s6
  loop: start=0, step=1, limit=4
  $region2: #{forward.31} parent=0 // loop_pre_header
    _
  $region3: #{forward.31} parent=0 // loop_header
    %s11 = sphi 0, %s15
    %p12 = scmp.ge.s32.totalorder %s11, 4
    %s21 = sphi 0, %s23
    %s24 = sphi 0, %s21
    %s25 = sphi 0, %s24
    %s41 = sphi 0, %s25
    %s45 = sphi 0, %s45
    %s47 = sphi 0, %s45
    %s48 = sphi 0, %s47
    %s62 = sphi 0, %s48
    %s66 = sphi 0, %s66
    %s68 = sphi 0, %s66
    %s69 = sphi 0, %s68
    %s83 = sphi 0, %s69
    %s89 = sphi 0, %s91
    %s92 = sphi 0, %s89
    %s93 = sphi 0, %s92
    %s109 = sphi 0, %s93
    %s115 = sphi 0, %s117
    %s118 = sphi 0, %s115
    %s119 = sphi 0, %s118
    %s135 = sphi 0, %s119
  $region4: #{forward.31} parent=0 // loop_header_branch
    %14 = sbr.rel (%p12) target = $region8
  $region5: #{forward.31} parent=0 // loop_body
    %s16 = ssub.s32 %s11, 1
    %s17 = ssub.s32 %s11, 2
    %s18 = sadd.s32 %s11, 1
    %s19 = ssub.s32 %s11, %s18
    %p20 = scmp.eq.s32.totalorder %s19, 0
    %s22 = sadd.s32 %s21, 1
    %s23 = scalar_select %p20, %s21, %s22
    %p26 = pneg %p20
    %p27 = scmp.eq.s32.totalorder %s11, 1
    %p28 = por %p26, %p27
    %p29 = scmp.ne.s32.totalorder %s21, %s24
    %p30 = scmp.eq.s32.totalorder %s11, 0
    %p31 = por %p29, %p30
    %p32 = scmp.ne.s32.totalorder %s21, %s24
    %p33 = scmp.eq.s32.totalorder %s16, 1
    %p34 = por %p32, %p33
    %p35 = scmp.ne.s32.totalorder %s24, %s25
    %p36 = scmp.eq.s32.totalorder %s16, 0
    %p37 = por %p35, %p36
    %p38 = scmp.ne.s32.totalorder %s24, %s25
    %p39 = scmp.eq.s32.totalorder %s17, 1
    %p40 = por %p38, %p39
    %p42 = scmp.ne.s32.totalorder %s25, %s41
    %p43 = scmp.eq.s32.totalorder %s17, 0
    %p44 = por %p42, %p43
    %s46 = sadd.s32 %s45, 1
    %p49 = scmp.eq.s32.totalorder %s11, 1
    %p50 = scmp.ne.s32.totalorder %s45, %s47
    %p51 = scmp.eq.s32.totalorder %s11, 0
    %p52 = por %p50, %p51
    %p53 = scmp.ne.s32.totalorder %s45, %s47
    %p54 = scmp.eq.s32.totalorder %s16, 1
    %p55 = por %p53, %p54
    %p56 = scmp.ne.s32.totalorder %s47, %s48
    %p57 = scmp.eq.s32.totalorder %s16, 0
    %p58 = por %p56, %p57
    %p59 = scmp.ne.s32.totalorder %s47, %s48
    %p60 = scmp.eq.s32.totalorder %s17, 1
    %p61 = por %p59, %p60
    %p63 = scmp.ne.s32.totalorder %s48, %s62
    %p64 = scmp.eq.s32.totalorder %s17, 0
    %p65 = por %p63, %p64
    %s67 = sadd.s32 %s66, 1
    %p70 = scmp.eq.s32.totalorder %s11, 1
    %p71 = scmp.ne.s32.totalorder %s66, %s68
    %p72 = scmp.eq.s32.totalorder %s11, 0
    %p73 = por %p71, %p72
    %p74 = scmp.ne.s32.totalorder %s66, %s68
    %p75 = scmp.eq.s32.totalorder %s16, 1
    %p76 = por %p74, %p75
    %p77 = scmp.ne.s32.totalorder %s68, %s69
    %p78 = scmp.eq.s32.totalorder %s16, 0
    %p79 = por %p77, %p78
    %p80 = scmp.ne.s32.totalorder %s68, %s69
    %p81 = scmp.eq.s32.totalorder %s17, 1
    %p82 = por %p80, %p81
    %p84 = scmp.ne.s32.totalorder %s69, %s83
    %p85 = scmp.eq.s32.totalorder %s17, 0
    %p86 = por %p84, %p85
    %s87 = ssub.s32 %s11, %s18
    %p88 = scmp.eq.s32.totalorder %s87, 0
    %s90 = sadd.s32 %s89, 1
    %s91 = scalar_select %p88, %s89, %s90
    %p94 = pneg %p88
    %p95 = scmp.eq.s32.totalorder %s11, 1
    %p96 = por %p94, %p95
    %p97 = scmp.ne.s32.totalorder %s89, %s92
    %p98 = scmp.eq.s32.totalorder %s11, 0
    %p99 = por %p97, %p98
    %p100 = scmp.ne.s32.totalorder %s89, %s92
    %p101 = scmp.eq.s32.totalorder %s16, 1
    %p102 = por %p100, %p101
    %p103 = scmp.ne.s32.totalorder %s92, %s93
    %p104 = scmp.eq.s32.totalorder %s16, 0
    %p105 = por %p103, %p104
    %p106 = scmp.ne.s32.totalorder %s92, %s93
    %p107 = scmp.eq.s32.totalorder %s17, 1
    %p108 = por %p106, %p107
    %p110 = scmp.ne.s32.totalorder %s93, %s109
    %p111 = scmp.eq.s32.totalorder %s17, 0
    %p112 = por %p110, %p111
    %s113 = ssub.s32 %s11, %s18
    %p114 = scmp.eq.s32.totalorder %s113, 0
    %s116 = sadd.s32 %s115, 1
    %s117 = scalar_select %p114, %s115, %s116
    %p120 = pneg %p114
    %p121 = scmp.eq.s32.totalorder %s11, 1
    %p122 = por %p120, %p121
    %p123 = scmp.ne.s32.totalorder %s115, %s118
    %p124 = scmp.eq.s32.totalorder %s11, 0
    %p125 = por %p123, %p124
    %p126 = scmp.ne.s32.totalorder %s115, %s118
    %p127 = scmp.eq.s32.totalorder %s16, 1
    %p128 = por %p126, %p127
    %p129 = scmp.ne.s32.totalorder %s118, %s119
    %p130 = scmp.eq.s32.totalorder %s16, 0
    %p131 = por %p129, %p130
    %p132 = scmp.ne.s32.totalorder %s118, %s119
    %p133 = scmp.eq.s32.totalorder %s17, 1
    %p134 = por %p132, %p133
    %p136 = scmp.ne.s32.totalorder %s119, %s135
    %p137 = scmp.eq.s32.totalorder %s17, 0
    %p138 = por %p136, %p137
    %p139 = scmp.le.s32.totalorder 1, %s11
    %p140 = scmp.lt.s32.totalorder %s11, 3
    %p141 = pnand %p139, %p140
    %p142 = pneg %p141
    // Predicated region
    $region9: #{forward.31} parent=5 // pred_check
      _
    $region10: #{forward.31} parent=5 // pred_check_branch
      %144 = sbr.rel (%p141) target = $region12
    $region11: #{forward.31} parent=5 // pred_region
      %s145 = ssub.s32 %s11, 1
      // Predicated region
      $region13: #{forward.31} parent=11 // pred_check
        %p146 = pneg %p58
      $region14: #{forward.31} parent=11 // pred_check_branch
        %148 = sbr.rel (%p146) target = $region16
      $region15: #{forward.31} parent=11 // pred_region
        _
      $region16: #{forward.31} parent=11 // pred_fallthru
        _
      // Predicated region
      $region17: #{forward.31} parent=11 // pred_check
        %p149 = pneg %p79
      $region18: #{forward.31} parent=11 // pred_check_branch
        %151 = sbr.rel (%p149) target = $region20
      $region19: #{forward.31} parent=11 // pred_region
        _
      $region20: #{forward.31} parent=11 // pred_fallthru
        _
    $region12: #{forward.31} parent=5 // pred_fallthru
      _
    %p152 = scmp.lt.s32.totalorder %s11, 2
    // Predicated region
    $region21: #{forward.31} parent=5 // pred_check
      %p153 = pneg %p152
    $region22: #{forward.31} parent=5 // pred_check_branch
      %155 = sbr.rel (%p153) target = $region24
    $region23: #{forward.31} parent=5 // pred_region
      // Predicated region
      $region25: #{forward.31} parent=23 // pred_check
        %p156 = pneg %p31
      $region26: #{forward.31} parent=23 // pred_check_branch
        %158 = sbr.rel (%p156) target = $region28
      $region27: #{forward.31} parent=23 // pred_region
        %p159 = scmp.lt.s32.totalorder %s11, 1
        %s160 = scalar_select %p159, %s11, 1
        %s161 = smul.addr %s160, 5
        %s162 = smul.addr %s161, 4
        %s163 = scalar_lea.vmem %s0, %s162
      $region28: #{forward.31} parent=23 // pred_fallthru
        _
    $region24: #{forward.31} parent=5 // pred_fallthru
      _
    %p164 = scmp.le.s32.totalorder 1, %s11
    %p165 = scmp.lt.s32.totalorder %s11, 3
    %p166 = pnand %p164, %p165
    %p167 = pneg %p166
    // Predicated region
    $region29: #{forward.31} parent=5 // pred_check
      _
    $region30: #{forward.31} parent=5 // pred_check_branch
      %169 = sbr.rel (%p166) target = $region32
    $region31: #{forward.31} parent=5 // pred_region
      %s170 = ssub.s32 %s11, 1
      %p171 = scmp.lt.s32.totalorder %s16, 1
      %s172 = scalar_select %p171, %s16, 1
      %s173 = smul.addr %s172, 5
      %s174 = smul.addr %s173, 4
      %s175 = scalar_lea.vmem %s0, %s174
      %p176 = pneg %p37
      %p177 = pneg %p34
      %p178 = pneg %p58
      %p179 = pneg %p55
      %p180 = pneg %p79
      %p181 = pneg %p76
      %p182 = pneg %p105
      %p183 = pneg %p102
      %p184 = scmp.lt.s32.totalorder %s16, 1
      %s185 = scalar_select %p184, %s16, 1
      %s186 = smul.addr %s185, 8
      %s187 = smul.addr %s186, 2
      %s188 = scalar_lea.vmem %s3, %s187
      %p189 = pneg %p131
      %p190 = pneg %p128
      %p191 = scmp.lt.s32.totalorder %s16, 1
      %s192 = scalar_select %p191, %s16, 1
      %s193 = smul.addr %s192, 2
      %s194 = scalar_lea.vmem %s4, %s193
      %p195 = scmp.lt.s32.totalorder %s16, 1
      %s196 = scalar_select %p195, %s16, 1
      %s197 = smul.addr %s196, 5
      %s198 = smul.addr %s197, 4
      %s199 = scalar_lea.vmem %s0, %s198
      %p200 = scmp.lt.s32.totalorder %s16, 1
      %s201 = scalar_select %p200, %s16, 1
      %s202 = smul.addr %s201, 8
      %s203 = smul.addr %s202, 2
      %s204 = scalar_lea.vmem %s3, %s203
      %p205 = scmp.lt.s32.totalorder %s16, 1
      %s206 = scalar_select %p205, %s16, 1
      %s207 = smul.addr %s206, 2
      %s208 = scalar_lea.vmem %s4, %s207
      %v210 = vld [vmem:[%s199] sm:$0x7]
      %v211 = vld [vmem:[%s199 + $0x4] sm:$0x7]
      %v212 = vld [vmem:[%s199 + $0x8] sm:$0x7]
      %v213 = vld [vmem:[%s199 + $0xc] sm:$0x7]
      %v214 = vld [vmem:[%s199 + $0x10] sm:$0x7]
      %v215 = vld [vmem:[%s1] sm:$0xf]
      %v216 = vld [vmem:[%s1 + $0x4] sm:$0xf]
      %v222 = vunpack.c.l.s4 1983009808
      %v223 = vunpack.c.0.s8 %v222
      %v224 = vlaneseq
      %v225 = vshrl.u32 %v224, 7
      %v226 = vsub.s32 %v223, %v225
      %v227 = vrot.slane %v210, %v226
      %v228 = vcombine.high %v227, %v227
      %v230 = vunpack.c.l.s4 1983009808
      %v231 = vunpack.c.0.s8 %v230
      %v232 = vlaneseq
      %v233 = vshrl.u32 %v232, 7
      %v234 = vsub.s32 %v231, %v233
      %v235 = vrot.slane %v211, %v234
      %v236 = vcombine.high %v235, %v235
      %v238 = vunpack.c.l.s4 1983009808
      %v239 = vunpack.c.0.s8 %v238
      %v240 = vlaneseq
      %v241 = vshrl.u32 %v240, 7
      %v242 = vsub.s32 %v239, %v241
      %v243 = vrot.slane %v212, %v242
      %v244 = vcombine.high %v243, %v243
      %v246 = vunpack.c.l.s4 1983009808
      %v247 = vunpack.c.0.s8 %v246
      %v248 = vlaneseq
      %v249 = vshrl.u32 %v248, 7
      %v250 = vsub.s32 %v247, %v249
      %v251 = vrot.slane %v213, %v250
      %v252 = vcombine.high %v251, %v251
      %vm253 = vsmask.f32 1280
      %vm254 = vsmask.f32 3336
      %vm255 = vmor %vm253, %vm254
      %vm256 = vsmask.f32 5392
      %vm257 = vmor %vm255, %vm256
      %vm258 = vsmask.f32 7448
      %vm259 = vmor %vm257, %vm258
      %v261 = vshrl.u32 %v227, 16
      %v263 = vrot.slane %v261, 6
      %v264 = vshll.u32 %v227, 16
      %v266 = vrot.slane %v264, 7
      %v267 = vor.u32 %v263, %v266
      %v268 = vrot.slane %v267, 2
      %v270 = vshll.u32 %v228, 16
      %v272 = vrot.slane %v270, 7
      %v273 = vsel %vm259, %v268, %v272
      %v275 = vshrl.u32 %v235, 16
      %v277 = vrot.slane %v275, 6
      %v278 = vshll.u32 %v235, 16
      %v280 = vrot.slane %v278, 7
      %v281 = vor.u32 %v277, %v280
      %v282 = vrot.slane %v281, 2
      %v284 = vshll.u32 %v236, 16
      %v286 = vrot.slane %v284, 7
      %v287 = vsel %vm259, %v282, %v286
      %v289 = vshrl.u32 %v243, 16
      %v291 = vrot.slane %v289, 6
      %v292 = vshll.u32 %v243, 16
      %v294 = vrot.slane %v292, 7
      %v295 = vor.u32 %v291, %v294
      %v296 = vrot.slane %v295, 2
      %v298 = vshll.u32 %v244, 16
      %v300 = vrot.slane %v298, 7
      %v301 = vsel %vm259, %v296, %v300
      %v303 = vshrl.u32 %v251, 16
      %v305 = vrot.slane %v303, 6
      %v306 = vshll.u32 %v251, 16
      %v308 = vrot.slane %v306, 7
      %v309 = vor.u32 %v305, %v308
      %v310 = vrot.slane %v309, 2
      %v312 = vshll.u32 %v252, 16
      %v314 = vrot.slane %v312, 7
      %v315 = vsel %vm259, %v310, %v314
      %s316 = scalar_lea.vmem %s1, 8
      %v317 = vld [vmem:[%s316] sm:$0xf]
      %v318 = vld [vmem:[%s316 + $0x4] sm:$0xf]
      %v319 = vcombine.low %v273, %v287
      %v320 = vcombine.low %v301, %v315
      %v322 = vunpack.c.l.s4 1983009808
      %v323 = vunpack.c.0.s8 %v322
      %v324 = vlaneseq
      %v325 = vshrl.u32 %v324, 7
      %v326 = vsub.s32 %v323, %v325
      %v327 = vrot.slane %v319, %v326
      %v329 = vunpack.c.l.s4 1983009808
      %v330 = vunpack.c.0.s8 %v329
      %v331 = vlaneseq
      %v332 = vshrl.u32 %v331, 7
      %v333 = vsub.s32 %v330, %v332
      %v334 = vrot.slane %v320, %v333
      %v335 = vcombine.low %v327, %v334
      %v338 = vunpack.c.l.b16 %v317
      %v339 = vunpack.c.l.b16 %v318
      %v340 = vpack.c.b16 %v339, %v338
      %vm342 = vcmask 130048
      %v344 = vsel %vm342, %v335, 0
      %346 = vmatprep.subr.bf16.mxu0 0
      %347 = vmatpush1.bf16.msra.mxu0 0
      %348 = vmatprep.subr.bf16.mxu0 0
      %349 = vmatpush1.bf16.msra.mxu0 0
      %350 = vmatprep.subr.bf16.mxu0 0
      %351 = vmatpush1.bf16.msra.mxu0 0
      %352 = vmatprep.subr.bf16.mxu0 0
      %353 = vmatpush1.bf16.msra.mxu0 0
      %354 = vmatprep.subr.bf16.mxu0 0
      %355 = vmatpush1.bf16.msra.mxu0 0
      %356 = vmatprep.subr.bf16.mxu0 0
      %357 = vmatpush1.bf16.msra.mxu0 0
      %358 = vmatprep.subr.bf16.mxu0 0
      %359 = vmatpush1.bf16.msra.mxu0 0
      %360 = vmatprep.subr.bf16.mxu0 0
      %361 = vmatpush1.bf16.msra.mxu0 %v340
      %362 = vmatprep.subr.bf16.mxu0 0
      %363 = vmatpush2.bf16.msra.mxu0 0
      %364 = vmatprep.subr.bf16.mxu0 0
      %365 = vmatpush2.bf16.msra.mxu0 0
      %366 = vmatprep.subr.bf16.mxu0 0
      %367 = vmatpush2.bf16.msra.mxu0 0
      %368 = vmatprep.subr.bf16.mxu0 0
      %369 = vmatpush2.bf16.msra.mxu0 0
      %370 = vmatprep.subr.bf16.mxu0 0
      %371 = vmatpush2.bf16.msra.mxu0 0
      %372 = vmatprep.subr.bf16.mxu0 0
      %373 = vmatpush2.bf16.msra.mxu0 0
      %374 = vmatprep.subr.bf16.mxu0 0
      %375 = vmatpush2.bf16.msra.mxu0 0
      %376 = vmatprep.subr.bf16.mxu0 0
      %377 = vmatpush2.bf16.msra.mxu0 0
      %378 = vmatprep.mubr.bf16.mxu0 0
      %379 = vmatmul.mubr.bf16.gmra.mxu0 %v344
      %v380 = vpop.f32.mrf.mxu0
      %v381 = vadd.f32 0.0, %v380
      %v382 = vpop.f32.mrf.mxu0
      %v383 = vpop.f32.mrf.mxu0
      %v384 = vadd.f32 0.0, %v383
      %v385 = vpop.f32.mrf.mxu0
      %386 = vdwg.mxu0
      %v387 = vcombine.low %v210, %v211
      %v388 = vcombine.low %v212, %v213
      %v390 = vunpack.c.l.s4 1983009808
      %v391 = vunpack.c.0.s8 %v390
      %v392 = vlaneseq
      %v393 = vshrl.u32 %v392, 7
      %v394 = vsub.s32 %v391, %v393
      %v395 = vrot.slane %v387, %v394
      %v397 = vunpack.c.l.s4 1983009808
      %v398 = vunpack.c.0.s8 %v397
      %v399 = vlaneseq
      %v400 = vshrl.u32 %v399, 7
      %v401 = vsub.s32 %v398, %v400
      %v402 = vrot.slane %v388, %v401
      %v403 = vcombine.low %v395, %v402
      %v406 = vunpack.c.l.b16 %v215
      %v407 = vunpack.c.l.b16 %v216
      %v408 = vpack.c.b16 %v407, %v406
      %v411 = vsel %vm342, %v403, 0
      %413 = vmatprep.subr.bf16.mxu0 0
      %414 = vmatpush1.bf16.msra.mxu0 0
      %415 = vmatprep.subr.bf16.mxu0 0
      %416 = vmatpush1.bf16.msra.mxu0 0
      %417 = vmatprep.subr.bf16.mxu0 0
      %418 = vmatpush1.bf16.msra.mxu0 0
      %419 = vmatprep.subr.bf16.mxu0 0
      %420 = vmatpush1.bf16.msra.mxu0 0
      %421 = vmatprep.subr.bf16.mxu0 0
      %422 = vmatpush1.bf16.msra.mxu0 0
      %423 = vmatprep.subr.bf16.mxu0 0
      %424 = vmatpush1.bf16.msra.mxu0 0
      %425 = vmatprep.subr.bf16.mxu0 0
      %426 = vmatpush1.bf16.msra.mxu0 0
      %427 = vmatprep.subr.bf16.mxu0 0
      %428 = vmatpush1.bf16.msra.mxu0 %v408
      %429 = vmatprep.subr.bf16.mxu0 0
      %430 = vmatpush2.bf16.msra.mxu0 0
      %431 = vmatprep.subr.bf16.mxu0 0
      %432 = vmatpush2.bf16.msra.mxu0 0
      %433 = vmatprep.subr.bf16.mxu0 0
      %434 = vmatpush2.bf16.msra.mxu0 0
      %435 = vmatprep.subr.bf16.mxu0 0
      %436 = vmatpush2.bf16.msra.mxu0 0
      %437 = vmatprep.subr.bf16.mxu0 0
      %438 = vmatpush2.bf16.msra.mxu0 0
      %439 = vmatprep.subr.bf16.mxu0 0
      %440 = vmatpush2.bf16.msra.mxu0 0
      %441 = vmatprep.subr.bf16.mxu0 0
      %442 = vmatpush2.bf16.msra.mxu0 0
      %443 = vmatprep.subr.bf16.mxu0 0
      %444 = vmatpush2.bf16.msra.mxu0 0
      %445 = vmatprep.mubr.bf16.mxu0 0
      %446 = vmatmul.mubr.bf16.gmra.mxu0 %v411
      %v447 = vpop.f32.mrf.mxu0
      %v448 = vadd.f32 %v381, %v447
      %v449 = vpop.f32.mrf.mxu0
      %v450 = vpop.f32.mrf.mxu0
      %v451 = vadd.f32 %v384, %v450
      %v452 = vpop.f32.mrf.mxu0
      %453 = vdwg.mxu0
      %s454 = scalar_lea.vmem %s1, 16
      %v455 = vld [vmem:[%s454] sm:$0xf]
      %v456 = vld [vmem:[%s454 + $0x4] sm:$0xf]
      %v458 = vcombine.low %v211, %v212
      %v459 = vcombine.low %v213, %v214
      %v461 = vunpack.c.l.s4 1983009808
      %v462 = vunpack.c.0.s8 %v461
      %v463 = vlaneseq
      %v464 = vshrl.u32 %v463, 7
      %v465 = vsub.s32 %v462, %v464
      %v466 = vrot.slane %v458, %v465
      %v468 = vunpack.c.l.s4 1983009808
      %v469 = vunpack.c.0.s8 %v468
      %v470 = vlaneseq
      %v471 = vshrl.u32 %v470, 7
      %v472 = vsub.s32 %v469, %v471
      %v473 = vrot.slane %v459, %v472
      %v474 = vcombine.low %v466, %v473
      %v477 = vunpack.c.l.b16 %v455
      %v478 = vunpack.c.l.b16 %v456
      %v479 = vpack.c.b16 %v478, %v477
      %v482 = vsel %vm342, %v474, 0
      %484 = vmatprep.subr.bf16.mxu0 0
      %485 = vmatpush1.bf16.msra.mxu0 0
      %486 = vmatprep.subr.bf16.mxu0 0
      %487 = vmatpush1.bf16.msra.mxu0 0
      %488 = vmatprep.subr.bf16.mxu0 0
      %489 = vmatpush1.bf16.msra.mxu0 0
      %490 = vmatprep.subr.bf16.mxu0 0
      %491 = vmatpush1.bf16.msra.mxu0 0
      %492 = vmatprep.subr.bf16.mxu0 0
      %493 = vmatpush1.bf16.msra.mxu0 0
      %494 = vmatprep.subr.bf16.mxu0 0
      %495 = vmatpush1.bf16.msra.mxu0 0
      %496 = vmatprep.subr.bf16.mxu0 0
      %497 = vmatpush1.bf16.msra.mxu0 0
      %498 = vmatprep.subr.bf16.mxu0 0
      %499 = vmatpush1.bf16.msra.mxu0 %v479
      %500 = vmatprep.subr.bf16.mxu0 0
      %501 = vmatpush2.bf16.msra.mxu0 0
      %502 = vmatprep.subr.bf16.mxu0 0
      %503 = vmatpush2.bf16.msra.mxu0 0
      %504 = vmatprep.subr.bf16.mxu0 0
      %505 = vmatpush2.bf16.msra.mxu0 0
      %506 = vmatprep.subr.bf16.mxu0 0
      %507 = vmatpush2.bf16.msra.mxu0 0
      %508 = vmatprep.subr.bf16.mxu0 0
      %509 = vmatpush2.bf16.msra.mxu0 0
      %510 = vmatprep.subr.bf16.mxu0 0
      %511 = vmatpush2.bf16.msra.mxu0 0
      %512 = vmatprep.subr.bf16.mxu0 0
      %513 = vmatpush2.bf16.msra.mxu0 0
      %514 = vmatprep.subr.bf16.mxu0 0
      %515 = vmatpush2.bf16.msra.mxu0 0
      %516 = vmatprep.mubr.bf16.mxu0 0
      %517 = vmatmul.mubr.bf16.gmra.mxu0 %v482
      %v518 = vpop.f32.mrf.mxu0
      %v519 = vadd.f32 0.0, %v518
      %v520 = vpop.f32.mrf.mxu0
      %v521 = vpop.f32.mrf.mxu0
      %v522 = vadd.f32 0.0, %v521
      %v523 = vpop.f32.mrf.mxu0
      %524 = vdwg.mxu0
      %v525 = vadd.f32 %v448, %v519
      %v526 = vadd.f32 %v451, %v522
      %v528 = vunpack.c.l.s4 1983009808
      %v529 = vunpack.c.0.s8 %v528
      %v530 = vlaneseq
      %v531 = vshrl.u32 %v530, 7
      %v532 = vsub.s32 %v529, %v531
      %v533 = vrot.slane %v214, %v532
      %v534 = vcombine.high %v533, %v533
      %v536 = vshrl.u32 %v533, 16
      %v538 = vrot.slane %v536, 6
      %v539 = vshll.u32 %v533, 16
      %v541 = vrot.slane %v539, 7
      %v542 = vor.u32 %v538, %v541
      %v543 = vrot.slane %v542, 2
      %v545 = vshll.u32 %v534, 16
      %v547 = vrot.slane %v545, 7
      %v548 = vsel %vm259, %v543, %v547
      %s549 = scalar_lea.vmem %s1, 24
      %v550 = vld [vmem:[%s549] sm:$0xf]
      %v551 = vld [vmem:[%s549 + $0x4] sm:$0xf]
      %v552 = vcombine.low %v287, %v301
      %v553 = vcombine.low %v315, %v548
      %v555 = vunpack.c.l.s4 1983009808
      %v556 = vunpack.c.0.s8 %v555
      %v557 = vlaneseq
      %v558 = vshrl.u32 %v557, 7
      %v559 = vsub.s32 %v556, %v558
      %v560 = vrot.slane %v552, %v559
      %v562 = vunpack.c.l.s4 1983009808
      %v563 = vunpack.c.0.s8 %v562
      %v564 = vlaneseq
      %v565 = vshrl.u32 %v564, 7
      %v566 = vsub.s32 %v563, %v565
      %v567 = vrot.slane %v553, %v566
      %v568 = vcombine.low %v560, %v567
      %v571 = vunpack.c.l.b16 %v550
      %v572 = vunpack.c.l.b16 %v551
      %v573 = vpack.c.b16 %v572, %v571
      %v576 = vsel %vm342, %v568, 0
      %578 = vmatprep.subr.bf16.mxu0 0
      %579 = vmatpush1.bf16.msra.mxu0 0
      %580 = vmatprep.subr.bf16.mxu0 0
      %581 = vmatpush1.bf16.msra.mxu0 0
      %582 = vmatprep.subr.bf16.mxu0 0
      %583 = vmatpush1.bf16.msra.mxu0 0
      %584 = vmatprep.subr.bf16.mxu0 0
      %585 = vmatpush1.bf16.msra.mxu0 0
      %586 = vmatprep.subr.bf16.mxu0 0
      %587 = vmatpush1.bf16.msra.mxu0 0
      %588 = vmatprep.subr.bf16.mxu0 0
      %589 = vmatpush1.bf16.msra.mxu0 0
      %590 = vmatprep.subr.bf16.mxu0 0
      %591 = vmatpush1.bf16.msra.mxu0 0
      %592 = vmatprep.subr.bf16.mxu0 0
      %593 = vmatpush1.bf16.msra.mxu0 %v573
      %594 = vmatprep.subr.bf16.mxu0 0
      %595 = vmatpush2.bf16.msra.mxu0 0
      %596 = vmatprep.subr.bf16.mxu0 0
      %597 = vmatpush2.bf16.msra.mxu0 0
      %598 = vmatprep.subr.bf16.mxu0 0
      %599 = vmatpush2.bf16.msra.mxu0 0
      %600 = vmatprep.subr.bf16.mxu0 0
      %601 = vmatpush2.bf16.msra.mxu0 0
      %602 = vmatprep.subr.bf16.mxu0 0
      %603 = vmatpush2.bf16.msra.mxu0 0
      %604 = vmatprep.subr.bf16.mxu0 0
      %605 = vmatpush2.bf16.msra.mxu0 0
      %606 = vmatprep.subr.bf16.mxu0 0
      %607 = vmatpush2.bf16.msra.mxu0 0
      %608 = vmatprep.subr.bf16.mxu0 0
      %609 = vmatpush2.bf16.msra.mxu0 0
      %610 = vmatprep.mubr.bf16.mxu0 0
      %611 = vmatmul.mubr.bf16.gmra.mxu0 %v576
      %v612 = vpop.f32.mrf.mxu0
      %v613 = vadd.f32 0.0, %v612
      %v614 = vpop.f32.mrf.mxu0
      %v615 = vpop.f32.mrf.mxu0
      %v616 = vadd.f32 0.0, %v615
      %v617 = vpop.f32.mrf.mxu0
      %618 = vdwg.mxu0
      %v619 = vadd.f32 %v525, %v613
      %v620 = vadd.f32 %v526, %v616
      %v621 = vld [vmem:[%s2] sm:$0x1]
      %v623 = vlaneseq
      %v624 = vshrl.u32 %v623, 7
      %v625 = vsub.s32 0, %v624
      %v626 = vrot.slane %v621, %v625
      %v628 = vadd.f32 %v619, %v626
      %v629 = vadd.f32 %v620, %v626
      %vm630 = vcmask 261120
      %v631 = vsel %vm630, %v628, 0.0
      %v632 = vsel %vm630, %v629, 0.0
      %v633 = vadd.f32 %v631, %v632
      %v634 = vrot.slane %v633, 4
      %v635 = vadd.f32 %v633, %v634
      %v636 = vrot.slane %v635, 2
      %v637 = vadd.f32 %v635, %v636
      %v638 = vrot.slane %v637, 1
      %v639 = vadd.f32 %v637, %v638
      %v640 = vmul.f32 %v639, 0.0625
      %v641 = vsub.f32 %v628, %v640
      %v642 = vsub.f32 %v629, %v640
      %v643 = vmul.f32 %v641, %v641
      %v644 = vmul.f32 %v642, %v642
      %v645 = vsel %vm630, %v643, 0.0
      %v646 = vsel %vm630, %v644, 0.0
      %v647 = vadd.f32 %v645, %v646
      %v648 = vrot.slane %v647, 4
      %v649 = vadd.f32 %v647, %v648
      %v650 = vrot.slane %v649, 2
      %v651 = vadd.f32 %v649, %v650
      %v652 = vrot.slane %v651, 1
      %v653 = vadd.f32 %v651, %v652
      %vm654 = vcmask 1040384
      %v655 = vsel %vm654, %v639, %v653
      %vm656 = vcmask 254976
      %657 = vst.msk [vmem:[%s208] sm:$0x3] %vm656, %v655
      %v658 = vpack.c.bf16 %v629, %v628
      %v660 = vcombine.high %v658, %v658
      %v662 = vunpack.c.l.s4 1983009808
      %v663 = vunpack.c.0.s8 %v662
      %v664 = vlaneseq
      %v665 = vshrl.u32 %v664, 7
      %v666 = vsub.s32 %v663, %v665
      %v667 = vrot.slane %v658, %v666
      %v669 = vunpack.c.l.s4 1983009808
      %v670 = vunpack.c.0.s8 %v669
      %v671 = vlaneseq
      %v672 = vshrl.u32 %v671, 7
      %v673 = vsub.s32 %v670, %v672
      %v674 = vrot.slane %v660, %v673
      %v675 = vcombine.high %v667, %v667
      %v676 = vcombine.high %v674, %v674
      %vm681 = vcmask 123904
      %682 = vst.msk [vmem:[%s204] sm:$0x3] %vm681, %v667
      %683 = vst.msk [vmem:[%s204 + $0x4] sm:$0x3] %vm681, %v675
      %684 = vst.msk [vmem:[%s204 + $0x8] sm:$0x3] %vm681, %v674
      %685 = vst.msk [vmem:[%s204 + $0xc] sm:$0x3] %vm681, %v676
      %686 = vrot.lane.b32.xlu0 %v667, 112
      %v687 = vpop.permute.xlu0 %686
      %688 = vrot.lane.b32.xlu0 %v675, 112
      %v689 = vpop.permute.xlu0 %688
      %690 = vrot.lane.b32.xlu0 %v674, 112
      %v691 = vpop.permute.xlu0 %690
      %692 = vrot.lane.b32.xlu0 %v676, 112
      %v693 = vpop.permute.xlu0 %692
      %s698 = scalar_lea.vmem %s204, 2
      %699 = vst.msk [vmem:[%s698] sm:$0x3] %vm681, %v687
      %700 = vst.msk [vmem:[%s698 + $0x4] sm:$0x3] %vm681, %v689
      %701 = vst.msk [vmem:[%s698 + $0x8] sm:$0x3] %vm681, %v691
      %702 = vst.msk [vmem:[%s698 + $0xc] sm:$0x3] %vm681, %v693
      %p703 = scmp.lt.s32.totalorder %s16, 1
      %s704 = scalar_select %p703, %s16, 1
      %s705 = smul.addr %s704, 8
      %s706 = smul.addr %s705, 2
      %s707 = scalar_lea.vmem %s3, %s706
      %p708 = scmp.lt.s32.totalorder %s16, 1
      %s709 = scalar_select %p708, %s16, 1
      %s710 = smul.addr %s709, 2
      %s711 = scalar_lea.vmem %s4, %s710
      // Predicated region
      $region33: #{forward.31} parent=31 // pred_check
        %p712 = pneg %p102
      $region34: #{forward.31} parent=31 // pred_check_branch
        %714 = sbr.rel (%p712) target = $region36
      $region35: #{forward.31} parent=31 // pred_region
        _
      $region36: #{forward.31} parent=31 // pred_fallthru
        _
      // Predicated region
      $region37: #{forward.31} parent=31 // pred_check
        %p715 = pneg %p128
      $region38: #{forward.31} parent=31 // pred_check_branch
        %717 = sbr.rel (%p715) target = $region40
      $region39: #{forward.31} parent=31 // pred_region
        _
      $region40: #{forward.31} parent=31 // pred_fallthru
        _
    $region32: #{forward.31} parent=5 // pred_fallthru
      _
    %p718 = scmp.le.s32.totalorder 2, %s11
    // Predicated region
    $region41: #{forward.31} parent=5 // pred_check
      %p719 = pneg %p718
    $region42: #{forward.31} parent=5 // pred_check_branch
      %721 = sbr.rel (%p719) target = $region44
    $region43: #{forward.31} parent=5 // pred_region
      %s722 = ssub.s32 %s11, 2
      // Predicated region
      $region45: #{forward.31} parent=43 // pred_check
        %p723 = pneg %p108
      $region46: #{forward.31} parent=43 // pred_check_branch
        %725 = sbr.rel (%p723) target = $region48
      $region47: #{forward.31} parent=43 // pred_region
        %p726 = scmp.lt.s32.totalorder %s17, 1
        %s727 = scalar_select %p726, %s17, 1
        %s728 = smul.addr %s727, 8
        %s729 = smul.addr %s728, 2
        %s730 = scalar_lea.vmem %s3, %s729
      $region48: #{forward.31} parent=43 // pred_fallthru
        _
      // Predicated region
      $region49: #{forward.31} parent=43 // pred_check
        %p731 = pneg %p134
      $region50: #{forward.31} parent=43 // pred_check_branch
        %733 = sbr.rel (%p731) target = $region52
      $region51: #{forward.31} parent=43 // pred_region
        %p734 = scmp.lt.s32.totalorder %s17, 1
        %s735 = scalar_select %p734, %s17, 1
        %s736 = smul.addr %s735, 2
        %s737 = scalar_lea.vmem %s4, %s736
      $region52: #{forward.31} parent=43 // pred_fallthru
        _
    $region44: #{forward.31} parent=5 // pred_fallthru
      _
  $region6: #{forward.31} parent=0 // loop_footer
    %s15 = sadd.s32 1, %s11
  $region7: #{forward.31} parent=0 // loop_footer_branch
    %10 = sbr.rel target = $region3
  $region8: #{forward.31} parent=0 // loop_exit
    _

// kernel: forward.34
$region0: #{forward.34}
  #allocation0 [shape = 'u32[]', space=smem, size = 0x4, offset = 0x4, fixed_abs, tag = 'smem constant byte address 0x4 - core index']
  #allocation1 [shape = 'u32[144,128]{1,0:T(1,128)}', space=vmem, size = 0x12000, scoped, tag = 'internal scratch']
  %s0 = inlined_call_operand.vmem [shape: bf16[256,16], index: 0, kind: input, shape index: {}]
  %s1 = inlined_call_operand.vmem [shape: f32[1,16], index: 1, kind: input, shape index: {}]
  %s2 = inlined_call_operand.vmem [shape: f32[1,16], index: 2, kind: input, shape index: {}]
  %s3 = inlined_call_operand.vmem [shape: bf16[256,16], index: 3, kind: output, shape index: {}]
  %s4 = sld [smem:[#allocation0]]
  $region45: #{forward.34} parent=0
    _
  %s6 = ssub.s32 1, %s4
  %s7 = scalar_select 0, %s6, %s4
  loop: start=0, step=1, limit=4
  $region2: #{forward.34} parent=0 // loop_pre_header
    _
  $region3: #{forward.34} parent=0 // loop_header
    %s9 = sphi 0, %s13
    %p10 = scmp.ge.s32.totalorder %s9, 4
    %s19 = sphi 0, %s21
    %s22 = sphi 0, %s19
    %s23 = sphi 0, %s22
    %s39 = sphi 0, %s23
    %s43 = sphi 0, %s43
    %s45 = sphi 0, %s43
    %s46 = sphi 0, %s45
    %s60 = sphi 0, %s46
    %s64 = sphi 0, %s64
    %s66 = sphi 0, %s64
    %s67 = sphi 0, %s66
    %s81 = sphi 0, %s67
    %s87 = sphi 0, %s89
    %s90 = sphi 0, %s87
    %s91 = sphi 0, %s90
    %s107 = sphi 0, %s91
  $region4: #{forward.34} parent=0 // loop_header_branch
    %12 = sbr.rel (%p10) target = $region8
  $region5: #{forward.34} parent=0 // loop_body
    %s14 = ssub.s32 %s9, 1
    %s15 = ssub.s32 %s9, 2
    %s16 = sadd.s32 %s9, 1
    %s17 = ssub.s32 %s9, %s16
    %p18 = scmp.eq.s32.totalorder %s17, 0
    %s20 = sadd.s32 %s19, 1
    %s21 = scalar_select %p18, %s19, %s20
    %p24 = pneg %p18
    %p25 = scmp.eq.s32.totalorder %s9, 1
    %p26 = por %p24, %p25
    %p27 = scmp.ne.s32.totalorder %s19, %s22
    %p28 = scmp.eq.s32.totalorder %s9, 0
    %p29 = por %p27, %p28
    %p30 = scmp.ne.s32.totalorder %s19, %s22
    %p31 = scmp.eq.s32.totalorder %s14, 1
    %p32 = por %p30, %p31
    %p33 = scmp.ne.s32.totalorder %s22, %s23
    %p34 = scmp.eq.s32.totalorder %s14, 0
    %p35 = por %p33, %p34
    %p36 = scmp.ne.s32.totalorder %s22, %s23
    %p37 = scmp.eq.s32.totalorder %s15, 1
    %p38 = por %p36, %p37
    %p40 = scmp.ne.s32.totalorder %s23, %s39
    %p41 = scmp.eq.s32.totalorder %s15, 0
    %p42 = por %p40, %p41
    %s44 = sadd.s32 %s43, 1
    %p47 = scmp.eq.s32.totalorder %s9, 1
    %p48 = scmp.ne.s32.totalorder %s43, %s45
    %p49 = scmp.eq.s32.totalorder %s9, 0
    %p50 = por %p48, %p49
    %p51 = scmp.ne.s32.totalorder %s43, %s45
    %p52 = scmp.eq.s32.totalorder %s14, 1
    %p53 = por %p51, %p52
    %p54 = scmp.ne.s32.totalorder %s45, %s46
    %p55 = scmp.eq.s32.totalorder %s14, 0
    %p56 = por %p54, %p55
    %p57 = scmp.ne.s32.totalorder %s45, %s46
    %p58 = scmp.eq.s32.totalorder %s15, 1
    %p59 = por %p57, %p58
    %p61 = scmp.ne.s32.totalorder %s46, %s60
    %p62 = scmp.eq.s32.totalorder %s15, 0
    %p63 = por %p61, %p62
    %s65 = sadd.s32 %s64, 1
    %p68 = scmp.eq.s32.totalorder %s9, 1
    %p69 = scmp.ne.s32.totalorder %s64, %s66
    %p70 = scmp.eq.s32.totalorder %s9, 0
    %p71 = por %p69, %p70
    %p72 = scmp.ne.s32.totalorder %s64, %s66
    %p73 = scmp.eq.s32.totalorder %s14, 1
    %p74 = por %p72, %p73
    %p75 = scmp.ne.s32.totalorder %s66, %s67
    %p76 = scmp.eq.s32.totalorder %s14, 0
    %p77 = por %p75, %p76
    %p78 = scmp.ne.s32.totalorder %s66, %s67
    %p79 = scmp.eq.s32.totalorder %s15, 1
    %p80 = por %p78, %p79
    %p82 = scmp.ne.s32.totalorder %s67, %s81
    %p83 = scmp.eq.s32.totalorder %s15, 0
    %p84 = por %p82, %p83
    %s85 = ssub.s32 %s9, %s16
    %p86 = scmp.eq.s32.totalorder %s85, 0
    %s88 = sadd.s32 %s87, 1
    %s89 = scalar_select %p86, %s87, %s88
    %p92 = pneg %p86
    %p93 = scmp.eq.s32.totalorder %s9, 1
    %p94 = por %p92, %p93
    %p95 = scmp.ne.s32.totalorder %s87, %s90
    %p96 = scmp.eq.s32.totalorder %s9, 0
    %p97 = por %p95, %p96
    %p98 = scmp.ne.s32.totalorder %s87, %s90
    %p99 = scmp.eq.s32.totalorder %s14, 1
    %p100 = por %p98, %p99
    %p101 = scmp.ne.s32.totalorder %s90, %s91
    %p102 = scmp.eq.s32.totalorder %s14, 0
    %p103 = por %p101, %p102
    %p104 = scmp.ne.s32.totalorder %s90, %s91
    %p105 = scmp.eq.s32.totalorder %s15, 1
    %p106 = por %p104, %p105
    %p108 = scmp.ne.s32.totalorder %s91, %s107
    %p109 = scmp.eq.s32.totalorder %s15, 0
    %p110 = por %p108, %p109
    %p111 = scmp.le.s32.totalorder 1, %s9
    %p112 = scmp.lt.s32.totalorder %s9, 3
    %p113 = pnand %p111, %p112
    %p114 = pneg %p113
    // Predicated region
    $region9: #{forward.34} parent=5 // pred_check
      _
    $region10: #{forward.34} parent=5 // pred_check_branch
      %116 = sbr.rel (%p113) target = $region12
    $region11: #{forward.34} parent=5 // pred_region
      %s117 = ssub.s32 %s9, 1
      // Predicated region
      $region13: #{forward.34} parent=11 // pred_check
        %p118 = pneg %p56
      $region14: #{forward.34} parent=11 // pred_check_branch
        %120 = sbr.rel (%p118) target = $region16
      $region15: #{forward.34} parent=11 // pred_region
        _
      $region16: #{forward.34} parent=11 // pred_fallthru
        _
      // Predicated region
      $region17: #{forward.34} parent=11 // pred_check
        %p121 = pneg %p77
      $region18: #{forward.34} parent=11 // pred_check_branch
        %123 = sbr.rel (%p121) target = $region20
      $region19: #{forward.34} parent=11 // pred_region
        _
      $region20: #{forward.34} parent=11 // pred_fallthru
        _
    $region12: #{forward.34} parent=5 // pred_fallthru
      _
    %p124 = scmp.lt.s32.totalorder %s9, 2
    // Predicated region
    $region21: #{forward.34} parent=5 // pred_check
      %p125 = pneg %p124
    $region22: #{forward.34} parent=5 // pred_check_branch
      %127 = sbr.rel (%p125) target = $region24
    $region23: #{forward.34} parent=5 // pred_region
      // Predicated region
      $region25: #{forward.34} parent=23 // pred_check
        %p128 = pneg %p29
      $region26: #{forward.34} parent=23 // pred_check_branch
        %130 = sbr.rel (%p128) target = $region28
      $region27: #{forward.34} parent=23 // pred_region
        %s131 = smul.u32 16, %s9
        %p132 = scmp.lt.s32.totalorder %s131, 31
        %s133 = scalar_select %p132, %s131, 31
        %s134 = smul.addr %s133, 4
        %s135 = scalar_lea.vmem %s0, %s134
        %s136 = smul.u32 16, %s9
      $region28: #{forward.34} parent=23 // pred_fallthru
        _
    $region24: #{forward.34} parent=5 // pred_fallthru
      _
    %p137 = scmp.le.s32.totalorder 1, %s9
    %p138 = scmp.lt.s32.totalorder %s9, 3
    %p139 = pnand %p137, %p138
    %p140 = pneg %p139
    // Predicated region
    $region29: #{forward.34} parent=5 // pred_check
      _
    $region30: #{forward.34} parent=5 // pred_check_branch
      %142 = sbr.rel (%p139) target = $region32
    $region31: #{forward.34} parent=5 // pred_region
      %s143 = ssub.s32 %s9, 1
      %s144 = smul.u32 16, %s14
      %p145 = scmp.lt.s32.totalorder %s144, 31
      %s146 = scalar_select %p145, %s144, 31
      %s147 = smul.addr %s146, 4
      %s148 = scalar_lea.vmem %s0, %s147
      %p149 = pneg %p35
      %p150 = pneg %p32
      %p151 = pneg %p56
      %p152 = pneg %p53
      %p153 = pneg %p77
      %p154 = pneg %p74
      %p155 = pneg %p103
      %p156 = pneg %p100
      %s157 = smul.u32 16, %s14
      %p158 = scmp.lt.s32.totalorder %s157, 31
      %s159 = scalar_select %p158, %s157, 31
      %s160 = smul.addr %s159, 4
      %s161 = scalar_lea.vmem %s3, %s160
      %s162 = smul.u32 16, %s14
      %p163 = scmp.lt.s32.totalorder %s162, 31
      %s164 = scalar_select %p163, %s162, 31
      %s165 = smul.addr %s164, 4
      %s166 = scalar_lea.vmem %s0, %s165
      %s167 = smul.u32 16, %s14
      %s168 = smul.u32 16, %s14
      %p169 = scmp.lt.s32.totalorder %s168, 31
      %s170 = scalar_select %p169, %s168, 31
      %s171 = smul.addr %s170, 4
      %s172 = scalar_lea.vmem %s3, %s171
      %s173 = smul.u32 16, %s14
      %v174 = vld [vmem:[%s166] sm:$0xf]
      %v175 = vld [vmem:[%s166 + $0x4] sm:$0xf]
      %v176 = vld [vmem:[%s166 + $0x8] sm:$0xf]
      %v177 = vld [vmem:[%s166 + $0xc] sm:$0xf]
      %v178 = vld [vmem:[%s166 + $0x10] sm:$0xf]
      %v179 = vld [vmem:[%s166 + $0x14] sm:$0xf]
      %v180 = vld [vmem:[%s166 + $0x18] sm:$0xf]
      %v181 = vld [vmem:[%s166 + $0x1c] sm:$0xf]
      %v182 = vld [vmem:[%s166 + $0x20] sm:$0xf]
      %v183 = vld [vmem:[%s166 + $0x24] sm:$0xf]
      %v184 = vld [vmem:[%s166 + $0x28] sm:$0xf]
      %v185 = vld [vmem:[%s166 + $0x2c] sm:$0xf]
      %v186 = vld [vmem:[%s166 + $0x30] sm:$0xf]
      %v187 = vld [vmem:[%s166 + $0x34] sm:$0xf]
      %v188 = vld [vmem:[%s166 + $0x38] sm:$0xf]
      %v189 = vld [vmem:[%s166 + $0x3c] sm:$0xf]
      %v190 = vunpack.c.l.bf16 %v174
      %v191 = vunpack.c.l.bf16 %v175
      %v192 = vunpack.c.l.bf16 %v176
      %v193 = vunpack.c.l.bf16 %v177
      %v194 = vunpack.c.l.bf16 %v178
      %v195 = vunpack.c.l.bf16 %v179
      %v196 = vunpack.c.l.bf16 %v180
      %v197 = vunpack.c.l.bf16 %v181
      %v198 = vunpack.c.l.bf16 %v182
      %v199 = vunpack.c.l.bf16 %v183
      %v200 = vunpack.c.l.bf16 %v184
      %v201 = vunpack.c.l.bf16 %v185
      %v202 = vunpack.c.l.bf16 %v186
      %v203 = vunpack.c.l.bf16 %v187
      %v204 = vunpack.c.l.bf16 %v188
      %v205 = vunpack.c.l.bf16 %v189
      %v206 = vld [vmem:[%s1] sm:$0x1]
      %v208 = vlaneseq
      %v209 = vshrl.u32 %v208, 7
      %v210 = vsub.s32 0, %v209
      %v211 = vrot.slane %v206, %v210
      %v213 = vmul.f32 %v190, %v211
      %v214 = vmul.f32 %v191, %v211
      %v215 = vmul.f32 %v192, %v211
      %v216 = vmul.f32 %v193, %v211
      %v217 = vmul.f32 %v194, %v211
      %v218 = vmul.f32 %v195, %v211
      %v219 = vmul.f32 %v196, %v211
      %v220 = vmul.f32 %v197, %v211
      %v221 = vmul.f32 %v198, %v211
      %v222 = vmul.f32 %v199, %v211
      %v223 = vmul.f32 %v200, %v211
      %v224 = vmul.f32 %v201, %v211
      %v225 = vmul.f32 %v202, %v211
      %v226 = vmul.f32 %v203, %v211
      %v227 = vmul.f32 %v204, %v211
      %v228 = vmul.f32 %v205, %v211
      %v229 = vld [vmem:[%s2] sm:$0x1]
      %v231 = vlaneseq
      %v232 = vshrl.u32 %v231, 7
      %v233 = vsub.s32 0, %v232
      %v234 = vrot.slane %v229, %v233
      %v236 = vadd.f32 %v213, %v234
      %v237 = vadd.f32 %v214, %v234
      %v238 = vadd.f32 %v215, %v234
      %v239 = vadd.f32 %v216, %v234
      %v240 = vadd.f32 %v217, %v234
      %v241 = vadd.f32 %v218, %v234
      %v242 = vadd.f32 %v219, %v234
      %v243 = vadd.f32 %v220, %v234
      %v244 = vadd.f32 %v221, %v234
      %v245 = vadd.f32 %v222, %v234
      %v246 = vadd.f32 %v223, %v234
      %v247 = vadd.f32 %v224, %v234
      %v248 = vadd.f32 %v225, %v234
      %v249 = vadd.f32 %v226, %v234
      %v250 = vadd.f32 %v227, %v234
      %v251 = vadd.f32 %v228, %v234
      %vm252 = vcmp.ge.f32.partialorder %v236, 0.0
      %vm253 = vcmp.ge.f32.partialorder %v237, 0.0
      %vm254 = vcmp.ge.f32.partialorder %v238, 0.0
      %vm255 = vcmp.ge.f32.partialorder %v239, 0.0
      %vm256 = vcmp.ge.f32.partialorder %v240, 0.0
      %vm257 = vcmp.ge.f32.partialorder %v241, 0.0
      %vm258 = vcmp.ge.f32.partialorder %v242, 0.0
      %vm259 = vcmp.ge.f32.partialorder %v243, 0.0
      %vm260 = vcmp.ge.f32.partialorder %v244, 0.0
      %vm261 = vcmp.ge.f32.partialorder %v245, 0.0
      %vm262 = vcmp.ge.f32.partialorder %v246, 0.0
      %vm263 = vcmp.ge.f32.partialorder %v247, 0.0
      %vm264 = vcmp.ge.f32.partialorder %v248, 0.0
      %vm265 = vcmp.ge.f32.partialorder %v249, 0.0
      %vm266 = vcmp.ge.f32.partialorder %v250, 0.0
      %vm267 = vcmp.ge.f32.partialorder %v251, 0.0
      %v268 = vmul.f32 %v236, 0.01
      %v269 = vmul.f32 %v237, 0.01
      %v270 = vmul.f32 %v238, 0.01
      %v271 = vmul.f32 %v239, 0.01
      %v272 = vmul.f32 %v240, 0.01
      %v273 = vmul.f32 %v241, 0.01
      %v274 = vmul.f32 %v242, 0.01
      %v275 = vmul.f32 %v243, 0.01
      %v276 = vmul.f32 %v244, 0.01
      %v277 = vmul.f32 %v245, 0.01
      %v278 = vmul.f32 %v246, 0.01
      %v279 = vmul.f32 %v247, 0.01
      %v280 = vmul.f32 %v248, 0.01
      %v281 = vmul.f32 %v249, 0.01
      %v282 = vmul.f32 %v250, 0.01
      %v283 = vmul.f32 %v251, 0.01
      %v284 = vsel %vm252, %v236, %v268
      %v285 = vsel %vm253, %v237, %v269
      %v286 = vsel %vm254, %v238, %v270
      %v287 = vsel %vm255, %v239, %v271
      %v288 = vsel %vm256, %v240, %v272
      %v289 = vsel %vm257, %v241, %v273
      %v290 = vsel %vm258, %v242, %v274
      %v291 = vsel %vm259, %v243, %v275
      %v292 = vsel %vm260, %v244, %v276
      %v293 = vsel %vm261, %v245, %v277
      %v294 = vsel %vm262, %v246, %v278
      %v295 = vsel %vm263, %v247, %v279
      %v296 = vsel %vm264, %v248, %v280
      %v297 = vsel %vm265, %v249, %v281
      %v298 = vsel %vm266, %v250, %v282
      %v299 = vsel %vm267, %v251, %v283
      %v300 = vpack.c.bf16 %v285, %v284
      %v301 = vpack.c.bf16 %v287, %v286
      %v302 = vpack.c.bf16 %v289, %v288
      %v303 = vpack.c.bf16 %v291, %v290
      %v304 = vpack.c.bf16 %v293, %v292
      %v305 = vpack.c.bf16 %v295, %v294
      %v306 = vpack.c.bf16 %v297, %v296
      %v307 = vpack.c.bf16 %v299, %v298
      %v316 = vunpack.c.l.b16 %v300
      %v317 = vunpack.c.h.b16 %v300
      %v318 = vunpack.c.l.b16 %v301
      %v319 = vunpack.c.h.b16 %v301
      %v320 = vunpack.c.l.b16 %v302
      %v321 = vunpack.c.h.b16 %v302
      %v322 = vunpack.c.l.b16 %v303
      %v323 = vunpack.c.h.b16 %v303
      %v324 = vunpack.c.l.b16 %v304
      %v325 = vunpack.c.h.b16 %v304
      %v326 = vunpack.c.l.b16 %v305
      %v327 = vunpack.c.h.b16 %v305
      %v328 = vunpack.c.l.b16 %v306
      %v329 = vunpack.c.h.b16 %v306
      %v330 = vunpack.c.l.b16 %v307
      %v331 = vunpack.c.h.b16 %v307
      %v332 = vpack.c.b16 %v316, %v316
      %v333 = vpack.c.b16 %v317, %v317
      %v334 = vpack.c.b16 %v318, %v318
      %v335 = vpack.c.b16 %v319, %v319
      %v336 = vpack.c.b16 %v320, %v320
      %v337 = vpack.c.b16 %v321, %v321
      %v338 = vpack.c.b16 %v322, %v322
      %v339 = vpack.c.b16 %v323, %v323
      %v340 = vpack.c.b16 %v324, %v324
      %v341 = vpack.c.b16 %v325, %v325
      %v342 = vpack.c.b16 %v326, %v326
      %v343 = vpack.c.b16 %v327, %v327
      %v344 = vpack.c.b16 %v328, %v328
      %v345 = vpack.c.b16 %v329, %v329
      %v346 = vpack.c.b16 %v330, %v330
      %v347 = vpack.c.b16 %v331, %v331
      %vm364 = vcmask 125952
      %365 = vst.msk [vmem:[%s172] sm:$0xf] %vm364, %v332
      %366 = vst.msk [vmem:[%s172 + $0x4] sm:$0xf] %vm364, %v333
      %367 = vst.msk [vmem:[%s172 + $0x8] sm:$0xf] %vm364, %v334
      %368 = vst.msk [vmem:[%s172 + $0xc] sm:$0xf] %vm364, %v335
      %369 = vst.msk [vmem:[%s172 + $0x10] sm:$0xf] %vm364, %v336
      %370 = vst.msk [vmem:[%s172 + $0x14] sm:$0xf] %vm364, %v337
      %371 = vst.msk [vmem:[%s172 + $0x18] sm:$0xf] %vm364, %v338
      %372 = vst.msk [vmem:[%s172 + $0x1c] sm:$0xf] %vm364, %v339
      %373 = vst.msk [vmem:[%s172 + $0x20] sm:$0xf] %vm364, %v340
      %374 = vst.msk [vmem:[%s172 + $0x24] sm:$0xf] %vm364, %v341
      %375 = vst.msk [vmem:[%s172 + $0x28] sm:$0xf] %vm364, %v342
      %376 = vst.msk [vmem:[%s172 + $0x2c] sm:$0xf] %vm364, %v343
      %377 = vst.msk [vmem:[%s172 + $0x30] sm:$0xf] %vm364, %v344
      %378 = vst.msk [vmem:[%s172 + $0x34] sm:$0xf] %vm364, %v345
      %379 = vst.msk [vmem:[%s172 + $0x38] sm:$0xf] %vm364, %v346
      %380 = vst.msk [vmem:[%s172 + $0x3c] sm:$0xf] %vm364, %v347
      %s381 = smul.u32 16, %s14
      %p382 = scmp.lt.s32.totalorder %s381, 31
      %s383 = scalar_select %p382, %s381, 31
      %s384 = smul.addr %s383, 4
      %s385 = scalar_lea.vmem %s3, %s384
      // Predicated region
      $region33: #{forward.34} parent=31 // pred_check
        %p386 = pneg %p100
      $region34: #{forward.34} parent=31 // pred_check_branch
        %388 = sbr.rel (%p386) target = $region36
      $region35: #{forward.34} parent=31 // pred_region
        %s389 = smul.u32 16, %s14
      $region36: #{forward.34} parent=31 // pred_fallthru
        _
    $region32: #{forward.34} parent=5 // pred_fallthru
      _
    %p390 = scmp.le.s32.totalorder 2, %s9
    // Predicated region
    $region37: #{forward.34} parent=5 // pred_check
      %p391 = pneg %p390
    $region38: #{forward.34} parent=5 // pred_check_branch
      %393 = sbr.rel (%p391) target = $region40
    $region39: #{forward.34} parent=5 // pred_region
      %s394 = ssub.s32 %s9, 2
      // Predicated region
      $region41: #{forward.34} parent=39 // pred_check
        %p395 = pneg %p106
      $region42: #{forward.34} parent=39 // pred_check_branch
        %397 = sbr.rel (%p395) target = $region44
      $region43: #{forward.34} parent=39 // pred_region
        %s398 = smul.u32 16, %s15
        %p399 = scmp.lt.s32.totalorder %s398, 31
        %s400 = scalar_select %p399, %s398, 31
        %s401 = smul.addr %s400, 4
        %s402 = scalar_lea.vmem %s3, %s401
      $region44: #{forward.34} parent=39 // pred_fallthru
        _
    $region40: #{forward.34} parent=5 // pred_fallthru
      _
  $region6: #{forward.34} parent=0 // loop_footer
    %s13 = sadd.s32 1, %s9
  $region7: #{forward.34} parent=0 // loop_footer_branch
    %8 = sbr.rel target = $region3
  $region8: #{forward.34} parent=0 // loop_exit
    _

// kernel: forward.33
$region0: #{forward.33}
  #allocation0 [shape = 'u32[]', space=smem, size = 0x4, offset = 0x4, fixed_abs, tag = 'smem constant byte address 0x4 - core index']
  #allocation1 [shape = 'u32[144,128]{1,0:T(1,128)}', space=vmem, size = 0x12000, scoped, tag = 'internal scratch']
  %s0 = inlined_call_operand.vmem [shape: bf16[2,9,9,8], index: 0, kind: input, shape index: {}]
  %s1 = inlined_call_operand.vmem [shape: bf16[4,8,32], index: 1, kind: input, shape index: {}]
  %s2 = inlined_call_operand.vmem [shape: f32[1,32], index: 2, kind: input, shape index: {}]
  %s3 = inlined_call_operand.vmem [shape: bf16[2,8,2,8,16], index: 3, kind: output, shape index: {0}]
  %s4 = inlined_call_operand.vmem [shape: f32[2,2,32], index: 4, kind: output, shape index: {1}]
  %5 = xla_tuple %s3, %s4
  %s6 = sld [smem:[#allocation0]]
  $region53: #{forward.33} parent=0
    _
  %s8 = ssub.s32 1, %s6
  %s9 = scalar_select 0, %s8, %s6
  loop: start=0, step=1, limit=4
  $region2: #{forward.33} parent=0 // loop_pre_header
    _
  $region3: #{forward.33} parent=0 // loop_header
    %s11 = sphi 0, %s15
    %p12 = scmp.ge.s32.totalorder %s11, 4
    %s21 = sphi 0, %s23
    %s24 = sphi 0, %s21
    %s25 = sphi 0, %s24
    %s41 = sphi 0, %s25
    %s45 = sphi 0, %s45
    %s47 = sphi 0, %s45
    %s48 = sphi 0, %s47
    %s62 = sphi 0, %s48
    %s66 = sphi 0, %s66
    %s68 = sphi 0, %s66
    %s69 = sphi 0, %s68
    %s83 = sphi 0, %s69
    %s89 = sphi 0, %s91
    %s92 = sphi 0, %s89
    %s93 = sphi 0, %s92
    %s109 = sphi 0, %s93
    %s115 = sphi 0, %s117
    %s118 = sphi 0, %s115
    %s119 = sphi 0, %s118
    %s135 = sphi 0, %s119
  $region4: #{forward.33} parent=0 // loop_header_branch
    %14 = sbr.rel (%p12) target = $region8
  $region5: #{forward.33} parent=0 // loop_body
    %s16 = ssub.s32 %s11, 1
    %s17 = ssub.s32 %s11, 2
    %s18 = sadd.s32 %s11, 1
    %s19 = ssub.s32 %s11, %s18
    %p20 = scmp.eq.s32.totalorder %s19, 0
    %s22 = sadd.s32 %s21, 1
    %s23 = scalar_select %p20, %s21, %s22
    %p26 = pneg %p20
    %p27 = scmp.eq.s32.totalorder %s11, 1
    %p28 = por %p26, %p27
    %p29 = scmp.ne.s32.totalorder %s21, %s24
    %p30 = scmp.eq.s32.totalorder %s11, 0
    %p31 = por %p29, %p30
    %p32 = scmp.ne.s32.totalorder %s21, %s24
    %p33 = scmp.eq.s32.totalorder %s16, 1
    %p34 = por %p32, %p33
    %p35 = scmp.ne.s32.totalorder %s24, %s25
    %p36 = scmp.eq.s32.totalorder %s16, 0
    %p37 = por %p35, %p36
    %p38 = scmp.ne.s32.totalorder %s24, %s25
    %p39 = scmp.eq.s32.totalorder %s17, 1
    %p40 = por %p38, %p39
    %p42 = scmp.ne.s32.totalorder %s25, %s41
    %p43 = scmp.eq.s32.totalorder %s17, 0
    %p44 = por %p42, %p43
    %s46 = sadd.s32 %s45, 1
    %p49 = scmp.eq.s32.totalorder %s11, 1
    %p50 = scmp.ne.s32.totalorder %s45, %s47
    %p51 = scmp.eq.s32.totalorder %s11, 0
    %p52 = por %p50, %p51
    %p53 = scmp.ne.s32.totalorder %s45, %s47
    %p54 = scmp.eq.s32.totalorder %s16, 1
    %p55 = por %p53, %p54
    %p56 = scmp.ne.s32.totalorder %s47, %s48
    %p57 = scmp.eq.s32.totalorder %s16, 0
    %p58 = por %p56, %p57
    %p59 = scmp.ne.s32.totalorder %s47, %s48
    %p60 = scmp.eq.s32.totalorder %s17, 1
    %p61 = por %p59, %p60
    %p63 = scmp.ne.s32.totalorder %s48, %s62
    %p64 = scmp.eq.s32.totalorder %s17, 0
    %p65 = por %p63, %p64
    %s67 = sadd.s32 %s66, 1
    %p70 = scmp.eq.s32.totalorder %s11, 1
    %p71 = scmp.ne.s32.totalorder %s66, %s68
    %p72 = scmp.eq.s32.totalorder %s11, 0
    %p73 = por %p71, %p72
    %p74 = scmp.ne.s32.totalorder %s66, %s68
    %p75 = scmp.eq.s32.totalorder %s16, 1
    %p76 = por %p74, %p75
    %p77 = scmp.ne.s32.totalorder %s68, %s69
    %p78 = scmp.eq.s32.totalorder %s16, 0
    %p79 = por %p77, %p78
    %p80 = scmp.ne.s32.totalorder %s68, %s69
    %p81 = scmp.eq.s32.totalorder %s17, 1
    %p82 = por %p80, %p81
    %p84 = scmp.ne.s32.totalorder %s69, %s83
    %p85 = scmp.eq.s32.totalorder %s17, 0
    %p86 = por %p84, %p85
    %s87 = ssub.s32 %s11, %s18
    %p88 = scmp.eq.s32.totalorder %s87, 0
    %s90 = sadd.s32 %s89, 1
    %s91 = scalar_select %p88, %s89, %s90
    %p94 = pneg %p88
    %p95 = scmp.eq.s32.totalorder %s11, 1
    %p96 = por %p94, %p95
    %p97 = scmp.ne.s32.totalorder %s89, %s92
    %p98 = scmp.eq.s32.totalorder %s11, 0
    %p99 = por %p97, %p98
    %p100 = scmp.ne.s32.totalorder %s89, %s92
    %p101 = scmp.eq.s32.totalorder %s16, 1
    %p102 = por %p100, %p101
    %p103 = scmp.ne.s32.totalorder %s92, %s93
    %p104 = scmp.eq.s32.totalorder %s16, 0
    %p105 = por %p103, %p104
    %p106 = scmp.ne.s32.totalorder %s92, %s93
    %p107 = scmp.eq.s32.totalorder %s17, 1
    %p108 = por %p106, %p107
    %p110 = scmp.ne.s32.totalorder %s93, %s109
    %p111 = scmp.eq.s32.totalorder %s17, 0
    %p112 = por %p110, %p111
    %s113 = ssub.s32 %s11, %s18
    %p114 = scmp.eq.s32.totalorder %s113, 0
    %s116 = sadd.s32 %s115, 1
    %s117 = scalar_select %p114, %s115, %s116
    %p120 = pneg %p114
    %p121 = scmp.eq.s32.totalorder %s11, 1
    %p122 = por %p120, %p121
    %p123 = scmp.ne.s32.totalorder %s115, %s118
    %p124 = scmp.eq.s32.totalorder %s11, 0
    %p125 = por %p123, %p124
    %p126 = scmp.ne.s32.totalorder %s115, %s118
    %p127 = scmp.eq.s32.totalorder %s16, 1
    %p128 = por %p126, %p127
    %p129 = scmp.ne.s32.totalorder %s118, %s119
    %p130 = scmp.eq.s32.totalorder %s16, 0
    %p131 = por %p129, %p130
    %p132 = scmp.ne.s32.totalorder %s118, %s119
    %p133 = scmp.eq.s32.totalorder %s17, 1
    %p134 = por %p132, %p133
    %p136 = scmp.ne.s32.totalorder %s119, %s135
    %p137 = scmp.eq.s32.totalorder %s17, 0
    %p138 = por %p136, %p137
    %p139 = scmp.le.s32.totalorder 1, %s11
    %p140 = scmp.lt.s32.totalorder %s11, 3
    %p141 = pnand %p139, %p140
    %p142 = pneg %p141
    // Predicated region
    $region9: #{forward.33} parent=5 // pred_check
      _
    $region10: #{forward.33} parent=5 // pred_check_branch
      %144 = sbr.rel (%p141) target = $region12
    $region11: #{forward.33} parent=5 // pred_region
      %s145 = ssub.s32 %s11, 1
      // Predicated region
      $region13: #{forward.33} parent=11 // pred_check
        %p146 = pneg %p58
      $region14: #{forward.33} parent=11 // pred_check_branch
        %148 = sbr.rel (%p146) target = $region16
      $region15: #{forward.33} parent=11 // pred_region
        _
      $region16: #{forward.33} parent=11 // pred_fallthru
        _
      // Predicated region
      $region17: #{forward.33} parent=11 // pred_check
        %p149 = pneg %p79
      $region18: #{forward.33} parent=11 // pred_check_branch
        %151 = sbr.rel (%p149) target = $region20
      $region19: #{forward.33} parent=11 // pred_region
        _
      $region20: #{forward.33} parent=11 // pred_fallthru
        _
    $region12: #{forward.33} parent=5 // pred_fallthru
      _
    %p152 = scmp.lt.s32.totalorder %s11, 2
    // Predicated region
    $region21: #{forward.33} parent=5 // pred_check
      %p153 = pneg %p152
    $region22: #{forward.33} parent=5 // pred_check_branch
      %155 = sbr.rel (%p153) target = $region24
    $region23: #{forward.33} parent=5 // pred_region
      // Predicated region
      $region25: #{forward.33} parent=23 // pred_check
        %p156 = pneg %p31
      $region26: #{forward.33} parent=23 // pred_check_branch
        %158 = sbr.rel (%p156) target = $region28
      $region27: #{forward.33} parent=23 // pred_region
        %p159 = scmp.lt.s32.totalorder %s11, 1
        %s160 = scalar_select %p159, %s11, 1
        %s161 = smul.addr %s160, 18
        %s162 = smul.addr %s161, 4
        %s163 = scalar_lea.vmem %s0, %s162
      $region28: #{forward.33} parent=23 // pred_fallthru
        _
    $region24: #{forward.33} parent=5 // pred_fallthru
      _
    %p164 = scmp.le.s32.totalorder 1, %s11
    %p165 = scmp.lt.s32.totalorder %s11, 3
    %p166 = pnand %p164, %p165
    %p167 = pneg %p166
    // Predicated region
    $region29: #{forward.33} parent=5 // pred_check
      _
    $region30: #{forward.33} parent=5 // pred_check_branch
      %169 = sbr.rel (%p166) target = $region32
    $region31: #{forward.33} parent=5 // pred_region
      %s170 = ssub.s32 %s11, 1
      %p171 = scmp.lt.s32.totalorder %s16, 1
      %s172 = scalar_select %p171, %s16, 1
      %s173 = smul.addr %s172, 18
      %s174 = smul.addr %s173, 4
      %s175 = scalar_lea.vmem %s0, %s174
      %p176 = pneg %p37
      %p177 = pneg %p34
      %p178 = pneg %p58
      %p179 = pneg %p55
      %p180 = pneg %p79
      %p181 = pneg %p76
      %p182 = pneg %p105
      %p183 = pneg %p102
      %p184 = scmp.lt.s32.totalorder %s16, 1
      %s185 = scalar_select %p184, %s16, 1
      %s186 = smul.addr %s185, 16
      %s187 = smul.addr %s186, 4
      %s188 = scalar_lea.vmem %s3, %s187
      %p189 = pneg %p131
      %p190 = pneg %p128
      %p191 = scmp.lt.s32.totalorder %s16, 1
      %s192 = scalar_select %p191, %s16, 1
      %s193 = smul.addr %s192, 2
      %s194 = scalar_lea.vmem %s4, %s193
      %p195 = scmp.lt.s32.totalorder %s16, 1
      %s196 = scalar_select %p195, %s16, 1
      %s197 = smul.addr %s196, 18
      %s198 = smul.addr %s197, 4
      %s199 = scalar_lea.vmem %s0, %s198
      %p200 = scmp.lt.s32.totalorder %s16, 1
      %s201 = scalar_select %p200, %s16, 1
      %s202 = smul.addr %s201, 16
      %s203 = smul.addr %s202, 4
      %s204 = scalar_lea.vmem %s3, %s203
      %p205 = scmp.lt.s32.totalorder %s16, 1
      %s206 = scalar_select %p205, %s16, 1
      %s207 = smul.addr %s206, 2
      %s208 = scalar_lea.vmem %s4, %s207
      %v210 = vld [vmem:[%s199] sm:$0xf]
      %v211 = vld [vmem:[%s199 + $0x4] sm:$0x1]
      %v212 = vld [vmem:[%s199 + $0x8] sm:$0xf]
      %v213 = vld [vmem:[%s199 + $0xc] sm:$0x1]
      %v214 = vld [vmem:[%s199 + $0x10] sm:$0xf]
      %v215 = vld [vmem:[%s199 + $0x14] sm:$0x1]
      %v216 = vld [vmem:[%s199 + $0x18] sm:$0xf]
      %v217 = vld [vmem:[%s199 + $0x1c] sm:$0x1]
      %v218 = vld [vmem:[%s199 + $0x20] sm:$0xf]
      %v219 = vld [vmem:[%s199 + $0x24] sm:$0x1]
      %v220 = vld [vmem:[%s199 + $0x28] sm:$0xf]
      %v221 = vld [vmem:[%s199 + $0x2c] sm:$0x1]
      %v222 = vld [vmem:[%s199 + $0x30] sm:$0xf]
      %v223 = vld [vmem:[%s199 + $0x34] sm:$0x1]
      %v224 = vld [vmem:[%s199 + $0x38] sm:$0xf]
      %v225 = vld [vmem:[%s199 + $0x3c] sm:$0x1]
      %v226 = vld [vmem:[%s199 + $0x40] sm:$0xf]
      %v227 = vld [vmem:[%s199 + $0x44] sm:$0x1]
      %v228 = vld [vmem:[%s1] sm:$0xf]
      %vm229 = vsmask.f32 3328
      %vm230 = vsmask.f32 7440
      %vm231 = vmor %vm229, %vm230
      %v233 = vshrl.u32 %v210, 16
      %v235 = vrot.slane %v233, 4
      %v236 = vshll.u32 %v210, 16
      %v238 = vrot.slane %v236, 5
      %v239 = vor.u32 %v235, %v238
      %v240 = vrot.slane %v239, 4
      %v242 = vshll.u32 %v211, 16
      %v244 = vrot.slane %v242, 5
      %v245 = vsel %vm231, %v240, %v244
      %v247 = vshrl.u32 %v212, 16
      %v249 = vrot.slane %v247, 4
      %v250 = vshll.u32 %v212, 16
      %v252 = vrot.slane %v250, 5
      %v253 = vor.u32 %v249, %v252
      %v254 = vrot.slane %v253, 4
      %v256 = vshll.u32 %v213, 16
      %v258 = vrot.slane %v256, 5
      %v259 = vsel %vm231, %v254, %v258
      %v261 = vshrl.u32 %v214, 16
      %v263 = vrot.slane %v261, 4
      %v264 = vshll.u32 %v214, 16
      %v266 = vrot.slane %v264, 5
      %v267 = vor.u32 %v263, %v266
      %v268 = vrot.slane %v267, 4
      %v270 = vshll.u32 %v215, 16
      %v272 = vrot.slane %v270, 5
      %v273 = vsel %vm231, %v268, %v272
      %v275 = vshrl.u32 %v216, 16
      %v277 = vrot.slane %v275, 4
      %v278 = vshll.u32 %v216, 16
      %v280 = vrot.slane %v278, 5
      %v281 = vor.u32 %v277, %v280
      %v282 = vrot.slane %v281, 4
      %v284 = vshll.u32 %v217, 16
      %v286 = vrot.slane %v284, 5
      %v287 = vsel %vm231, %v282, %v286
      %v289 = vshrl.u32 %v218, 16
      %v291 = vrot.slane %v289, 4
      %v292 = vshll.u32 %v218, 16
      %v294 = vrot.slane %v292, 5
      %v295 = vor.u32 %v291, %v294
      %v296 = vrot.slane %v295, 4
      %v298 = vshll.u32 %v219, 16
      %v300 = vrot.slane %v298, 5
      %v301 = vsel %vm231, %v296, %v300
      %v303 = vshrl.u32 %v220, 16
      %v305 = vrot.slane %v303, 4
      %v306 = vshll.u32 %v220, 16
      %v308 = vrot.slane %v306, 5
      %v309 = vor.u32 %v305, %v308
      %v310 = vrot.slane %v309, 4
      %v312 = vshll.u32 %v221, 16
      %v314 = vrot.slane %v312, 5
      %v315 = vsel %vm231, %v310, %v314
      %v317 = vshrl.u32 %v222, 16
      %v319 = vrot.slane %v317, 4
      %v320 = vshll.u32 %v222, 16
      %v322 = vrot.slane %v320, 5
      %v323 = vor.u32 %v319, %v322
      %v324 = vrot.slane %v323, 4
      %v326 = vshll.u32 %v223, 16
      %v328 = vrot.slane %v326, 5
      %v329 = vsel %vm231, %v324, %v328
      %v331 = vshrl.u32 %v224, 16
      %v333 = vrot.slane %v331, 4
      %v334 = vshll.u32 %v224, 16
      %v336 = vrot.slane %v334, 5
      %v337 = vor.u32 %v333, %v336
      %v338 = vrot.slane %v337, 4
      %v340 = vshll.u32 %v225, 16
      %v342 = vrot.slane %v340, 5
      %v343 = vsel %vm231, %v338, %v342
      %s344 = scalar_lea.vmem %s1, 4
      %v345 = vld [vmem:[%s344] sm:$0xf]
      %v346 = vunpack.c.l.b16 %v245
      %v347 = vunpack.c.l.b16 %v259
      %v348 = vunpack.c.l.b16 %v273
      %v349 = vunpack.c.l.b16 %v287
      %v350 = vunpack.c.l.b16 %v301
      %v351 = vunpack.c.l.b16 %v315
      %v352 = vunpack.c.l.b16 %v329
      %v353 = vunpack.c.l.b16 %v343
      %v354 = vpack.c.b16 %v347, %v346
      %v355 = vpack.c.b16 %v349, %v348
      %v356 = vpack.c.b16 %v351, %v350
      %v357 = vpack.c.b16 %v353, %v352
      %vm358 = vcmask 64512
      %v360 = vsel %vm358, %v354, 0
      %v363 = vsel %vm358, %v355, 0
      %v366 = vsel %vm358, %v356, 0
      %v369 = vsel %vm358, %v357, 0
      %vm371 = vcmask 1043456
      %v373 = vsel %vm371, %v345, 0
      %375 = vmatprep.subr.bf16.mxu0 0
      %376 = vmatpush1.bf16.msra.mxu0 0
      %377 = vmatprep.subr.bf16.mxu0 0
      %378 = vmatpush1.bf16.msra.mxu0 0
      %379 = vmatprep.subr.bf16.mxu0 0
      %380 = vmatpush1.bf16.msra.mxu0 0
      %381 = vmatprep.subr.bf16.mxu0 0
      %382 = vmatpush1.bf16.msra.mxu0 0
      %383 = vmatprep.subr.bf16.mxu0 0
      %384 = vmatpush1.bf16.msra.mxu0 0
      %385 = vmatprep.subr.bf16.mxu0 0
      %386 = vmatpush1.bf16.msra.mxu0 0
      %387 = vmatprep.subr.bf16.mxu0 0
      %388 = vmatpush1.bf16.msra.mxu0 0
      %389 = vmatprep.subr.bf16.mxu0 0
      %390 = vmatpush1.bf16.msra.mxu0 %v373
      %391 = vmatprep.subr.bf16.mxu0 0
      %392 = vmatpush2.bf16.msra.mxu0 0
      %393 = vmatprep.subr.bf16.mxu0 0
      %394 = vmatpush2.bf16.msra.mxu0 0
      %395 = vmatprep.subr.bf16.mxu0 0
      %396 = vmatpush2.bf16.msra.mxu0 0
      %397 = vmatprep.subr.bf16.mxu0 0
      %398 = vmatpush2.bf16.msra.mxu0 0
      %399 = vmatprep.subr.bf16.mxu0 0
      %400 = vmatpush2.bf16.msra.mxu0 0
      %401 = vmatprep.subr.bf16.mxu0 0
      %402 = vmatpush2.bf16.msra.mxu0 0
      %403 = vmatprep.subr.bf16.mxu0 0
      %404 = vmatpush2.bf16.msra.mxu0 0
      %405 = vmatprep.subr.bf16.mxu0 0
      %406 = vmatpush2.bf16.msra.mxu0 0
      %407 = vmatprep.mubr.bf16.mxu0 0
      %408 = vmatmul.mubr.bf16.gmra.mxu0 %v360
      %v409 = vpop.f32.mrf.mxu0
      %v410 = vadd.f32 0.0, %v409
      %v411 = vpop.f32.mrf.mxu0
      %v412 = vpop.f32.mrf.mxu0
      %v413 = vadd.f32 0.0, %v412
      %v414 = vpop.f32.mrf.mxu0
      %415 = vmatprep.mubr.bf16.mxu0 0
      %416 = vmatmul.mubr.bf16.gmra.mxu0 %v363
      %v417 = vpop.f32.mrf.mxu0
      %v418 = vadd.f32 0.0, %v417
      %v419 = vpop.f32.mrf.mxu0
      %v420 = vpop.f32.mrf.mxu0
      %v421 = vadd.f32 0.0, %v420
      %v422 = vpop.f32.mrf.mxu0
      %423 = vmatprep.mubr.bf16.mxu0 0
      %424 = vmatmul.mubr.bf16.gmra.mxu0 %v366
      %v425 = vpop.f32.mrf.mxu0
      %v426 = vadd.f32 0.0, %v425
      %v427 = vpop.f32.mrf.mxu0
      %v428 = vpop.f32.mrf.mxu0
      %v429 = vadd.f32 0.0, %v428
      %v430 = vpop.f32.mrf.mxu0
      %431 = vmatprep.mubr.bf16.mxu0 0
      %432 = vmatmul.mubr.bf16.gmra.mxu0 %v369
      %v433 = vpop.f32.mrf.mxu0
      %v434 = vadd.f32 0.0, %v433
      %v435 = vpop.f32.mrf.mxu0
      %v436 = vpop.f32.mrf.mxu0
      %v437 = vadd.f32 0.0, %v436
      %v438 = vpop.f32.mrf.mxu0
      %439 = vdwg.mxu0
      %v448 = vunpack.c.l.b16 %v210
      %v449 = vunpack.c.l.b16 %v212
      %v450 = vunpack.c.l.b16 %v214
      %v451 = vunpack.c.l.b16 %v216
      %v452 = vunpack.c.l.b16 %v218
      %v453 = vunpack.c.l.b16 %v220
      %v454 = vunpack.c.l.b16 %v222
      %v455 = vunpack.c.l.b16 %v224
      %v456 = vpack.c.b16 %v449, %v448
      %v457 = vpack.c.b16 %v451, %v450
      %v458 = vpack.c.b16 %v453, %v452
      %v459 = vpack.c.b16 %v455, %v454
      %v461 = vsel %vm358, %v456, 0
      %v464 = vsel %vm358, %v457, 0
      %v467 = vsel %vm358, %v458, 0
      %v470 = vsel %vm358, %v459, 0
      %v473 = vsel %vm371, %v228, 0
      %475 = vmatprep.subr.bf16.mxu0 0
      %476 = vmatpush1.bf16.msra.mxu0 0
      %477 = vmatprep.subr.bf16.mxu0 0
      %478 = vmatpush1.bf16.msra.mxu0 0
      %479 = vmatprep.subr.bf16.mxu0 0
      %480 = vmatpush1.bf16.msra.mxu0 0
      %481 = vmatprep.subr.bf16.mxu0 0
      %482 = vmatpush1.bf16.msra.mxu0 0
      %483 = vmatprep.subr.bf16.mxu0 0
      %484 = vmatpush1.bf16.msra.mxu0 0
      %485 = vmatprep.subr.bf16.mxu0 0
      %486 = vmatpush1.bf16.msra.mxu0 0
      %487 = vmatprep.subr.bf16.mxu0 0
      %488 = vmatpush1.bf16.msra.mxu0 0
      %489 = vmatprep.subr.bf16.mxu0 0
      %490 = vmatpush1.bf16.msra.mxu0 %v473
      %491 = vmatprep.subr.bf16.mxu0 0
      %492 = vmatpush2.bf16.msra.mxu0 0
      %493 = vmatprep.subr.bf16.mxu0 0
      %494 = vmatpush2.bf16.msra.mxu0 0
      %495 = vmatprep.subr.bf16.mxu0 0
      %496 = vmatpush2.bf16.msra.mxu0 0
      %497 = vmatprep.subr.bf16.mxu0 0
      %498 = vmatpush2.bf16.msra.mxu0 0
      %499 = vmatprep.subr.bf16.mxu0 0
      %500 = vmatpush2.bf16.msra.mxu0 0
      %501 = vmatprep.subr.bf16.mxu0 0
      %502 = vmatpush2.bf16.msra.mxu0 0
      %503 = vmatprep.subr.bf16.mxu0 0
      %504 = vmatpush2.bf16.msra.mxu0 0
      %505 = vmatprep.subr.bf16.mxu0 0
      %506 = vmatpush2.bf16.msra.mxu0 0
      %507 = vmatprep.mubr.bf16.mxu0 0
      %508 = vmatmul.mubr.bf16.gmra.mxu0 %v461
      %v509 = vpop.f32.mrf.mxu0
      %v510 = vadd.f32 %v410, %v509
      %v511 = vpop.f32.mrf.mxu0
      %v512 = vpop.f32.mrf.mxu0
      %v513 = vadd.f32 %v413, %v512
      %v514 = vpop.f32.mrf.mxu0
      %515 = vmatprep.mubr.bf16.mxu0 0
      %516 = vmatmul.mubr.bf16.gmra.mxu0 %v464
      %v517 = vpop.f32.mrf.mxu0
      %v518 = vadd.f32 %v418, %v517
      %v519 = vpop.f32.mrf.mxu0
      %v520 = vpop.f32.mrf.mxu0
      %v521 = vadd.f32 %v421, %v520
      %v522 = vpop.f32.mrf.mxu0
      %523 = vmatprep.mubr.bf16.mxu0 0
      %524 = vmatmul.mubr.bf16.gmra.mxu0 %v467
      %v525 = vpop.f32.mrf.mxu0
      %v526 = vadd.f32 %v426, %v525
      %v527 = vpop.f32.mrf.mxu0
      %v528 = vpop.f32.mrf.mxu0
      %v529 = vadd.f32 %v429, %v528
      %v530 = vpop.f32.mrf.mxu0
      %531 = vmatprep.mubr.bf16.mxu0 0
      %532 = vmatmul.mubr.bf16.gmra.mxu0 %v470
      %v533 = vpop.f32.mrf.mxu0
      %v534 = vadd.f32 %v434, %v533
      %v535 = vpop.f32.mrf.mxu0
      %v536 = vpop.f32.mrf.mxu0
      %v537 = vadd.f32 %v437, %v536
      %v538 = vpop.f32.mrf.mxu0
      %539 = vdwg.mxu0
      %s540 = scalar_lea.vmem %s1, 8
      %v541 = vld [vmem:[%s540] sm:$0xf]
      %v543 = vunpack.c.l.b16 %v226
      %v544 = vpack.c.b16 %v450, %v449
      %v545 = vpack.c.b16 %v452, %v451
      %v546 = vpack.c.b16 %v454, %v453
      %v547 = vpack.c.b16 %v543, %v455
      %v549 = vsel %vm358, %v544, 0
      %v552 = vsel %vm358, %v545, 0
      %v555 = vsel %vm358, %v546, 0
      %v558 = vsel %vm358, %v547, 0
      %v561 = vsel %vm371, %v541, 0
      %563 = vmatprep.subr.bf16.mxu0 0
      %564 = vmatpush1.bf16.msra.mxu0 0
      %565 = vmatprep.subr.bf16.mxu0 0
      %566 = vmatpush1.bf16.msra.mxu0 0
      %567 = vmatprep.subr.bf16.mxu0 0
      %568 = vmatpush1.bf16.msra.mxu0 0
      %569 = vmatprep.subr.bf16.mxu0 0
      %570 = vmatpush1.bf16.msra.mxu0 0
      %571 = vmatprep.subr.bf16.mxu0 0
      %572 = vmatpush1.bf16.msra.mxu0 0
      %573 = vmatprep.subr.bf16.mxu0 0
      %574 = vmatpush1.bf16.msra.mxu0 0
      %575 = vmatprep.subr.bf16.mxu0 0
      %576 = vmatpush1.bf16.msra.mxu0 0
      %577 = vmatprep.subr.bf16.mxu0 0
      %578 = vmatpush1.bf16.msra.mxu0 %v561
      %579 = vmatprep.subr.bf16.mxu0 0
      %580 = vmatpush2.bf16.msra.mxu0 0
      %581 = vmatprep.subr.bf16.mxu0 0
      %582 = vmatpush2.bf16.msra.mxu0 0
      %583 = vmatprep.subr.bf16.mxu0 0
      %584 = vmatpush2.bf16.msra.mxu0 0
      %585 = vmatprep.subr.bf16.mxu0 0
      %586 = vmatpush2.bf16.msra.mxu0 0
      %587 = vmatprep.subr.bf16.mxu0 0
      %588 = vmatpush2.bf16.msra.mxu0 0
      %589 = vmatprep.subr.bf16.mxu0 0
      %590 = vmatpush2.bf16.msra.mxu0 0
      %591 = vmatprep.subr.bf16.mxu0 0
      %592 = vmatpush2.bf16.msra.mxu0 0
      %593 = vmatprep.subr.bf16.mxu0 0
      %594 = vmatpush2.bf16.msra.mxu0 0
      %595 = vmatprep.mubr.bf16.mxu0 0
      %596 = vmatmul.mubr.bf16.gmra.mxu0 %v549
      %v597 = vpop.f32.mrf.mxu0
      %v598 = vadd.f32 0.0, %v597
      %v599 = vpop.f32.mrf.mxu0
      %v600 = vpop.f32.mrf.mxu0
      %v601 = vadd.f32 0.0, %v600
      %v602 = vpop.f32.mrf.mxu0
      %603 = vmatprep.mubr.bf16.mxu0 0
      %604 = vmatmul.mubr.bf16.gmra.mxu0 %v552
      %v605 = vpop.f32.mrf.mxu0
      %v606 = vadd.f32 0.0, %v605
      %v607 = vpop.f32.mrf.mxu0
      %v608 = vpop.f32.mrf.mxu0
      %v609 = vadd.f32 0.0, %v608
      %v610 = vpop.f32.mrf.mxu0
      %611 = vmatprep.mubr.bf16.mxu0 0
      %612 = vmatmul.mubr.bf16.gmra.mxu0 %v555
      %v613 = vpop.f32.mrf.mxu0
      %v614 = vadd.f32 0.0, %v613
      %v615 = vpop.f32.mrf.mxu0
      %v616 = vpop.f32.mrf.mxu0
      %v617 = vadd.f32 0.0, %v616
      %v618 = vpop.f32.mrf.mxu0
      %619 = vmatprep.mubr.bf16.mxu0 0
      %620 = vmatmul.mubr.bf16.gmra.mxu0 %v558
      %v621 = vpop.f32.mrf.mxu0
      %v622 = vadd.f32 0.0, %v621
      %v623 = vpop.f32.mrf.mxu0
      %v624 = vpop.f32.mrf.mxu0
      %v625 = vadd.f32 0.0, %v624
      %v626 = vpop.f32.mrf.mxu0
      %627 = vdwg.mxu0
      %v628 = vadd.f32 %v510, %v598
      %v629 = vadd.f32 %v513, %v601
      %v630 = vadd.f32 %v518, %v606
      %v631 = vadd.f32 %v521, %v609
      %v632 = vadd.f32 %v526, %v614
      %v633 = vadd.f32 %v529, %v617
      %v634 = vadd.f32 %v534, %v622
      %v635 = vadd.f32 %v537, %v625
      %v637 = vshrl.u32 %v226, 16
      %v639 = vrot.slane %v637, 4
      %v640 = vshll.u32 %v226, 16
      %v642 = vrot.slane %v640, 5
      %v643 = vor.u32 %v639, %v642
      %v644 = vrot.slane %v643, 4
      %v646 = vshll.u32 %v227, 16
      %v648 = vrot.slane %v646, 5
      %v649 = vsel %vm231, %v644, %v648
      %s650 = scalar_lea.vmem %s1, 12
      %v651 = vld [vmem:[%s650] sm:$0xf]
      %v652 = vunpack.c.l.b16 %v649
      %v653 = vpack.c.b16 %v348, %v347
      %v654 = vpack.c.b16 %v350, %v349
      %v655 = vpack.c.b16 %v352, %v351
      %v656 = vpack.c.b16 %v652, %v353
      %v658 = vsel %vm358, %v653, 0
      %v661 = vsel %vm358, %v654, 0
      %v664 = vsel %vm358, %v655, 0
      %v667 = vsel %vm358, %v656, 0
      %v670 = vsel %vm371, %v651, 0
      %672 = vmatprep.subr.bf16.mxu0 0
      %673 = vmatpush1.bf16.msra.mxu0 0
      %674 = vmatprep.subr.bf16.mxu0 0
      %675 = vmatpush1.bf16.msra.mxu0 0
      %676 = vmatprep.subr.bf16.mxu0 0
      %677 = vmatpush1.bf16.msra.mxu0 0
      %678 = vmatprep.subr.bf16.mxu0 0
      %679 = vmatpush1.bf16.msra.mxu0 0
      %680 = vmatprep.subr.bf16.mxu0 0
      %681 = vmatpush1.bf16.msra.mxu0 0
      %682 = vmatprep.subr.bf16.mxu0 0
      %683 = vmatpush1.bf16.msra.mxu0 0
      %684 = vmatprep.subr.bf16.mxu0 0
      %685 = vmatpush1.bf16.msra.mxu0 0
      %686 = vmatprep.subr.bf16.mxu0 0
      %687 = vmatpush1.bf16.msra.mxu0 %v670
      %688 = vmatprep.subr.bf16.mxu0 0
      %689 = vmatpush2.bf16.msra.mxu0 0
      %690 = vmatprep.subr.bf16.mxu0 0
      %691 = vmatpush2.bf16.msra.mxu0 0
      %692 = vmatprep.subr.bf16.mxu0 0
      %693 = vmatpush2.bf16.msra.mxu0 0
      %694 = vmatprep.subr.bf16.mxu0 0
      %695 = vmatpush2.bf16.msra.mxu0 0
      %696 = vmatprep.subr.bf16.mxu0 0
      %697 = vmatpush2.bf16.msra.mxu0 0
      %698 = vmatprep.subr.bf16.mxu0 0
      %699 = vmatpush2.bf16.msra.mxu0 0
      %700 = vmatprep.subr.bf16.mxu0 0
      %701 = vmatpush2.bf16.msra.mxu0 0
      %702 = vmatprep.subr.bf16.mxu0 0
      %703 = vmatpush2.bf16.msra.mxu0 0
      %704 = vmatprep.mubr.bf16.mxu0 0
      %705 = vmatmul.mubr.bf16.gmra.mxu0 %v658
      %v706 = vpop.f32.mrf.mxu0
      %v707 = vadd.f32 0.0, %v706
      %v708 = vpop.f32.mrf.mxu0
      %v709 = vpop.f32.mrf.mxu0
      %v710 = vadd.f32 0.0, %v709
      %v711 = vpop.f32.mrf.mxu0
      %712 = vmatprep.mubr.bf16.mxu0 0
      %713 = vmatmul.mubr.bf16.gmra.mxu0 %v661
      %v714 = vpop.f32.mrf.mxu0
      %v715 = vadd.f32 0.0, %v714
      %v716 = vpop.f32.mrf.mxu0
      %v717 = vpop.f32.mrf.mxu0
      %v718 = vadd.f32 0.0, %v717
      %v719 = vpop.f32.mrf.mxu0
      %720 = vmatprep.mubr.bf16.mxu0 0
      %721 = vmatmul.mubr.bf16.gmra.mxu0 %v664
      %v722 = vpop.f32.mrf.mxu0
      %v723 = vadd.f32 0.0, %v722
      %v724 = vpop.f32.mrf.mxu0
      %v725 = vpop.f32.mrf.mxu0
      %v726 = vadd.f32 0.0, %v725
      %v727 = vpop.f32.mrf.mxu0
      %728 = vmatprep.mubr.bf16.mxu0 0
      %729 = vmatmul.mubr.bf16.gmra.mxu0 %v667
      %v730 = vpop.f32.mrf.mxu0
      %v731 = vadd.f32 0.0, %v730
      %v732 = vpop.f32.mrf.mxu0
      %v733 = vpop.f32.mrf.mxu0
      %v734 = vadd.f32 0.0, %v733
      %v735 = vpop.f32.mrf.mxu0
      %736 = vdwg.mxu0
      %v737 = vadd.f32 %v628, %v707
      %v738 = vadd.f32 %v629, %v710
      %v739 = vadd.f32 %v630, %v715
      %v740 = vadd.f32 %v631, %v718
      %v741 = vadd.f32 %v632, %v723
      %v742 = vadd.f32 %v633, %v726
      %v743 = vadd.f32 %v634, %v731
      %v744 = vadd.f32 %v635, %v734
      %v745 = vld [vmem:[%s2] sm:$0x1]
      %v747 = vlaneseq
      %v748 = vshrl.u32 %v747, 7
      %v749 = vsub.s32 0, %v748
      %v750 = vrot.slane %v745, %v749
      %v752 = vadd.f32 %v737, %v750
      %v753 = vadd.f32 %v738, %v750
      %v754 = vadd.f32 %v739, %v750
      %v755 = vadd.f32 %v740, %v750
      %v756 = vadd.f32 %v741, %v750
      %v757 = vadd.f32 %v742, %v750
      %v758 = vadd.f32 %v743, %v750
      %v759 = vadd.f32 %v744, %v750
      %vm760 = vcmask 261120
      %v761 = vsel %vm760, %v752, 0.0
      %v762 = vsel %vm760, %v753, 0.0
      %v763 = vadd.f32 %v761, %v762
      %v764 = vsel %vm760, %v754, 0.0
      %v765 = vadd.f32 %v763, %v764
      %v766 = vsel %vm760, %v755, 0.0
      %v767 = vadd.f32 %v765, %v766
      %v768 = vsel %vm760, %v756, 0.0
      %v769 = vadd.f32 %v767, %v768
      %v770 = vsel %vm760, %v757, 0.0
      %v771 = vadd.f32 %v769, %v770
      %v772 = vsel %vm760, %v758, 0.0
      %v773 = vadd.f32 %v771, %v772
      %v774 = vsel %vm760, %v759, 0.0
      %v775 = vadd.f32 %v773, %v774
      %v776 = vrot.slane %v775, 4
      %v777 = vadd.f32 %v775, %v776
      %v778 = vrot.slane %v777, 2
      %v779 = vadd.f32 %v777, %v778
      %v780 = vrot.slane %v779, 1
      %v781 = vadd.f32 %v779, %v780
      %v782 = vmul.f32 %v781, 0.015625
      %v783 = vsub.f32 %v752, %v782
      %v784 = vsub.f32 %v753, %v782
      %v785 = vsub.f32 %v754, %v782
      %v786 = vsub.f32 %v755, %v782
      %v787 = vsub.f32 %v756, %v782
      %v788 = vsub.f32 %v757, %v782
      %v789 = vsub.f32 %v758, %v782
      %v790 = vsub.f32 %v759, %v782
      %v791 = vmul.f32 %v783, %v783
      %v792 = vmul.f32 %v784, %v784
      %v793 = vmul.f32 %v785, %v785
      %v794 = vmul.f32 %v786, %v786
      %v795 = vmul.f32 %v787, %v787
      %v796 = vmul.f32 %v788, %v788
      %v797 = vmul.f32 %v789, %v789
      %v798 = vmul.f32 %v790, %v790
      %v799 = vsel %vm760, %v791, 0.0
      %v800 = vsel %vm760, %v792, 0.0
      %v801 = vadd.f32 %v799, %v800
      %v802 = vsel %vm760, %v793, 0.0
      %v803 = vadd.f32 %v801, %v802
      %v804 = vsel %vm760, %v794, 0.0
      %v805 = vadd.f32 %v803, %v804
      %v806 = vsel %vm760, %v795, 0.0
      %v807 = vadd.f32 %v805, %v806
      %v808 = vsel %vm760, %v796, 0.0
      %v809 = vadd.f32 %v807, %v808
      %v810 = vsel %vm760, %v797, 0.0
      %v811 = vadd.f32 %v809, %v810
      %v812 = vsel %vm760, %v798, 0.0
      %v813 = vadd.f32 %v811, %v812
      %v814 = vrot.slane %v813, 4
      %v815 = vadd.f32 %v813, %v814
      %v816 = vrot.slane %v815, 2
      %v817 = vadd.f32 %v815, %v816
      %v818 = vrot.slane %v817, 1
      %v819 = vadd.f32 %v817, %v818
      %vm820 = vcmask 1040384
      %v821 = vsel %vm820, %v781, %v819
      %vm822 = vcmask 254976
      %823 = vst.msk [vmem:[%s208] sm:$0x3] %vm822, %v821
      %v824 = vpack.c.bf16 %v753, %v752
      %v825 = vpack.c.bf16 %v755, %v754
      %v826 = vpack.c.bf16 %v757, %v756
      %v827 = vpack.c.bf16 %v759, %v758
      %v832 = vunpack.c.l.b16 %v824
      %v833 = vunpack.c.h.b16 %v824
      %v834 = vunpack.c.l.b16 %v825
      %v835 = vunpack.c.h.b16 %v825
      %v836 = vunpack.c.l.b16 %v826
      %v837 = vunpack.c.h.b16 %v826
      %v838 = vunpack.c.l.b16 %v827
      %v839 = vunpack.c.h.b16 %v827
      %v840 = vpack.c.b16 %v832, %v832
      %v841 = vpack.c.b16 %v833, %v833
      %v842 = vpack.c.b16 %v834, %v834
      %v843 = vpack.c.b16 %v835, %v835
      %v844 = vpack.c.b16 %v836, %v836
      %v845 = vpack.c.b16 %v837, %v837
      %v846 = vpack.c.b16 %v838, %v838
      %v847 = vpack.c.b16 %v839, %v839
      %vm856 = vcmask 125952
      %857 = vst.msk [vmem:[%s204] sm:$0xf] %vm856, %v840
      %858 = vst.msk [vmem:[%s204 + $0x8] sm:$0xf] %vm856, %v841
      %859 = vst.msk [vmem:[%s204 + $0x10] sm:$0xf] %vm856, %v842
      %860 = vst.msk [vmem:[%s204 + $0x18] sm:$0xf] %vm856, %v843
      %861 = vst.msk [vmem:[%s204 + $0x20] sm:$0xf] %vm856, %v844
      %862 = vst.msk [vmem:[%s204 + $0x28] sm:$0xf] %vm856, %v845
      %863 = vst.msk [vmem:[%s204 + $0x30] sm:$0xf] %vm856, %v846
      %864 = vst.msk [vmem:[%s204 + $0x38] sm:$0xf] %vm856, %v847
      %865 = vrot.lane.b32.xlu0 %v840, 112
      %v866 = vpop.permute.xlu0 %865
      %867 = vrot.lane.b32.xlu0 %v841, 112
      %v868 = vpop.permute.xlu0 %867
      %869 = vrot.lane.b32.xlu0 %v842, 112
      %v870 = vpop.permute.xlu0 %869
      %871 = vrot.lane.b32.xlu0 %v843, 112
      %v872 = vpop.permute.xlu0 %871
      %873 = vrot.lane.b32.xlu0 %v844, 112
      %v874 = vpop.permute.xlu0 %873
      %875 = vrot.lane.b32.xlu0 %v845, 112
      %v876 = vpop.permute.xlu0 %875
      %877 = vrot.lane.b32.xlu0 %v846, 112
      %v878 = vpop.permute.xlu0 %877
      %879 = vrot.lane.b32.xlu0 %v847, 112
      %v880 = vpop.permute.xlu0 %879
      %s889 = scalar_lea.vmem %s204, 4
      %890 = vst.msk [vmem:[%s889] sm:$0xf] %vm856, %v866
      %891 = vst.msk [vmem:[%s889 + $0x8] sm:$0xf] %vm856, %v868
      %892 = vst.msk [vmem:[%s889 + $0x10] sm:$0xf] %vm856, %v870
      %893 = vst.msk [vmem:[%s889 + $0x18] sm:$0xf] %vm856, %v872
      %894 = vst.msk [vmem:[%s889 + $0x20] sm:$0xf] %vm856, %v874
      %895 = vst.msk [vmem:[%s889 + $0x28] sm:$0xf] %vm856, %v876
      %896 = vst.msk [vmem:[%s889 + $0x30] sm:$0xf] %vm856, %v878
      %897 = vst.msk [vmem:[%s889 + $0x38] sm:$0xf] %vm856, %v880
      %p898 = scmp.lt.s32.totalorder %s16, 1
      %s899 = scalar_select %p898, %s16, 1
      %s900 = smul.addr %s899, 16
      %s901 = smul.addr %s900, 4
      %s902 = scalar_lea.vmem %s3, %s901
      %p903 = scmp.lt.s32.totalorder %s16, 1
      %s904 = scalar_select %p903, %s16, 1
      %s905 = smul.addr %s904, 2
      %s906 = scalar_lea.vmem %s4, %s905
      // Predicated region
      $region33: #{forward.33} parent=31 // pred_check
        %p907 = pneg %p102
      $region34: #{forward.33} parent=31 // pred_check_branch
        %909 = sbr.rel (%p907) target = $region36
      $region35: #{forward.33} parent=31 // pred_region
        _
      $region36: #{forward.33} parent=31 // pred_fallthru
        _
      // Predicated region
      $region37: #{forward.33} parent=31 // pred_check
        %p910 = pneg %p128
      $region38: #{forward.33} parent=31 // pred_check_branch
        %912 = sbr.rel (%p910) target = $region40
      $region39: #{forward.33} parent=31 // pred_region
        _
      $region40: #{forward.33} parent=31 // pred_fallthru
        _
    $region32: #{forward.33} parent=5 // pred_fallthru
      _
    %p913 = scmp.le.s32.totalorder 2, %s11
    // Predicated region
    $region41: #{forward.33} parent=5 // pred_check
      %p914 = pneg %p913
    $region42: #{forward.33} parent=5 // pred_check_branch
      %916 = sbr.rel (%p914) target = $region44
    $region43: #{forward.33} parent=5 // pred_region
      %s917 = ssub.s32 %s11, 2
      // Predicated region
      $region45: #{forward.33} parent=43 // pred_check
        %p918 = pneg %p108
      $region46: #{forward.33} parent=43 // pred_check_branch
        %920 = sbr.rel (%p918) target = $region48
      $region47: #{forward.33} parent=43 // pred_region
        %p921 = scmp.lt.s32.totalorder %s17, 1
        %s922 = scalar_select %p921, %s17, 1
        %s923 = smul.addr %s922, 16
        %s924 = smul.addr %s923, 4
        %s925 = scalar_lea.vmem %s3, %s924
      $region48: #{forward.33} parent=43 // pred_fallthru
        _
      // Predicated region
      $region49: #{forward.33} parent=43 // pred_check
        %p926 = pneg %p134
      $region50: #{forward.33} parent=43 // pred_check_branch
        %928 = sbr.rel (%p926) target = $region52
      $region51: #{forward.33} parent=43 // pred_region
        %p929 = scmp.lt.s32.totalorder %s17, 1
        %s930 = scalar_select %p929, %s17, 1
        %s931 = smul.addr %s930, 2
        %s932 = scalar_lea.vmem %s4, %s931
      $region52: #{forward.33} parent=43 // pred_fallthru
        _
    $region44: #{forward.33} parent=5 // pred_fallthru
      _
  $region6: #{forward.33} parent=0 // loop_footer
    %s15 = sadd.s32 1, %s11
  $region7: #{forward.33} parent=0 // loop_footer_branch
    %10 = sbr.rel target = $region3
  $region8: #{forward.33} parent=0 // loop_exit
    _

// kernel: forward.35
$region0: #{forward.35}
  #allocation0 [shape = 'u32[]', space=smem, size = 0x4, offset = 0x4, fixed_abs, tag = 'smem constant byte address 0x4 - core index']
  #allocation1 [shape = 'u32[144,128]{1,0:T(1,128)}', space=vmem, size = 0x12000, scoped, tag = 'internal scratch']
  %s0 = inlined_call_operand.vmem [shape: bf16[2,18,18,8], index: 0, kind: input, shape index: {}]
  %s1 = inlined_call_operand.vmem [shape: bf16[3,3,8,3], index: 1, kind: input, shape index: {}]
  %s2 = inlined_call_operand.vmem [shape: f32[1,3], index: 2, kind: input, shape index: {}]
  %s3 = inlined_call_operand.vmem [shape: f32[2,16,16,3], index: 3, kind: output, shape index: {}]
  %s4 = sld [smem:[#allocation0]]
  $region45: #{forward.35} parent=0
    _
  %s6 = ssub.s32 1, %s4
  %s7 = scalar_select 0, %s6, %s4
  loop: start=0, step=1, limit=4
  $region2: #{forward.35} parent=0 // loop_pre_header
    _
  $region3: #{forward.35} parent=0 // loop_header
    %s9 = sphi 0, %s13
    %p10 = scmp.ge.s32.totalorder %s9, 4
    %s19 = sphi 0, %s21
    %s22 = sphi 0, %s19
    %s23 = sphi 0, %s22
    %s39 = sphi 0, %s23
    %s43 = sphi 0, %s43
    %s45 = sphi 0, %s43
    %s46 = sphi 0, %s45
    %s60 = sphi 0, %s46
    %s64 = sphi 0, %s64
    %s66 = sphi 0, %s64
    %s67 = sphi 0, %s66
    %s81 = sphi 0, %s67
    %s87 = sphi 0, %s89
    %s90 = sphi 0, %s87
    %s91 = sphi 0, %s90
    %s107 = sphi 0, %s91
  $region4: #{forward.35} parent=0 // loop_header_branch
    %12 = sbr.rel (%p10) target = $region8
  $region5: #{forward.35} parent=0 // loop_body
    %s14 = ssub.s32 %s9, 1
    %s15 = ssub.s32 %s9, 2
    %s16 = sadd.s32 %s9, 1
    %s17 = ssub.s32 %s9, %s16
    %p18 = scmp.eq.s32.totalorder %s17, 0
    %s20 = sadd.s32 %s19, 1
    %s21 = scalar_select %p18, %s19, %s20
    %p24 = pneg %p18
    %p25 = scmp.eq.s32.totalorder %s9, 1
    %p26 = por %p24, %p25
    %p27 = scmp.ne.s32.totalorder %s19, %s22
    %p28 = scmp.eq.s32.totalorder %s9, 0
    %p29 = por %p27, %p28
    %p30 = scmp.ne.s32.totalorder %s19, %s22
    %p31 = scmp.eq.s32.totalorder %s14, 1
    %p32 = por %p30, %p31
    %p33 = scmp.ne.s32.totalorder %s22, %s23
    %p34 = scmp.eq.s32.totalorder %s14, 0
    %p35 = por %p33, %p34
    %p36 = scmp.ne.s32.totalorder %s22, %s23
    %p37 = scmp.eq.s32.totalorder %s15, 1
    %p38 = por %p36, %p37
    %p40 = scmp.ne.s32.totalorder %s23, %s39
    %p41 = scmp.eq.s32.totalorder %s15, 0
    %p42 = por %p40, %p41
    %s44 = sadd.s32 %s43, 1
    %p47 = scmp.eq.s32.totalorder %s9, 1
    %p48 = scmp.ne.s32.totalorder %s43, %s45
    %p49 = scmp.eq.s32.totalorder %s9, 0
    %p50 = por %p48, %p49
    %p51 = scmp.ne.s32.totalorder %s43, %s45
    %p52 = scmp.eq.s32.totalorder %s14, 1
    %p53 = por %p51, %p52
    %p54 = scmp.ne.s32.totalorder %s45, %s46
    %p55 = scmp.eq.s32.totalorder %s14, 0
    %p56 = por %p54, %p55
    %p57 = scmp.ne.s32.totalorder %s45, %s46
    %p58 = scmp.eq.s32.totalorder %s15, 1
    %p59 = por %p57, %p58
    %p61 = scmp.ne.s32.totalorder %s46, %s60
    %p62 = scmp.eq.s32.totalorder %s15, 0
    %p63 = por %p61, %p62
    %s65 = sadd.s32 %s64, 1
    %p68 = scmp.eq.s32.totalorder %s9, 1
    %p69 = scmp.ne.s32.totalorder %s64, %s66
    %p70 = scmp.eq.s32.totalorder %s9, 0
    %p71 = por %p69, %p70
    %p72 = scmp.ne.s32.totalorder %s64, %s66
    %p73 = scmp.eq.s32.totalorder %s14, 1
    %p74 = por %p72, %p73
    %p75 = scmp.ne.s32.totalorder %s66, %s67
    %p76 = scmp.eq.s32.totalorder %s14, 0
    %p77 = por %p75, %p76
    %p78 = scmp.ne.s32.totalorder %s66, %s67
    %p79 = scmp.eq.s32.totalorder %s15, 1
    %p80 = por %p78, %p79
    %p82 = scmp.ne.s32.totalorder %s67, %s81
    %p83 = scmp.eq.s32.totalorder %s15, 0
    %p84 = por %p82, %p83
    %s85 = ssub.s32 %s9, %s16
    %p86 = scmp.eq.s32.totalorder %s85, 0
    %s88 = sadd.s32 %s87, 1
    %s89 = scalar_select %p86, %s87, %s88
    %p92 = pneg %p86
    %p93 = scmp.eq.s32.totalorder %s9, 1
    %p94 = por %p92, %p93
    %p95 = scmp.ne.s32.totalorder %s87, %s90
    %p96 = scmp.eq.s32.totalorder %s9, 0
    %p97 = por %p95, %p96
    %p98 = scmp.ne.s32.totalorder %s87, %s90
    %p99 = scmp.eq.s32.totalorder %s14, 1
    %p100 = por %p98, %p99
    %p101 = scmp.ne.s32.totalorder %s90, %s91
    %p102 = scmp.eq.s32.totalorder %s14, 0
    %p103 = por %p101, %p102
    %p104 = scmp.ne.s32.totalorder %s90, %s91
    %p105 = scmp.eq.s32.totalorder %s15, 1
    %p106 = por %p104, %p105
    %p108 = scmp.ne.s32.totalorder %s91, %s107
    %p109 = scmp.eq.s32.totalorder %s15, 0
    %p110 = por %p108, %p109
    %p111 = scmp.le.s32.totalorder 1, %s9
    %p112 = scmp.lt.s32.totalorder %s9, 3
    %p113 = pnand %p111, %p112
    %p114 = pneg %p113
    // Predicated region
    $region9: #{forward.35} parent=5 // pred_check
      _
    $region10: #{forward.35} parent=5 // pred_check_branch
      %116 = sbr.rel (%p113) target = $region12
    $region11: #{forward.35} parent=5 // pred_region
      %s117 = ssub.s32 %s9, 1
      // Predicated region
      $region13: #{forward.35} parent=11 // pred_check
        %p118 = pneg %p56
      $region14: #{forward.35} parent=11 // pred_check_branch
        %120 = sbr.rel (%p118) target = $region16
      $region15: #{forward.35} parent=11 // pred_region
        _
      $region16: #{forward.35} parent=11 // pred_fallthru
        _
      // Predicated region
      $region17: #{forward.35} parent=11 // pred_check
        %p121 = pneg %p77
      $region18: #{forward.35} parent=11 // pred_check_branch
        %123 = sbr.rel (%p121) target = $region20
      $region19: #{forward.35} parent=11 // pred_region
        _
      $region20: #{forward.35} parent=11 // pred_fallthru
        _
    $region12: #{forward.35} parent=5 // pred_fallthru
      _
    %p124 = scmp.lt.s32.totalorder %s9, 2
    // Predicated region
    $region21: #{forward.35} parent=5 // pred_check
      %p125 = pneg %p124
    $region22: #{forward.35} parent=5 // pred_check_branch
      %127 = sbr.rel (%p125) target = $region24
    $region23: #{forward.35} parent=5 // pred_region
      // Predicated region
      $region25: #{forward.35} parent=23 // pred_check
        %p128 = pneg %p29
      $region26: #{forward.35} parent=23 // pred_check_branch
        %130 = sbr.rel (%p128) target = $region28
      $region27: #{forward.35} parent=23 // pred_region
        %p131 = scmp.lt.s32.totalorder %s9, 1
        %s132 = scalar_select %p131, %s9, 1
        %s133 = smul.addr %s132, 54
        %s134 = smul.addr %s133, 4
        %s135 = scalar_lea.vmem %s0, %s134
      $region28: #{forward.35} parent=23 // pred_fallthru
        _
    $region24: #{forward.35} parent=5 // pred_fallthru
      _
    %p136 = scmp.le.s32.totalorder 1, %s9
    %p137 = scmp.lt.s32.totalorder %s9, 3
    %p138 = pnand %p136, %p137
    %p139 = pneg %p138
    // Predicated region
    $region29: #{forward.35} parent=5 // pred_check
      _
    $region30: #{forward.35} parent=5 // pred_check_branch
      %141 = sbr.rel (%p138) target = $region32
    $region31: #{forward.35} parent=5 // pred_region
      %s142 = ssub.s32 %s9, 1
      %p143 = scmp.lt.s32.totalorder %s14, 1
      %s144 = scalar_select %p143, %s14, 1
      %s145 = smul.addr %s144, 54
      %s146 = smul.addr %s145, 4
      %s147 = scalar_lea.vmem %s0, %s146
      %p148 = pneg %p35
      %p149 = pneg %p32
      %p150 = pneg %p56
      %p151 = pneg %p53
      %p152 = pneg %p77
      %p153 = pneg %p74
      %p154 = pneg %p103
      %p155 = pneg %p100
      %p156 = scmp.lt.s32.totalorder %s14, 1
      %s157 = scalar_select %p156, %s14, 1
      %s158 = smul.addr %s157, 32
      %s159 = smul.addr %s158, 8
      %s160 = scalar_lea.vmem %s3, %s159
      %p161 = scmp.lt.s32.totalorder %s14, 1
      %s162 = scalar_select %p161, %s14, 1
      %s163 = smul.addr %s162, 54
      %s164 = smul.addr %s163, 4
      %s165 = scalar_lea.vmem %s0, %s164
      %p166 = scmp.lt.s32.totalorder %s14, 1
      %s167 = scalar_select %p166, %s14, 1
      %s168 = smul.addr %s167, 32
      %s169 = smul.addr %s168, 8
      %s170 = scalar_lea.vmem %s3, %s169
      %v172 = vld [vmem:[%s165] sm:$0xf]
      %v173 = vld [vmem:[%s165 + $0x4] sm:$0xf]
      %v174 = vld [vmem:[%s165 + $0x8] sm:$0x1]
      %v175 = vld [vmem:[%s165 + $0xc] sm:$0xf]
      %v176 = vld [vmem:[%s165 + $0x10] sm:$0xf]
      %v177 = vld [vmem:[%s165 + $0x14] sm:$0x1]
      %v178 = vld [vmem:[%s165 + $0x18] sm:$0xf]
      %v179 = vld [vmem:[%s165 + $0x1c] sm:$0xf]
      %v180 = vld [vmem:[%s165 + $0x20] sm:$0x1]
      %v181 = vld [vmem:[%s165 + $0x24] sm:$0xf]
      %v182 = vld [vmem:[%s165 + $0x28] sm:$0xf]
      %v183 = vld [vmem:[%s165 + $0x2c] sm:$0x1]
      %v184 = vld [vmem:[%s165 + $0x30] sm:$0xf]
      %v185 = vld [vmem:[%s165 + $0x34] sm:$0xf]
      %v186 = vld [vmem:[%s165 + $0x38] sm:$0x1]
      %v187 = vld [vmem:[%s165 + $0x3c] sm:$0xf]
      %v188 = vld [vmem:[%s165 + $0x40] sm:$0xf]
      %v189 = vld [vmem:[%s165 + $0x44] sm:$0x1]
      %v190 = vld [vmem:[%s165 + $0x48] sm:$0xf]
      %v191 = vld [vmem:[%s165 + $0x4c] sm:$0xf]
      %v192 = vld [vmem:[%s165 + $0x50] sm:$0x1]
      %v193 = vld [vmem:[%s165 + $0x54] sm:$0xf]
      %v194 = vld [vmem:[%s165 + $0x58] sm:$0xf]
      %v195 = vld [vmem:[%s165 + $0x5c] sm:$0x1]
      %v196 = vld [vmem:[%s165 + $0x60] sm:$0xf]
      %v197 = vld [vmem:[%s165 + $0x64] sm:$0xf]
      %v198 = vld [vmem:[%s165 + $0x68] sm:$0x1]
      %v199 = vld [vmem:[%s165 + $0x6c] sm:$0xf]
      %v200 = vld [vmem:[%s165 + $0x70] sm:$0xf]
      %v201 = vld [vmem:[%s165 + $0x74] sm:$0x1]
      %v202 = vld [vmem:[%s165 + $0x78] sm:$0xf]
      %v203 = vld [vmem:[%s165 + $0x7c] sm:$0xf]
      %v204 = vld [vmem:[%s165 + $0x80] sm:$0x1]
      %v205 = vld [vmem:[%s165 + $0x84] sm:$0xf]
      %v206 = vld [vmem:[%s165 + $0x88] sm:$0xf]
      %v207 = vld [vmem:[%s165 + $0x8c] sm:$0x1]
      %v208 = vld [vmem:[%s165 + $0x90] sm:$0xf]
      %v209 = vld [vmem:[%s165 + $0x94] sm:$0xf]
      %v210 = vld [vmem:[%s165 + $0x98] sm:$0x1]
      %v211 = vld [vmem:[%s165 + $0x9c] sm:$0xf]
      %v212 = vld [vmem:[%s165 + $0xa0] sm:$0xf]
      %v213 = vld [vmem:[%s165 + $0xa4] sm:$0x1]
      %v214 = vld [vmem:[%s165 + $0xa8] sm:$0xf]
      %v215 = vld [vmem:[%s165 + $0xac] sm:$0xf]
      %v216 = vld [vmem:[%s165 + $0xb0] sm:$0x1]
      %v217 = vld [vmem:[%s165 + $0xb4] sm:$0xf]
      %v218 = vld [vmem:[%s165 + $0xb8] sm:$0xf]
      %v219 = vld [vmem:[%s165 + $0xbc] sm:$0x1]
      %v220 = vld [vmem:[%s165 + $0xc0] sm:$0xf]
      %v221 = vld [vmem:[%s165 + $0xc4] sm:$0xf]
      %v222 = vld [vmem:[%s165 + $0xc8] sm:$0x1]
      %v223 = vld [vmem:[%s165 + $0xcc] sm:$0xf]
      %v224 = vld [vmem:[%s165 + $0xd0] sm:$0xf]
      %v225 = vld [vmem:[%s165 + $0xd4] sm:$0x1]
      %v226 = vld [vmem:[%s1] sm:$0xf]
      %vm227 = vsmask.f32 3328
      %vm228 = vsmask.f32 7440
      %vm229 = vmor %vm227, %vm228
      %v231 = vshrl.u32 %v172, 16
      %v233 = vrot.slane %v231, 4
      %v234 = vshll.u32 %v172, 16
      %v236 = vrot.slane %v234, 5
      %v237 = vor.u32 %v233, %v236
      %v238 = vrot.slane %v237, 4
      %v240 = vshll.u32 %v173, 16
      %v242 = vrot.slane %v240, 5
      %v243 = vsel %vm229, %v238, %v242
      %v244 = vshrl.u32 %v173, 16
      %v246 = vrot.slane %v244, 4
      %v247 = vor.u32 %v246, %v242
      %v248 = vrot.slane %v247, 4
      %v250 = vshll.u32 %v174, 16
      %v252 = vrot.slane %v250, 5
      %v253 = vsel %vm229, %v248, %v252
      %v255 = vshrl.u32 %v175, 16
      %v257 = vrot.slane %v255, 4
      %v258 = vshll.u32 %v175, 16
      %v260 = vrot.slane %v258, 5
      %v261 = vor.u32 %v257, %v260
      %v262 = vrot.slane %v261, 4
      %v264 = vshll.u32 %v176, 16
      %v266 = vrot.slane %v264, 5
      %v267 = vsel %vm229, %v262, %v266
      %v268 = vshrl.u32 %v176, 16
      %v270 = vrot.slane %v268, 4
      %v271 = vor.u32 %v270, %v266
      %v272 = vrot.slane %v271, 4
      %v274 = vshll.u32 %v177, 16
      %v276 = vrot.slane %v274, 5
      %v277 = vsel %vm229, %v272, %v276
      %v279 = vshrl.u32 %v178, 16
      %v281 = vrot.slane %v279, 4
      %v282 = vshll.u32 %v178, 16
      %v284 = vrot.slane %v282, 5
      %v285 = vor.u32 %v281, %v284
      %v286 = vrot.slane %v285, 4
      %v288 = vshll.u32 %v179, 16
      %v290 = vrot.slane %v288, 5
      %v291 = vsel %vm229, %v286, %v290
      %v292 = vshrl.u32 %v179, 16
      %v294 = vrot.slane %v292, 4
      %v295 = vor.u32 %v294, %v290
      %v296 = vrot.slane %v295, 4
      %v298 = vshll.u32 %v180, 16
      %v300 = vrot.slane %v298, 5
      %v301 = vsel %vm229, %v296, %v300
      %v303 = vshrl.u32 %v181, 16
      %v305 = vrot.slane %v303, 4
      %v306 = vshll.u32 %v181, 16
      %v308 = vrot.slane %v306, 5
      %v309 = vor.u32 %v305, %v308
      %v310 = vrot.slane %v309, 4
      %v312 = vshll.u32 %v182, 16
      %v314 = vrot.slane %v312, 5
      %v315 = vsel %vm229, %v310, %v314
      %v316 = vshrl.u32 %v182, 16
      %v318 = vrot.slane %v316, 4
      %v319 = vor.u32 %v318, %v314
      %v320 = vrot.slane %v319, 4
      %v322 = vshll.u32 %v183, 16
      %v324 = vrot.slane %v322, 5
      %v325 = vsel %vm229, %v320, %v324
      %v327 = vshrl.u32 %v184, 16
      %v329 = vrot.slane %v327, 4
      %v330 = vshll.u32 %v184, 16
      %v332 = vrot.slane %v330, 5
      %v333 = vor.u32 %v329, %v332
      %v334 = vrot.slane %v333, 4
      %v336 = vshll.u32 %v185, 16
      %v338 = vrot.slane %v336, 5
      %v339 = vsel %vm229, %v334, %v338
      %v340 = vshrl.u32 %v185, 16
      %v342 = vrot.slane %v340, 4
      %v343 = vor.u32 %v342, %v338
      %v344 = vrot.slane %v343, 4
      %v346 = vshll.u32 %v186, 16
      %v348 = vrot.slane %v346, 5
      %v349 = vsel %vm229, %v344, %v348
      %v351 = vshrl.u32 %v187, 16
      %v353 = vrot.slane %v351, 4
      %v354 = vshll.u32 %v187, 16
      %v356 = vrot.slane %v354, 5
      %v357 = vor.u32 %v353, %v356
      %v358 = vrot.slane %v357, 4
      %v360 = vshll.u32 %v188, 16
      %v362 = vrot.slane %v360, 5
      %v363 = vsel %vm229, %v358, %v362
      %v364 = vshrl.u32 %v188, 16
      %v366 = vrot.slane %v364, 4
      %v367 = vor.u32 %v366, %v362
      %v368 = vrot.slane %v367, 4
      %v370 = vshll.u32 %v189, 16
      %v372 = vrot.slane %v370, 5
      %v373 = vsel %vm229, %v368, %v372
      %v375 = vshrl.u32 %v190, 16
      %v377 = vrot.slane %v375, 4
      %v378 = vshll.u32 %v190, 16
      %v380 = vrot.slane %v378, 5
      %v381 = vor.u32 %v377, %v380
      %v382 = vrot.slane %v381, 4
      %v384 = vshll.u32 %v191, 16
      %v386 = vrot.slane %v384, 5
      %v387 = vsel %vm229, %v382, %v386
      %v388 = vshrl.u32 %v191, 16
      %v390 = vrot.slane %v388, 4
      %v391 = vor.u32 %v390, %v386
      %v392 = vrot.slane %v391, 4
      %v394 = vshll.u32 %v192, 16
      %v396 = vrot.slane %v394, 5
      %v397 = vsel %vm229, %v392, %v396
      %v399 = vshrl.u32 %v193, 16
      %v401 = vrot.slane %v399, 4
      %v402 = vshll.u32 %v193, 16
      %v404 = vrot.slane %v402, 5
      %v405 = vor.u32 %v401, %v404
      %v406 = vrot.slane %v405, 4
      %v408 = vshll.u32 %v194, 16
      %v410 = vrot.slane %v408, 5
      %v411 = vsel %vm229, %v406, %v410
      %v412 = vshrl.u32 %v194, 16
      %v414 = vrot.slane %v412, 4
      %v415 = vor.u32 %v414, %v410
      %v416 = vrot.slane %v415, 4
      %v418 = vshll.u32 %v195, 16
      %v420 = vrot.slane %v418, 5
      %v421 = vsel %vm229, %v416, %v420
      %v423 = vshrl.u32 %v196, 16
      %v425 = vrot.slane %v423, 4
      %v426 = vshll.u32 %v196, 16
      %v428 = vrot.slane %v426, 5
      %v429 = vor.u32 %v425, %v428
      %v430 = vrot.slane %v429, 4
      %v432 = vshll.u32 %v197, 16
      %v434 = vrot.slane %v432, 5
      %v435 = vsel %vm229, %v430, %v434
      %v436 = vshrl.u32 %v197, 16
      %v438 = vrot.slane %v436, 4
      %v439 = vor.u32 %v438, %v434
      %v440 = vrot.slane %v439, 4
      %v442 = vshll.u32 %v198, 16
      %v444 = vrot.slane %v442, 5
      %v445 = vsel %vm229, %v440, %v444
      %v447 = vshrl.u32 %v199, 16
      %v449 = vrot.slane %v447, 4
      %v450 = vshll.u32 %v199, 16
      %v452 = vrot.slane %v450, 5
      %v453 = vor.u32 %v449, %v452
      %v454 = vrot.slane %v453, 4
      %v456 = vshll.u32 %v200, 16
      %v458 = vrot.slane %v456, 5
      %v459 = vsel %vm229, %v454, %v458
      %v460 = vshrl.u32 %v200, 16
      %v462 = vrot.slane %v460, 4
      %v463 = vor.u32 %v462, %v458
      %v464 = vrot.slane %v463, 4
      %v466 = vshll.u32 %v201, 16
      %v468 = vrot.slane %v466, 5
      %v469 = vsel %vm229, %v464, %v468
      %v471 = vshrl.u32 %v202, 16
      %v473 = vrot.slane %v471, 4
      %v474 = vshll.u32 %v202, 16
      %v476 = vrot.slane %v474, 5
      %v477 = vor.u32 %v473, %v476
      %v478 = vrot.slane %v477, 4
      %v480 = vshll.u32 %v203, 16
      %v482 = vrot.slane %v480, 5
      %v483 = vsel %vm229, %v478, %v482
      %v484 = vshrl.u32 %v203, 16
      %v486 = vrot.slane %v484, 4
      %v487 = vor.u32 %v486, %v482
      %v488 = vrot.slane %v487, 4
      %v490 = vshll.u32 %v204, 16
      %v492 = vrot.slane %v490, 5
      %v493 = vsel %vm229, %v488, %v492
      %v495 = vshrl.u32 %v205, 16
      %v497 = vrot.slane %v495, 4
      %v498 = vshll.u32 %v205, 16
      %v500 = vrot.slane %v498, 5
      %v501 = vor.u32 %v497, %v500
      %v502 = vrot.slane %v501, 4
      %v504 = vshll.u32 %v206, 16
      %v506 = vrot.slane %v504, 5
      %v507 = vsel %vm229, %v502, %v506
      %v508 = vshrl.u32 %v206, 16
      %v510 = vrot.slane %v508, 4
      %v511 = vor.u32 %v510, %v506
      %v512 = vrot.slane %v511, 4
      %v514 = vshll.u32 %v207, 16
      %v516 = vrot.slane %v514, 5
      %v517 = vsel %vm229, %v512, %v516
      %v519 = vshrl.u32 %v208, 16
      %v521 = vrot.slane %v519, 4
      %v522 = vshll.u32 %v208, 16
      %v524 = vrot.slane %v522, 5
      %v525 = vor.u32 %v521, %v524
      %v526 = vrot.slane %v525, 4
      %v528 = vshll.u32 %v209, 16
      %v530 = vrot.slane %v528, 5
      %v531 = vsel %vm229, %v526, %v530
      %v532 = vshrl.u32 %v209, 16
      %v534 = vrot.slane %v532, 4
      %v535 = vor.u32 %v534, %v530
      %v536 = vrot.slane %v535, 4
      %v538 = vshll.u32 %v210, 16
      %v540 = vrot.slane %v538, 5
      %v541 = vsel %vm229, %v536, %v540
      %v543 = vshrl.u32 %v211, 16
      %v545 = vrot.slane %v543, 4
      %v546 = vshll.u32 %v211, 16
      %v548 = vrot.slane %v546, 5
      %v549 = vor.u32 %v545, %v548
      %v550 = vrot.slane %v549, 4
      %v552 = vshll.u32 %v212, 16
      %v554 = vrot.slane %v552, 5
      %v555 = vsel %vm229, %v550, %v554
      %v556 = vshrl.u32 %v212, 16
      %v558 = vrot.slane %v556, 4
      %v559 = vor.u32 %v558, %v554
      %v560 = vrot.slane %v559, 4
      %v562 = vshll.u32 %v213, 16
      %v564 = vrot.slane %v562, 5
      %v565 = vsel %vm229, %v560, %v564
      %v567 = vshrl.u32 %v214, 16
      %v569 = vrot.slane %v567, 4
      %v570 = vshll.u32 %v214, 16
      %v572 = vrot.slane %v570, 5
      %v573 = vor.u32 %v569, %v572
      %v574 = vrot.slane %v573, 4
      %v576 = vshll.u32 %v215, 16
      %v578 = vrot.slane %v576, 5
      %v579 = vsel %vm229, %v574, %v578
      %v580 = vshrl.u32 %v215, 16
      %v582 = vrot.slane %v580, 4
      %v583 = vor.u32 %v582, %v578
      %v584 = vrot.slane %v583, 4
      %v586 = vshll.u32 %v216, 16
      %v588 = vrot.slane %v586, 5
      %v589 = vsel %vm229, %v584, %v588
      %v591 = vshrl.u32 %v217, 16
      %v593 = vrot.slane %v591, 4
      %v594 = vshll.u32 %v217, 16
      %v596 = vrot.slane %v594, 5
      %v597 = vor.u32 %v593, %v596
      %v598 = vrot.slane %v597, 4
      %v600 = vshll.u32 %v218, 16
      %v602 = vrot.slane %v600, 5
      %v603 = vsel %vm229, %v598, %v602
      %v604 = vshrl.u32 %v218, 16
      %v606 = vrot.slane %v604, 4
      %v607 = vor.u32 %v606, %v602
      %v608 = vrot.slane %v607, 4
      %v610 = vshll.u32 %v219, 16
      %v612 = vrot.slane %v610, 5
      %v613 = vsel %vm229, %v608, %v612
      %s614 = scalar_lea.vmem %s1, 4
      %v615 = vld [vmem:[%s614] sm:$0xf]
      %v616 = vunpack.c.l.b16 %v243
      %v617 = vunpack.c.l.b16 %v253
      %v618 = vunpack.c.l.b16 %v267
      %v619 = vunpack.c.l.b16 %v277
      %v620 = vunpack.c.l.b16 %v291
      %v621 = vunpack.c.l.b16 %v301
      %v622 = vunpack.c.l.b16 %v315
      %v623 = vunpack.c.l.b16 %v325
      %v624 = vunpack.c.l.b16 %v339
      %v625 = vunpack.c.l.b16 %v349
      %v626 = vunpack.c.l.b16 %v363
      %v627 = vunpack.c.l.b16 %v373
      %v628 = vunpack.c.l.b16 %v387
      %v629 = vunpack.c.l.b16 %v397
      %v630 = vunpack.c.l.b16 %v411
      %v631 = vunpack.c.l.b16 %v421
      %v632 = vunpack.c.l.b16 %v435
      %v633 = vunpack.c.l.b16 %v445
      %v634 = vunpack.c.l.b16 %v459
      %v635 = vunpack.c.l.b16 %v469
      %v636 = vunpack.c.l.b16 %v483
      %v637 = vunpack.c.l.b16 %v493
      %v638 = vunpack.c.l.b16 %v507
      %v639 = vunpack.c.l.b16 %v517
      %v640 = vunpack.c.l.b16 %v531
      %v641 = vunpack.c.l.b16 %v541
      %v642 = vunpack.c.l.b16 %v555
      %v643 = vunpack.c.l.b16 %v565
      %v644 = vunpack.c.l.b16 %v579
      %v645 = vunpack.c.l.b16 %v589
      %v646 = vunpack.c.l.b16 %v603
      %v647 = vunpack.c.l.b16 %v613
      %v648 = vpack.c.b16 %v617, %v616
      %v649 = vpack.c.b16 %v619, %v618
      %v650 = vpack.c.b16 %v621, %v620
      %v651 = vpack.c.b16 %v623, %v622
      %v652 = vpack.c.b16 %v625, %v624
      %v653 = vpack.c.b16 %v627, %v626
      %v654 = vpack.c.b16 %v629, %v628
      %v655 = vpack.c.b16 %v631, %v630
      %v656 = vpack.c.b16 %v633, %v632
      %v657 = vpack.c.b16 %v635, %v634
      %v658 = vpack.c.b16 %v637, %v636
      %v659 = vpack.c.b16 %v639, %v638
      %v660 = vpack.c.b16 %v641, %v640
      %v661 = vpack.c.b16 %v643, %v642
      %v662 = vpack.c.b16 %v645, %v644
      %v663 = vpack.c.b16 %v647, %v646
      %vm664 = vcmask 64512
      %v666 = vsel %vm664, %v648, 0
      %v669 = vsel %vm664, %v649, 0
      %v672 = vsel %vm664, %v650, 0
      %v675 = vsel %vm664, %v651, 0
      %v678 = vsel %vm664, %v652, 0
      %v681 = vsel %vm664, %v653, 0
      %v684 = vsel %vm664, %v654, 0
      %v687 = vsel %vm664, %v655, 0
      %v690 = vsel %vm664, %v656, 0
      %v693 = vsel %vm664, %v657, 0
      %v696 = vsel %vm664, %v658, 0
      %v699 = vsel %vm664, %v659, 0
      %v702 = vsel %vm664, %v660, 0
      %v705 = vsel %vm664, %v661, 0
      %v708 = vsel %vm664, %v662, 0
      %v711 = vsel %vm664, %v663, 0
      %vm713 = vcmask 1043456
      %v715 = vsel %vm713, %v615, 0
      %717 = vmatprep.subr.bf16.mxu0 0
      %718 = vmatpush1.bf16.msra.mxu0 0
      %719 = vmatprep.subr.bf16.mxu0 0
      %720 = vmatpush1.bf16.msra.mxu0 0
      %721 = vmatprep.subr.bf16.mxu0 0
      %722 = vmatpush1.bf16.msra.mxu0 0
      %723 = vmatprep.subr.bf16.mxu0 0
      %724 = vmatpush1.bf16.msra.mxu0 0
      %725 = vmatprep.subr.bf16.mxu0 0
      %726 = vmatpush1.bf16.msra.mxu0 0
      %727 = vmatprep.subr.bf16.mxu0 0
      %728 = vmatpush1.bf16.msra.mxu0 0
      %729 = vmatprep.subr.bf16.mxu0 0
      %730 = vmatpush1.bf16.msra.mxu0 0
      %731 = vmatprep.subr.bf16.mxu0 0
      %732 = vmatpush1.bf16.msra.mxu0 %v715
      %733 = vmatprep.subr.bf16.mxu0 0
      %734 = vmatpush2.bf16.msra.mxu0 0
      %735 = vmatprep.subr.bf16.mxu0 0
      %736 = vmatpush2.bf16.msra.mxu0 0
      %737 = vmatprep.subr.bf16.mxu0 0
      %738 = vmatpush2.bf16.msra.mxu0 0
      %739 = vmatprep.subr.bf16.mxu0 0
      %740 = vmatpush2.bf16.msra.mxu0 0
      %741 = vmatprep.subr.bf16.mxu0 0
      %742 = vmatpush2.bf16.msra.mxu0 0
      %743 = vmatprep.subr.bf16.mxu0 0
      %744 = vmatpush2.bf16.msra.mxu0 0
      %745 = vmatprep.subr.bf16.mxu0 0
      %746 = vmatpush2.bf16.msra.mxu0 0
      %747 = vmatprep.subr.bf16.mxu0 0
      %748 = vmatpush2.bf16.msra.mxu0 0
      %749 = vmatprep.mubr.bf16.mxu0 0
      %750 = vmatmul.mubr.bf16.gmra.mxu0 %v666
      %v751 = vpop.f32.mrf.mxu0
      %v752 = vadd.f32 0.0, %v751
      %v753 = vpop.f32.mrf.mxu0
      %v754 = vpop.f32.mrf.mxu0
      %v755 = vadd.f32 0.0, %v754
      %v756 = vpop.f32.mrf.mxu0
      %757 = vmatprep.mubr.bf16.mxu0 0
      %758 = vmatmul.mubr.bf16.gmra.mxu0 %v669
      %v759 = vpop.f32.mrf.mxu0
      %v760 = vadd.f32 0.0, %v759
      %v761 = vpop.f32.mrf.mxu0
      %v762 = vpop.f32.mrf.mxu0
      %v763 = vadd.f32 0.0, %v762
      %v764 = vpop.f32.mrf.mxu0
      %765 = vmatprep.mubr.bf16.mxu0 0
      %766 = vmatmul.mubr.bf16.gmra.mxu0 %v672
      %v767 = vpop.f32.mrf.mxu0
      %v768 = vadd.f32 0.0, %v767
      %v769 = vpop.f32.mrf.mxu0
      %v770 = vpop.f32.mrf.mxu0
      %v771 = vadd.f32 0.0, %v770
      %v772 = vpop.f32.mrf.mxu0
      %773 = vmatprep.mubr.bf16.mxu0 0
      %774 = vmatmul.mubr.bf16.gmra.mxu0 %v675
      %v775 = vpop.f32.mrf.mxu0
      %v776 = vadd.f32 0.0, %v775
      %v777 = vpop.f32.mrf.mxu0
      %v778 = vpop.f32.mrf.mxu0
      %v779 = vadd.f32 0.0, %v778
      %v780 = vpop.f32.mrf.mxu0
      %781 = vmatprep.mubr.bf16.mxu0 0
      %782 = vmatmul.mubr.bf16.gmra.mxu0 %v678
      %v783 = vpop.f32.mrf.mxu0
      %v784 = vadd.f32 0.0, %v783
      %v785 = vpop.f32.mrf.mxu0
      %v786 = vpop.f32.mrf.mxu0
      %v787 = vadd.f32 0.0, %v786
      %v788 = vpop.f32.mrf.mxu0
      %789 = vmatprep.mubr.bf16.mxu0 0
      %790 = vmatmul.mubr.bf16.gmra.mxu0 %v681
      %v791 = vpop.f32.mrf.mxu0
      %v792 = vadd.f32 0.0, %v791
      %v793 = vpop.f32.mrf.mxu0
      %v794 = vpop.f32.mrf.mxu0
      %v795 = vadd.f32 0.0, %v794
      %v796 = vpop.f32.mrf.mxu0
      %797 = vmatprep.mubr.bf16.mxu0 0
      %798 = vmatmul.mubr.bf16.gmra.mxu0 %v684
      %v799 = vpop.f32.mrf.mxu0
      %v800 = vadd.f32 0.0, %v799
      %v801 = vpop.f32.mrf.mxu0
      %v802 = vpop.f32.mrf.mxu0
      %v803 = vadd.f32 0.0, %v802
      %v804 = vpop.f32.mrf.mxu0
      %805 = vmatprep.mubr.bf16.mxu0 0
      %806 = vmatmul.mubr.bf16.gmra.mxu0 %v687
      %v807 = vpop.f32.mrf.mxu0
      %v808 = vadd.f32 0.0, %v807
      %v809 = vpop.f32.mrf.mxu0
      %v810 = vpop.f32.mrf.mxu0
      %v811 = vadd.f32 0.0, %v810
      %v812 = vpop.f32.mrf.mxu0
      %813 = vmatprep.mubr.bf16.mxu0 0
      %814 = vmatmul.mubr.bf16.gmra.mxu0 %v690
      %v815 = vpop.f32.mrf.mxu0
      %v816 = vadd.f32 0.0, %v815
      %v817 = vpop.f32.mrf.mxu0
      %v818 = vpop.f32.mrf.mxu0
      %v819 = vadd.f32 0.0, %v818
      %v820 = vpop.f32.mrf.mxu0
      %821 = vmatprep.mubr.bf16.mxu0 0
      %822 = vmatmul.mubr.bf16.gmra.mxu0 %v693
      %v823 = vpop.f32.mrf.mxu0
      %v824 = vadd.f32 0.0, %v823
      %v825 = vpop.f32.mrf.mxu0
      %v826 = vpop.f32.mrf.mxu0
      %v827 = vadd.f32 0.0, %v826
      %v828 = vpop.f32.mrf.mxu0
      %829 = vmatprep.mubr.bf16.mxu0 0
      %830 = vmatmul.mubr.bf16.gmra.mxu0 %v696
      %v831 = vpop.f32.mrf.mxu0
      %v832 = vadd.f32 0.0, %v831
      %v833 = vpop.f32.mrf.mxu0
      %v834 = vpop.f32.mrf.mxu0
      %v835 = vadd.f32 0.0, %v834
      %v836 = vpop.f32.mrf.mxu0
      %837 = vmatprep.mubr.bf16.mxu0 0
      %838 = vmatmul.mubr.bf16.gmra.mxu0 %v699
      %v839 = vpop.f32.mrf.mxu0
      %v840 = vadd.f32 0.0, %v839
      %v841 = vpop.f32.mrf.mxu0
      %v842 = vpop.f32.mrf.mxu0
      %v843 = vadd.f32 0.0, %v842
      %v844 = vpop.f32.mrf.mxu0
      %845 = vmatprep.mubr.bf16.mxu0 0
      %846 = vmatmul.mubr.bf16.gmra.mxu0 %v702
      %v847 = vpop.f32.mrf.mxu0
      %v848 = vadd.f32 0.0, %v847
      %v849 = vpop.f32.mrf.mxu0
      %v850 = vpop.f32.mrf.mxu0
      %v851 = vadd.f32 0.0, %v850
      %v852 = vpop.f32.mrf.mxu0
      %853 = vmatprep.mubr.bf16.mxu0 0
      %854 = vmatmul.mubr.bf16.gmra.mxu0 %v705
      %v855 = vpop.f32.mrf.mxu0
      %v856 = vadd.f32 0.0, %v855
      %v857 = vpop.f32.mrf.mxu0
      %v858 = vpop.f32.mrf.mxu0
      %v859 = vadd.f32 0.0, %v858
      %v860 = vpop.f32.mrf.mxu0
      %861 = vmatprep.mubr.bf16.mxu0 0
      %862 = vmatmul.mubr.bf16.gmra.mxu0 %v708
      %v863 = vpop.f32.mrf.mxu0
      %v864 = vadd.f32 0.0, %v863
      %v865 = vpop.f32.mrf.mxu0
      %v866 = vpop.f32.mrf.mxu0
      %v867 = vadd.f32 0.0, %v866
      %v868 = vpop.f32.mrf.mxu0
      %869 = vmatprep.mubr.bf16.mxu0 0
      %870 = vmatmul.mubr.bf16.gmra.mxu0 %v711
      %v871 = vpop.f32.mrf.mxu0
      %v872 = vadd.f32 0.0, %v871
      %v873 = vpop.f32.mrf.mxu0
      %v874 = vpop.f32.mrf.mxu0
      %v875 = vadd.f32 0.0, %v874
      %v876 = vpop.f32.mrf.mxu0
      %877 = vdwg.mxu0
      %v910 = vunpack.c.l.b16 %v172
      %v911 = vunpack.c.l.b16 %v173
      %v912 = vunpack.c.l.b16 %v175
      %v913 = vunpack.c.l.b16 %v176
      %v914 = vunpack.c.l.b16 %v178
      %v915 = vunpack.c.l.b16 %v179
      %v916 = vunpack.c.l.b16 %v181
      %v917 = vunpack.c.l.b16 %v182
      %v918 = vunpack.c.l.b16 %v184
      %v919 = vunpack.c.l.b16 %v185
      %v920 = vunpack.c.l.b16 %v187
      %v921 = vunpack.c.l.b16 %v188
      %v922 = vunpack.c.l.b16 %v190
      %v923 = vunpack.c.l.b16 %v191
      %v924 = vunpack.c.l.b16 %v193
      %v925 = vunpack.c.l.b16 %v194
      %v926 = vunpack.c.l.b16 %v196
      %v927 = vunpack.c.l.b16 %v197
      %v928 = vunpack.c.l.b16 %v199
      %v929 = vunpack.c.l.b16 %v200
      %v930 = vunpack.c.l.b16 %v202
      %v931 = vunpack.c.l.b16 %v203
      %v932 = vunpack.c.l.b16 %v205
      %v933 = vunpack.c.l.b16 %v206
      %v934 = vunpack.c.l.b16 %v208
      %v935 = vunpack.c.l.b16 %v209
      %v936 = vunpack.c.l.b16 %v211
      %v937 = vunpack.c.l.b16 %v212
      %v938 = vunpack.c.l.b16 %v214
      %v939 = vunpack.c.l.b16 %v215
      %v940 = vunpack.c.l.b16 %v217
      %v941 = vunpack.c.l.b16 %v218
      %v942 = vpack.c.b16 %v911, %v910
      %v943 = vpack.c.b16 %v913, %v912
      %v944 = vpack.c.b16 %v915, %v914
      %v945 = vpack.c.b16 %v917, %v916
      %v946 = vpack.c.b16 %v919, %v918
      %v947 = vpack.c.b16 %v921, %v920
      %v948 = vpack.c.b16 %v923, %v922
      %v949 = vpack.c.b16 %v925, %v924
      %v950 = vpack.c.b16 %v927, %v926
      %v951 = vpack.c.b16 %v929, %v928
      %v952 = vpack.c.b16 %v931, %v930
      %v953 = vpack.c.b16 %v933, %v932
      %v954 = vpack.c.b16 %v935, %v934
      %v955 = vpack.c.b16 %v937, %v936
      %v956 = vpack.c.b16 %v939, %v938
      %v957 = vpack.c.b16 %v941, %v940
      %v959 = vsel %vm664, %v942, 0
      %v962 = vsel %vm664, %v943, 0
      %v965 = vsel %vm664, %v944, 0
      %v968 = vsel %vm664, %v945, 0
      %v971 = vsel %vm664, %v946, 0
      %v974 = vsel %vm664, %v947, 0
      %v977 = vsel %vm664, %v948, 0
      %v980 = vsel %vm664, %v949, 0
      %v983 = vsel %vm664, %v950, 0
      %v986 = vsel %vm664, %v951, 0
      %v989 = vsel %vm664, %v952, 0
      %v992 = vsel %vm664, %v953, 0
      %v995 = vsel %vm664, %v954, 0
      %v998 = vsel %vm664, %v955, 0
      %v1001 = vsel %vm664, %v956, 0
      %v1004 = vsel %vm664, %v957, 0
      %v1007 = vsel %vm713, %v226, 0
      %1009 = vmatprep.subr.bf16.mxu0 0
      %1010 = vmatpush1.bf16.msra.mxu0 0
      %1011 = vmatprep.subr.bf16.mxu0 0
      %1012 = vmatpush1.bf16.msra.mxu0 0
      %1013 = vmatprep.subr.bf16.mxu0 0
      %1014 = vmatpush1.bf16.msra.mxu0 0
      %1015 = vmatprep.subr.bf16.mxu0 0
      %1016 = vmatpush1.bf16.msra.mxu0 0
      %1017 = vmatprep.subr.bf16.mxu0 0
      %1018 = vmatpush1.bf16.msra.mxu0 0
      %1019 = vmatprep.subr.bf16.mxu0 0
      %1020 = vmatpush1.bf16.msra.mxu0 0
      %1021 = vmatprep.subr.bf16.mxu0 0
      %1022 = vmatpush1.bf16.msra.mxu0 0
      %1023 = vmatprep.subr.bf16.mxu0 0
      %1024 = vmatpush1.bf16.msra.mxu0 %v1007
      %1025 = vmatprep.subr.bf16.mxu0 0
      %1026 = vmatpush2.bf16.msra.mxu0 0
      %1027 = vmatprep.subr.bf16.mxu0 0
      %1028 = vmatpush2.bf16.msra.mxu0 0
      %1029 = vmatprep.subr.bf16.mxu0 0
      %1030 = vmatpush2.bf16.msra.mxu0 0
      %1031 = vmatprep.subr.bf16.mxu0 0
      %1032 = vmatpush2.bf16.msra.mxu0 0
      %1033 = vmatprep.subr.bf16.mxu0 0
      %1034 = vmatpush2.bf16.msra.mxu0 0
      %1035 = vmatprep.subr.bf16.mxu0 0
      %1036 = vmatpush2.bf16.msra.mxu0 0
      %1037 = vmatprep.subr.bf16.mxu0 0
      %1038 = vmatpush2.bf16.msra.mxu0 0
      %1039 = vmatprep.subr.bf16.mxu0 0
      %1040 = vmatpush2.bf16.msra.mxu0 0
      %1041 = vmatprep.mubr.bf16.mxu0 0
      %1042 = vmatmul.mubr.bf16.gmra.mxu0 %v959
      %v1043 = vpop.f32.mrf.mxu0
      %v1044 = vadd.f32 %v752, %v1043
      %v1045 = vpop.f32.mrf.mxu0
      %v1046 = vpop.f32.mrf.mxu0
      %v1047 = vadd.f32 %v755, %v1046
      %v1048 = vpop.f32.mrf.mxu0
      %1049 = vmatprep.mubr.bf16.mxu0 0
      %1050 = vmatmul.mubr.bf16.gmra.mxu0 %v962
      %v1051 = vpop.f32.mrf.mxu0
      %v1052 = vadd.f32 %v760, %v1051
      %v1053 = vpop.f32.mrf.mxu0
      %v1054 = vpop.f32.mrf.mxu0
      %v1055 = vadd.f32 %v763, %v1054
      %v1056 = vpop.f32.mrf.mxu0
      %1057 = vmatprep.mubr.bf16.mxu0 0
      %1058 = vmatmul.mubr.bf16.gmra.mxu0 %v965
      %v1059 = vpop.f32.mrf.mxu0
      %v1060 = vadd.f32 %v768, %v1059
      %v1061 = vpop.f32.mrf.mxu0
      %v1062 = vpop.f32.mrf.mxu0
      %v1063 = vadd.f32 %v771, %v1062
      %v1064 = vpop.f32.mrf.mxu0
      %1065 = vmatprep.mubr.bf16.mxu0 0
      %1066 = vmatmul.mubr.bf16.gmra.mxu0 %v968
      %v1067 = vpop.f32.mrf.mxu0
      %v1068 = vadd.f32 %v776, %v1067
      %v1069 = vpop.f32.mrf.mxu0
      %v1070 = vpop.f32.mrf.mxu0
      %v1071 = vadd.f32 %v779, %v1070
      %v1072 = vpop.f32.mrf.mxu0
      %1073 = vmatprep.mubr.bf16.mxu0 0
      %1074 = vmatmul.mubr.bf16.gmra.mxu0 %v971
      %v1075 = vpop.f32.mrf.mxu0
      %v1076 = vadd.f32 %v784, %v1075
      %v1077 = vpop.f32.mrf.mxu0
      %v1078 = vpop.f32.mrf.mxu0
      %v1079 = vadd.f32 %v787, %v1078
      %v1080 = vpop.f32.mrf.mxu0
      %1081 = vmatprep.mubr.bf16.mxu0 0
      %1082 = vmatmul.mubr.bf16.gmra.mxu0 %v974
      %v1083 = vpop.f32.mrf.mxu0
      %v1084 = vadd.f32 %v792, %v1083
      %v1085 = vpop.f32.mrf.mxu0
      %v1086 = vpop.f32.mrf.mxu0
      %v1087 = vadd.f32 %v795, %v1086
      %v1088 = vpop.f32.mrf.mxu0
      %1089 = vmatprep.mubr.bf16.mxu0 0
      %1090 = vmatmul.mubr.bf16.gmra.mxu0 %v977
      %v1091 = vpop.f32.mrf.mxu0
      %v1092 = vadd.f32 %v800, %v1091
      %v1093 = vpop.f32.mrf.mxu0
      %v1094 = vpop.f32.mrf.mxu0
      %v1095 = vadd.f32 %v803, %v1094
      %v1096 = vpop.f32.mrf.mxu0
      %1097 = vmatprep.mubr.bf16.mxu0 0
      %1098 = vmatmul.mubr.bf16.gmra.mxu0 %v980
      %v1099 = vpop.f32.mrf.mxu0
      %v1100 = vadd.f32 %v808, %v1099
      %v1101 = vpop.f32.mrf.mxu0
      %v1102 = vpop.f32.mrf.mxu0
      %v1103 = vadd.f32 %v811, %v1102
      %v1104 = vpop.f32.mrf.mxu0
      %1105 = vmatprep.mubr.bf16.mxu0 0
      %1106 = vmatmul.mubr.bf16.gmra.mxu0 %v983
      %v1107 = vpop.f32.mrf.mxu0
      %v1108 = vadd.f32 %v816, %v1107
      %v1109 = vpop.f32.mrf.mxu0
      %v1110 = vpop.f32.mrf.mxu0
      %v1111 = vadd.f32 %v819, %v1110
      %v1112 = vpop.f32.mrf.mxu0
      %1113 = vmatprep.mubr.bf16.mxu0 0
      %1114 = vmatmul.mubr.bf16.gmra.mxu0 %v986
      %v1115 = vpop.f32.mrf.mxu0
      %v1116 = vadd.f32 %v824, %v1115
      %v1117 = vpop.f32.mrf.mxu0
      %v1118 = vpop.f32.mrf.mxu0
      %v1119 = vadd.f32 %v827, %v1118
      %v1120 = vpop.f32.mrf.mxu0
      %1121 = vmatprep.mubr.bf16.mxu0 0
      %1122 = vmatmul.mubr.bf16.gmra.mxu0 %v989
      %v1123 = vpop.f32.mrf.mxu0
      %v1124 = vadd.f32 %v832, %v1123
      %v1125 = vpop.f32.mrf.mxu0
      %v1126 = vpop.f32.mrf.mxu0
      %v1127 = vadd.f32 %v835, %v1126
      %v1128 = vpop.f32.mrf.mxu0
      %1129 = vmatprep.mubr.bf16.mxu0 0
      %1130 = vmatmul.mubr.bf16.gmra.mxu0 %v992
      %v1131 = vpop.f32.mrf.mxu0
      %v1132 = vadd.f32 %v840, %v1131
      %v1133 = vpop.f32.mrf.mxu0
      %v1134 = vpop.f32.mrf.mxu0
      %v1135 = vadd.f32 %v843, %v1134
      %v1136 = vpop.f32.mrf.mxu0
      %1137 = vmatprep.mubr.bf16.mxu0 0
      %1138 = vmatmul.mubr.bf16.gmra.mxu0 %v995
      %v1139 = vpop.f32.mrf.mxu0
      %v1140 = vadd.f32 %v848, %v1139
      %v1141 = vpop.f32.mrf.mxu0
      %v1142 = vpop.f32.mrf.mxu0
      %v1143 = vadd.f32 %v851, %v1142
      %v1144 = vpop.f32.mrf.mxu0
      %1145 = vmatprep.mubr.bf16.mxu0 0
      %1146 = vmatmul.mubr.bf16.gmra.mxu0 %v998
      %v1147 = vpop.f32.mrf.mxu0
      %v1148 = vadd.f32 %v856, %v1147
      %v1149 = vpop.f32.mrf.mxu0
      %v1150 = vpop.f32.mrf.mxu0
      %v1151 = vadd.f32 %v859, %v1150
      %v1152 = vpop.f32.mrf.mxu0
      %1153 = vmatprep.mubr.bf16.mxu0 0
      %1154 = vmatmul.mubr.bf16.gmra.mxu0 %v1001
      %v1155 = vpop.f32.mrf.mxu0
      %v1156 = vadd.f32 %v864, %v1155
      %v1157 = vpop.f32.mrf.mxu0
      %v1158 = vpop.f32.mrf.mxu0
      %v1159 = vadd.f32 %v867, %v1158
      %v1160 = vpop.f32.mrf.mxu0
      %1161 = vmatprep.mubr.bf16.mxu0 0
      %1162 = vmatmul.mubr.bf16.gmra.mxu0 %v1004
      %v1163 = vpop.f32.mrf.mxu0
      %v1164 = vadd.f32 %v872, %v1163
      %v1165 = vpop.f32.mrf.mxu0
      %v1166 = vpop.f32.mrf.mxu0
      %v1167 = vadd.f32 %v875, %v1166
      %v1168 = vpop.f32.mrf.mxu0
      %1169 = vdwg.mxu0
      %vm1186 = vcmask 1042432
      %vm1187 = vcmask 1046532
      %vm1188 = vmor %vm1186, %vm1187
      %v1189 = vrot.slane %v172, 5
      %v1190 = vrot.slane %v1189, 4
      %v1191 = vrot.slane %v173, 5
      %v1192 = vsel %vm1188, %v1190, %v1191
      %v1193 = vrot.slane %v1191, 4
      %v1194 = vrot.slane %v174, 5
      %v1195 = vsel %vm1188, %v1193, %v1194
      %v1196 = vrot.slane %v175, 5
      %v1197 = vrot.slane %v1196, 4
      %v1198 = vrot.slane %v176, 5
      %v1199 = vsel %vm1188, %v1197, %v1198
      %v1200 = vrot.slane %v1198, 4
      %v1201 = vrot.slane %v177, 5
      %v1202 = vsel %vm1188, %v1200, %v1201
      %v1203 = vrot.slane %v178, 5
      %v1204 = vrot.slane %v1203, 4
      %v1205 = vrot.slane %v179, 5
      %v1206 = vsel %vm1188, %v1204, %v1205
      %v1207 = vrot.slane %v1205, 4
      %v1208 = vrot.slane %v180, 5
      %v1209 = vsel %vm1188, %v1207, %v1208
      %v1210 = vrot.slane %v181, 5
      %v1211 = vrot.slane %v1210, 4
      %v1212 = vrot.slane %v182, 5
      %v1213 = vsel %vm1188, %v1211, %v1212
      %v1214 = vrot.slane %v1212, 4
      %v1215 = vrot.slane %v183, 5
      %v1216 = vsel %vm1188, %v1214, %v1215
      %v1217 = vrot.slane %v184, 5
      %v1218 = vrot.slane %v1217, 4
      %v1219 = vrot.slane %v185, 5
      %v1220 = vsel %vm1188, %v1218, %v1219
      %v1221 = vrot.slane %v1219, 4
      %v1222 = vrot.slane %v186, 5
      %v1223 = vsel %vm1188, %v1221, %v1222
      %v1224 = vrot.slane %v187, 5
      %v1225 = vrot.slane %v1224, 4
      %v1226 = vrot.slane %v188, 5
      %v1227 = vsel %vm1188, %v1225, %v1226
      %v1228 = vrot.slane %v1226, 4
      %v1229 = vrot.slane %v189, 5
      %v1230 = vsel %vm1188, %v1228, %v1229
      %v1231 = vrot.slane %v190, 5
      %v1232 = vrot.slane %v1231, 4
      %v1233 = vrot.slane %v191, 5
      %v1234 = vsel %vm1188, %v1232, %v1233
      %v1235 = vrot.slane %v1233, 4
      %v1236 = vrot.slane %v192, 5
      %v1237 = vsel %vm1188, %v1235, %v1236
      %v1238 = vrot.slane %v193, 5
      %v1239 = vrot.slane %v1238, 4
      %v1240 = vrot.slane %v194, 5
      %v1241 = vsel %vm1188, %v1239, %v1240
      %v1242 = vrot.slane %v1240, 4
      %v1243 = vrot.slane %v195, 5
      %v1244 = vsel %vm1188, %v1242, %v1243
      %v1245 = vrot.slane %v196, 5
      %v1246 = vrot.slane %v1245, 4
      %v1247 = vrot.slane %v197, 5
      %v1248 = vsel %vm1188, %v1246, %v1247
      %v1249 = vrot.slane %v1247, 4
      %v1250 = vrot.slane %v198, 5
      %v1251 = vsel %vm1188, %v1249, %v1250
      %v1252 = vrot.slane %v199, 5
      %v1253 = vrot.slane %v1252, 4
      %v1254 = vrot.slane %v200, 5
      %v1255 = vsel %vm1188, %v1253, %v1254
      %v1256 = vrot.slane %v1254, 4
      %v1257 = vrot.slane %v201, 5
      %v1258 = vsel %vm1188, %v1256, %v1257
      %v1259 = vrot.slane %v202, 5
      %v1260 = vrot.slane %v1259, 4
      %v1261 = vrot.slane %v203, 5
      %v1262 = vsel %vm1188, %v1260, %v1261
      %v1263 = vrot.slane %v1261, 4
      %v1264 = vrot.slane %v204, 5
      %v1265 = vsel %vm1188, %v1263, %v1264
      %v1266 = vrot.slane %v205, 5
      %v1267 = vrot.slane %v1266, 4
      %v1268 = vrot.slane %v206, 5
      %v1269 = vsel %vm1188, %v1267, %v1268
      %v1270 = vrot.slane %v1268, 4
      %v1271 = vrot.slane %v207, 5
      %v1272 = vsel %vm1188, %v1270, %v1271
      %v1273 = vrot.slane %v208, 5
      %v1274 = vrot.slane %v1273, 4
      %v1275 = vrot.slane %v209, 5
      %v1276 = vsel %vm1188, %v1274, %v1275
      %v1277 = vrot.slane %v1275, 4
      %v1278 = vrot.slane %v210, 5
      %v1279 = vsel %vm1188, %v1277, %v1278
      %v1280 = vrot.slane %v211, 5
      %v1281 = vrot.slane %v1280, 4
      %v1282 = vrot.slane %v212, 5
      %v1283 = vsel %vm1188, %v1281, %v1282
      %v1284 = vrot.slane %v1282, 4
      %v1285 = vrot.slane %v213, 5
      %v1286 = vsel %vm1188, %v1284, %v1285
      %v1287 = vrot.slane %v214, 5
      %v1288 = vrot.slane %v1287, 4
      %v1289 = vrot.slane %v215, 5
      %v1290 = vsel %vm1188, %v1288, %v1289
      %v1291 = vrot.slane %v1289, 4
      %v1292 = vrot.slane %v216, 5
      %v1293 = vsel %vm1188, %v1291, %v1292
      %v1294 = vrot.slane %v217, 5
      %v1295 = vrot.slane %v1294, 4
      %v1296 = vrot.slane %v218, 5
      %v1297 = vsel %vm1188, %v1295, %v1296
      %v1298 = vrot.slane %v1296, 4
      %v1299 = vrot.slane %v219, 5
      %v1300 = vsel %vm1188, %v1298, %v1299
      %s1301 = scalar_lea.vmem %s1, 8
      %v1302 = vld [vmem:[%s1301] sm:$0xf]
      %v1303 = vunpack.c.l.b16 %v1192
      %v1304 = vunpack.c.l.b16 %v1195
      %v1305 = vunpack.c.l.b16 %v1199
      %v1306 = vunpack.c.l.b16 %v1202
      %v1307 = vunpack.c.l.b16 %v1206
      %v1308 = vunpack.c.l.b16 %v1209
      %v1309 = vunpack.c.l.b16 %v1213
      %v1310 = vunpack.c.l.b16 %v1216
      %v1311 = vunpack.c.l.b16 %v1220
      %v1312 = vunpack.c.l.b16 %v1223
      %v1313 = vunpack.c.l.b16 %v1227
      %v1314 = vunpack.c.l.b16 %v1230
      %v1315 = vunpack.c.l.b16 %v1234
      %v1316 = vunpack.c.l.b16 %v1237
      %v1317 = vunpack.c.l.b16 %v1241
      %v1318 = vunpack.c.l.b16 %v1244
      %v1319 = vunpack.c.l.b16 %v1248
      %v1320 = vunpack.c.l.b16 %v1251
      %v1321 = vunpack.c.l.b16 %v1255
      %v1322 = vunpack.c.l.b16 %v1258
      %v1323 = vunpack.c.l.b16 %v1262
      %v1324 = vunpack.c.l.b16 %v1265
      %v1325 = vunpack.c.l.b16 %v1269
      %v1326 = vunpack.c.l.b16 %v1272
      %v1327 = vunpack.c.l.b16 %v1276
      %v1328 = vunpack.c.l.b16 %v1279
      %v1329 = vunpack.c.l.b16 %v1283
      %v1330 = vunpack.c.l.b16 %v1286
      %v1331 = vunpack.c.l.b16 %v1290
      %v1332 = vunpack.c.l.b16 %v1293
      %v1333 = vunpack.c.l.b16 %v1297
      %v1334 = vunpack.c.l.b16 %v1300
      %v1335 = vpack.c.b16 %v1304, %v1303
      %v1336 = vpack.c.b16 %v1306, %v1305
      %v1337 = vpack.c.b16 %v1308, %v1307
      %v1338 = vpack.c.b16 %v1310, %v1309
      %v1339 = vpack.c.b16 %v1312, %v1311
      %v1340 = vpack.c.b16 %v1314, %v1313
      %v1341 = vpack.c.b16 %v1316, %v1315
      %v1342 = vpack.c.b16 %v1318, %v1317
      %v1343 = vpack.c.b16 %v1320, %v1319
      %v1344 = vpack.c.b16 %v1322, %v1321
      %v1345 = vpack.c.b16 %v1324, %v1323
      %v1346 = vpack.c.b16 %v1326, %v1325
      %v1347 = vpack.c.b16 %v1328, %v1327
      %v1348 = vpack.c.b16 %v1330, %v1329
      %v1349 = vpack.c.b16 %v1332, %v1331
      %v1350 = vpack.c.b16 %v1334, %v1333
      %v1352 = vsel %vm664, %v1335, 0
      %v1355 = vsel %vm664, %v1336, 0
      %v1358 = vsel %vm664, %v1337, 0
      %v1361 = vsel %vm664, %v1338, 0
      %v1364 = vsel %vm664, %v1339, 0
      %v1367 = vsel %vm664, %v1340, 0
      %v1370 = vsel %vm664, %v1341, 0
      %v1373 = vsel %vm664, %v1342, 0
      %v1376 = vsel %vm664, %v1343, 0
      %v1379 = vsel %vm664, %v1344, 0
      %v1382 = vsel %vm664, %v1345, 0
      %v1385 = vsel %vm664, %v1346, 0
      %v1388 = vsel %vm664, %v1347, 0
      %v1391 = vsel %vm664, %v1348, 0
      %v1394 = vsel %vm664, %v1349, 0
      %v1397 = vsel %vm664, %v1350, 0
      %v1400 = vsel %vm713, %v1302, 0
      %1402 = vmatprep.subr.bf16.mxu0 0
      %1403 = vmatpush1.bf16.msra.mxu0 0
      %1404 = vmatprep.subr.bf16.mxu0 0
      %1405 = vmatpush1.bf16.msra.mxu0 0
      %1406 = vmatprep.subr.bf16.mxu0 0
      %1407 = vmatpush1.bf16.msra.mxu0 0
      %1408 = vmatprep.subr.bf16.mxu0 0
      %1409 = vmatpush1.bf16.msra.mxu0 0
      %1410 = vmatprep.subr.bf16.mxu0 0
      %1411 = vmatpush1.bf16.msra.mxu0 0
      %1412 = vmatprep.subr.bf16.mxu0 0
      %1413 = vmatpush1.bf16.msra.mxu0 0
      %1414 = vmatprep.subr.bf16.mxu0 0
      %1415 = vmatpush1.bf16.msra.mxu0 0
      %1416 = vmatprep.subr.bf16.mxu0 0
      %1417 = vmatpush1.bf16.msra.mxu0 %v1400
      %1418 = vmatprep.subr.bf16.mxu0 0
      %1419 = vmatpush2.bf16.msra.mxu0 0
      %1420 = vmatprep.subr.bf16.mxu0 0
      %1421 = vmatpush2.bf16.msra.mxu0 0
      %1422 = vmatprep.subr.bf16.mxu0 0
      %1423 = vmatpush2.bf16.msra.mxu0 0
      %1424 = vmatprep.subr.bf16.mxu0 0
      %1425 = vmatpush2.bf16.msra.mxu0 0
      %1426 = vmatprep.subr.bf16.mxu0 0
      %1427 = vmatpush2.bf16.msra.mxu0 0
      %1428 = vmatprep.subr.bf16.mxu0 0
      %1429 = vmatpush2.bf16.msra.mxu0 0
      %1430 = vmatprep.subr.bf16.mxu0 0
      %1431 = vmatpush2.bf16.msra.mxu0 0
      %1432 = vmatprep.subr.bf16.mxu0 0
      %1433 = vmatpush2.bf16.msra.mxu0 0
      %1434 = vmatprep.mubr.bf16.mxu0 0
      %1435 = vmatmul.mubr.bf16.gmra.mxu0 %v1352
      %v1436 = vpop.f32.mrf.mxu0
      %v1437 = vadd.f32 0.0, %v1436
      %v1438 = vpop.f32.mrf.mxu0
      %v1439 = vpop.f32.mrf.mxu0
      %v1440 = vadd.f32 0.0, %v1439
      %v1441 = vpop.f32.mrf.mxu0
      %1442 = vmatprep.mubr.bf16.mxu0 0
      %1443 = vmatmul.mubr.bf16.gmra.mxu0 %v1355
      %v1444 = vpop.f32.mrf.mxu0
      %v1445 = vadd.f32 0.0, %v1444
      %v1446 = vpop.f32.mrf.mxu0
      %v1447 = vpop.f32.mrf.mxu0
      %v1448 = vadd.f32 0.0, %v1447
      %v1449 = vpop.f32.mrf.mxu0
      %1450 = vmatprep.mubr.bf16.mxu0 0
      %1451 = vmatmul.mubr.bf16.gmra.mxu0 %v1358
      %v1452 = vpop.f32.mrf.mxu0
      %v1453 = vadd.f32 0.0, %v1452
      %v1454 = vpop.f32.mrf.mxu0
      %v1455 = vpop.f32.mrf.mxu0
      %v1456 = vadd.f32 0.0, %v1455
      %v1457 = vpop.f32.mrf.mxu0
      %1458 = vmatprep.mubr.bf16.mxu0 0
      %1459 = vmatmul.mubr.bf16.gmra.mxu0 %v1361
      %v1460 = vpop.f32.mrf.mxu0
      %v1461 = vadd.f32 0.0, %v1460
      %v1462 = vpop.f32.mrf.mxu0
      %v1463 = vpop.f32.mrf.mxu0
      %v1464 = vadd.f32 0.0, %v1463
      %v1465 = vpop.f32.mrf.mxu0
      %1466 = vmatprep.mubr.bf16.mxu0 0
      %1467 = vmatmul.mubr.bf16.gmra.mxu0 %v1364
      %v1468 = vpop.f32.mrf.mxu0
      %v1469 = vadd.f32 0.0, %v1468
      %v1470 = vpop.f32.mrf.mxu0
      %v1471 = vpop.f32.mrf.mxu0
      %v1472 = vadd.f32 0.0, %v1471
      %v1473 = vpop.f32.mrf.mxu0
      %1474 = vmatprep.mubr.bf16.mxu0 0
      %1475 = vmatmul.mubr.bf16.gmra.mxu0 %v1367
      %v1476 = vpop.f32.mrf.mxu0
      %v1477 = vadd.f32 0.0, %v1476
      %v1478 = vpop.f32.mrf.mxu0
      %v1479 = vpop.f32.mrf.mxu0
      %v1480 = vadd.f32 0.0, %v1479
      %v1481 = vpop.f32.mrf.mxu0
      %1482 = vmatprep.mubr.bf16.mxu0 0
      %1483 = vmatmul.mubr.bf16.gmra.mxu0 %v1370
      %v1484 = vpop.f32.mrf.mxu0
      %v1485 = vadd.f32 0.0, %v1484
      %v1486 = vpop.f32.mrf.mxu0
      %v1487 = vpop.f32.mrf.mxu0
      %v1488 = vadd.f32 0.0, %v1487
      %v1489 = vpop.f32.mrf.mxu0
      %1490 = vmatprep.mubr.bf16.mxu0 0
      %1491 = vmatmul.mubr.bf16.gmra.mxu0 %v1373
      %v1492 = vpop.f32.mrf.mxu0
      %v1493 = vadd.f32 0.0, %v1492
      %v1494 = vpop.f32.mrf.mxu0
      %v1495 = vpop.f32.mrf.mxu0
      %v1496 = vadd.f32 0.0, %v1495
      %v1497 = vpop.f32.mrf.mxu0
      %1498 = vmatprep.mubr.bf16.mxu0 0
      %1499 = vmatmul.mubr.bf16.gmra.mxu0 %v1376
      %v1500 = vpop.f32.mrf.mxu0
      %v1501 = vadd.f32 0.0, %v1500
      %v1502 = vpop.f32.mrf.mxu0
      %v1503 = vpop.f32.mrf.mxu0
      %v1504 = vadd.f32 0.0, %v1503
      %v1505 = vpop.f32.mrf.mxu0
      %1506 = vmatprep.mubr.bf16.mxu0 0
      %1507 = vmatmul.mubr.bf16.gmra.mxu0 %v1379
      %v1508 = vpop.f32.mrf.mxu0
      %v1509 = vadd.f32 0.0, %v1508
      %v1510 = vpop.f32.mrf.mxu0
      %v1511 = vpop.f32.mrf.mxu0
      %v1512 = vadd.f32 0.0, %v1511
      %v1513 = vpop.f32.mrf.mxu0
      %1514 = vmatprep.mubr.bf16.mxu0 0
      %1515 = vmatmul.mubr.bf16.gmra.mxu0 %v1382
      %v1516 = vpop.f32.mrf.mxu0
      %v1517 = vadd.f32 0.0, %v1516
      %v1518 = vpop.f32.mrf.mxu0
      %v1519 = vpop.f32.mrf.mxu0
      %v1520 = vadd.f32 0.0, %v1519
      %v1521 = vpop.f32.mrf.mxu0
      %1522 = vmatprep.mubr.bf16.mxu0 0
      %1523 = vmatmul.mubr.bf16.gmra.mxu0 %v1385
      %v1524 = vpop.f32.mrf.mxu0
      %v1525 = vadd.f32 0.0, %v1524
      %v1526 = vpop.f32.mrf.mxu0
      %v1527 = vpop.f32.mrf.mxu0
      %v1528 = vadd.f32 0.0, %v1527
      %v1529 = vpop.f32.mrf.mxu0
      %1530 = vmatprep.mubr.bf16.mxu0 0
      %1531 = vmatmul.mubr.bf16.gmra.mxu0 %v1388
      %v1532 = vpop.f32.mrf.mxu0
      %v1533 = vadd.f32 0.0, %v1532
      %v1534 = vpop.f32.mrf.mxu0
      %v1535 = vpop.f32.mrf.mxu0
      %v1536 = vadd.f32 0.0, %v1535
      %v1537 = vpop.f32.mrf.mxu0
      %1538 = vmatprep.mubr.bf16.mxu0 0
      %1539 = vmatmul.mubr.bf16.gmra.mxu0 %v1391
      %v1540 = vpop.f32.mrf.mxu0
      %v1541 = vadd.f32 0.0, %v1540
      %v1542 = vpop.f32.mrf.mxu0
      %v1543 = vpop.f32.mrf.mxu0
      %v1544 = vadd.f32 0.0, %v1543
      %v1545 = vpop.f32.mrf.mxu0
      %1546 = vmatprep.mubr.bf16.mxu0 0
      %1547 = vmatmul.mubr.bf16.gmra.mxu0 %v1394
      %v1548 = vpop.f32.mrf.mxu0
      %v1549 = vadd.f32 0.0, %v1548
      %v1550 = vpop.f32.mrf.mxu0
      %v1551 = vpop.f32.mrf.mxu0
      %v1552 = vadd.f32 0.0, %v1551
      %v1553 = vpop.f32.mrf.mxu0
      %1554 = vmatprep.mubr.bf16.mxu0 0
      %1555 = vmatmul.mubr.bf16.gmra.mxu0 %v1397
      %v1556 = vpop.f32.mrf.mxu0
      %v1557 = vadd.f32 0.0, %v1556
      %v1558 = vpop.f32.mrf.mxu0
      %v1559 = vpop.f32.mrf.mxu0
      %v1560 = vadd.f32 0.0, %v1559
      %v1561 = vpop.f32.mrf.mxu0
      %1562 = vdwg.mxu0
      %v1563 = vadd.f32 %v1044, %v1437
      %v1564 = vadd.f32 %v1047, %v1440
      %v1565 = vadd.f32 %v1052, %v1445
      %v1566 = vadd.f32 %v1055, %v1448
      %v1567 = vadd.f32 %v1060, %v1453
      %v1568 = vadd.f32 %v1063, %v1456
      %v1569 = vadd.f32 %v1068, %v1461
      %v1570 = vadd.f32 %v1071, %v1464
      %v1571 = vadd.f32 %v1076, %v1469
      %v1572 = vadd.f32 %v1079, %v1472
      %v1573 = vadd.f32 %v1084, %v1477
      %v1574 = vadd.f32 %v1087, %v1480
      %v1575 = vadd.f32 %v1092, %v1485
      %v1576 = vadd.f32 %v1095, %v1488
      %v1577 = vadd.f32 %v1100, %v1493
      %v1578 = vadd.f32 %v1103, %v1496
      %v1579 = vadd.f32 %v1108, %v1501
      %v1580 = vadd.f32 %v1111, %v1504
      %v1581 = vadd.f32 %v1116, %v1509
      %v1582 = vadd.f32 %v1119, %v1512
      %v1583 = vadd.f32 %v1124, %v1517
      %v1584 = vadd.f32 %v1127, %v1520
      %v1585 = vadd.f32 %v1132, %v1525
      %v1586 = vadd.f32 %v1135, %v1528
      %v1587 = vadd.f32 %v1140, %v1533
      %v1588 = vadd.f32 %v1143, %v1536
      %v1589 = vadd.f32 %v1148, %v1541
      %v1590 = vadd.f32 %v1151, %v1544
      %v1591 = vadd.f32 %v1156, %v1549
      %v1592 = vadd.f32 %v1159, %v1552
      %v1593 = vadd.f32 %v1164, %v1557
      %v1594 = vadd.f32 %v1167, %v1560
      %s1595 = scalar_lea.vmem %s1, 12
      %v1596 = vld [vmem:[%s1595] sm:$0xf]
      %v1599 = vunpack.c.l.b16 %v220
      %v1600 = vunpack.c.l.b16 %v221
      %v1601 = vpack.c.b16 %v1600, %v1599
      %v1603 = vsel %vm664, %v1601, 0
      %v1606 = vsel %vm713, %v1596, 0
      %1608 = vmatprep.subr.bf16.mxu0 0
      %1609 = vmatpush1.bf16.msra.mxu0 0
      %1610 = vmatprep.subr.bf16.mxu0 0
      %1611 = vmatpush1.bf16.msra.mxu0 0
      %1612 = vmatprep.subr.bf16.mxu0 0
      %1613 = vmatpush1.bf16.msra.mxu0 0
      %1614 = vmatprep.subr.bf16.mxu0 0
      %1615 = vmatpush1.bf16.msra.mxu0 0
      %1616 = vmatprep.subr.bf16.mxu0 0
      %1617 = vmatpush1.bf16.msra.mxu0 0
      %1618 = vmatprep.subr.bf16.mxu0 0
      %1619 = vmatpush1.bf16.msra.mxu0 0
      %1620 = vmatprep.subr.bf16.mxu0 0
      %1621 = vmatpush1.bf16.msra.mxu0 0
      %1622 = vmatprep.subr.bf16.mxu0 0
      %1623 = vmatpush1.bf16.msra.mxu0 %v1606
      %1624 = vmatprep.subr.bf16.mxu0 0
      %1625 = vmatpush2.bf16.msra.mxu0 0
      %1626 = vmatprep.subr.bf16.mxu0 0
      %1627 = vmatpush2.bf16.msra.mxu0 0
      %1628 = vmatprep.subr.bf16.mxu0 0
      %1629 = vmatpush2.bf16.msra.mxu0 0
      %1630 = vmatprep.subr.bf16.mxu0 0
      %1631 = vmatpush2.bf16.msra.mxu0 0
      %1632 = vmatprep.subr.bf16.mxu0 0
      %1633 = vmatpush2.bf16.msra.mxu0 0
      %1634 = vmatprep.subr.bf16.mxu0 0
      %1635 = vmatpush2.bf16.msra.mxu0 0
      %1636 = vmatprep.subr.bf16.mxu0 0
      %1637 = vmatpush2.bf16.msra.mxu0 0
      %1638 = vmatprep.subr.bf16.mxu0 0
      %1639 = vmatpush2.bf16.msra.mxu0 0
      %1640 = vmatprep.mubr.bf16.mxu0 0
      %1641 = vmatmul.mubr.bf16.gmra.mxu0 %v962
      %v1642 = vpop.f32.mrf.mxu0
      %v1643 = vadd.f32 0.0, %v1642
      %v1644 = vpop.f32.mrf.mxu0
      %v1645 = vpop.f32.mrf.mxu0
      %v1646 = vadd.f32 0.0, %v1645
      %v1647 = vpop.f32.mrf.mxu0
      %1648 = vmatprep.mubr.bf16.mxu0 0
      %1649 = vmatmul.mubr.bf16.gmra.mxu0 %v965
      %v1650 = vpop.f32.mrf.mxu0
      %v1651 = vadd.f32 0.0, %v1650
      %v1652 = vpop.f32.mrf.mxu0
      %v1653 = vpop.f32.mrf.mxu0
      %v1654 = vadd.f32 0.0, %v1653
      %v1655 = vpop.f32.mrf.mxu0
      %1656 = vmatprep.mubr.bf16.mxu0 0
      %1657 = vmatmul.mubr.bf16.gmra.mxu0 %v968
      %v1658 = vpop.f32.mrf.mxu0
      %v1659 = vadd.f32 0.0, %v1658
      %v1660 = vpop.f32.mrf.mxu0
      %v1661 = vpop.f32.mrf.mxu0
      %v1662 = vadd.f32 0.0, %v1661
      %v1663 = vpop.f32.mrf.mxu0
      %1664 = vmatprep.mubr.bf16.mxu0 0
      %1665 = vmatmul.mubr.bf16.gmra.mxu0 %v971
      %v1666 = vpop.f32.mrf.mxu0
      %v1667 = vadd.f32 0.0, %v1666
      %v1668 = vpop.f32.mrf.mxu0
      %v1669 = vpop.f32.mrf.mxu0
      %v1670 = vadd.f32 0.0, %v1669
      %v1671 = vpop.f32.mrf.mxu0
      %1672 = vmatprep.mubr.bf16.mxu0 0
      %1673 = vmatmul.mubr.bf16.gmra.mxu0 %v974
      %v1674 = vpop.f32.mrf.mxu0
      %v1675 = vadd.f32 0.0, %v1674
      %v1676 = vpop.f32.mrf.mxu0
      %v1677 = vpop.f32.mrf.mxu0
      %v1678 = vadd.f32 0.0, %v1677
      %v1679 = vpop.f32.mrf.mxu0
      %1680 = vmatprep.mubr.bf16.mxu0 0
      %1681 = vmatmul.mubr.bf16.gmra.mxu0 %v977
      %v1682 = vpop.f32.mrf.mxu0
      %v1683 = vadd.f32 0.0, %v1682
      %v1684 = vpop.f32.mrf.mxu0
      %v1685 = vpop.f32.mrf.mxu0
      %v1686 = vadd.f32 0.0, %v1685
      %v1687 = vpop.f32.mrf.mxu0
      %1688 = vmatprep.mubr.bf16.mxu0 0
      %1689 = vmatmul.mubr.bf16.gmra.mxu0 %v980
      %v1690 = vpop.f32.mrf.mxu0
      %v1691 = vadd.f32 0.0, %v1690
      %v1692 = vpop.f32.mrf.mxu0
      %v1693 = vpop.f32.mrf.mxu0
      %v1694 = vadd.f32 0.0, %v1693
      %v1695 = vpop.f32.mrf.mxu0
      %1696 = vmatprep.mubr.bf16.mxu0 0
      %1697 = vmatmul.mubr.bf16.gmra.mxu0 %v983
      %v1698 = vpop.f32.mrf.mxu0
      %v1699 = vadd.f32 0.0, %v1698
      %v1700 = vpop.f32.mrf.mxu0
      %v1701 = vpop.f32.mrf.mxu0
      %v1702 = vadd.f32 0.0, %v1701
      %v1703 = vpop.f32.mrf.mxu0
      %1704 = vmatprep.mubr.bf16.mxu0 0
      %1705 = vmatmul.mubr.bf16.gmra.mxu0 %v986
      %v1706 = vpop.f32.mrf.mxu0
      %v1707 = vadd.f32 0.0, %v1706
      %v1708 = vpop.f32.mrf.mxu0
      %v1709 = vpop.f32.mrf.mxu0
      %v1710 = vadd.f32 0.0, %v1709
      %v1711 = vpop.f32.mrf.mxu0
      %1712 = vmatprep.mubr.bf16.mxu0 0
      %1713 = vmatmul.mubr.bf16.gmra.mxu0 %v989
      %v1714 = vpop.f32.mrf.mxu0
      %v1715 = vadd.f32 0.0, %v1714
      %v1716 = vpop.f32.mrf.mxu0
      %v1717 = vpop.f32.mrf.mxu0
      %v1718 = vadd.f32 0.0, %v1717
      %v1719 = vpop.f32.mrf.mxu0
      %1720 = vmatprep.mubr.bf16.mxu0 0
      %1721 = vmatmul.mubr.bf16.gmra.mxu0 %v992
      %v1722 = vpop.f32.mrf.mxu0
      %v1723 = vadd.f32 0.0, %v1722
      %v1724 = vpop.f32.mrf.mxu0
      %v1725 = vpop.f32.mrf.mxu0
      %v1726 = vadd.f32 0.0, %v1725
      %v1727 = vpop.f32.mrf.mxu0
      %1728 = vmatprep.mubr.bf16.mxu0 0
      %1729 = vmatmul.mubr.bf16.gmra.mxu0 %v995
      %v1730 = vpop.f32.mrf.mxu0
      %v1731 = vadd.f32 0.0, %v1730
      %v1732 = vpop.f32.mrf.mxu0
      %v1733 = vpop.f32.mrf.mxu0
      %v1734 = vadd.f32 0.0, %v1733
      %v1735 = vpop.f32.mrf.mxu0
      %1736 = vmatprep.mubr.bf16.mxu0 0
      %1737 = vmatmul.mubr.bf16.gmra.mxu0 %v998
      %v1738 = vpop.f32.mrf.mxu0
      %v1739 = vadd.f32 0.0, %v1738
      %v1740 = vpop.f32.mrf.mxu0
      %v1741 = vpop.f32.mrf.mxu0
      %v1742 = vadd.f32 0.0, %v1741
      %v1743 = vpop.f32.mrf.mxu0
      %1744 = vmatprep.mubr.bf16.mxu0 0
      %1745 = vmatmul.mubr.bf16.gmra.mxu0 %v1001
      %v1746 = vpop.f32.mrf.mxu0
      %v1747 = vadd.f32 0.0, %v1746
      %v1748 = vpop.f32.mrf.mxu0
      %v1749 = vpop.f32.mrf.mxu0
      %v1750 = vadd.f32 0.0, %v1749
      %v1751 = vpop.f32.mrf.mxu0
      %1752 = vmatprep.mubr.bf16.mxu0 0
      %1753 = vmatmul.mubr.bf16.gmra.mxu0 %v1004
      %v1754 = vpop.f32.mrf.mxu0
      %v1755 = vadd.f32 0.0, %v1754
      %v1756 = vpop.f32.mrf.mxu0
      %v1757 = vpop.f32.mrf.mxu0
      %v1758 = vadd.f32 0.0, %v1757
      %v1759 = vpop.f32.mrf.mxu0
      %1760 = vmatprep.mubr.bf16.mxu0 0
      %1761 = vmatmul.mubr.bf16.gmra.mxu0 %v1603
      %v1762 = vpop.f32.mrf.mxu0
      %v1763 = vadd.f32 0.0, %v1762
      %v1764 = vpop.f32.mrf.mxu0
      %v1765 = vpop.f32.mrf.mxu0
      %v1766 = vadd.f32 0.0, %v1765
      %v1767 = vpop.f32.mrf.mxu0
      %1768 = vdwg.mxu0
      %v1769 = vadd.f32 %v1563, %v1643
      %v1770 = vadd.f32 %v1564, %v1646
      %v1771 = vadd.f32 %v1565, %v1651
      %v1772 = vadd.f32 %v1566, %v1654
      %v1773 = vadd.f32 %v1567, %v1659
      %v1774 = vadd.f32 %v1568, %v1662
      %v1775 = vadd.f32 %v1569, %v1667
      %v1776 = vadd.f32 %v1570, %v1670
      %v1777 = vadd.f32 %v1571, %v1675
      %v1778 = vadd.f32 %v1572, %v1678
      %v1779 = vadd.f32 %v1573, %v1683
      %v1780 = vadd.f32 %v1574, %v1686
      %v1781 = vadd.f32 %v1575, %v1691
      %v1782 = vadd.f32 %v1576, %v1694
      %v1783 = vadd.f32 %v1577, %v1699
      %v1784 = vadd.f32 %v1578, %v1702
      %v1785 = vadd.f32 %v1579, %v1707
      %v1786 = vadd.f32 %v1580, %v1710
      %v1787 = vadd.f32 %v1581, %v1715
      %v1788 = vadd.f32 %v1582, %v1718
      %v1789 = vadd.f32 %v1583, %v1723
      %v1790 = vadd.f32 %v1584, %v1726
      %v1791 = vadd.f32 %v1585, %v1731
      %v1792 = vadd.f32 %v1586, %v1734
      %v1793 = vadd.f32 %v1587, %v1739
      %v1794 = vadd.f32 %v1588, %v1742
      %v1795 = vadd.f32 %v1589, %v1747
      %v1796 = vadd.f32 %v1590, %v1750
      %v1797 = vadd.f32 %v1591, %v1755
      %v1798 = vadd.f32 %v1592, %v1758
      %v1799 = vadd.f32 %v1593, %v1763
      %v1800 = vadd.f32 %v1594, %v1766
      %v1802 = vshrl.u32 %v220, 16
      %v1804 = vrot.slane %v1802, 4
      %v1805 = vshll.u32 %v220, 16
      %v1807 = vrot.slane %v1805, 5
      %v1808 = vor.u32 %v1804, %v1807
      %v1809 = vrot.slane %v1808, 4
      %v1811 = vshll.u32 %v221, 16
      %v1813 = vrot.slane %v1811, 5
      %v1814 = vsel %vm229, %v1809, %v1813
      %v1815 = vshrl.u32 %v221, 16
      %v1817 = vrot.slane %v1815, 4
      %v1818 = vor.u32 %v1817, %v1813
      %v1819 = vrot.slane %v1818, 4
      %v1821 = vshll.u32 %v222, 16
      %v1823 = vrot.slane %v1821, 5
      %v1824 = vsel %vm229, %v1819, %v1823
      %s1825 = scalar_lea.vmem %s1, 16
      %v1826 = vld [vmem:[%s1825] sm:$0xf]
      %v1827 = vunpack.c.l.b16 %v1814
      %v1828 = vunpack.c.l.b16 %v1824
      %v1829 = vpack.c.b16 %v1828, %v1827
      %v1831 = vsel %vm664, %v1829, 0
      %v1834 = vsel %vm713, %v1826, 0
      %1836 = vmatprep.subr.bf16.mxu0 0
      %1837 = vmatpush1.bf16.msra.mxu0 0
      %1838 = vmatprep.subr.bf16.mxu0 0
      %1839 = vmatpush1.bf16.msra.mxu0 0
      %1840 = vmatprep.subr.bf16.mxu0 0
      %1841 = vmatpush1.bf16.msra.mxu0 0
      %1842 = vmatprep.subr.bf16.mxu0 0
      %1843 = vmatpush1.bf16.msra.mxu0 0
      %1844 = vmatprep.subr.bf16.mxu0 0
      %1845 = vmatpush1.bf16.msra.mxu0 0
      %1846 = vmatprep.subr.bf16.mxu0 0
      %1847 = vmatpush1.bf16.msra.mxu0 0
      %1848 = vmatprep.subr.bf16.mxu0 0
      %1849 = vmatpush1.bf16.msra.mxu0 0
      %1850 = vmatprep.subr.bf16.mxu0 0
      %1851 = vmatpush1.bf16.msra.mxu0 %v1834
      %1852 = vmatprep.subr.bf16.mxu0 0
      %1853 = vmatpush2.bf16.msra.mxu0 0
      %1854 = vmatprep.subr.bf16.mxu0 0
      %1855 = vmatpush2.bf16.msra.mxu0 0
      %1856 = vmatprep.subr.bf16.mxu0 0
      %1857 = vmatpush2.bf16.msra.mxu0 0
      %1858 = vmatprep.subr.bf16.mxu0 0
      %1859 = vmatpush2.bf16.msra.mxu0 0
      %1860 = vmatprep.subr.bf16.mxu0 0
      %1861 = vmatpush2.bf16.msra.mxu0 0
      %1862 = vmatprep.subr.bf16.mxu0 0
      %1863 = vmatpush2.bf16.msra.mxu0 0
      %1864 = vmatprep.subr.bf16.mxu0 0
      %1865 = vmatpush2.bf16.msra.mxu0 0
      %1866 = vmatprep.subr.bf16.mxu0 0
      %1867 = vmatpush2.bf16.msra.mxu0 0
      %1868 = vmatprep.mubr.bf16.mxu0 0
      %1869 = vmatmul.mubr.bf16.gmra.mxu0 %v669
      %v1870 = vpop.f32.mrf.mxu0
      %v1871 = vadd.f32 0.0, %v1870
      %v1872 = vpop.f32.mrf.mxu0
      %v1873 = vpop.f32.mrf.mxu0
      %v1874 = vadd.f32 0.0, %v1873
      %v1875 = vpop.f32.mrf.mxu0
      %1876 = vmatprep.mubr.bf16.mxu0 0
      %1877 = vmatmul.mubr.bf16.gmra.mxu0 %v672
      %v1878 = vpop.f32.mrf.mxu0
      %v1879 = vadd.f32 0.0, %v1878
      %v1880 = vpop.f32.mrf.mxu0
      %v1881 = vpop.f32.mrf.mxu0
      %v1882 = vadd.f32 0.0, %v1881
      %v1883 = vpop.f32.mrf.mxu0
      %1884 = vmatprep.mubr.bf16.mxu0 0
      %1885 = vmatmul.mubr.bf16.gmra.mxu0 %v675
      %v1886 = vpop.f32.mrf.mxu0
      %v1887 = vadd.f32 0.0, %v1886
      %v1888 = vpop.f32.mrf.mxu0
      %v1889 = vpop.f32.mrf.mxu0
      %v1890 = vadd.f32 0.0, %v1889
      %v1891 = vpop.f32.mrf.mxu0
      %1892 = vmatprep.mubr.bf16.mxu0 0
      %1893 = vmatmul.mubr.bf16.gmra.mxu0 %v678
      %v1894 = vpop.f32.mrf.mxu0
      %v1895 = vadd.f32 0.0, %v1894
      %v1896 = vpop.f32.mrf.mxu0
      %v1897 = vpop.f32.mrf.mxu0
      %v1898 = vadd.f32 0.0, %v1897
      %v1899 = vpop.f32.mrf.mxu0
      %1900 = vmatprep.mubr.bf16.mxu0 0
      %1901 = vmatmul.mubr.bf16.gmra.mxu0 %v681
      %v1902 = vpop.f32.mrf.mxu0
      %v1903 = vadd.f32 0.0, %v1902
      %v1904 = vpop.f32.mrf.mxu0
      %v1905 = vpop.f32.mrf.mxu0
      %v1906 = vadd.f32 0.0, %v1905
      %v1907 = vpop.f32.mrf.mxu0
      %1908 = vmatprep.mubr.bf16.mxu0 0
      %1909 = vmatmul.mubr.bf16.gmra.mxu0 %v684
      %v1910 = vpop.f32.mrf.mxu0
      %v1911 = vadd.f32 0.0, %v1910
      %v1912 = vpop.f32.mrf.mxu0
      %v1913 = vpop.f32.mrf.mxu0
      %v1914 = vadd.f32 0.0, %v1913
      %v1915 = vpop.f32.mrf.mxu0
      %1916 = vmatprep.mubr.bf16.mxu0 0
      %1917 = vmatmul.mubr.bf16.gmra.mxu0 %v687
      %v1918 = vpop.f32.mrf.mxu0
      %v1919 = vadd.f32 0.0, %v1918
      %v1920 = vpop.f32.mrf.mxu0
      %v1921 = vpop.f32.mrf.mxu0
      %v1922 = vadd.f32 0.0, %v1921
      %v1923 = vpop.f32.mrf.mxu0
      %1924 = vmatprep.mubr.bf16.mxu0 0
      %1925 = vmatmul.mubr.bf16.gmra.mxu0 %v690
      %v1926 = vpop.f32.mrf.mxu0
      %v1927 = vadd.f32 0.0, %v1926
      %v1928 = vpop.f32.mrf.mxu0
      %v1929 = vpop.f32.mrf.mxu0
      %v1930 = vadd.f32 0.0, %v1929
      %v1931 = vpop.f32.mrf.mxu0
      %1932 = vmatprep.mubr.bf16.mxu0 0
      %1933 = vmatmul.mubr.bf16.gmra.mxu0 %v693
      %v1934 = vpop.f32.mrf.mxu0
      %v1935 = vadd.f32 0.0, %v1934
      %v1936 = vpop.f32.mrf.mxu0
      %v1937 = vpop.f32.mrf.mxu0
      %v1938 = vadd.f32 0.0, %v1937
      %v1939 = vpop.f32.mrf.mxu0
      %1940 = vmatprep.mubr.bf16.mxu0 0
      %1941 = vmatmul.mubr.bf16.gmra.mxu0 %v696
      %v1942 = vpop.f32.mrf.mxu0
      %v1943 = vadd.f32 0.0, %v1942
      %v1944 = vpop.f32.mrf.mxu0
      %v1945 = vpop.f32.mrf.mxu0
      %v1946 = vadd.f32 0.0, %v1945
      %v1947 = vpop.f32.mrf.mxu0
      %1948 = vmatprep.mubr.bf16.mxu0 0
      %1949 = vmatmul.mubr.bf16.gmra.mxu0 %v699
      %v1950 = vpop.f32.mrf.mxu0
      %v1951 = vadd.f32 0.0, %v1950
      %v1952 = vpop.f32.mrf.mxu0
      %v1953 = vpop.f32.mrf.mxu0
      %v1954 = vadd.f32 0.0, %v1953
      %v1955 = vpop.f32.mrf.mxu0
      %1956 = vmatprep.mubr.bf16.mxu0 0
      %1957 = vmatmul.mubr.bf16.gmra.mxu0 %v702
      %v1958 = vpop.f32.mrf.mxu0
      %v1959 = vadd.f32 0.0, %v1958
      %v1960 = vpop.f32.mrf.mxu0
      %v1961 = vpop.f32.mrf.mxu0
      %v1962 = vadd.f32 0.0, %v1961
      %v1963 = vpop.f32.mrf.mxu0
      %1964 = vmatprep.mubr.bf16.mxu0 0
      %1965 = vmatmul.mubr.bf16.gmra.mxu0 %v705
      %v1966 = vpop.f32.mrf.mxu0
      %v1967 = vadd.f32 0.0, %v1966
      %v1968 = vpop.f32.mrf.mxu0
      %v1969 = vpop.f32.mrf.mxu0
      %v1970 = vadd.f32 0.0, %v1969
      %v1971 = vpop.f32.mrf.mxu0
      %1972 = vmatprep.mubr.bf16.mxu0 0
      %1973 = vmatmul.mubr.bf16.gmra.mxu0 %v708
      %v1974 = vpop.f32.mrf.mxu0
      %v1975 = vadd.f32 0.0, %v1974
      %v1976 = vpop.f32.mrf.mxu0
      %v1977 = vpop.f32.mrf.mxu0
      %v1978 = vadd.f32 0.0, %v1977
      %v1979 = vpop.f32.mrf.mxu0
      %1980 = vmatprep.mubr.bf16.mxu0 0
      %1981 = vmatmul.mubr.bf16.gmra.mxu0 %v711
      %v1982 = vpop.f32.mrf.mxu0
      %v1983 = vadd.f32 0.0, %v1982
      %v1984 = vpop.f32.mrf.mxu0
      %v1985 = vpop.f32.mrf.mxu0
      %v1986 = vadd.f32 0.0, %v1985
      %v1987 = vpop.f32.mrf.mxu0
      %1988 = vmatprep.mubr.bf16.mxu0 0
      %1989 = vmatmul.mubr.bf16.gmra.mxu0 %v1831
      %v1990 = vpop.f32.mrf.mxu0
      %v1991 = vadd.f32 0.0, %v1990
      %v1992 = vpop.f32.mrf.mxu0
      %v1993 = vpop.f32.mrf.mxu0
      %v1994 = vadd.f32 0.0, %v1993
      %v1995 = vpop.f32.mrf.mxu0
      %1996 = vdwg.mxu0
      %v1997 = vadd.f32 %v1769, %v1871
      %v1998 = vadd.f32 %v1770, %v1874
      %v1999 = vadd.f32 %v1771, %v1879
      %v2000 = vadd.f32 %v1772, %v1882
      %v2001 = vadd.f32 %v1773, %v1887
      %v2002 = vadd.f32 %v1774, %v1890
      %v2003 = vadd.f32 %v1775, %v1895
      %v2004 = vadd.f32 %v1776, %v1898
      %v2005 = vadd.f32 %v1777, %v1903
      %v2006 = vadd.f32 %v1778, %v1906
      %v2007 = vadd.f32 %v1779, %v1911
      %v2008 = vadd.f32 %v1780, %v1914
      %v2009 = vadd.f32 %v1781, %v1919
      %v2010 = vadd.f32 %v1782, %v1922
      %v2011 = vadd.f32 %v1783, %v1927
      %v2012 = vadd.f32 %v1784, %v1930
      %v2013 = vadd.f32 %v1785, %v1935
      %v2014 = vadd.f32 %v1786, %v1938
      %v2015 = vadd.f32 %v1787, %v1943
      %v2016 = vadd.f32 %v1788, %v1946
      %v2017 = vadd.f32 %v1789, %v1951
      %v2018 = vadd.f32 %v1790, %v1954
      %v2019 = vadd.f32 %v1791, %v1959
      %v2020 = vadd.f32 %v1792, %v1962
      %v2021 = vadd.f32 %v1793, %v1967
      %v2022 = vadd.f32 %v1794, %v1970
      %v2023 = vadd.f32 %v1795, %v1975
      %v2024 = vadd.f32 %v1796, %v1978
      %v2025 = vadd.f32 %v1797, %v1983
      %v2026 = vadd.f32 %v1798, %v1986
      %v2027 = vadd.f32 %v1799, %v1991
      %v2028 = vadd.f32 %v1800, %v1994
      %v2030 = vrot.slane %v220, 5
      %v2031 = vrot.slane %v2030, 4
      %v2032 = vrot.slane %v221, 5
      %v2033 = vsel %vm1188, %v2031, %v2032
      %v2034 = vrot.slane %v2032, 4
      %v2035 = vrot.slane %v222, 5
      %v2036 = vsel %vm1188, %v2034, %v2035
      %s2037 = scalar_lea.vmem %s1, 20
      %v2038 = vld [vmem:[%s2037] sm:$0xf]
      %v2039 = vunpack.c.l.b16 %v2033
      %v2040 = vunpack.c.l.b16 %v2036
      %v2041 = vpack.c.b16 %v2040, %v2039
      %v2043 = vsel %vm664, %v2041, 0
      %v2046 = vsel %vm713, %v2038, 0
      %2048 = vmatprep.subr.bf16.mxu0 0
      %2049 = vmatpush1.bf16.msra.mxu0 0
      %2050 = vmatprep.subr.bf16.mxu0 0
      %2051 = vmatpush1.bf16.msra.mxu0 0
      %2052 = vmatprep.subr.bf16.mxu0 0
      %2053 = vmatpush1.bf16.msra.mxu0 0
      %2054 = vmatprep.subr.bf16.mxu0 0
      %2055 = vmatpush1.bf16.msra.mxu0 0
      %2056 = vmatprep.subr.bf16.mxu0 0
      %2057 = vmatpush1.bf16.msra.mxu0 0
      %2058 = vmatprep.subr.bf16.mxu0 0
      %2059 = vmatpush1.bf16.msra.mxu0 0
      %2060 = vmatprep.subr.bf16.mxu0 0
      %2061 = vmatpush1.bf16.msra.mxu0 0
      %2062 = vmatprep.subr.bf16.mxu0 0
      %2063 = vmatpush1.bf16.msra.mxu0 %v2046
      %2064 = vmatprep.subr.bf16.mxu0 0
      %2065 = vmatpush2.bf16.msra.mxu0 0
      %2066 = vmatprep.subr.bf16.mxu0 0
      %2067 = vmatpush2.bf16.msra.mxu0 0
      %2068 = vmatprep.subr.bf16.mxu0 0
      %2069 = vmatpush2.bf16.msra.mxu0 0
      %2070 = vmatprep.subr.bf16.mxu0 0
      %2071 = vmatpush2.bf16.msra.mxu0 0
      %2072 = vmatprep.subr.bf16.mxu0 0
      %2073 = vmatpush2.bf16.msra.mxu0 0
      %2074 = vmatprep.subr.bf16.mxu0 0
      %2075 = vmatpush2.bf16.msra.mxu0 0
      %2076 = vmatprep.subr.bf16.mxu0 0
      %2077 = vmatpush2.bf16.msra.mxu0 0
      %2078 = vmatprep.subr.bf16.mxu0 0
      %2079 = vmatpush2.bf16.msra.mxu0 0
      %2080 = vmatprep.mubr.bf16.mxu0 0
      %2081 = vmatmul.mubr.bf16.gmra.mxu0 %v1355
      %v2082 = vpop.f32.mrf.mxu0
      %v2083 = vadd.f32 0.0, %v2082
      %v2084 = vpop.f32.mrf.mxu0
      %v2085 = vpop.f32.mrf.mxu0
      %v2086 = vadd.f32 0.0, %v2085
      %v2087 = vpop.f32.mrf.mxu0
      %2088 = vmatprep.mubr.bf16.mxu0 0
      %2089 = vmatmul.mubr.bf16.gmra.mxu0 %v1358
      %v2090 = vpop.f32.mrf.mxu0
      %v2091 = vadd.f32 0.0, %v2090
      %v2092 = vpop.f32.mrf.mxu0
      %v2093 = vpop.f32.mrf.mxu0
      %v2094 = vadd.f32 0.0, %v2093
      %v2095 = vpop.f32.mrf.mxu0
      %2096 = vmatprep.mubr.bf16.mxu0 0
      %2097 = vmatmul.mubr.bf16.gmra.mxu0 %v1361
      %v2098 = vpop.f32.mrf.mxu0
      %v2099 = vadd.f32 0.0, %v2098
      %v2100 = vpop.f32.mrf.mxu0
      %v2101 = vpop.f32.mrf.mxu0
      %v2102 = vadd.f32 0.0, %v2101
      %v2103 = vpop.f32.mrf.mxu0
      %2104 = vmatprep.mubr.bf16.mxu0 0
      %2105 = vmatmul.mubr.bf16.gmra.mxu0 %v1364
      %v2106 = vpop.f32.mrf.mxu0
      %v2107 = vadd.f32 0.0, %v2106
      %v2108 = vpop.f32.mrf.mxu0
      %v2109 = vpop.f32.mrf.mxu0
      %v2110 = vadd.f32 0.0, %v2109
      %v2111 = vpop.f32.mrf.mxu0
      %2112 = vmatprep.mubr.bf16.mxu0 0
      %2113 = vmatmul.mubr.bf16.gmra.mxu0 %v1367
      %v2114 = vpop.f32.mrf.mxu0
      %v2115 = vadd.f32 0.0, %v2114
      %v2116 = vpop.f32.mrf.mxu0
      %v2117 = vpop.f32.mrf.mxu0
      %v2118 = vadd.f32 0.0, %v2117
      %v2119 = vpop.f32.mrf.mxu0
      %2120 = vmatprep.mubr.bf16.mxu0 0
      %2121 = vmatmul.mubr.bf16.gmra.mxu0 %v1370
      %v2122 = vpop.f32.mrf.mxu0
      %v2123 = vadd.f32 0.0, %v2122
      %v2124 = vpop.f32.mrf.mxu0
      %v2125 = vpop.f32.mrf.mxu0
      %v2126 = vadd.f32 0.0, %v2125
      %v2127 = vpop.f32.mrf.mxu0
      %2128 = vmatprep.mubr.bf16.mxu0 0
      %2129 = vmatmul.mubr.bf16.gmra.mxu0 %v1373
      %v2130 = vpop.f32.mrf.mxu0
      %v2131 = vadd.f32 0.0, %v2130
      %v2132 = vpop.f32.mrf.mxu0
      %v2133 = vpop.f32.mrf.mxu0
      %v2134 = vadd.f32 0.0, %v2133
      %v2135 = vpop.f32.mrf.mxu0
      %2136 = vmatprep.mubr.bf16.mxu0 0
      %2137 = vmatmul.mubr.bf16.gmra.mxu0 %v1376
      %v2138 = vpop.f32.mrf.mxu0
      %v2139 = vadd.f32 0.0, %v2138
      %v2140 = vpop.f32.mrf.mxu0
      %v2141 = vpop.f32.mrf.mxu0
      %v2142 = vadd.f32 0.0, %v2141
      %v2143 = vpop.f32.mrf.mxu0
      %2144 = vmatprep.mubr.bf16.mxu0 0
      %2145 = vmatmul.mubr.bf16.gmra.mxu0 %v1379
      %v2146 = vpop.f32.mrf.mxu0
      %v2147 = vadd.f32 0.0, %v2146
      %v2148 = vpop.f32.mrf.mxu0
      %v2149 = vpop.f32.mrf.mxu0
      %v2150 = vadd.f32 0.0, %v2149
      %v2151 = vpop.f32.mrf.mxu0
      %2152 = vmatprep.mubr.bf16.mxu0 0
      %2153 = vmatmul.mubr.bf16.gmra.mxu0 %v1382
      %v2154 = vpop.f32.mrf.mxu0
      %v2155 = vadd.f32 0.0, %v2154
      %v2156 = vpop.f32.mrf.mxu0
      %v2157 = vpop.f32.mrf.mxu0
      %v2158 = vadd.f32 0.0, %v2157
      %v2159 = vpop.f32.mrf.mxu0
      %2160 = vmatprep.mubr.bf16.mxu0 0
      %2161 = vmatmul.mubr.bf16.gmra.mxu0 %v1385
      %v2162 = vpop.f32.mrf.mxu0
      %v2163 = vadd.f32 0.0, %v2162
      %v2164 = vpop.f32.mrf.mxu0
      %v2165 = vpop.f32.mrf.mxu0
      %v2166 = vadd.f32 0.0, %v2165
      %v2167 = vpop.f32.mrf.mxu0
      %2168 = vmatprep.mubr.bf16.mxu0 0
      %2169 = vmatmul.mubr.bf16.gmra.mxu0 %v1388
      %v2170 = vpop.f32.mrf.mxu0
      %v2171 = vadd.f32 0.0, %v2170
      %v2172 = vpop.f32.mrf.mxu0
      %v2173 = vpop.f32.mrf.mxu0
      %v2174 = vadd.f32 0.0, %v2173
      %v2175 = vpop.f32.mrf.mxu0
      %2176 = vmatprep.mubr.bf16.mxu0 0
      %2177 = vmatmul.mubr.bf16.gmra.mxu0 %v1391
      %v2178 = vpop.f32.mrf.mxu0
      %v2179 = vadd.f32 0.0, %v2178
      %v2180 = vpop.f32.mrf.mxu0
      %v2181 = vpop.f32.mrf.mxu0
      %v2182 = vadd.f32 0.0, %v2181
      %v2183 = vpop.f32.mrf.mxu0
      %2184 = vmatprep.mubr.bf16.mxu0 0
      %2185 = vmatmul.mubr.bf16.gmra.mxu0 %v1394
      %v2186 = vpop.f32.mrf.mxu0
      %v2187 = vadd.f32 0.0, %v2186
      %v2188 = vpop.f32.mrf.mxu0
      %v2189 = vpop.f32.mrf.mxu0
      %v2190 = vadd.f32 0.0, %v2189
      %v2191 = vpop.f32.mrf.mxu0
      %2192 = vmatprep.mubr.bf16.mxu0 0
      %2193 = vmatmul.mubr.bf16.gmra.mxu0 %v1397
      %v2194 = vpop.f32.mrf.mxu0
      %v2195 = vadd.f32 0.0, %v2194
      %v2196 = vpop.f32.mrf.mxu0
      %v2197 = vpop.f32.mrf.mxu0
      %v2198 = vadd.f32 0.0, %v2197
      %v2199 = vpop.f32.mrf.mxu0
      %2200 = vmatprep.mubr.bf16.mxu0 0
      %2201 = vmatmul.mubr.bf16.gmra.mxu0 %v2043
      %v2202 = vpop.f32.mrf.mxu0
      %v2203 = vadd.f32 0.0, %v2202
      %v2204 = vpop.f32.mrf.mxu0
      %v2205 = vpop.f32.mrf.mxu0
      %v2206 = vadd.f32 0.0, %v2205
      %v2207 = vpop.f32.mrf.mxu0
      %2208 = vdwg.mxu0
      %v2209 = vadd.f32 %v1997, %v2083
      %v2210 = vadd.f32 %v1998, %v2086
      %v2211 = vadd.f32 %v1999, %v2091
      %v2212 = vadd.f32 %v2000, %v2094
      %v2213 = vadd.f32 %v2001, %v2099
      %v2214 = vadd.f32 %v2002, %v2102
      %v2215 = vadd.f32 %v2003, %v2107
      %v2216 = vadd.f32 %v2004, %v2110
      %v2217 = vadd.f32 %v2005, %v2115
      %v2218 = vadd.f32 %v2006, %v2118
      %v2219 = vadd.f32 %v2007, %v2123
      %v2220 = vadd.f32 %v2008, %v2126
      %v2221 = vadd.f32 %v2009, %v2131
      %v2222 = vadd.f32 %v2010, %v2134
      %v2223 = vadd.f32 %v2011, %v2139
      %v2224 = vadd.f32 %v2012, %v2142
      %v2225 = vadd.f32 %v2013, %v2147
      %v2226 = vadd.f32 %v2014, %v2150
      %v2227 = vadd.f32 %v2015, %v2155
      %v2228 = vadd.f32 %v2016, %v2158
      %v2229 = vadd.f32 %v2017, %v2163
      %v2230 = vadd.f32 %v2018, %v2166
      %v2231 = vadd.f32 %v2019, %v2171
      %v2232 = vadd.f32 %v2020, %v2174
      %v2233 = vadd.f32 %v2021, %v2179
      %v2234 = vadd.f32 %v2022, %v2182
      %v2235 = vadd.f32 %v2023, %v2187
      %v2236 = vadd.f32 %v2024, %v2190
      %v2237 = vadd.f32 %v2025, %v2195
      %v2238 = vadd.f32 %v2026, %v2198
      %v2239 = vadd.f32 %v2027, %v2203
      %v2240 = vadd.f32 %v2028, %v2206
      %s2241 = scalar_lea.vmem %s1, 24
      %v2242 = vld [vmem:[%s2241] sm:$0xf]
      %v2245 = vunpack.c.l.b16 %v223
      %v2246 = vunpack.c.l.b16 %v224
      %v2247 = vpack.c.b16 %v2246, %v2245
      %v2249 = vsel %vm664, %v2247, 0
      %v2252 = vsel %vm713, %v2242, 0
      %2254 = vmatprep.subr.bf16.mxu0 0
      %2255 = vmatpush1.bf16.msra.mxu0 0
      %2256 = vmatprep.subr.bf16.mxu0 0
      %2257 = vmatpush1.bf16.msra.mxu0 0
      %2258 = vmatprep.subr.bf16.mxu0 0
      %2259 = vmatpush1.bf16.msra.mxu0 0
      %2260 = vmatprep.subr.bf16.mxu0 0
      %2261 = vmatpush1.bf16.msra.mxu0 0
      %2262 = vmatprep.subr.bf16.mxu0 0
      %2263 = vmatpush1.bf16.msra.mxu0 0
      %2264 = vmatprep.subr.bf16.mxu0 0
      %2265 = vmatpush1.bf16.msra.mxu0 0
      %2266 = vmatprep.subr.bf16.mxu0 0
      %2267 = vmatpush1.bf16.msra.mxu0 0
      %2268 = vmatprep.subr.bf16.mxu0 0
      %2269 = vmatpush1.bf16.msra.mxu0 %v2252
      %2270 = vmatprep.subr.bf16.mxu0 0
      %2271 = vmatpush2.bf16.msra.mxu0 0
      %2272 = vmatprep.subr.bf16.mxu0 0
      %2273 = vmatpush2.bf16.msra.mxu0 0
      %2274 = vmatprep.subr.bf16.mxu0 0
      %2275 = vmatpush2.bf16.msra.mxu0 0
      %2276 = vmatprep.subr.bf16.mxu0 0
      %2277 = vmatpush2.bf16.msra.mxu0 0
      %2278 = vmatprep.subr.bf16.mxu0 0
      %2279 = vmatpush2.bf16.msra.mxu0 0
      %2280 = vmatprep.subr.bf16.mxu0 0
      %2281 = vmatpush2.bf16.msra.mxu0 0
      %2282 = vmatprep.subr.bf16.mxu0 0
      %2283 = vmatpush2.bf16.msra.mxu0 0
      %2284 = vmatprep.subr.bf16.mxu0 0
      %2285 = vmatpush2.bf16.msra.mxu0 0
      %2286 = vmatprep.mubr.bf16.mxu0 0
      %2287 = vmatmul.mubr.bf16.gmra.mxu0 %v965
      %v2288 = vpop.f32.mrf.mxu0
      %v2289 = vadd.f32 0.0, %v2288
      %v2290 = vpop.f32.mrf.mxu0
      %v2291 = vpop.f32.mrf.mxu0
      %v2292 = vadd.f32 0.0, %v2291
      %v2293 = vpop.f32.mrf.mxu0
      %2294 = vmatprep.mubr.bf16.mxu0 0
      %2295 = vmatmul.mubr.bf16.gmra.mxu0 %v968
      %v2296 = vpop.f32.mrf.mxu0
      %v2297 = vadd.f32 0.0, %v2296
      %v2298 = vpop.f32.mrf.mxu0
      %v2299 = vpop.f32.mrf.mxu0
      %v2300 = vadd.f32 0.0, %v2299
      %v2301 = vpop.f32.mrf.mxu0
      %2302 = vmatprep.mubr.bf16.mxu0 0
      %2303 = vmatmul.mubr.bf16.gmra.mxu0 %v971
      %v2304 = vpop.f32.mrf.mxu0
      %v2305 = vadd.f32 0.0, %v2304
      %v2306 = vpop.f32.mrf.mxu0
      %v2307 = vpop.f32.mrf.mxu0
      %v2308 = vadd.f32 0.0, %v2307
      %v2309 = vpop.f32.mrf.mxu0
      %2310 = vmatprep.mubr.bf16.mxu0 0
      %2311 = vmatmul.mubr.bf16.gmra.mxu0 %v974
      %v2312 = vpop.f32.mrf.mxu0
      %v2313 = vadd.f32 0.0, %v2312
      %v2314 = vpop.f32.mrf.mxu0
      %v2315 = vpop.f32.mrf.mxu0
      %v2316 = vadd.f32 0.0, %v2315
      %v2317 = vpop.f32.mrf.mxu0
      %2318 = vmatprep.mubr.bf16.mxu0 0
      %2319 = vmatmul.mubr.bf16.gmra.mxu0 %v977
      %v2320 = vpop.f32.mrf.mxu0
      %v2321 = vadd.f32 0.0, %v2320
      %v2322 = vpop.f32.mrf.mxu0
      %v2323 = vpop.f32.mrf.mxu0
      %v2324 = vadd.f32 0.0, %v2323
      %v2325 = vpop.f32.mrf.mxu0
      %2326 = vmatprep.mubr.bf16.mxu0 0
      %2327 = vmatmul.mubr.bf16.gmra.mxu0 %v980
      %v2328 = vpop.f32.mrf.mxu0
      %v2329 = vadd.f32 0.0, %v2328
      %v2330 = vpop.f32.mrf.mxu0
      %v2331 = vpop.f32.mrf.mxu0
      %v2332 = vadd.f32 0.0, %v2331
      %v2333 = vpop.f32.mrf.mxu0
      %2334 = vmatprep.mubr.bf16.mxu0 0
      %2335 = vmatmul.mubr.bf16.gmra.mxu0 %v983
      %v2336 = vpop.f32.mrf.mxu0
      %v2337 = vadd.f32 0.0, %v2336
      %v2338 = vpop.f32.mrf.mxu0
      %v2339 = vpop.f32.mrf.mxu0
      %v2340 = vadd.f32 0.0, %v2339
      %v2341 = vpop.f32.mrf.mxu0
      %2342 = vmatprep.mubr.bf16.mxu0 0
      %2343 = vmatmul.mubr.bf16.gmra.mxu0 %v986
      %v2344 = vpop.f32.mrf.mxu0
      %v2345 = vadd.f32 0.0, %v2344
      %v2346 = vpop.f32.mrf.mxu0
      %v2347 = vpop.f32.mrf.mxu0
      %v2348 = vadd.f32 0.0, %v2347
      %v2349 = vpop.f32.mrf.mxu0
      %2350 = vmatprep.mubr.bf16.mxu0 0
      %2351 = vmatmul.mubr.bf16.gmra.mxu0 %v989
      %v2352 = vpop.f32.mrf.mxu0
      %v2353 = vadd.f32 0.0, %v2352
      %v2354 = vpop.f32.mrf.mxu0
      %v2355 = vpop.f32.mrf.mxu0
      %v2356 = vadd.f32 0.0, %v2355
      %v2357 = vpop.f32.mrf.mxu0
      %2358 = vmatprep.mubr.bf16.mxu0 0
      %2359 = vmatmul.mubr.bf16.gmra.mxu0 %v992
      %v2360 = vpop.f32.mrf.mxu0
      %v2361 = vadd.f32 0.0, %v2360
      %v2362 = vpop.f32.mrf.mxu0
      %v2363 = vpop.f32.mrf.mxu0
      %v2364 = vadd.f32 0.0, %v2363
      %v2365 = vpop.f32.mrf.mxu0
      %2366 = vmatprep.mubr.bf16.mxu0 0
      %2367 = vmatmul.mubr.bf16.gmra.mxu0 %v995
      %v2368 = vpop.f32.mrf.mxu0
      %v2369 = vadd.f32 0.0, %v2368
      %v2370 = vpop.f32.mrf.mxu0
      %v2371 = vpop.f32.mrf.mxu0
      %v2372 = vadd.f32 0.0, %v2371
      %v2373 = vpop.f32.mrf.mxu0
      %2374 = vmatprep.mubr.bf16.mxu0 0
      %2375 = vmatmul.mubr.bf16.gmra.mxu0 %v998
      %v2376 = vpop.f32.mrf.mxu0
      %v2377 = vadd.f32 0.0, %v2376
      %v2378 = vpop.f32.mrf.mxu0
      %v2379 = vpop.f32.mrf.mxu0
      %v2380 = vadd.f32 0.0, %v2379
      %v2381 = vpop.f32.mrf.mxu0
      %2382 = vmatprep.mubr.bf16.mxu0 0
      %2383 = vmatmul.mubr.bf16.gmra.mxu0 %v1001
      %v2384 = vpop.f32.mrf.mxu0
      %v2385 = vadd.f32 0.0, %v2384
      %v2386 = vpop.f32.mrf.mxu0
      %v2387 = vpop.f32.mrf.mxu0
      %v2388 = vadd.f32 0.0, %v2387
      %v2389 = vpop.f32.mrf.mxu0
      %2390 = vmatprep.mubr.bf16.mxu0 0
      %2391 = vmatmul.mubr.bf16.gmra.mxu0 %v1004
      %v2392 = vpop.f32.mrf.mxu0
      %v2393 = vadd.f32 0.0, %v2392
      %v2394 = vpop.f32.mrf.mxu0
      %v2395 = vpop.f32.mrf.mxu0
      %v2396 = vadd.f32 0.0, %v2395
      %v2397 = vpop.f32.mrf.mxu0
      %2398 = vmatprep.mubr.bf16.mxu0 0
      %2399 = vmatmul.mubr.bf16.gmra.mxu0 %v1603
      %v2400 = vpop.f32.mrf.mxu0
      %v2401 = vadd.f32 0.0, %v2400
      %v2402 = vpop.f32.mrf.mxu0
      %v2403 = vpop.f32.mrf.mxu0
      %v2404 = vadd.f32 0.0, %v2403
      %v2405 = vpop.f32.mrf.mxu0
      %2406 = vmatprep.mubr.bf16.mxu0 0
      %2407 = vmatmul.mubr.bf16.gmra.mxu0 %v2249
      %v2408 = vpop.f32.mrf.mxu0
      %v2409 = vadd.f32 0.0, %v2408
      %v2410 = vpop.f32.mrf.mxu0
      %v2411 = vpop.f32.mrf.mxu0
      %v2412 = vadd.f32 0.0, %v2411
      %v2413 = vpop.f32.mrf.mxu0
      %2414 = vdwg.mxu0
      %v2415 = vadd.f32 %v2209, %v2289
      %v2416 = vadd.f32 %v2210, %v2292
      %v2417 = vadd.f32 %v2211, %v2297
      %v2418 = vadd.f32 %v2212, %v2300
      %v2419 = vadd.f32 %v2213, %v2305
      %v2420 = vadd.f32 %v2214, %v2308
      %v2421 = vadd.f32 %v2215, %v2313
      %v2422 = vadd.f32 %v2216, %v2316
      %v2423 = vadd.f32 %v2217, %v2321
      %v2424 = vadd.f32 %v2218, %v2324
      %v2425 = vadd.f32 %v2219, %v2329
      %v2426 = vadd.f32 %v2220, %v2332
      %v2427 = vadd.f32 %v2221, %v2337
      %v2428 = vadd.f32 %v2222, %v2340
      %v2429 = vadd.f32 %v2223, %v2345
      %v2430 = vadd.f32 %v2224, %v2348
      %v2431 = vadd.f32 %v2225, %v2353
      %v2432 = vadd.f32 %v2226, %v2356
      %v2433 = vadd.f32 %v2227, %v2361
      %v2434 = vadd.f32 %v2228, %v2364
      %v2435 = vadd.f32 %v2229, %v2369
      %v2436 = vadd.f32 %v2230, %v2372
      %v2437 = vadd.f32 %v2231, %v2377
      %v2438 = vadd.f32 %v2232, %v2380
      %v2439 = vadd.f32 %v2233, %v2385
      %v2440 = vadd.f32 %v2234, %v2388
      %v2441 = vadd.f32 %v2235, %v2393
      %v2442 = vadd.f32 %v2236, %v2396
      %v2443 = vadd.f32 %v2237, %v2401
      %v2444 = vadd.f32 %v2238, %v2404
      %v2445 = vadd.f32 %v2239, %v2409
      %v2446 = vadd.f32 %v2240, %v2412
      %v2448 = vshrl.u32 %v223, 16
      %v2450 = vrot.slane %v2448, 4
      %v2451 = vshll.u32 %v223, 16
      %v2453 = vrot.slane %v2451, 5
      %v2454 = vor.u32 %v2450, %v2453
      %v2455 = vrot.slane %v2454, 4
      %v2457 = vshll.u32 %v224, 16
      %v2459 = vrot.slane %v2457, 5
      %v2460 = vsel %vm229, %v2455, %v2459
      %v2461 = vshrl.u32 %v224, 16
      %v2463 = vrot.slane %v2461, 4
      %v2464 = vor.u32 %v2463, %v2459
      %v2465 = vrot.slane %v2464, 4
      %v2467 = vshll.u32 %v225, 16
      %v2469 = vrot.slane %v2467, 5
      %v2470 = vsel %vm229, %v2465, %v2469
      %s2471 = scalar_lea.vmem %s1, 28
      %v2472 = vld [vmem:[%s2471] sm:$0xf]
      %v2473 = vunpack.c.l.b16 %v2460
      %v2474 = vunpack.c.l.b16 %v2470
      %v2475 = vpack.c.b16 %v2474, %v2473
      %v2477 = vsel %vm664, %v2475, 0
      %v2480 = vsel %vm713, %v2472, 0
      %2482 = vmatprep.subr.bf16.mxu0 0
      %2483 = vmatpush1.bf16.msra.mxu0 0
      %2484 = vmatprep.subr.bf16.mxu0 0
      %2485 = vmatpush1.bf16.msra.mxu0 0
      %2486 = vmatprep.subr.bf16.mxu0 0
      %2487 = vmatpush1.bf16.msra.mxu0 0
      %2488 = vmatprep.subr.bf16.mxu0 0
      %2489 = vmatpush1.bf16.msra.mxu0 0
      %2490 = vmatprep.subr.bf16.mxu0 0
      %2491 = vmatpush1.bf16.msra.mxu0 0
      %2492 = vmatprep.subr.bf16.mxu0 0
      %2493 = vmatpush1.bf16.msra.mxu0 0
      %2494 = vmatprep.subr.bf16.mxu0 0
      %2495 = vmatpush1.bf16.msra.mxu0 0
      %2496 = vmatprep.subr.bf16.mxu0 0
      %2497 = vmatpush1.bf16.msra.mxu0 %v2480
      %2498 = vmatprep.subr.bf16.mxu0 0
      %2499 = vmatpush2.bf16.msra.mxu0 0
      %2500 = vmatprep.subr.bf16.mxu0 0
      %2501 = vmatpush2.bf16.msra.mxu0 0
      %2502 = vmatprep.subr.bf16.mxu0 0
      %2503 = vmatpush2.bf16.msra.mxu0 0
      %2504 = vmatprep.subr.bf16.mxu0 0
      %2505 = vmatpush2.bf16.msra.mxu0 0
      %2506 = vmatprep.subr.bf16.mxu0 0
      %2507 = vmatpush2.bf16.msra.mxu0 0
      %2508 = vmatprep.subr.bf16.mxu0 0
      %2509 = vmatpush2.bf16.msra.mxu0 0
      %2510 = vmatprep.subr.bf16.mxu0 0
      %2511 = vmatpush2.bf16.msra.mxu0 0
      %2512 = vmatprep.subr.bf16.mxu0 0
      %2513 = vmatpush2.bf16.msra.mxu0 0
      %2514 = vmatprep.mubr.bf16.mxu0 0
      %2515 = vmatmul.mubr.bf16.gmra.mxu0 %v672
      %v2516 = vpop.f32.mrf.mxu0
      %v2517 = vadd.f32 0.0, %v2516
      %v2518 = vpop.f32.mrf.mxu0
      %v2519 = vpop.f32.mrf.mxu0
      %v2520 = vadd.f32 0.0, %v2519
      %v2521 = vpop.f32.mrf.mxu0
      %2522 = vmatprep.mubr.bf16.mxu0 0
      %2523 = vmatmul.mubr.bf16.gmra.mxu0 %v675
      %v2524 = vpop.f32.mrf.mxu0
      %v2525 = vadd.f32 0.0, %v2524
      %v2526 = vpop.f32.mrf.mxu0
      %v2527 = vpop.f32.mrf.mxu0
      %v2528 = vadd.f32 0.0, %v2527
      %v2529 = vpop.f32.mrf.mxu0
      %2530 = vmatprep.mubr.bf16.mxu0 0
      %2531 = vmatmul.mubr.bf16.gmra.mxu0 %v678
      %v2532 = vpop.f32.mrf.mxu0
      %v2533 = vadd.f32 0.0, %v2532
      %v2534 = vpop.f32.mrf.mxu0
      %v2535 = vpop.f32.mrf.mxu0
      %v2536 = vadd.f32 0.0, %v2535
      %v2537 = vpop.f32.mrf.mxu0
      %2538 = vmatprep.mubr.bf16.mxu0 0
      %2539 = vmatmul.mubr.bf16.gmra.mxu0 %v681
      %v2540 = vpop.f32.mrf.mxu0
      %v2541 = vadd.f32 0.0, %v2540
      %v2542 = vpop.f32.mrf.mxu0
      %v2543 = vpop.f32.mrf.mxu0
      %v2544 = vadd.f32 0.0, %v2543
      %v2545 = vpop.f32.mrf.mxu0
      %2546 = vmatprep.mubr.bf16.mxu0 0
      %2547 = vmatmul.mubr.bf16.gmra.mxu0 %v684
      %v2548 = vpop.f32.mrf.mxu0
      %v2549 = vadd.f32 0.0, %v2548
      %v2550 = vpop.f32.mrf.mxu0
      %v2551 = vpop.f32.mrf.mxu0
      %v2552 = vadd.f32 0.0, %v2551
      %v2553 = vpop.f32.mrf.mxu0
      %2554 = vmatprep.mubr.bf16.mxu0 0
      %2555 = vmatmul.mubr.bf16.gmra.mxu0 %v687
      %v2556 = vpop.f32.mrf.mxu0
      %v2557 = vadd.f32 0.0, %v2556
      %v2558 = vpop.f32.mrf.mxu0
      %v2559 = vpop.f32.mrf.mxu0
      %v2560 = vadd.f32 0.0, %v2559
      %v2561 = vpop.f32.mrf.mxu0
      %2562 = vmatprep.mubr.bf16.mxu0 0
      %2563 = vmatmul.mubr.bf16.gmra.mxu0 %v690
      %v2564 = vpop.f32.mrf.mxu0
      %v2565 = vadd.f32 0.0, %v2564
      %v2566 = vpop.f32.mrf.mxu0
      %v2567 = vpop.f32.mrf.mxu0
      %v2568 = vadd.f32 0.0, %v2567
      %v2569 = vpop.f32.mrf.mxu0
      %2570 = vmatprep.mubr.bf16.mxu0 0
      %2571 = vmatmul.mubr.bf16.gmra.mxu0 %v693
      %v2572 = vpop.f32.mrf.mxu0
      %v2573 = vadd.f32 0.0, %v2572
      %v2574 = vpop.f32.mrf.mxu0
      %v2575 = vpop.f32.mrf.mxu0
      %v2576 = vadd.f32 0.0, %v2575
      %v2577 = vpop.f32.mrf.mxu0
      %2578 = vmatprep.mubr.bf16.mxu0 0
      %2579 = vmatmul.mubr.bf16.gmra.mxu0 %v696
      %v2580 = vpop.f32.mrf.mxu0
      %v2581 = vadd.f32 0.0, %v2580
      %v2582 = vpop.f32.mrf.mxu0
      %v2583 = vpop.f32.mrf.mxu0
      %v2584 = vadd.f32 0.0, %v2583
      %v2585 = vpop.f32.mrf.mxu0
      %2586 = vmatprep.mubr.bf16.mxu0 0
      %2587 = vmatmul.mubr.bf16.gmra.mxu0 %v699
      %v2588 = vpop.f32.mrf.mxu0
      %v2589 = vadd.f32 0.0, %v2588
      %v2590 = vpop.f32.mrf.mxu0
      %v2591 = vpop.f32.mrf.mxu0
      %v2592 = vadd.f32 0.0, %v2591
      %v2593 = vpop.f32.mrf.mxu0
      %2594 = vmatprep.mubr.bf16.mxu0 0
      %2595 = vmatmul.mubr.bf16.gmra.mxu0 %v702
      %v2596 = vpop.f32.mrf.mxu0
      %v2597 = vadd.f32 0.0, %v2596
      %v2598 = vpop.f32.mrf.mxu0
      %v2599 = vpop.f32.mrf.mxu0
      %v2600 = vadd.f32 0.0, %v2599
      %v2601 = vpop.f32.mrf.mxu0
      %2602 = vmatprep.mubr.bf16.mxu0 0
      %2603 = vmatmul.mubr.bf16.gmra.mxu0 %v705
      %v2604 = vpop.f32.mrf.mxu0
      %v2605 = vadd.f32 0.0, %v2604
      %v2606 = vpop.f32.mrf.mxu0
      %v2607 = vpop.f32.mrf.mxu0
      %v2608 = vadd.f32 0.0, %v2607
      %v2609 = vpop.f32.mrf.mxu0
      %2610 = vmatprep.mubr.bf16.mxu0 0
      %2611 = vmatmul.mubr.bf16.gmra.mxu0 %v708
      %v2612 = vpop.f32.mrf.mxu0
      %v2613 = vadd.f32 0.0, %v2612
      %v2614 = vpop.f32.mrf.mxu0
      %v2615 = vpop.f32.mrf.mxu0
      %v2616 = vadd.f32 0.0, %v2615
      %v2617 = vpop.f32.mrf.mxu0
      %2618 = vmatprep.mubr.bf16.mxu0 0
      %2619 = vmatmul.mubr.bf16.gmra.mxu0 %v711
      %v2620 = vpop.f32.mrf.mxu0
      %v2621 = vadd.f32 0.0, %v2620
      %v2622 = vpop.f32.mrf.mxu0
      %v2623 = vpop.f32.mrf.mxu0
      %v2624 = vadd.f32 0.0, %v2623
      %v2625 = vpop.f32.mrf.mxu0
      %2626 = vmatprep.mubr.bf16.mxu0 0
      %2627 = vmatmul.mubr.bf16.gmra.mxu0 %v1831
      %v2628 = vpop.f32.mrf.mxu0
      %v2629 = vadd.f32 0.0, %v2628
      %v2630 = vpop.f32.mrf.mxu0
      %v2631 = vpop.f32.mrf.mxu0
      %v2632 = vadd.f32 0.0, %v2631
      %v2633 = vpop.f32.mrf.mxu0
      %2634 = vmatprep.mubr.bf16.mxu0 0
      %2635 = vmatmul.mubr.bf16.gmra.mxu0 %v2477
      %v2636 = vpop.f32.mrf.mxu0
      %v2637 = vadd.f32 0.0, %v2636
      %v2638 = vpop.f32.mrf.mxu0
      %v2639 = vpop.f32.mrf.mxu0
      %v2640 = vadd.f32 0.0, %v2639
      %v2641 = vpop.f32.mrf.mxu0
      %2642 = vdwg.mxu0
      %v2643 = vadd.f32 %v2415, %v2517
      %v2644 = vadd.f32 %v2416, %v2520
      %v2645 = vadd.f32 %v2417, %v2525
      %v2646 = vadd.f32 %v2418, %v2528
      %v2647 = vadd.f32 %v2419, %v2533
      %v2648 = vadd.f32 %v2420, %v2536
      %v2649 = vadd.f32 %v2421, %v2541
      %v2650 = vadd.f32 %v2422, %v2544
      %v2651 = vadd.f32 %v2423, %v2549
      %v2652 = vadd.f32 %v2424, %v2552
      %v2653 = vadd.f32 %v2425, %v2557
      %v2654 = vadd.f32 %v2426, %v2560
      %v2655 = vadd.f32 %v2427, %v2565
      %v2656 = vadd.f32 %v2428, %v2568
      %v2657 = vadd.f32 %v2429, %v2573
      %v2658 = vadd.f32 %v2430, %v2576
      %v2659 = vadd.f32 %v2431, %v2581
      %v2660 = vadd.f32 %v2432, %v2584
      %v2661 = vadd.f32 %v2433, %v2589
      %v2662 = vadd.f32 %v2434, %v2592
      %v2663 = vadd.f32 %v2435, %v2597
      %v2664 = vadd.f32 %v2436, %v2600
      %v2665 = vadd.f32 %v2437, %v2605
      %v2666 = vadd.f32 %v2438, %v2608
      %v2667 = vadd.f32 %v2439, %v2613
      %v2668 = vadd.f32 %v2440, %v2616
      %v2669 = vadd.f32 %v2441, %v2621
      %v2670 = vadd.f32 %v2442, %v2624
      %v2671 = vadd.f32 %v2443, %v2629
      %v2672 = vadd.f32 %v2444, %v2632
      %v2673 = vadd.f32 %v2445, %v2637
      %v2674 = vadd.f32 %v2446, %v2640
      %v2676 = vrot.slane %v223, 5
      %v2677 = vrot.slane %v2676, 4
      %v2678 = vrot.slane %v224, 5
      %v2679 = vsel %vm1188, %v2677, %v2678
      %v2680 = vrot.slane %v2678, 4
      %v2681 = vrot.slane %v225, 5
      %v2682 = vsel %vm1188, %v2680, %v2681
      %s2683 = scalar_lea.vmem %s1, 32
      %v2684 = vld [vmem:[%s2683] sm:$0xf]
      %v2685 = vunpack.c.l.b16 %v2679
      %v2686 = vunpack.c.l.b16 %v2682
      %v2687 = vpack.c.b16 %v2686, %v2685
      %v2689 = vsel %vm664, %v2687, 0
      %v2692 = vsel %vm713, %v2684, 0
      %2694 = vmatprep.subr.bf16.mxu0 0
      %2695 = vmatpush1.bf16.msra.mxu0 0
      %2696 = vmatprep.subr.bf16.mxu0 0
      %2697 = vmatpush1.bf16.msra.mxu0 0
      %2698 = vmatprep.subr.bf16.mxu0 0
      %2699 = vmatpush1.bf16.msra.mxu0 0
      %2700 = vmatprep.subr.bf16.mxu0 0
      %2701 = vmatpush1.bf16.msra.mxu0 0
      %2702 = vmatprep.subr.bf16.mxu0 0
      %2703 = vmatpush1.bf16.msra.mxu0 0
      %2704 = vmatprep.subr.bf16.mxu0 0
      %2705 = vmatpush1.bf16.msra.mxu0 0
      %2706 = vmatprep.subr.bf16.mxu0 0
      %2707 = vmatpush1.bf16.msra.mxu0 0
      %2708 = vmatprep.subr.bf16.mxu0 0
      %2709 = vmatpush1.bf16.msra.mxu0 %v2692
      %2710 = vmatprep.subr.bf16.mxu0 0
      %2711 = vmatpush2.bf16.msra.mxu0 0
      %2712 = vmatprep.subr.bf16.mxu0 0
      %2713 = vmatpush2.bf16.msra.mxu0 0
      %2714 = vmatprep.subr.bf16.mxu0 0
      %2715 = vmatpush2.bf16.msra.mxu0 0
      %2716 = vmatprep.subr.bf16.mxu0 0
      %2717 = vmatpush2.bf16.msra.mxu0 0
      %2718 = vmatprep.subr.bf16.mxu0 0
      %2719 = vmatpush2.bf16.msra.mxu0 0
      %2720 = vmatprep.subr.bf16.mxu0 0
      %2721 = vmatpush2.bf16.msra.mxu0 0
      %2722 = vmatprep.subr.bf16.mxu0 0
      %2723 = vmatpush2.bf16.msra.mxu0 0
      %2724 = vmatprep.subr.bf16.mxu0 0
      %2725 = vmatpush2.bf16.msra.mxu0 0
      %2726 = vmatprep.mubr.bf16.mxu0 0
      %2727 = vmatmul.mubr.bf16.gmra.mxu0 %v1358
      %v2728 = vpop.f32.mrf.mxu0
      %v2729 = vadd.f32 0.0, %v2728
      %v2730 = vpop.f32.mrf.mxu0
      %v2731 = vpop.f32.mrf.mxu0
      %v2732 = vadd.f32 0.0, %v2731
      %v2733 = vpop.f32.mrf.mxu0
      %2734 = vmatprep.mubr.bf16.mxu0 0
      %2735 = vmatmul.mubr.bf16.gmra.mxu0 %v1361
      %v2736 = vpop.f32.mrf.mxu0
      %v2737 = vadd.f32 0.0, %v2736
      %v2738 = vpop.f32.mrf.mxu0
      %v2739 = vpop.f32.mrf.mxu0
      %v2740 = vadd.f32 0.0, %v2739
      %v2741 = vpop.f32.mrf.mxu0
      %2742 = vmatprep.mubr.bf16.mxu0 0
      %2743 = vmatmul.mubr.bf16.gmra.mxu0 %v1364
      %v2744 = vpop.f32.mrf.mxu0
      %v2745 = vadd.f32 0.0, %v2744
      %v2746 = vpop.f32.mrf.mxu0
      %v2747 = vpop.f32.mrf.mxu0
      %v2748 = vadd.f32 0.0, %v2747
      %v2749 = vpop.f32.mrf.mxu0
      %2750 = vmatprep.mubr.bf16.mxu0 0
      %2751 = vmatmul.mubr.bf16.gmra.mxu0 %v1367
      %v2752 = vpop.f32.mrf.mxu0
      %v2753 = vadd.f32 0.0, %v2752
      %v2754 = vpop.f32.mrf.mxu0
      %v2755 = vpop.f32.mrf.mxu0
      %v2756 = vadd.f32 0.0, %v2755
      %v2757 = vpop.f32.mrf.mxu0
      %2758 = vmatprep.mubr.bf16.mxu0 0
      %2759 = vmatmul.mubr.bf16.gmra.mxu0 %v1370
      %v2760 = vpop.f32.mrf.mxu0
      %v2761 = vadd.f32 0.0, %v2760
      %v2762 = vpop.f32.mrf.mxu0
      %v2763 = vpop.f32.mrf.mxu0
      %v2764 = vadd.f32 0.0, %v2763
      %v2765 = vpop.f32.mrf.mxu0
      %2766 = vmatprep.mubr.bf16.mxu0 0
      %2767 = vmatmul.mubr.bf16.gmra.mxu0 %v1373
      %v2768 = vpop.f32.mrf.mxu0
      %v2769 = vadd.f32 0.0, %v2768
      %v2770 = vpop.f32.mrf.mxu0
      %v2771 = vpop.f32.mrf.mxu0
      %v2772 = vadd.f32 0.0, %v2771
      %v2773 = vpop.f32.mrf.mxu0
      %2774 = vmatprep.mubr.bf16.mxu0 0
      %2775 = vmatmul.mubr.bf16.gmra.mxu0 %v1376
      %v2776 = vpop.f32.mrf.mxu0
      %v2777 = vadd.f32 0.0, %v2776
      %v2778 = vpop.f32.mrf.mxu0
      %v2779 = vpop.f32.mrf.mxu0
      %v2780 = vadd.f32 0.0, %v2779
      %v2781 = vpop.f32.mrf.mxu0
      %2782 = vmatprep.mubr.bf16.mxu0 0
      %2783 = vmatmul.mubr.bf16.gmra.mxu0 %v1379
      %v2784 = vpop.f32.mrf.mxu0
      %v2785 = vadd.f32 0.0, %v2784
      %v2786 = vpop.f32.mrf.mxu0
      %v2787 = vpop.f32.mrf.mxu0
      %v2788 = vadd.f32 0.0, %v2787
      %v2789 = vpop.f32.mrf.mxu0
      %2790 = vmatprep.mubr.bf16.mxu0 0
      %2791 = vmatmul.mubr.bf16.gmra.mxu0 %v1382
      %v2792 = vpop.f32.mrf.mxu0
      %v2793 = vadd.f32 0.0, %v2792
      %v2794 = vpop.f32.mrf.mxu0
      %v2795 = vpop.f32.mrf.mxu0
      %v2796 = vadd.f32 0.0, %v2795
      %v2797 = vpop.f32.mrf.mxu0
      %2798 = vmatprep.mubr.bf16.mxu0 0
      %2799 = vmatmul.mubr.bf16.gmra.mxu0 %v1385
      %v2800 = vpop.f32.mrf.mxu0
      %v2801 = vadd.f32 0.0, %v2800
      %v2802 = vpop.f32.mrf.mxu0
      %v2803 = vpop.f32.mrf.mxu0
      %v2804 = vadd.f32 0.0, %v2803
      %v2805 = vpop.f32.mrf.mxu0
      %2806 = vmatprep.mubr.bf16.mxu0 0
      %2807 = vmatmul.mubr.bf16.gmra.mxu0 %v1388
      %v2808 = vpop.f32.mrf.mxu0
      %v2809 = vadd.f32 0.0, %v2808
      %v2810 = vpop.f32.mrf.mxu0
      %v2811 = vpop.f32.mrf.mxu0
      %v2812 = vadd.f32 0.0, %v2811
      %v2813 = vpop.f32.mrf.mxu0
      %2814 = vmatprep.mubr.bf16.mxu0 0
      %2815 = vmatmul.mubr.bf16.gmra.mxu0 %v1391
      %v2816 = vpop.f32.mrf.mxu0
      %v2817 = vadd.f32 0.0, %v2816
      %v2818 = vpop.f32.mrf.mxu0
      %v2819 = vpop.f32.mrf.mxu0
      %v2820 = vadd.f32 0.0, %v2819
      %v2821 = vpop.f32.mrf.mxu0
      %2822 = vmatprep.mubr.bf16.mxu0 0
      %2823 = vmatmul.mubr.bf16.gmra.mxu0 %v1394
      %v2824 = vpop.f32.mrf.mxu0
      %v2825 = vadd.f32 0.0, %v2824
      %v2826 = vpop.f32.mrf.mxu0
      %v2827 = vpop.f32.mrf.mxu0
      %v2828 = vadd.f32 0.0, %v2827
      %v2829 = vpop.f32.mrf.mxu0
      %2830 = vmatprep.mubr.bf16.mxu0 0
      %2831 = vmatmul.mubr.bf16.gmra.mxu0 %v1397
      %v2832 = vpop.f32.mrf.mxu0
      %v2833 = vadd.f32 0.0, %v2832
      %v2834 = vpop.f32.mrf.mxu0
      %v2835 = vpop.f32.mrf.mxu0
      %v2836 = vadd.f32 0.0, %v2835
      %v2837 = vpop.f32.mrf.mxu0
      %2838 = vmatprep.mubr.bf16.mxu0 0
      %2839 = vmatmul.mubr.bf16.gmra.mxu0 %v2043
      %v2840 = vpop.f32.mrf.mxu0
      %v2841 = vadd.f32 0.0, %v2840
      %v2842 = vpop.f32.mrf.mxu0
      %v2843 = vpop.f32.mrf.mxu0
      %v2844 = vadd.f32 0.0, %v2843
      %v2845 = vpop.f32.mrf.mxu0
      %2846 = vmatprep.mubr.bf16.mxu0 0
      %2847 = vmatmul.mubr.bf16.gmra.mxu0 %v2689
      %v2848 = vpop.f32.mrf.mxu0
      %v2849 = vadd.f32 0.0, %v2848
      %v2850 = vpop.f32.mrf.mxu0
      %v2851 = vpop.f32.mrf.mxu0
      %v2852 = vadd.f32 0.0, %v2851
      %v2853 = vpop.f32.mrf.mxu0
      %2854 = vdwg.mxu0
      %v2855 = vadd.f32 %v2643, %v2729
      %v2856 = vadd.f32 %v2644, %v2732
      %v2857 = vadd.f32 %v2645, %v2737
      %v2858 = vadd.f32 %v2646, %v2740
      %v2859 = vadd.f32 %v2647, %v2745
      %v2860 = vadd.f32 %v2648, %v2748
      %v2861 = vadd.f32 %v2649, %v2753
      %v2862 = vadd.f32 %v2650, %v2756
      %v2863 = vadd.f32 %v2651, %v2761
      %v2864 = vadd.f32 %v2652, %v2764
      %v2865 = vadd.f32 %v2653, %v2769
      %v2866 = vadd.f32 %v2654, %v2772
      %v2867 = vadd.f32 %v2655, %v2777
      %v2868 = vadd.f32 %v2656, %v2780
      %v2869 = vadd.f32 %v2657, %v2785
      %v2870 = vadd.f32 %v2658, %v2788
      %v2871 = vadd.f32 %v2659, %v2793
      %v2872 = vadd.f32 %v2660, %v2796
      %v2873 = vadd.f32 %v2661, %v2801
      %v2874 = vadd.f32 %v2662, %v2804
      %v2875 = vadd.f32 %v2663, %v2809
      %v2876 = vadd.f32 %v2664, %v2812
      %v2877 = vadd.f32 %v2665, %v2817
      %v2878 = vadd.f32 %v2666, %v2820
      %v2879 = vadd.f32 %v2667, %v2825
      %v2880 = vadd.f32 %v2668, %v2828
      %v2881 = vadd.f32 %v2669, %v2833
      %v2882 = vadd.f32 %v2670, %v2836
      %v2883 = vadd.f32 %v2671, %v2841
      %v2884 = vadd.f32 %v2672, %v2844
      %v2885 = vadd.f32 %v2673, %v2849
      %v2886 = vadd.f32 %v2674, %v2852
      %v2887 = vld [vmem:[%s2] sm:$0x1]
      %v2889 = vlaneseq
      %v2890 = vshrl.u32 %v2889, 7
      %v2891 = vsub.s32 0, %v2890
      %v2892 = vrot.slane %v2887, %v2891
      %v2894 = vadd.f32 %v2855, %v2892
      %v2895 = vadd.f32 %v2856, %v2892
      %v2896 = vadd.f32 %v2857, %v2892
      %v2897 = vadd.f32 %v2858, %v2892
      %v2898 = vadd.f32 %v2859, %v2892
      %v2899 = vadd.f32 %v2860, %v2892
      %v2900 = vadd.f32 %v2861, %v2892
      %v2901 = vadd.f32 %v2862, %v2892
      %v2902 = vadd.f32 %v2863, %v2892
      %v2903 = vadd.f32 %v2864, %v2892
      %v2904 = vadd.f32 %v2865, %v2892
      %v2905 = vadd.f32 %v2866, %v2892
      %v2906 = vadd.f32 %v2867, %v2892
      %v2907 = vadd.f32 %v2868, %v2892
      %v2908 = vadd.f32 %v2869, %v2892
      %v2909 = vadd.f32 %v2870, %v2892
      %v2910 = vadd.f32 %v2871, %v2892
      %v2911 = vadd.f32 %v2872, %v2892
      %v2912 = vadd.f32 %v2873, %v2892
      %v2913 = vadd.f32 %v2874, %v2892
      %v2914 = vadd.f32 %v2875, %v2892
      %v2915 = vadd.f32 %v2876, %v2892
      %v2916 = vadd.f32 %v2877, %v2892
      %v2917 = vadd.f32 %v2878, %v2892
      %v2918 = vadd.f32 %v2879, %v2892
      %v2919 = vadd.f32 %v2880, %v2892
      %v2920 = vadd.f32 %v2881, %v2892
      %v2921 = vadd.f32 %v2882, %v2892
      %v2922 = vadd.f32 %v2883, %v2892
      %v2923 = vadd.f32 %v2884, %v2892
      %v2924 = vadd.f32 %v2885, %v2892
      %v2925 = vadd.f32 %v2886, %v2892
      %v2926 = vtanh.pop %v2894
      %v2927 = vtanh.pop %v2895
      %v2928 = vtanh.pop %v2896
      %v2929 = vtanh.pop %v2897
      %v2930 = vtanh.pop %v2898
      %v2931 = vtanh.pop %v2899
      %v2932 = vtanh.pop %v2900
      %v2933 = vtanh.pop %v2901
      %v2934 = vtanh.pop %v2902
      %v2935 = vtanh.pop %v2903
      %v2936 = vtanh.pop %v2904
      %v2937 = vtanh.pop %v2905
      %v2938 = vtanh.pop %v2906
      %v2939 = vtanh.pop %v2907
      %v2940 = vtanh.pop %v2908
      %v2941 = vtanh.pop %v2909
      %v2942 = vtanh.pop %v2910
      %v2943 = vtanh.pop %v2911
      %v2944 = vtanh.pop %v2912
      %v2945 = vtanh.pop %v2913
      %v2946 = vtanh.pop %v2914
      %v2947 = vtanh.pop %v2915
      %v2948 = vtanh.pop %v2916
      %v2949 = vtanh.pop %v2917
      %v2950 = vtanh.pop %v2918
      %v2951 = vtanh.pop %v2919
      %v2952 = vtanh.pop %v2920
      %v2953 = vtanh.pop %v2921
      %v2954 = vtanh.pop %v2922
      %v2955 = vtanh.pop %v2923
      %v2956 = vtanh.pop %v2924
      %v2957 = vtanh.pop %v2925
      %vm2958 = vcmask 23552
      %2959 = vst.msk [vmem:[%s170] sm:$0xff] %vm2958, %v2926
      %2960 = vst.msk [vmem:[%s170 + $0x8] sm:$0xff] %vm2958, %v2927
      %2961 = vst.msk [vmem:[%s170 + $0x10] sm:$0xff] %vm2958, %v2928
      %2962 = vst.msk [vmem:[%s170 + $0x18] sm:$0xff] %vm2958, %v2929
      %2963 = vst.msk [vmem:[%s170 + $0x20] sm:$0xff] %vm2958, %v2930
      %2964 = vst.msk [vmem:[%s170 + $0x28] sm:$0xff] %vm2958, %v2931
      %2965 = vst.msk [vmem:[%s170 + $0x30] sm:$0xff] %vm2958, %v2932
      %2966 = vst.msk [vmem:[%s170 + $0x38] sm:$0xff] %vm2958, %v2933
      %2967 = vst.msk [vmem:[%s170 + $0x40] sm:$0xff] %vm2958, %v2934
      %2968 = vst.msk [vmem:[%s170 + $0x48] sm:$0xff] %vm2958, %v2935
      %2969 = vst.msk [vmem:[%s170 + $0x50] sm:$0xff] %vm2958, %v2936
      %2970 = vst.msk [vmem:[%s170 + $0x58] sm:$0xff] %vm2958, %v2937
      %2971 = vst.msk [vmem:[%s170 + $0x60] sm:$0xff] %vm2958, %v2938
      %2972 = vst.msk [vmem:[%s170 + $0x68] sm:$0xff] %vm2958, %v2939
      %2973 = vst.msk [vmem:[%s170 + $0x70] sm:$0xff] %vm2958, %v2940
      %2974 = vst.msk [vmem:[%s170 + $0x78] sm:$0xff] %vm2958, %v2941
      %2975 = vst.msk [vmem:[%s170 + $0x80] sm:$0xff] %vm2958, %v2942
      %2976 = vst.msk [vmem:[%s170 + $0x88] sm:$0xff] %vm2958, %v2943
      %2977 = vst.msk [vmem:[%s170 + $0x90] sm:$0xff] %vm2958, %v2944
      %2978 = vst.msk [vmem:[%s170 + $0x98] sm:$0xff] %vm2958, %v2945
      %2979 = vst.msk [vmem:[%s170 + $0xa0] sm:$0xff] %vm2958, %v2946
      %2980 = vst.msk [vmem:[%s170 + $0xa8] sm:$0xff] %vm2958, %v2947
      %2981 = vst.msk [vmem:[%s170 + $0xb0] sm:$0xff] %vm2958, %v2948
      %2982 = vst.msk [vmem:[%s170 + $0xb8] sm:$0xff] %vm2958, %v2949
      %2983 = vst.msk [vmem:[%s170 + $0xc0] sm:$0xff] %vm2958, %v2950
      %2984 = vst.msk [vmem:[%s170 + $0xc8] sm:$0xff] %vm2958, %v2951
      %2985 = vst.msk [vmem:[%s170 + $0xd0] sm:$0xff] %vm2958, %v2952
      %2986 = vst.msk [vmem:[%s170 + $0xd8] sm:$0xff] %vm2958, %v2953
      %2987 = vst.msk [vmem:[%s170 + $0xe0] sm:$0xff] %vm2958, %v2954
      %2988 = vst.msk [vmem:[%s170 + $0xe8] sm:$0xff] %vm2958, %v2955
      %2989 = vst.msk [vmem:[%s170 + $0xf0] sm:$0xff] %vm2958, %v2956
      %2990 = vst.msk [vmem:[%s170 + $0xf8] sm:$0xff] %vm2958, %v2957
      %p2991 = scmp.lt.s32.totalorder %s14, 1
      %s2992 = scalar_select %p2991, %s14, 1
      %s2993 = smul.addr %s2992, 32
      %s2994 = smul.addr %s2993, 8
      %s2995 = scalar_lea.vmem %s3, %s2994
      // Predicated region
      $region33: #{forward.35} parent=31 // pred_check
        %p2996 = pneg %p100
      $region34: #{forward.35} parent=31 // pred_check_branch
        %2998 = sbr.rel (%p2996) target = $region36
      $region35: #{forward.35} parent=31 // pred_region
        _
      $region36: #{forward.35} parent=31 // pred_fallthru
        _
    $region32: #{forward.35} parent=5 // pred_fallthru
      _
    %p2999 = scmp.le.s32.totalorder 2, %s9
    // Predicated region
    $region37: #{forward.35} parent=5 // pred_check
      %p3000 = pneg %p2999
    $region38: #{forward.35} parent=5 // pred_check_branch
      %3002 = sbr.rel (%p3000) target = $region40
    $region39: #{forward.35} parent=5 // pred_region
      %s3003 = ssub.s32 %s9, 2
      // Predicated region
      $region41: #{forward.35} parent=39 // pred_check
        %p3004 = pneg %p106
      $region42: #{forward.35} parent=39 // pred_check_branch
        %3006 = sbr.rel (%p3004) target = $region44
      $region43: #{forward.35} parent=39 // pred_region
        %p3007 = scmp.lt.s32.totalorder %s15, 1
        %s3008 = scalar_select %p3007, %s15, 1
        %s3009 = smul.addr %s3008, 32
        %s3010 = smul.addr %s3009, 8
        %s3011 = scalar_lea.vmem %s3, %s3010
      $region44: #{forward.35} parent=39 // pred_fallthru
        _
    $region40: #{forward.35} parent=5 // pred_fallthru
      _
  $region6: #{forward.35} parent=0 // loop_footer
    %s13 = sadd.s32 1, %s9
  $region7: #{forward.35} parent=0 // loop_footer_branch
    %8 = sbr.rel target = $region3
  $region8: #{forward.35} parent=0 // loop_exit
    _

</llo_original>
